<compile_context>
chip_gen: v7x
topology: tpu7x:2x2x1
jax: 0.10.0
libtpu: 0.0.40
codegen_flags: <defaults>
</compile_context>

<pallas_src>
import functools

import jax
import jax.numpy as jnp
from jax.experimental import pallas as pl
from jax.experimental.pallas import tpu as pltpu

D_MODEL = 256
D_FFN = 512
MEM_DIM = 1024
NUM_HEADS = 8
LN_EPS = 1e-5

_F32 = jnp.float32
_BF16 = jnp.bfloat16

# Flat per-layer weight ordering handed to the kernel.
_LAYER_NAMES = ["kv_w", "kv_b", "qry_w", "qry_b", "n1_g", "n1_b",
                "lin1_w", "lin1_b", "lin2_w", "lin2_b", "n2_g", "n2_b"]
_SELF_ATTN_NAMES = ["attn_wqk", "attn_bqk", "attn_wv", "attn_bv",
                    "attn_wo", "attn_bo", "n3_g", "n3_b"]
_N_L0 = len(_LAYER_NAMES) + len(_SELF_ATTN_NAMES)   # 20 refs (isfirst layer)
_N_L1 = len(_LAYER_NAMES)                            # 12 refs

_SMEM = getattr(pltpu, "MemorySpace", pltpu).SMEM    # cross-version SMEM space


def _bdot(a, b):
    """Matmul with bf16 inputs / f32 accumulation (native MXU rate)."""
    return jnp.dot(a.astype(_BF16), b.astype(_BF16), preferred_element_type=_F32)


def _bein(eq, a, b):
    return jnp.einsum(eq, a.astype(_BF16), b.astype(_BF16),
                      preferred_element_type=_F32)


def _layer_norm(x, g, b):
    mu = jnp.mean(x, axis=-1, keepdims=True)
    xc = x - mu
    var = jnp.mean(xc * xc, axis=-1, keepdims=True)
    return xc * jax.lax.rsqrt(var + LN_EPS) * g + b


def _softmax_last(x, *, approx=False):
    m = jnp.max(x, axis=-1, keepdims=True)
    e = jnp.exp(x - m)
    s = jnp.sum(e, axis=-1, keepdims=True)
    if approx and hasattr(pl, "reciprocal"):
        return e * pl.reciprocal(s, approx=True)   # EUP slot -> frees VALU divides
    return e / s


# --------------------------- fused decoder kernel ---------------------------
def _decoder_kernel(scale_ref, mem_ref, qe_ref, *rest,
                    b_blk, seq_len, n_cluster, d_model, num_heads):
    l0 = rest[:_N_L0]
    l1 = rest[_N_L0:_N_L0 + _N_L1]
    tgt_out, att_out, mha_scr = rest[_N_L0 + _N_L1:]

    B, T, Nc, d = b_blk, seq_len, n_cluster, d_model
    mem2d = mem_ref[...]                 # (B*T, 1024) bf16 — read once for BOTH layers
    qe = qe_ref[...].astype(_F32)        # (Nc, d) query embedding / positional

    def cross_attn_ffn(tgt, scale, refs):
        (kv_w, kv_b, qry_w, qry_b, n1g, n1b, w1, b1, w2, b2, n2g, n2b) = refs
        # Fused key|value projection: one (1024, 2d) matmul with M = B*T rows.
        kv = _bdot(mem2d, kv_w[...]) + kv_b[...]                     # (B*T, 2d) f32
        key = kv[:, :d].reshape(B, T, d)
        value = kv[:, d:].reshape(B, T, d)
        query = (_bdot((tgt + qe).reshape(B * Nc, d), qry_w[...])
                 + qry_b[...]).reshape(B, Nc, d)
        # Logits laid out (B, Nc, T): softmax over the memory axis (torch dim=1)
        # sits on lanes and tgt2 = adj @ value needs no in-kernel transpose.
        logits = _bein("bnd,btd->bnt", query, key) * scale
        adj = _softmax_last(logits, approx=True)                     # (B, Nc, T)
        tgt2 = _bein("bnt,btd->bnd", adj, value)                     # == adj^T @ value
        # TODO(synk): dropout1/2/3 are identity (eval-mode forward).
        tgt = _layer_norm(tgt + tgt2, n1g[...], n1b[...])
        h = jnp.maximum(_bdot(tgt.reshape(B * Nc, d), w1[...]) + b1[...], 0.0)
        tgt2 = (_bdot(h, w2[...]) + b2[...]).reshape(B, Nc, d)
        tgt = _layer_norm(tgt + tgt2, n2g[...], n2b[...])
        return tgt, adj

    # ---------------- layer 0 (isfirst=True) ----------------
    tgt = jnp.zeros((B, Nc, d), _F32)        # decoder starts from tgt = 0
    tgt, adj0 = cross_attn_ffn(tgt, scale_ref[0], l0[:len(_LAYER_NAMES)])

    wqk, bqk, wv, bv, wo, bo, n3g, n3b = l0[len(_LAYER_NAMES):]
    qk_p = _bdot((tgt + qe).reshape(B * Nc, d), wqk[...]) + bqk[...]   # fused q|k proj
    v_p = (_bdot(tgt.reshape(B * Nc, d), wv[...]) + bv[...]).reshape(B, Nc, d)
    q_p = qk_p[:, :d].reshape(B, Nc, d)
    k_p = qk_p[:, d:].reshape(B, Nc, d)
    hd = d // num_heads
    hscale = float(hd) ** -0.5
    for hh in range(num_heads):   # static loop; heads assembled in VMEM scratch (no lane concat)
        lo = hh * hd
        s = _bein("bqd,bkd->bqk", q_p[:, :, lo:lo + hd] * hscale, k_p[:, :, lo:lo + hd])
        a = _softmax_last(s, approx=True)
        mha_scr[:, :, lo:lo + hd] = _bein("bqk,bkd->bqd", a, v_p[:, :, lo:lo + hd])
    tgt2 = (_bdot(mha_scr[...].reshape(B * Nc, d), wo[...]) + bo[...]).reshape(B, Nc, d)
    tgt = _layer_norm(tgt + tgt2, n3g[...], n3b[...])

    # ---------------- layer 1 (isfirst=False); tgt never leaves VMEM ----------------
    tgt, adj1 = cross_attn_ffn(tgt, scale_ref[1], l1)

    tgt_out[...] = tgt.astype(tgt_out.dtype)
    att_out[:, 0, :, :] = adj0.astype(att_out.dtype)
    att_out[:, 1, :, :] = adj1.astype(att_out.dtype)


# --------------------------------- wrapper ----------------------------------
def action_decoder_forward(x, params):
    """x: (bs, T, 1024) f32.  Returns (tgt (bs, Nc, 256) f32, att (bs, 2T, Nc) f32)."""
    bs, T, mem_dim = x.shape
    qe = params["query_embed"]
    n_cluster, d_model = qe.shape
    l0, l1 = params["layer0"], params["layer1"]
    d_ffn = l0["lin1_w"].shape[1]

    # Batch blocking: target >= 256 memory rows per grid step so the MXU sees a
    # tall M dimension instead of T rows.
    b_blk = min(bs, max(1, 256 // max(T, 1)))
    if b_blk < bs and (b_blk * T) % 16 != 0:   # keep the bf16 memory block sublane-aligned
        b_blk = bs
    n_blocks = -(-bs // b_blk)
    bs_pad = n_blocks * b_blk
    if bs_pad != bs:
        x = jnp.concatenate(
            [x, jnp.zeros((bs_pad - bs,) + x.shape[1:], x.dtype)], axis=0)

    # bf16 memory halves the dominant HBM read; pre-flattened so the kernel needs
    # no reshape before the fused key|value projection.
    mem2d = x.astype(_BF16).reshape(bs_pad * T, mem_dim)
    # Precomputed per-layer scale 1/(d_model * temp), read from SMEM in-kernel.
    scales = jnp.stack([1.0 / (d_model * l0["temp"]),
                        1.0 / (d_model * l1["temp"])]).astype(_F32)

    weight_args = ([l0[n] for n in _LAYER_NAMES + _SELF_ATTN_NAMES]
                   + [l1[n] for n in _LAYER_NAMES])

    def const_spec(a):
        # TODO(synk): on jax versions exposing pl.Buffered, pipeline_mode=pl.Buffered(1)
        # would single-buffer these never-changing weight blocks (v7x VMEM saving).
        return pl.BlockSpec(a.shape, lambda b, _n=a.ndim: (0,) * _n)

    in_specs = ([pl.BlockSpec(memory_space=_SMEM),                    # scales (2,)
                 pl.BlockSpec((b_blk * T, mem_dim), lambda b: (b, 0)),  # memory slab
                 const_spec(qe)]
                + [const_spec(a) for a in weight_args])
    out_specs = (pl.BlockSpec((b_blk, n_cluster, d_model), lambda b: (b, 0, 0)),
                 pl.BlockSpec((b_blk, 2, n_cluster, T), lambda b: (b, 0, 0, 0)))
    out_shape = (jax.ShapeDtypeStruct((bs_pad, n_cluster, d_model), _F32),
                 jax.ShapeDtypeStruct((bs_pad, 2, n_cluster, T), _F32))

    cp_cls = getattr(pltpu, "CompilerParams", None) or getattr(pltpu, "TPUCompilerParams")
    extra = {}
    if hasattr(pl, "CostEstimate"):
        hd = d_model // NUM_HEADS
        per_layer = (2 * T * mem_dim * (2 * d_model)       # fused key|value proj
                     + 2 * n_cluster * d_model * d_model   # query proj
                     + 4 * n_cluster * T * d_model         # logits + adj @ value
                     + 4 * n_cluster * d_model * d_ffn)    # FFN
        mha = (2 * n_cluster * d_model * (2 * d_model)     # fused q|k proj
               + 4 * n_cluster * d_model * d_model         # v proj + out proj
               + 4 * NUM_HEADS * n_cluster * n_cluster * hd)
        flops = bs_pad * (2 * per_layer + mha)
        transcendentals = bs_pad * (2 * n_cluster * T + NUM_HEADS * n_cluster * n_cluster)
        bytes_accessed = (int(mem2d.size) * 2 + int(qe.size) * 4
                          + sum(int(a.size) * a.dtype.itemsize for a in weight_args)
                          + bs_pad * n_cluster * d_model * 4
                          + bs_pad * 2 * n_cluster * T * 4)
        extra["cost_estimate"] = pl.CostEstimate(
            flops=int(flops), transcendentals=int(transcendentals),
            bytes_accessed=int(bytes_accessed))

    kernel = functools.partial(_decoder_kernel, b_blk=b_blk, seq_len=T,
                               n_cluster=n_cluster, d_model=d_model,
                               num_heads=NUM_HEADS)
    tgt_pad, att_pad = pl.pallas_call(
        kernel,
        out_shape=out_shape,
        grid_spec=pltpu.PrefetchScalarGridSpec(
            num_scalar_prefetch=0,
            grid=(n_blocks,),
            in_specs=in_specs,
            out_specs=out_specs,
            scratch_shapes=[pltpu.VMEM((b_blk, n_cluster, d_model), _F32)]),
        compiler_params=cp_cls(
            # TODO(synk): pltpu.CORE_PARALLEL for guaranteed v7x dual-TC sharding
            # once there are >= 2 batch blocks per chip.
            dimension_semantics=("parallel",),
            vmem_limit_bytes=32 * 1024 * 1024),
        **extra,
    )(scales, mem2d, qe, *weight_args)

    tgt = tgt_pad[:bs]
    # (bs, 2, Nc, T) -> (bs, 2T, Nc): matches torch.cat([att1, att2], dim=1).
    att = att_pad[:bs].transpose(0, 1, 3, 2).reshape(bs, 2 * T, n_cluster)
    return tgt, att


# ------------------------------- parameters ---------------------------------
def init_decoder_params(key, num_cluster, d_model=D_MODEL, d_ffn=D_FFN, mem_dim=MEM_DIM):
    """Deterministic init.  Linear weights stored pre-transposed (in, out) and
    pre-fused (key|value, q|k) in bf16; biases / LayerNorm params / temp stay f32."""
    keys = iter(jax.random.split(key, 32))

    def lin_w(d_in, d_out):
        bound = 1.0 / (d_in ** 0.5)
        return jax.random.uniform(next(keys), (d_in, d_out), _F32, -bound, bound).astype(_BF16)

    def lin_b(d_in, d_out):
        bound = 1.0 / (d_in ** 0.5)
        return jax.random.uniform(next(keys), (1, d_out), _F32, -bound, bound)

    def layer(isfirst):
        p = {"temp": jnp.asarray(0.07, _F32)}
        p["kv_w"], p["kv_b"] = lin_w(mem_dim, 2 * d_model), lin_b(mem_dim, 2 * d_model)
        p["qry_w"], p["qry_b"] = lin_w(d_model, d_model), lin_b(d_model, d_model)
        p["n1_g"], p["n1_b"] = jnp.ones((1, d_model), _F32), jnp.zeros((1, d_model), _F32)
        p["lin1_w"], p["lin1_b"] = lin_w(d_model, d_ffn), lin_b(d_model, d_ffn)
        p["lin2_w"], p["lin2_b"] = lin_w(d_ffn, d_model), lin_b(d_ffn, d_model)
        p["n2_g"], p["n2_b"] = jnp.ones((1, d_model), _F32), jnp.zeros((1, d_model), _F32)
        if isfirst:
            p["attn_wqk"], p["attn_bqk"] = lin_w(d_model, 2 * d_model), lin_b(d_model, 2 * d_model)
            p["attn_wv"], p["attn_bv"] = lin_w(d_model, d_model), lin_b(d_model, d_model)
            p["attn_wo"], p["attn_bo"] = lin_w(d_model, d_model), lin_b(d_model, d_model)
            p["n3_g"], p["n3_b"] = jnp.ones((1, d_model), _F32), jnp.zeros((1, d_model), _F32)
        return p

    query_embed = 0.02 * jax.random.normal(next(keys), (num_cluster, d_model), _F32)
    return {"query_embed": query_embed, "layer0": layer(True), "layer1": layer(False)}


# ----------------------------- pure-JAX reference ----------------------------
def _ref_layer(tgt, mem2d_b16, qe, p, bs, T, *, isfirst):
    n_cluster, d = qe.shape
    kv = _bdot(mem2d_b16, p["kv_w"]) + p["kv_b"]
    key = kv[:, :d].reshape(bs, T, d)
    value = kv[:, d:].reshape(bs, T, d)
    query = (_bdot((tgt + qe).reshape(bs * n_cluster, d), p["qry_w"]) + p["qry_b"]
             ).reshape(bs, n_cluster, d)
    logits = _bein("bnd,btd->bnt", query, key) * (1.0 / (d * p["temp"]))
    adj = _softmax_last(logits)                      # softmax over memory axis T
    tgt2 = _bein("bnt,btd->bnd", adj, value)
    tgt = _layer_norm(tgt + tgt2, p["n1_g"], p["n1_b"])
    h = jnp.maximum(_bdot(tgt.reshape(bs * n_cluster, d), p["lin1_w"]) + p["lin1_b"], 0.0)
    tgt2 = (_bdot(h, p["lin2_w"]) + p["lin2_b"]).reshape(bs, n_cluster, d)
    tgt = _layer_norm(tgt + tgt2, p["n2_g"], p["n2_b"])
    if isfirst:
        qk_p = _bdot((tgt + qe).reshape(bs * n_cluster, d), p["attn_wqk"]) + p["attn_bqk"]
        v_p = (_bdot(tgt.reshape(bs * n_cluster, d), p["attn_wv"]) + p["attn_bv"]
               ).reshape(bs, n_cluster, d)
        q_p = qk_p[:, :d].reshape(bs, n_cluster, d)
        k_p = qk_p[:, d:].reshape(bs, n_cluster, d)
        hd = d // NUM_HEADS
        outs = []
        for hh in range(NUM_HEADS):
            lo = hh * hd
            s = _bein("bqd,bkd->bqk", q_p[:, :, lo:lo + hd] * hd ** -0.5,
                      k_p[:, :, lo:lo + hd])
            a = _softmax_last(s)
            outs.append(_bein("bqk,bkd->bqd", a, v_p[:, :, lo:lo + hd]))
        attn = jnp.concatenate(outs, axis=-1)
        tgt2 = (_bdot(attn.reshape(bs * n_cluster, d), p["attn_wo"]) + p["attn_bo"]
                ).reshape(bs, n_cluster, d)
        tgt = _layer_norm(tgt + tgt2, p["n3_g"], p["n3_b"])
    return tgt, adj


def reference_forward(x, params):
    """Pure-JAX reference with the same bf16-matmul / f32-accumulate policy."""
    bs, T, mem_dim = x.shape
    qe = params["query_embed"]
    n_cluster, d = qe.shape
    mem2d = x.astype(_BF16).reshape(bs * T, mem_dim)
    tgt = jnp.zeros((bs, n_cluster, d), _F32)
    tgt, adj0 = _ref_layer(tgt, mem2d, qe, params["layer0"], bs, T, isfirst=True)
    tgt, adj1 = _ref_layer(tgt, mem2d, qe, params["layer1"], bs, T, isfirst=False)
    att = jnp.concatenate([jnp.swapaxes(adj0, 1, 2), jnp.swapaxes(adj1, 1, 2)], axis=1)
    return tgt, att


if __name__ == "__main__":
    bs, T, num_cluster = 2, 8, 8
    kx, kp = jax.random.split(jax.random.PRNGKey(0))
    x = jax.random.normal(kx, (bs, T, MEM_DIM), _F32)
    params = init_decoder_params(kp, num_cluster)

    tgt, att = jax.jit(action_decoder_forward)(x, params)
    tgt = jax.block_until_ready(tgt)
    att = jax.block_until_ready(att)

    ref_tgt, ref_att = reference_forward(x, params)
    assert tgt.shape == (bs, num_cluster, D_MODEL), tgt.shape
    assert att.shape == (bs, 2 * T, num_cluster), att.shape
    err_tgt = float(jnp.max(jnp.abs(tgt - ref_tgt)))
    err_att = float(jnp.max(jnp.abs(att - ref_att)))
    # bf16 matmul inputs + approximate softmax reciprocal: allow a few bf16 ulps of drift.
    assert err_tgt < 2e-2 and err_att < 2e-2, (err_tgt, err_att)
    print("KERNEL_OK")
</pallas_src>

<mosaic_0001>
module attributes {stable_mosaic.version = 11 : i64} {
  func.func @_decoder_kernel(%arg0: i32, %arg1: memref<2xf32, #tpu.memory_space<smem>>, %arg2: memref<16x1024xbf16, #tpu.memory_space<vmem>>, %arg3: memref<8x256xf32, #tpu.memory_space<vmem>>, %arg4: memref<1024x512xbf16, #tpu.memory_space<vmem>>, %arg5: memref<1x512xf32, #tpu.memory_space<vmem>>, %arg6: memref<256x256xbf16, #tpu.memory_space<vmem>>, %arg7: memref<1x256xf32, #tpu.memory_space<vmem>>, %arg8: memref<1x256xf32, #tpu.memory_space<vmem>>, %arg9: memref<1x256xf32, #tpu.memory_space<vmem>>, %arg10: memref<256x512xbf16, #tpu.memory_space<vmem>>, %arg11: memref<1x512xf32, #tpu.memory_space<vmem>>, %arg12: memref<512x256xbf16, #tpu.memory_space<vmem>>, %arg13: memref<1x256xf32, #tpu.memory_space<vmem>>, %arg14: memref<1x256xf32, #tpu.memory_space<vmem>>, %arg15: memref<1x256xf32, #tpu.memory_space<vmem>>, %arg16: memref<256x512xbf16, #tpu.memory_space<vmem>>, %arg17: memref<1x512xf32, #tpu.memory_space<vmem>>, %arg18: memref<256x256xbf16, #tpu.memory_space<vmem>>, %arg19: memref<1x256xf32, #tpu.memory_space<vmem>>, %arg20: memref<256x256xbf16, #tpu.memory_space<vmem>>, %arg21: memref<1x256xf32, #tpu.memory_space<vmem>>, %arg22: memref<1x256xf32, #tpu.memory_space<vmem>>, %arg23: memref<1x256xf32, #tpu.memory_space<vmem>>, %arg24: memref<1024x512xbf16, #tpu.memory_space<vmem>>, %arg25: memref<1x512xf32, #tpu.memory_space<vmem>>, %arg26: memref<256x256xbf16, #tpu.memory_space<vmem>>, %arg27: memref<1x256xf32, #tpu.memory_space<vmem>>, %arg28: memref<1x256xf32, #tpu.memory_space<vmem>>, %arg29: memref<1x256xf32, #tpu.memory_space<vmem>>, %arg30: memref<256x512xbf16, #tpu.memory_space<vmem>>, %arg31: memref<1x512xf32, #tpu.memory_space<vmem>>, %arg32: memref<512x256xbf16, #tpu.memory_space<vmem>>, %arg33: memref<1x256xf32, #tpu.memory_space<vmem>>, %arg34: memref<1x256xf32, #tpu.memory_space<vmem>>, %arg35: memref<1x256xf32, #tpu.memory_space<vmem>>, %arg36: memref<2x8x256xf32, #tpu.memory_space<vmem>>, %arg37: memref<2x2x8x8xf32, #tpu.memory_space<vmem>>, %arg38: memref<2x8x256xf32, #tpu.memory_space<vmem>>) attributes {dimension_semantics = [#tpu.dimension_semantics<parallel>], iteration_bounds = array<i64: 1>, scalar_prefetch = 0 : i64, scratch_operands = 1 : i64, tpu.core_type = #tpu.core_type<tc>, window_params = [{transform_indices = @transform_0, window_bounds = array<i64: 2>}, {transform_indices = @transform_1, window_bounds = array<i64: 16, 1024>}, {pipeline_mode = #tpu.pipeline_mode<synchronous>, transform_indices = @transform_2, window_bounds = array<i64: 8, 256>}, {pipeline_mode = #tpu.pipeline_mode<synchronous>, transform_indices = @transform_3, window_bounds = array<i64: 1024, 512>}, {pipeline_mode = #tpu.pipeline_mode<synchronous>, transform_indices = @transform_4, window_bounds = array<i64: 1, 512>}, {pipeline_mode = #tpu.pipeline_mode<synchronous>, transform_indices = @transform_5, window_bounds = array<i64: 256, 256>}, {pipeline_mode = #tpu.pipeline_mode<synchronous>, transform_indices = @transform_6, window_bounds = array<i64: 1, 256>}, {pipeline_mode = #tpu.pipeline_mode<synchronous>, transform_indices = @transform_7, window_bounds = array<i64: 1, 256>}, {pipeline_mode = #tpu.pipeline_mode<synchronous>, transform_indices = @transform_8, window_bounds = array<i64: 1, 256>}, {pipeline_mode = #tpu.pipeline_mode<synchronous>, transform_indices = @transform_9, window_bounds = array<i64: 256, 512>}, {pipeline_mode = #tpu.pipeline_mode<synchronous>, transform_indices = @transform_10, window_bounds = array<i64: 1, 512>}, {pipeline_mode = #tpu.pipeline_mode<synchronous>, transform_indices = @transform_11, window_bounds = array<i64: 512, 256>}, {pipeline_mode = #tpu.pipeline_mode<synchronous>, transform_indices = @transform_12, window_bounds = array<i64: 1, 256>}, {pipeline_mode = #tpu.pipeline_mode<synchronous>, transform_indices = @transform_13, window_bounds = array<i64: 1, 256>}, {pipeline_mode = #tpu.pipeline_mode<synchronous>, transform_indices = @transform_14, window_bounds = array<i64: 1, 256>}, {pipeline_mode = #tpu.pipeline_mode<synchronous>, transform_indices = @transform_15, window_bounds = array<i64: 256, 512>}, {pipeline_mode = #tpu.pipeline_mode<synchronous>, transform_indices = @transform_16, window_bounds = array<i64: 1, 512>}, {pipeline_mode = #tpu.pipeline_mode<synchronous>, transform_indices = @transform_17, window_bounds = array<i64: 256, 256>}, {pipeline_mode = #tpu.pipeline_mode<synchronous>, transform_indices = @transform_18, window_bounds = array<i64: 1, 256>}, {pipeline_mode = #tpu.pipeline_mode<synchronous>, transform_indices = @transform_19, window_bounds = array<i64: 256, 256>}, {pipeline_mode = #tpu.pipeline_mode<synchronous>, transform_indices = @transform_20, window_bounds = array<i64: 1, 256>}, {pipeline_mode = #tpu.pipeline_mode<synchronous>, transform_indices = @transform_21, window_bounds = array<i64: 1, 256>}, {pipeline_mode = #tpu.pipeline_mode<synchronous>, transform_indices = @transform_22, window_bounds = array<i64: 1, 256>}, {pipeline_mode = #tpu.pipeline_mode<synchronous>, transform_indices = @transform_23, window_bounds = array<i64: 1024, 512>}, {pipeline_mode = #tpu.pipeline_mode<synchronous>, transform_indices = @transform_24, window_bounds = array<i64: 1, 512>}, {pipeline_mode = #tpu.pipeline_mode<synchronous>, transform_indices = @transform_25, window_bounds = array<i64: 256, 256>}, {pipeline_mode = #tpu.pipeline_mode<synchronous>, transform_indices = @transform_26, window_bounds = array<i64: 1, 256>}, {pipeline_mode = #tpu.pipeline_mode<synchronous>, transform_indices = @transform_27, window_bounds = array<i64: 1, 256>}, {pipeline_mode = #tpu.pipeline_mode<synchronous>, transform_indices = @transform_28, window_bounds = array<i64: 1, 256>}, {pipeline_mode = #tpu.pipeline_mode<synchronous>, transform_indices = @transform_29, window_bounds = array<i64: 256, 512>}, {pipeline_mode = #tpu.pipeline_mode<synchronous>, transform_indices = @transform_30, window_bounds = array<i64: 1, 512>}, {pipeline_mode = #tpu.pipeline_mode<synchronous>, transform_indices = @transform_31, window_bounds = array<i64: 512, 256>}, {pipeline_mode = #tpu.pipeline_mode<synchronous>, transform_indices = @transform_32, window_bounds = array<i64: 1, 256>}, {pipeline_mode = #tpu.pipeline_mode<synchronous>, transform_indices = @transform_33, window_bounds = array<i64: 1, 256>}, {pipeline_mode = #tpu.pipeline_mode<synchronous>, transform_indices = @transform_34, window_bounds = array<i64: 1, 256>}, {transform_indices = @transform_35, window_bounds = array<i64: 2, 8, 256>}, {transform_indices = @transform_36, window_bounds = array<i64: 2, 2, 8, 8>}]} {
    %c0 = arith.constant 0 : index
    %c0_0 = arith.constant 0 : index
    %0 = vector.load %arg2[%c0, %c0_0] : memref<16x1024xbf16, #tpu.memory_space<vmem>>, vector<16x1024xbf16>
    %c0_1 = arith.constant 0 : index
    %c0_2 = arith.constant 0 : index
    %1 = vector.load %arg3[%c0_1, %c0_2] : memref<8x256xf32, #tpu.memory_space<vmem>>, vector<8x256xf32>
    %cst = arith.constant 0.000000e+00 : f32
    %2 = vector.broadcast %cst : f32 to vector<2x8x256xf32>
    %c0_3 = arith.constant 0 : index
    %3 = memref.load %arg1[%c0_3] : memref<2xf32, #tpu.memory_space<smem>>
    %c0_4 = arith.constant 0 : index
    %c0_5 = arith.constant 0 : index
    %4 = vector.load %arg4[%c0_4, %c0_5] : memref<1024x512xbf16, #tpu.memory_space<vmem>>, vector<1024x512xbf16>
    %cst_6 = arith.constant dense<0.000000e+00> : vector<16x512xf32>
    %5 = tpu.matmul %0, %4, %cst_6 {dimension_numbers = #tpu.dot_dimension_numbers<[1], [0], [0], [1], [0, 0, 1, 1], [], []>} : vector<16x1024xbf16>, vector<1024x512xbf16>, vector<16x512xf32> -> vector<16x512xf32>
    %c0_7 = arith.constant 0 : index
    %c0_8 = arith.constant 0 : index
    %6 = vector.load %arg5[%c0_7, %c0_8] : memref<1x512xf32, #tpu.memory_space<vmem>>, vector<1x512xf32>
    %7 = vector.broadcast %6 : vector<1x512xf32> to vector<16x512xf32>
    %8 = arith.addf %5, %7 : vector<16x512xf32>
    %9 = vector.extract_strided_slice %8 {offsets = [0, 0], sizes = [16, 256], strides = [1, 1]} : vector<16x512xf32> to vector<16x256xf32>
    %10 = vector.shape_cast %9 : vector<16x256xf32> to vector<2x8x256xf32>
    %11 = vector.extract_strided_slice %8 {offsets = [0, 256], sizes = [16, 256], strides = [1, 1]} : vector<16x512xf32> to vector<16x256xf32>
    %12 = vector.shape_cast %11 : vector<16x256xf32> to vector<2x8x256xf32>
    %13 = vector.shape_cast %1 : vector<8x256xf32> to vector<1x8x256xf32>
    %14 = vector.broadcast %13 : vector<1x8x256xf32> to vector<2x8x256xf32>
    %15 = arith.addf %2, %14 : vector<2x8x256xf32>
    %16 = vector.shape_cast %15 : vector<2x8x256xf32> to vector<16x256xf32>
    %c0_9 = arith.constant 0 : index
    %c0_10 = arith.constant 0 : index
    %17 = vector.load %arg6[%c0_9, %c0_10] : memref<256x256xbf16, #tpu.memory_space<vmem>>, vector<256x256xbf16>
    %18 = arith.truncf %16 : vector<16x256xf32> to vector<16x256xbf16>
    %cst_11 = arith.constant dense<0.000000e+00> : vector<16x256xf32>
    %19 = tpu.matmul %18, %17, %cst_11 {dimension_numbers = #tpu.dot_dimension_numbers<[1], [0], [0], [1], [0, 0, 1, 1], [], []>} : vector<16x256xbf16>, vector<256x256xbf16>, vector<16x256xf32> -> vector<16x256xf32>
    %c0_12 = arith.constant 0 : index
    %c0_13 = arith.constant 0 : index
    %20 = vector.load %arg7[%c0_12, %c0_13] : memref<1x256xf32, #tpu.memory_space<vmem>>, vector<1x256xf32>
    %21 = vector.broadcast %20 : vector<1x256xf32> to vector<16x256xf32>
    %22 = arith.addf %19, %21 : vector<16x256xf32>
    %23 = vector.shape_cast %22 : vector<16x256xf32> to vector<2x8x256xf32>
    %24 = arith.truncf %23 : vector<2x8x256xf32> to vector<2x8x256xbf16>
    %25 = arith.truncf %10 : vector<2x8x256xf32> to vector<2x8x256xbf16>
    "tpu.trace_start"() <{level = 10 : i32, message = "bnd,btd->bnt"}> : () -> ()
    %cst_14 = arith.constant dense<0.000000e+00> : vector<2x8x8xf32>
    %26 = tpu.matmul %24, %25, %cst_14 {dimension_numbers = #tpu.dot_dimension_numbers<[2], [2], [1], [1], [0, 0, 0, 1, 1, 1], [0], [0]>} : vector<2x8x256xbf16>, vector<2x8x256xbf16>, vector<2x8x8xf32> -> vector<2x8x8xf32>
    "tpu.trace_stop"() : () -> ()
    %27 = vector.broadcast %3 : f32 to vector<2x8x8xf32>
    %28 = arith.mulf %26, %27 : vector<2x8x8xf32>
    %cst_15 = arith.constant dense<0xFF800000> : vector<2x8xf32>
    %29 = vector.multi_reduction <maximumf>, %28, %cst_15 [2] : vector<2x8x8xf32> to vector<2x8xf32>
    %30 = vector.shape_cast %29 : vector<2x8xf32> to vector<2x8x1xf32>
    %31 = vector.broadcast %30 : vector<2x8x1xf32> to vector<2x8x8xf32>
    %32 = arith.subf %28, %31 : vector<2x8x8xf32>
    %33 = math.exp %32 : vector<2x8x8xf32>
    %cst_16 = arith.constant dense<0.000000e+00> : vector<2x8xf32>
    %34 = vector.multi_reduction <add>, %33, %cst_16 [2] : vector<2x8x8xf32> to vector<2x8xf32>
    %35 = vector.shape_cast %34 : vector<2x8xf32> to vector<2x8x1xf32>
    %36 = tpu.reciprocal %35 {approx = true} : vector<2x8x1xf32> -> vector<2x8x1xf32>
    %37 = vector.broadcast %36 : vector<2x8x1xf32> to vector<2x8x8xf32>
    %38 = arith.mulf %33, %37 : vector<2x8x8xf32>
    %39 = arith.truncf %38 : vector<2x8x8xf32> to vector<2x8x8xbf16>
    %40 = arith.truncf %12 : vector<2x8x256xf32> to vector<2x8x256xbf16>
    "tpu.trace_start"() <{level = 10 : i32, message = "bnt,btd->bnd"}> : () -> ()
    %cst_17 = arith.constant dense<0.000000e+00> : vector<2x8x256xf32>
    %41 = tpu.matmul %39, %40, %cst_17 {dimension_numbers = #tpu.dot_dimension_numbers<[2], [1], [1], [2], [0, 0, 0, 1, 1, 2], [0], [0]>} : vector<2x8x8xbf16>, vector<2x8x256xbf16>, vector<2x8x256xf32> -> vector<2x8x256xf32>
    "tpu.trace_stop"() : () -> ()
    %42 = arith.addf %2, %41 : vector<2x8x256xf32>
    %c0_18 = arith.constant 0 : index
    %c0_19 = arith.constant 0 : index
    %43 = vector.load %arg8[%c0_18, %c0_19] : memref<1x256xf32, #tpu.memory_space<vmem>>, vector<1x256xf32>
    %c0_20 = arith.constant 0 : index
    %c0_21 = arith.constant 0 : index
    %44 = vector.load %arg9[%c0_20, %c0_21] : memref<1x256xf32, #tpu.memory_space<vmem>>, vector<1x256xf32>
    %cst_22 = arith.constant dense<0.000000e+00> : vector<2x8xf32>
    %45 = vector.multi_reduction <add>, %42, %cst_22 [2] : vector<2x8x256xf32> to vector<2x8xf32>
    %46 = vector.shape_cast %45 : vector<2x8xf32> to vector<2x8x1xf32>
    %cst_23 = arith.constant 2.560000e+02 : f32
    %47 = vector.broadcast %cst_23 : f32 to vector<2x8x1xf32>
    %48 = arith.divf %46, %47 : vector<2x8x1xf32>
    %49 = vector.broadcast %48 : vector<2x8x1xf32> to vector<2x8x256xf32>
    %50 = arith.subf %42, %49 : vector<2x8x256xf32>
    %51 = arith.mulf %50, %50 : vector<2x8x256xf32>
    %cst_24 = arith.constant dense<0.000000e+00> : vector<2x8xf32>
    %52 = vector.multi_reduction <add>, %51, %cst_24 [2] : vector<2x8x256xf32> to vector<2x8xf32>
    %53 = vector.shape_cast %52 : vector<2x8xf32> to vector<2x8x1xf32>
    %cst_25 = arith.constant 2.560000e+02 : f32
    %54 = vector.broadcast %cst_25 : f32 to vector<2x8x1xf32>
    %55 = arith.divf %53, %54 : vector<2x8x1xf32>
    %cst_26 = arith.constant 9.99999974E-6 : f32
    %56 = vector.broadcast %cst_26 : f32 to vector<2x8x1xf32>
    %57 = arith.addf %55, %56 : vector<2x8x1xf32>
    %58 = math.rsqrt %57 : vector<2x8x1xf32>
    %59 = vector.broadcast %58 : vector<2x8x1xf32> to vector<2x8x256xf32>
    %60 = arith.mulf %50, %59 : vector<2x8x256xf32>
    %61 = vector.shape_cast %43 : vector<1x256xf32> to vector<1x1x256xf32>
    %62 = vector.broadcast %61 : vector<1x1x256xf32> to vector<2x8x256xf32>
    %63 = arith.mulf %60, %62 : vector<2x8x256xf32>
    %64 = vector.shape_cast %44 : vector<1x256xf32> to vector<1x1x256xf32>
    %65 = vector.broadcast %64 : vector<1x1x256xf32> to vector<2x8x256xf32>
    %66 = arith.addf %63, %65 : vector<2x8x256xf32>
    %67 = vector.shape_cast %66 : vector<2x8x256xf32> to vector<16x256xf32>
    %c0_27 = arith.constant 0 : index
    %c0_28 = arith.constant 0 : index
    %68 = vector.load %arg10[%c0_27, %c0_28] : memref<256x512xbf16, #tpu.memory_space<vmem>>, vector<256x512xbf16>
    %69 = arith.truncf %67 : vector<16x256xf32> to vector<16x256xbf16>
    %cst_29 = arith.constant dense<0.000000e+00> : vector<16x512xf32>
    %70 = tpu.matmul %69, %68, %cst_29 {dimension_numbers = #tpu.dot_dimension_numbers<[1], [0], [0], [1], [0, 0, 1, 1], [], []>} : vector<16x256xbf16>, vector<256x512xbf16>, vector<16x512xf32> -> vector<16x512xf32>
    %c0_30 = arith.constant 0 : index
    %c0_31 = arith.constant 0 : index
    %71 = vector.load %arg11[%c0_30, %c0_31] : memref<1x512xf32, #tpu.memory_space<vmem>>, vector<1x512xf32>
    %72 = vector.broadcast %71 : vector<1x512xf32> to vector<16x512xf32>
    %73 = arith.addf %70, %72 : vector<16x512xf32>
    %cst_32 = arith.constant 0.000000e+00 : f32
    %74 = vector.broadcast %cst_32 : f32 to vector<16x512xf32>
    %75 = arith.maximumf %73, %74 : vector<16x512xf32>
    %c0_33 = arith.constant 0 : index
    %c0_34 = arith.constant 0 : index
    %76 = vector.load %arg12[%c0_33, %c0_34] : memref<512x256xbf16, #tpu.memory_space<vmem>>, vector<512x256xbf16>
    %77 = arith.truncf %75 : vector<16x512xf32> to vector<16x512xbf16>
    %cst_35 = arith.constant dense<0.000000e+00> : vector<16x256xf32>
    %78 = tpu.matmul %77, %76, %cst_35 {dimension_numbers = #tpu.dot_dimension_numbers<[1], [0], [0], [1], [0, 0, 1, 1], [], []>} : vector<16x512xbf16>, vector<512x256xbf16>, vector<16x256xf32> -> vector<16x256xf32>
    %c0_36 = arith.constant 0 : index
    %c0_37 = arith.constant 0 : index
    %79 = vector.load %arg13[%c0_36, %c0_37] : memref<1x256xf32, #tpu.memory_space<vmem>>, vector<1x256xf32>
    %80 = vector.broadcast %79 : vector<1x256xf32> to vector<16x256xf32>
    %81 = arith.addf %78, %80 : vector<16x256xf32>
    %82 = vector.shape_cast %81 : vector<16x256xf32> to vector<2x8x256xf32>
    %83 = arith.addf %66, %82 : vector<2x8x256xf32>
    %c0_38 = arith.constant 0 : index
    %c0_39 = arith.constant 0 : index
    %84 = vector.load %arg14[%c0_38, %c0_39] : memref<1x256xf32, #tpu.memory_space<vmem>>, vector<1x256xf32>
    %c0_40 = arith.constant 0 : index
    %c0_41 = arith.constant 0 : index
    %85 = vector.load %arg15[%c0_40, %c0_41] : memref<1x256xf32, #tpu.memory_space<vmem>>, vector<1x256xf32>
    %cst_42 = arith.constant dense<0.000000e+00> : vector<2x8xf32>
    %86 = vector.multi_reduction <add>, %83, %cst_42 [2] : vector<2x8x256xf32> to vector<2x8xf32>
    %87 = vector.shape_cast %86 : vector<2x8xf32> to vector<2x8x1xf32>
    %cst_43 = arith.constant 2.560000e+02 : f32
    %88 = vector.broadcast %cst_43 : f32 to vector<2x8x1xf32>
    %89 = arith.divf %87, %88 : vector<2x8x1xf32>
    %90 = vector.broadcast %89 : vector<2x8x1xf32> to vector<2x8x256xf32>
    %91 = arith.subf %83, %90 : vector<2x8x256xf32>
    %92 = arith.mulf %91, %91 : vector<2x8x256xf32>
    %cst_44 = arith.constant dense<0.000000e+00> : vector<2x8xf32>
    %93 = vector.multi_reduction <add>, %92, %cst_44 [2] : vector<2x8x256xf32> to vector<2x8xf32>
    %94 = vector.shape_cast %93 : vector<2x8xf32> to vector<2x8x1xf32>
    %cst_45 = arith.constant 2.560000e+02 : f32
    %95 = vector.broadcast %cst_45 : f32 to vector<2x8x1xf32>
    %96 = arith.divf %94, %95 : vector<2x8x1xf32>
    %cst_46 = arith.constant 9.99999974E-6 : f32
    %97 = vector.broadcast %cst_46 : f32 to vector<2x8x1xf32>
    %98 = arith.addf %96, %97 : vector<2x8x1xf32>
    %99 = math.rsqrt %98 : vector<2x8x1xf32>
    %100 = vector.broadcast %99 : vector<2x8x1xf32> to vector<2x8x256xf32>
    %101 = arith.mulf %91, %100 : vector<2x8x256xf32>
    %102 = vector.shape_cast %84 : vector<1x256xf32> to vector<1x1x256xf32>
    %103 = vector.broadcast %102 : vector<1x1x256xf32> to vector<2x8x256xf32>
    %104 = arith.mulf %101, %103 : vector<2x8x256xf32>
    %105 = vector.shape_cast %85 : vector<1x256xf32> to vector<1x1x256xf32>
    %106 = vector.broadcast %105 : vector<1x1x256xf32> to vector<2x8x256xf32>
    %107 = arith.addf %104, %106 : vector<2x8x256xf32>
    %108 = vector.shape_cast %1 : vector<8x256xf32> to vector<1x8x256xf32>
    %109 = vector.broadcast %108 : vector<1x8x256xf32> to vector<2x8x256xf32>
    %110 = arith.addf %107, %109 : vector<2x8x256xf32>
    %111 = vector.shape_cast %110 : vector<2x8x256xf32> to vector<16x256xf32>
    %c0_47 = arith.constant 0 : index
    %c0_48 = arith.constant 0 : index
    %112 = vector.load %arg16[%c0_47, %c0_48] : memref<256x512xbf16, #tpu.memory_space<vmem>>, vector<256x512xbf16>
    %113 = arith.truncf %111 : vector<16x256xf32> to vector<16x256xbf16>
    %cst_49 = arith.constant dense<0.000000e+00> : vector<16x512xf32>
    %114 = tpu.matmul %113, %112, %cst_49 {dimension_numbers = #tpu.dot_dimension_numbers<[1], [0], [0], [1], [0, 0, 1, 1], [], []>} : vector<16x256xbf16>, vector<256x512xbf16>, vector<16x512xf32> -> vector<16x512xf32>
    %c0_50 = arith.constant 0 : index
    %c0_51 = arith.constant 0 : index
    %115 = vector.load %arg17[%c0_50, %c0_51] : memref<1x512xf32, #tpu.memory_space<vmem>>, vector<1x512xf32>
    %116 = vector.broadcast %115 : vector<1x512xf32> to vector<16x512xf32>
    %117 = arith.addf %114, %116 : vector<16x512xf32>
    %118 = vector.shape_cast %107 : vector<2x8x256xf32> to vector<16x256xf32>
    %c0_52 = arith.constant 0 : index
    %c0_53 = arith.constant 0 : index
    %119 = vector.load %arg18[%c0_52, %c0_53] : memref<256x256xbf16, #tpu.memory_space<vmem>>, vector<256x256xbf16>
    %120 = arith.truncf %118 : vector<16x256xf32> to vector<16x256xbf16>
    %cst_54 = arith.constant dense<0.000000e+00> : vector<16x256xf32>
    %121 = tpu.matmul %120, %119, %cst_54 {dimension_numbers = #tpu.dot_dimension_numbers<[1], [0], [0], [1], [0, 0, 1, 1], [], []>} : vector<16x256xbf16>, vector<256x256xbf16>, vector<16x256xf32> -> vector<16x256xf32>
    %c0_55 = arith.constant 0 : index
    %c0_56 = arith.constant 0 : index
    %122 = vector.load %arg19[%c0_55, %c0_56] : memref<1x256xf32, #tpu.memory_space<vmem>>, vector<1x256xf32>
    %123 = vector.broadcast %122 : vector<1x256xf32> to vector<16x256xf32>
    %124 = arith.addf %121, %123 : vector<16x256xf32>
    %125 = vector.shape_cast %124 : vector<16x256xf32> to vector<2x8x256xf32>
    %126 = vector.extract_strided_slice %117 {offsets = [0, 0], sizes = [16, 256], strides = [1, 1]} : vector<16x512xf32> to vector<16x256xf32>
    %127 = vector.shape_cast %126 : vector<16x256xf32> to vector<2x8x256xf32>
    %128 = vector.extract_strided_slice %117 {offsets = [0, 256], sizes = [16, 256], strides = [1, 1]} : vector<16x512xf32> to vector<16x256xf32>
    %129 = vector.shape_cast %128 : vector<16x256xf32> to vector<2x8x256xf32>
    %130 = vector.extract_strided_slice %127 {offsets = [0, 0, 0], sizes = [2, 8, 32], strides = [1, 1, 1]} : vector<2x8x256xf32> to vector<2x8x32xf32>
    %cst_57 = arith.constant 0.176776692 : f32
    %131 = vector.broadcast %cst_57 : f32 to vector<2x8x32xf32>
    %132 = arith.mulf %130, %131 : vector<2x8x32xf32>
    %133 = vector.extract_strided_slice %129 {offsets = [0, 0, 0], sizes = [2, 8, 32], strides = [1, 1, 1]} : vector<2x8x256xf32> to vector<2x8x32xf32>
    %134 = arith.truncf %132 : vector<2x8x32xf32> to vector<2x8x32xbf16>
    %135 = arith.truncf %133 : vector<2x8x32xf32> to vector<2x8x32xbf16>
    "tpu.trace_start"() <{level = 10 : i32, message = "bqd,bkd->bqk"}> : () -> ()
    %cst_58 = arith.constant dense<0.000000e+00> : vector<2x8x8xf32>
    %136 = tpu.matmul %134, %135, %cst_58 {dimension_numbers = #tpu.dot_dimension_numbers<[2], [2], [1], [1], [0, 0, 0, 1, 1, 1], [0], [0]>} : vector<2x8x32xbf16>, vector<2x8x32xbf16>, vector<2x8x8xf32> -> vector<2x8x8xf32>
    "tpu.trace_stop"() : () -> ()
    %cst_59 = arith.constant dense<0xFF800000> : vector<2x8xf32>
    %137 = vector.multi_reduction <maximumf>, %136, %cst_59 [2] : vector<2x8x8xf32> to vector<2x8xf32>
    %138 = vector.shape_cast %137 : vector<2x8xf32> to vector<2x8x1xf32>
    %139 = vector.broadcast %138 : vector<2x8x1xf32> to vector<2x8x8xf32>
    %140 = arith.subf %136, %139 : vector<2x8x8xf32>
    %141 = math.exp %140 : vector<2x8x8xf32>
    %cst_60 = arith.constant dense<0.000000e+00> : vector<2x8xf32>
    %142 = vector.multi_reduction <add>, %141, %cst_60 [2] : vector<2x8x8xf32> to vector<2x8xf32>
    %143 = vector.shape_cast %142 : vector<2x8xf32> to vector<2x8x1xf32>
    %144 = tpu.reciprocal %143 {approx = true} : vector<2x8x1xf32> -> vector<2x8x1xf32>
    %145 = vector.broadcast %144 : vector<2x8x1xf32> to vector<2x8x8xf32>
    %146 = arith.mulf %141, %145 : vector<2x8x8xf32>
    %147 = vector.extract_strided_slice %125 {offsets = [0, 0, 0], sizes = [2, 8, 32], strides = [1, 1, 1]} : vector<2x8x256xf32> to vector<2x8x32xf32>
    %148 = arith.truncf %146 : vector<2x8x8xf32> to vector<2x8x8xbf16>
    %149 = arith.truncf %147 : vector<2x8x32xf32> to vector<2x8x32xbf16>
    "tpu.trace_start"() <{level = 10 : i32, message = "bqk,bkd->bqd"}> : () -> ()
    %cst_61 = arith.constant dense<0.000000e+00> : vector<2x8x32xf32>
    %150 = tpu.matmul %148, %149, %cst_61 {dimension_numbers = #tpu.dot_dimension_numbers<[2], [1], [1], [2], [0, 0, 0, 1, 1, 2], [0], [0]>} : vector<2x8x8xbf16>, vector<2x8x32xbf16>, vector<2x8x32xf32> -> vector<2x8x32xf32>
    "tpu.trace_stop"() : () -> ()
    %c0_62 = arith.constant 0 : index
    %c0_63 = arith.constant 0 : index
    %c0_64 = arith.constant 0 : index
    %151 = vector.load %arg38[%c0_62, %c0_63, %c0_64] : memref<2x8x256xf32, #tpu.memory_space<vmem>>, vector<2x8x32xf32>
    tpu.vector_store %arg38[%c0_62, %c0_63, %c0_64], %150 {strides = array<i32>} : memref<2x8x256xf32, #tpu.memory_space<vmem>>, vector<2x8x32xf32>,
    %152 = vector.extract_strided_slice %127 {offsets = [0, 0, 32], sizes = [2, 8, 32], strides = [1, 1, 1]} : vector<2x8x256xf32> to vector<2x8x32xf32>
    %cst_65 = arith.constant 0.176776692 : f32
    %153 = vector.broadcast %cst_65 : f32 to vector<2x8x32xf32>
    %154 = arith.mulf %152, %153 : vector<2x8x32xf32>
    %155 = vector.extract_strided_slice %129 {offsets = [0, 0, 32], sizes = [2, 8, 32], strides = [1, 1, 1]} : vector<2x8x256xf32> to vector<2x8x32xf32>
    %156 = arith.truncf %154 : vector<2x8x32xf32> to vector<2x8x32xbf16>
    %157 = arith.truncf %155 : vector<2x8x32xf32> to vector<2x8x32xbf16>
    "tpu.trace_start"() <{level = 10 : i32, message = "bqd,bkd->bqk"}> : () -> ()
    %cst_66 = arith.constant dense<0.000000e+00> : vector<2x8x8xf32>
    %158 = tpu.matmul %156, %157, %cst_66 {dimension_numbers = #tpu.dot_dimension_numbers<[2], [2], [1], [1], [0, 0, 0, 1, 1, 1], [0], [0]>} : vector<2x8x32xbf16>, vector<2x8x32xbf16>, vector<2x8x8xf32> -> vector<2x8x8xf32>
    "tpu.trace_stop"() : () -> ()
    %cst_67 = arith.constant dense<0xFF800000> : vector<2x8xf32>
    %159 = vector.multi_reduction <maximumf>, %158, %cst_67 [2] : vector<2x8x8xf32> to vector<2x8xf32>
    %160 = vector.shape_cast %159 : vector<2x8xf32> to vector<2x8x1xf32>
    %161 = vector.broadcast %160 : vector<2x8x1xf32> to vector<2x8x8xf32>
    %162 = arith.subf %158, %161 : vector<2x8x8xf32>
    %163 = math.exp %162 : vector<2x8x8xf32>
    %cst_68 = arith.constant dense<0.000000e+00> : vector<2x8xf32>
    %164 = vector.multi_reduction <add>, %163, %cst_68 [2] : vector<2x8x8xf32> to vector<2x8xf32>
    %165 = vector.shape_cast %164 : vector<2x8xf32> to vector<2x8x1xf32>
    %166 = tpu.reciprocal %165 {approx = true} : vector<2x8x1xf32> -> vector<2x8x1xf32>
    %167 = vector.broadcast %166 : vector<2x8x1xf32> to vector<2x8x8xf32>
    %168 = arith.mulf %163, %167 : vector<2x8x8xf32>
    %169 = vector.extract_strided_slice %125 {offsets = [0, 0, 32], sizes = [2, 8, 32], strides = [1, 1, 1]} : vector<2x8x256xf32> to vector<2x8x32xf32>
    %170 = arith.truncf %168 : vector<2x8x8xf32> to vector<2x8x8xbf16>
    %171 = arith.truncf %169 : vector<2x8x32xf32> to vector<2x8x32xbf16>
    "tpu.trace_start"() <{level = 10 : i32, message = "bqk,bkd->bqd"}> : () -> ()
    %cst_69 = arith.constant dense<0.000000e+00> : vector<2x8x32xf32>
    %172 = tpu.matmul %170, %171, %cst_69 {dimension_numbers = #tpu.dot_dimension_numbers<[2], [1], [1], [2], [0, 0, 0, 1, 1, 2], [0], [0]>} : vector<2x8x8xbf16>, vector<2x8x32xbf16>, vector<2x8x32xf32> -> vector<2x8x32xf32>
    "tpu.trace_stop"() : () -> ()
    %c0_70 = arith.constant 0 : index
    %c0_71 = arith.constant 0 : index
    %c32 = arith.constant 32 : index
    %173 = vector.load %arg38[%c0_70, %c0_71, %c32] : memref<2x8x256xf32, #tpu.memory_space<vmem>>, vector<2x8x32xf32>
    tpu.vector_store %arg38[%c0_70, %c0_71, %c32], %172 {strides = array<i32>} : memref<2x8x256xf32, #tpu.memory_space<vmem>>, vector<2x8x32xf32>,
    %174 = vector.extract_strided_slice %127 {offsets = [0, 0, 64], sizes = [2, 8, 32], strides = [1, 1, 1]} : vector<2x8x256xf32> to vector<2x8x32xf32>
    %cst_72 = arith.constant 0.176776692 : f32
    %175 = vector.broadcast %cst_72 : f32 to vector<2x8x32xf32>
    %176 = arith.mulf %174, %175 : vector<2x8x32xf32>
    %177 = vector.extract_strided_slice %129 {offsets = [0, 0, 64], sizes = [2, 8, 32], strides = [1, 1, 1]} : vector<2x8x256xf32> to vector<2x8x32xf32>
    %178 = arith.truncf %176 : vector<2x8x32xf32> to vector<2x8x32xbf16>
    %179 = arith.truncf %177 : vector<2x8x32xf32> to vector<2x8x32xbf16>
    "tpu.trace_start"() <{level = 10 : i32, message = "bqd,bkd->bqk"}> : () -> ()
    %cst_73 = arith.constant dense<0.000000e+00> : vector<2x8x8xf32>
    %180 = tpu.matmul %178, %179, %cst_73 {dimension_numbers = #tpu.dot_dimension_numbers<[2], [2], [1], [1], [0, 0, 0, 1, 1, 1], [0], [0]>} : vector<2x8x32xbf16>, vector<2x8x32xbf16>, vector<2x8x8xf32> -> vector<2x8x8xf32>
    "tpu.trace_stop"() : () -> ()
    %cst_74 = arith.constant dense<0xFF800000> : vector<2x8xf32>
    %181 = vector.multi_reduction <maximumf>, %180, %cst_74 [2] : vector<2x8x8xf32> to vector<2x8xf32>
    %182 = vector.shape_cast %181 : vector<2x8xf32> to vector<2x8x1xf32>
    %183 = vector.broadcast %182 : vector<2x8x1xf32> to vector<2x8x8xf32>
    %184 = arith.subf %180, %183 : vector<2x8x8xf32>
    %185 = math.exp %184 : vector<2x8x8xf32>
    %cst_75 = arith.constant dense<0.000000e+00> : vector<2x8xf32>
    %186 = vector.multi_reduction <add>, %185, %cst_75 [2] : vector<2x8x8xf32> to vector<2x8xf32>
    %187 = vector.shape_cast %186 : vector<2x8xf32> to vector<2x8x1xf32>
    %188 = tpu.reciprocal %187 {approx = true} : vector<2x8x1xf32> -> vector<2x8x1xf32>
    %189 = vector.broadcast %188 : vector<2x8x1xf32> to vector<2x8x8xf32>
    %190 = arith.mulf %185, %189 : vector<2x8x8xf32>
    %191 = vector.extract_strided_slice %125 {offsets = [0, 0, 64], sizes = [2, 8, 32], strides = [1, 1, 1]} : vector<2x8x256xf32> to vector<2x8x32xf32>
    %192 = arith.truncf %190 : vector<2x8x8xf32> to vector<2x8x8xbf16>
    %193 = arith.truncf %191 : vector<2x8x32xf32> to vector<2x8x32xbf16>
    "tpu.trace_start"() <{level = 10 : i32, message = "bqk,bkd->bqd"}> : () -> ()
    %cst_76 = arith.constant dense<0.000000e+00> : vector<2x8x32xf32>
    %194 = tpu.matmul %192, %193, %cst_76 {dimension_numbers = #tpu.dot_dimension_numbers<[2], [1], [1], [2], [0, 0, 0, 1, 1, 2], [0], [0]>} : vector<2x8x8xbf16>, vector<2x8x32xbf16>, vector<2x8x32xf32> -> vector<2x8x32xf32>
    "tpu.trace_stop"() : () -> ()
    %c0_77 = arith.constant 0 : index
    %c0_78 = arith.constant 0 : index
    %c64 = arith.constant 64 : index
    %195 = vector.load %arg38[%c0_77, %c0_78, %c64] : memref<2x8x256xf32, #tpu.memory_space<vmem>>, vector<2x8x32xf32>
    tpu.vector_store %arg38[%c0_77, %c0_78, %c64], %194 {strides = array<i32>} : memref<2x8x256xf32, #tpu.memory_space<vmem>>, vector<2x8x32xf32>,
    %196 = vector.extract_strided_slice %127 {offsets = [0, 0, 96], sizes = [2, 8, 32], strides = [1, 1, 1]} : vector<2x8x256xf32> to vector<2x8x32xf32>
    %cst_79 = arith.constant 0.176776692 : f32
    %197 = vector.broadcast %cst_79 : f32 to vector<2x8x32xf32>
    %198 = arith.mulf %196, %197 : vector<2x8x32xf32>
    %199 = vector.extract_strided_slice %129 {offsets = [0, 0, 96], sizes = [2, 8, 32], strides = [1, 1, 1]} : vector<2x8x256xf32> to vector<2x8x32xf32>
    %200 = arith.truncf %198 : vector<2x8x32xf32> to vector<2x8x32xbf16>
    %201 = arith.truncf %199 : vector<2x8x32xf32> to vector<2x8x32xbf16>
    "tpu.trace_start"() <{level = 10 : i32, message = "bqd,bkd->bqk"}> : () -> ()
    %cst_80 = arith.constant dense<0.000000e+00> : vector<2x8x8xf32>
    %202 = tpu.matmul %200, %201, %cst_80 {dimension_numbers = #tpu.dot_dimension_numbers<[2], [2], [1], [1], [0, 0, 0, 1, 1, 1], [0], [0]>} : vector<2x8x32xbf16>, vector<2x8x32xbf16>, vector<2x8x8xf32> -> vector<2x8x8xf32>
    "tpu.trace_stop"() : () -> ()
    %cst_81 = arith.constant dense<0xFF800000> : vector<2x8xf32>
    %203 = vector.multi_reduction <maximumf>, %202, %cst_81 [2] : vector<2x8x8xf32> to vector<2x8xf32>
    %204 = vector.shape_cast %203 : vector<2x8xf32> to vector<2x8x1xf32>
    %205 = vector.broadcast %204 : vector<2x8x1xf32> to vector<2x8x8xf32>
    %206 = arith.subf %202, %205 : vector<2x8x8xf32>
    %207 = math.exp %206 : vector<2x8x8xf32>
    %cst_82 = arith.constant dense<0.000000e+00> : vector<2x8xf32>
    %208 = vector.multi_reduction <add>, %207, %cst_82 [2] : vector<2x8x8xf32> to vector<2x8xf32>
    %209 = vector.shape_cast %208 : vector<2x8xf32> to vector<2x8x1xf32>
    %210 = tpu.reciprocal %209 {approx = true} : vector<2x8x1xf32> -> vector<2x8x1xf32>
    %211 = vector.broadcast %210 : vector<2x8x1xf32> to vector<2x8x8xf32>
    %212 = arith.mulf %207, %211 : vector<2x8x8xf32>
    %213 = vector.extract_strided_slice %125 {offsets = [0, 0, 96], sizes = [2, 8, 32], strides = [1, 1, 1]} : vector<2x8x256xf32> to vector<2x8x32xf32>
    %214 = arith.truncf %212 : vector<2x8x8xf32> to vector<2x8x8xbf16>
    %215 = arith.truncf %213 : vector<2x8x32xf32> to vector<2x8x32xbf16>
    "tpu.trace_start"() <{level = 10 : i32, message = "bqk,bkd->bqd"}> : () -> ()
    %cst_83 = arith.constant dense<0.000000e+00> : vector<2x8x32xf32>
    %216 = tpu.matmul %214, %215, %cst_83 {dimension_numbers = #tpu.dot_dimension_numbers<[2], [1], [1], [2], [0, 0, 0, 1, 1, 2], [0], [0]>} : vector<2x8x8xbf16>, vector<2x8x32xbf16>, vector<2x8x32xf32> -> vector<2x8x32xf32>
    "tpu.trace_stop"() : () -> ()
    %c0_84 = arith.constant 0 : index
    %c0_85 = arith.constant 0 : index
    %c96 = arith.constant 96 : index
    %217 = vector.load %arg38[%c0_84, %c0_85, %c96] : memref<2x8x256xf32, #tpu.memory_space<vmem>>, vector<2x8x32xf32>
    tpu.vector_store %arg38[%c0_84, %c0_85, %c96], %216 {strides = array<i32>} : memref<2x8x256xf32, #tpu.memory_space<vmem>>, vector<2x8x32xf32>,
    %218 = vector.extract_strided_slice %127 {offsets = [0, 0, 128], sizes = [2, 8, 32], strides = [1, 1, 1]} : vector<2x8x256xf32> to vector<2x8x32xf32>
    %cst_86 = arith.constant 0.176776692 : f32
    %219 = vector.broadcast %cst_86 : f32 to vector<2x8x32xf32>
    %220 = arith.mulf %218, %219 : vector<2x8x32xf32>
    %221 = vector.extract_strided_slice %129 {offsets = [0, 0, 128], sizes = [2, 8, 32], strides = [1, 1, 1]} : vector<2x8x256xf32> to vector<2x8x32xf32>
    %222 = arith.truncf %220 : vector<2x8x32xf32> to vector<2x8x32xbf16>
    %223 = arith.truncf %221 : vector<2x8x32xf32> to vector<2x8x32xbf16>
    "tpu.trace_start"() <{level = 10 : i32, message = "bqd,bkd->bqk"}> : () -> ()
    %cst_87 = arith.constant dense<0.000000e+00> : vector<2x8x8xf32>
    %224 = tpu.matmul %222, %223, %cst_87 {dimension_numbers = #tpu.dot_dimension_numbers<[2], [2], [1], [1], [0, 0, 0, 1, 1, 1], [0], [0]>} : vector<2x8x32xbf16>, vector<2x8x32xbf16>, vector<2x8x8xf32> -> vector<2x8x8xf32>
    "tpu.trace_stop"() : () -> ()
    %cst_88 = arith.constant dense<0xFF800000> : vector<2x8xf32>
    %225 = vector.multi_reduction <maximumf>, %224, %cst_88 [2] : vector<2x8x8xf32> to vector<2x8xf32>
    %226 = vector.shape_cast %225 : vector<2x8xf32> to vector<2x8x1xf32>
    %227 = vector.broadcast %226 : vector<2x8x1xf32> to vector<2x8x8xf32>
    %228 = arith.subf %224, %227 : vector<2x8x8xf32>
    %229 = math.exp %228 : vector<2x8x8xf32>
    %cst_89 = arith.constant dense<0.000000e+00> : vector<2x8xf32>
    %230 = vector.multi_reduction <add>, %229, %cst_89 [2] : vector<2x8x8xf32> to vector<2x8xf32>
    %231 = vector.shape_cast %230 : vector<2x8xf32> to vector<2x8x1xf32>
    %232 = tpu.reciprocal %231 {approx = true} : vector<2x8x1xf32> -> vector<2x8x1xf32>
    %233 = vector.broadcast %232 : vector<2x8x1xf32> to vector<2x8x8xf32>
    %234 = arith.mulf %229, %233 : vector<2x8x8xf32>
    %235 = vector.extract_strided_slice %125 {offsets = [0, 0, 128], sizes = [2, 8, 32], strides = [1, 1, 1]} : vector<2x8x256xf32> to vector<2x8x32xf32>
    %236 = arith.truncf %234 : vector<2x8x8xf32> to vector<2x8x8xbf16>
    %237 = arith.truncf %235 : vector<2x8x32xf32> to vector<2x8x32xbf16>
    "tpu.trace_start"() <{level = 10 : i32, message = "bqk,bkd->bqd"}> : () -> ()
    %cst_90 = arith.constant dense<0.000000e+00> : vector<2x8x32xf32>
    %238 = tpu.matmul %236, %237, %cst_90 {dimension_numbers = #tpu.dot_dimension_numbers<[2], [1], [1], [2], [0, 0, 0, 1, 1, 2], [0], [0]>} : vector<2x8x8xbf16>, vector<2x8x32xbf16>, vector<2x8x32xf32> -> vector<2x8x32xf32>
    "tpu.trace_stop"() : () -> ()
    %c0_91 = arith.constant 0 : index
    %c0_92 = arith.constant 0 : index
    %c128 = arith.constant 128 : index
    %239 = vector.load %arg38[%c0_91, %c0_92, %c128] : memref<2x8x256xf32, #tpu.memory_space<vmem>>, vector<2x8x32xf32>
    tpu.vector_store %arg38[%c0_91, %c0_92, %c128], %238 {strides = array<i32>} : memref<2x8x256xf32, #tpu.memory_space<vmem>>, vector<2x8x32xf32>,
    %240 = vector.extract_strided_slice %127 {offsets = [0, 0, 160], sizes = [2, 8, 32], strides = [1, 1, 1]} : vector<2x8x256xf32> to vector<2x8x32xf32>
    %cst_93 = arith.constant 0.176776692 : f32
    %241 = vector.broadcast %cst_93 : f32 to vector<2x8x32xf32>
    %242 = arith.mulf %240, %241 : vector<2x8x32xf32>
    %243 = vector.extract_strided_slice %129 {offsets = [0, 0, 160], sizes = [2, 8, 32], strides = [1, 1, 1]} : vector<2x8x256xf32> to vector<2x8x32xf32>
    %244 = arith.truncf %242 : vector<2x8x32xf32> to vector<2x8x32xbf16>
    %245 = arith.truncf %243 : vector<2x8x32xf32> to vector<2x8x32xbf16>
    "tpu.trace_start"() <{level = 10 : i32, message = "bqd,bkd->bqk"}> : () -> ()
    %cst_94 = arith.constant dense<0.000000e+00> : vector<2x8x8xf32>
    %246 = tpu.matmul %244, %245, %cst_94 {dimension_numbers = #tpu.dot_dimension_numbers<[2], [2], [1], [1], [0, 0, 0, 1, 1, 1], [0], [0]>} : vector<2x8x32xbf16>, vector<2x8x32xbf16>, vector<2x8x8xf32> -> vector<2x8x8xf32>
    "tpu.trace_stop"() : () -> ()
    %cst_95 = arith.constant dense<0xFF800000> : vector<2x8xf32>
    %247 = vector.multi_reduction <maximumf>, %246, %cst_95 [2] : vector<2x8x8xf32> to vector<2x8xf32>
    %248 = vector.shape_cast %247 : vector<2x8xf32> to vector<2x8x1xf32>
    %249 = vector.broadcast %248 : vector<2x8x1xf32> to vector<2x8x8xf32>
    %250 = arith.subf %246, %249 : vector<2x8x8xf32>
    %251 = math.exp %250 : vector<2x8x8xf32>
    %cst_96 = arith.constant dense<0.000000e+00> : vector<2x8xf32>
    %252 = vector.multi_reduction <add>, %251, %cst_96 [2] : vector<2x8x8xf32> to vector<2x8xf32>
    %253 = vector.shape_cast %252 : vector<2x8xf32> to vector<2x8x1xf32>
    %254 = tpu.reciprocal %253 {approx = true} : vector<2x8x1xf32> -> vector<2x8x1xf32>
    %255 = vector.broadcast %254 : vector<2x8x1xf32> to vector<2x8x8xf32>
    %256 = arith.mulf %251, %255 : vector<2x8x8xf32>
    %257 = vector.extract_strided_slice %125 {offsets = [0, 0, 160], sizes = [2, 8, 32], strides = [1, 1, 1]} : vector<2x8x256xf32> to vector<2x8x32xf32>
    %258 = arith.truncf %256 : vector<2x8x8xf32> to vector<2x8x8xbf16>
    %259 = arith.truncf %257 : vector<2x8x32xf32> to vector<2x8x32xbf16>
    "tpu.trace_start"() <{level = 10 : i32, message = "bqk,bkd->bqd"}> : () -> ()
    %cst_97 = arith.constant dense<0.000000e+00> : vector<2x8x32xf32>
    %260 = tpu.matmul %258, %259, %cst_97 {dimension_numbers = #tpu.dot_dimension_numbers<[2], [1], [1], [2], [0, 0, 0, 1, 1, 2], [0], [0]>} : vector<2x8x8xbf16>, vector<2x8x32xbf16>, vector<2x8x32xf32> -> vector<2x8x32xf32>
    "tpu.trace_stop"() : () -> ()
    %c0_98 = arith.constant 0 : index
    %c0_99 = arith.constant 0 : index
    %c160 = arith.constant 160 : index
    %261 = vector.load %arg38[%c0_98, %c0_99, %c160] : memref<2x8x256xf32, #tpu.memory_space<vmem>>, vector<2x8x32xf32>
    tpu.vector_store %arg38[%c0_98, %c0_99, %c160], %260 {strides = array<i32>} : memref<2x8x256xf32, #tpu.memory_space<vmem>>, vector<2x8x32xf32>,
    %262 = vector.extract_strided_slice %127 {offsets = [0, 0, 192], sizes = [2, 8, 32], strides = [1, 1, 1]} : vector<2x8x256xf32> to vector<2x8x32xf32>
    %cst_100 = arith.constant 0.176776692 : f32
    %263 = vector.broadcast %cst_100 : f32 to vector<2x8x32xf32>
    %264 = arith.mulf %262, %263 : vector<2x8x32xf32>
    %265 = vector.extract_strided_slice %129 {offsets = [0, 0, 192], sizes = [2, 8, 32], strides = [1, 1, 1]} : vector<2x8x256xf32> to vector<2x8x32xf32>
    %266 = arith.truncf %264 : vector<2x8x32xf32> to vector<2x8x32xbf16>
    %267 = arith.truncf %265 : vector<2x8x32xf32> to vector<2x8x32xbf16>
    "tpu.trace_start"() <{level = 10 : i32, message = "bqd,bkd->bqk"}> : () -> ()
    %cst_101 = arith.constant dense<0.000000e+00> : vector<2x8x8xf32>
    %268 = tpu.matmul %266, %267, %cst_101 {dimension_numbers = #tpu.dot_dimension_numbers<[2], [2], [1], [1], [0, 0, 0, 1, 1, 1], [0], [0]>} : vector<2x8x32xbf16>, vector<2x8x32xbf16>, vector<2x8x8xf32> -> vector<2x8x8xf32>
    "tpu.trace_stop"() : () -> ()
    %cst_102 = arith.constant dense<0xFF800000> : vector<2x8xf32>
    %269 = vector.multi_reduction <maximumf>, %268, %cst_102 [2] : vector<2x8x8xf32> to vector<2x8xf32>
    %270 = vector.shape_cast %269 : vector<2x8xf32> to vector<2x8x1xf32>
    %271 = vector.broadcast %270 : vector<2x8x1xf32> to vector<2x8x8xf32>
    %272 = arith.subf %268, %271 : vector<2x8x8xf32>
    %273 = math.exp %272 : vector<2x8x8xf32>
    %cst_103 = arith.constant dense<0.000000e+00> : vector<2x8xf32>
    %274 = vector.multi_reduction <add>, %273, %cst_103 [2] : vector<2x8x8xf32> to vector<2x8xf32>
    %275 = vector.shape_cast %274 : vector<2x8xf32> to vector<2x8x1xf32>
    %276 = tpu.reciprocal %275 {approx = true} : vector<2x8x1xf32> -> vector<2x8x1xf32>
    %277 = vector.broadcast %276 : vector<2x8x1xf32> to vector<2x8x8xf32>
    %278 = arith.mulf %273, %277 : vector<2x8x8xf32>
    %279 = vector.extract_strided_slice %125 {offsets = [0, 0, 192], sizes = [2, 8, 32], strides = [1, 1, 1]} : vector<2x8x256xf32> to vector<2x8x32xf32>
    %280 = arith.truncf %278 : vector<2x8x8xf32> to vector<2x8x8xbf16>
    %281 = arith.truncf %279 : vector<2x8x32xf32> to vector<2x8x32xbf16>
    "tpu.trace_start"() <{level = 10 : i32, message = "bqk,bkd->bqd"}> : () -> ()
    %cst_104 = arith.constant dense<0.000000e+00> : vector<2x8x32xf32>
    %282 = tpu.matmul %280, %281, %cst_104 {dimension_numbers = #tpu.dot_dimension_numbers<[2], [1], [1], [2], [0, 0, 0, 1, 1, 2], [0], [0]>} : vector<2x8x8xbf16>, vector<2x8x32xbf16>, vector<2x8x32xf32> -> vector<2x8x32xf32>
    "tpu.trace_stop"() : () -> ()
    %c0_105 = arith.constant 0 : index
    %c0_106 = arith.constant 0 : index
    %c192 = arith.constant 192 : index
    %283 = vector.load %arg38[%c0_105, %c0_106, %c192] : memref<2x8x256xf32, #tpu.memory_space<vmem>>, vector<2x8x32xf32>
    tpu.vector_store %arg38[%c0_105, %c0_106, %c192], %282 {strides = array<i32>} : memref<2x8x256xf32, #tpu.memory_space<vmem>>, vector<2x8x32xf32>,
    %284 = vector.extract_strided_slice %127 {offsets = [0, 0, 224], sizes = [2, 8, 32], strides = [1, 1, 1]} : vector<2x8x256xf32> to vector<2x8x32xf32>
    %cst_107 = arith.constant 0.176776692 : f32
    %285 = vector.broadcast %cst_107 : f32 to vector<2x8x32xf32>
    %286 = arith.mulf %284, %285 : vector<2x8x32xf32>
    %287 = vector.extract_strided_slice %129 {offsets = [0, 0, 224], sizes = [2, 8, 32], strides = [1, 1, 1]} : vector<2x8x256xf32> to vector<2x8x32xf32>
    %288 = arith.truncf %286 : vector<2x8x32xf32> to vector<2x8x32xbf16>
    %289 = arith.truncf %287 : vector<2x8x32xf32> to vector<2x8x32xbf16>
    "tpu.trace_start"() <{level = 10 : i32, message = "bqd,bkd->bqk"}> : () -> ()
    %cst_108 = arith.constant dense<0.000000e+00> : vector<2x8x8xf32>
    %290 = tpu.matmul %288, %289, %cst_108 {dimension_numbers = #tpu.dot_dimension_numbers<[2], [2], [1], [1], [0, 0, 0, 1, 1, 1], [0], [0]>} : vector<2x8x32xbf16>, vector<2x8x32xbf16>, vector<2x8x8xf32> -> vector<2x8x8xf32>
    "tpu.trace_stop"() : () -> ()
    %cst_109 = arith.constant dense<0xFF800000> : vector<2x8xf32>
    %291 = vector.multi_reduction <maximumf>, %290, %cst_109 [2] : vector<2x8x8xf32> to vector<2x8xf32>
    %292 = vector.shape_cast %291 : vector<2x8xf32> to vector<2x8x1xf32>
    %293 = vector.broadcast %292 : vector<2x8x1xf32> to vector<2x8x8xf32>
    %294 = arith.subf %290, %293 : vector<2x8x8xf32>
    %295 = math.exp %294 : vector<2x8x8xf32>
    %cst_110 = arith.constant dense<0.000000e+00> : vector<2x8xf32>
    %296 = vector.multi_reduction <add>, %295, %cst_110 [2] : vector<2x8x8xf32> to vector<2x8xf32>
    %297 = vector.shape_cast %296 : vector<2x8xf32> to vector<2x8x1xf32>
    %298 = tpu.reciprocal %297 {approx = true} : vector<2x8x1xf32> -> vector<2x8x1xf32>
    %299 = vector.broadcast %298 : vector<2x8x1xf32> to vector<2x8x8xf32>
    %300 = arith.mulf %295, %299 : vector<2x8x8xf32>
    %301 = vector.extract_strided_slice %125 {offsets = [0, 0, 224], sizes = [2, 8, 32], strides = [1, 1, 1]} : vector<2x8x256xf32> to vector<2x8x32xf32>
    %302 = arith.truncf %300 : vector<2x8x8xf32> to vector<2x8x8xbf16>
    %303 = arith.truncf %301 : vector<2x8x32xf32> to vector<2x8x32xbf16>
    "tpu.trace_start"() <{level = 10 : i32, message = "bqk,bkd->bqd"}> : () -> ()
    %cst_111 = arith.constant dense<0.000000e+00> : vector<2x8x32xf32>
    %304 = tpu.matmul %302, %303, %cst_111 {dimension_numbers = #tpu.dot_dimension_numbers<[2], [1], [1], [2], [0, 0, 0, 1, 1, 2], [0], [0]>} : vector<2x8x8xbf16>, vector<2x8x32xbf16>, vector<2x8x32xf32> -> vector<2x8x32xf32>
    "tpu.trace_stop"() : () -> ()
    %c0_112 = arith.constant 0 : index
    %c0_113 = arith.constant 0 : index
    %c224 = arith.constant 224 : index
    %305 = vector.load %arg38[%c0_112, %c0_113, %c224] : memref<2x8x256xf32, #tpu.memory_space<vmem>>, vector<2x8x32xf32>
    tpu.vector_store %arg38[%c0_112, %c0_113, %c224], %304 {strides = array<i32>} : memref<2x8x256xf32, #tpu.memory_space<vmem>>, vector<2x8x32xf32>,
    %c0_114 = arith.constant 0 : index
    %c0_115 = arith.constant 0 : index
    %c0_116 = arith.constant 0 : index
    %306 = vector.load %arg38[%c0_114, %c0_115, %c0_116] : memref<2x8x256xf32, #tpu.memory_space<vmem>>, vector<2x8x256xf32>
    %307 = vector.shape_cast %306 : vector<2x8x256xf32> to vector<16x256xf32>
    %c0_117 = arith.constant 0 : index
    %c0_118 = arith.constant 0 : index
    %308 = vector.load %arg20[%c0_117, %c0_118] : memref<256x256xbf16, #tpu.memory_space<vmem>>, vector<256x256xbf16>
    %309 = arith.truncf %307 : vector<16x256xf32> to vector<16x256xbf16>
    %cst_119 = arith.constant dense<0.000000e+00> : vector<16x256xf32>
    %310 = tpu.matmul %309, %308, %cst_119 {dimension_numbers = #tpu.dot_dimension_numbers<[1], [0], [0], [1], [0, 0, 1, 1], [], []>} : vector<16x256xbf16>, vector<256x256xbf16>, vector<16x256xf32> -> vector<16x256xf32>
    %c0_120 = arith.constant 0 : index
    %c0_121 = arith.constant 0 : index
    %311 = vector.load %arg21[%c0_120, %c0_121] : memref<1x256xf32, #tpu.memory_space<vmem>>, vector<1x256xf32>
    %312 = vector.broadcast %311 : vector<1x256xf32> to vector<16x256xf32>
    %313 = arith.addf %310, %312 : vector<16x256xf32>
    %314 = vector.shape_cast %313 : vector<16x256xf32> to vector<2x8x256xf32>
    %315 = arith.addf %107, %314 : vector<2x8x256xf32>
    %c0_122 = arith.constant 0 : index
    %c0_123 = arith.constant 0 : index
    %316 = vector.load %arg22[%c0_122, %c0_123] : memref<1x256xf32, #tpu.memory_space<vmem>>, vector<1x256xf32>
    %c0_124 = arith.constant 0 : index
    %c0_125 = arith.constant 0 : index
    %317 = vector.load %arg23[%c0_124, %c0_125] : memref<1x256xf32, #tpu.memory_space<vmem>>, vector<1x256xf32>
    %cst_126 = arith.constant dense<0.000000e+00> : vector<2x8xf32>
    %318 = vector.multi_reduction <add>, %315, %cst_126 [2] : vector<2x8x256xf32> to vector<2x8xf32>
    %319 = vector.shape_cast %318 : vector<2x8xf32> to vector<2x8x1xf32>
    %cst_127 = arith.constant 2.560000e+02 : f32
    %320 = vector.broadcast %cst_127 : f32 to vector<2x8x1xf32>
    %321 = arith.divf %319, %320 : vector<2x8x1xf32>
    %322 = vector.broadcast %321 : vector<2x8x1xf32> to vector<2x8x256xf32>
    %323 = arith.subf %315, %322 : vector<2x8x256xf32>
    %324 = arith.mulf %323, %323 : vector<2x8x256xf32>
    %cst_128 = arith.constant dense<0.000000e+00> : vector<2x8xf32>
    %325 = vector.multi_reduction <add>, %324, %cst_128 [2] : vector<2x8x256xf32> to vector<2x8xf32>
    %326 = vector.shape_cast %325 : vector<2x8xf32> to vector<2x8x1xf32>
    %cst_129 = arith.constant 2.560000e+02 : f32
    %327 = vector.broadcast %cst_129 : f32 to vector<2x8x1xf32>
    %328 = arith.divf %326, %327 : vector<2x8x1xf32>
    %cst_130 = arith.constant 9.99999974E-6 : f32
    %329 = vector.broadcast %cst_130 : f32 to vector<2x8x1xf32>
    %330 = arith.addf %328, %329 : vector<2x8x1xf32>
    %331 = math.rsqrt %330 : vector<2x8x1xf32>
    %332 = vector.broadcast %331 : vector<2x8x1xf32> to vector<2x8x256xf32>
    %333 = arith.mulf %323, %332 : vector<2x8x256xf32>
    %334 = vector.shape_cast %316 : vector<1x256xf32> to vector<1x1x256xf32>
    %335 = vector.broadcast %334 : vector<1x1x256xf32> to vector<2x8x256xf32>
    %336 = arith.mulf %333, %335 : vector<2x8x256xf32>
    %337 = vector.shape_cast %317 : vector<1x256xf32> to vector<1x1x256xf32>
    %338 = vector.broadcast %337 : vector<1x1x256xf32> to vector<2x8x256xf32>
    %339 = arith.addf %336, %338 : vector<2x8x256xf32>
    %c1 = arith.constant 1 : index
    %340 = memref.load %arg1[%c1] : memref<2xf32, #tpu.memory_space<smem>>
    %c0_131 = arith.constant 0 : index
    %c0_132 = arith.constant 0 : index
    %341 = vector.load %arg24[%c0_131, %c0_132] : memref<1024x512xbf16, #tpu.memory_space<vmem>>, vector<1024x512xbf16>
    %cst_133 = arith.constant dense<0.000000e+00> : vector<16x512xf32>
    %342 = tpu.matmul %0, %341, %cst_133 {dimension_numbers = #tpu.dot_dimension_numbers<[1], [0], [0], [1], [0, 0, 1, 1], [], []>} : vector<16x1024xbf16>, vector<1024x512xbf16>, vector<16x512xf32> -> vector<16x512xf32>
    %c0_134 = arith.constant 0 : index
    %c0_135 = arith.constant 0 : index
    %343 = vector.load %arg25[%c0_134, %c0_135] : memref<1x512xf32, #tpu.memory_space<vmem>>, vector<1x512xf32>
    %344 = vector.broadcast %343 : vector<1x512xf32> to vector<16x512xf32>
    %345 = arith.addf %342, %344 : vector<16x512xf32>
    %346 = vector.extract_strided_slice %345 {offsets = [0, 0], sizes = [16, 256], strides = [1, 1]} : vector<16x512xf32> to vector<16x256xf32>
    %347 = vector.shape_cast %346 : vector<16x256xf32> to vector<2x8x256xf32>
    %348 = vector.extract_strided_slice %345 {offsets = [0, 256], sizes = [16, 256], strides = [1, 1]} : vector<16x512xf32> to vector<16x256xf32>
    %349 = vector.shape_cast %348 : vector<16x256xf32> to vector<2x8x256xf32>
    %350 = vector.shape_cast %1 : vector<8x256xf32> to vector<1x8x256xf32>
    %351 = vector.broadcast %350 : vector<1x8x256xf32> to vector<2x8x256xf32>
    %352 = arith.addf %339, %351 : vector<2x8x256xf32>
    %353 = vector.shape_cast %352 : vector<2x8x256xf32> to vector<16x256xf32>
    %c0_136 = arith.constant 0 : index
    %c0_137 = arith.constant 0 : index
    %354 = vector.load %arg26[%c0_136, %c0_137] : memref<256x256xbf16, #tpu.memory_space<vmem>>, vector<256x256xbf16>
    %355 = arith.truncf %353 : vector<16x256xf32> to vector<16x256xbf16>
    %cst_138 = arith.constant dense<0.000000e+00> : vector<16x256xf32>
    %356 = tpu.matmul %355, %354, %cst_138 {dimension_numbers = #tpu.dot_dimension_numbers<[1], [0], [0], [1], [0, 0, 1, 1], [], []>} : vector<16x256xbf16>, vector<256x256xbf16>, vector<16x256xf32> -> vector<16x256xf32>
    %c0_139 = arith.constant 0 : index
    %c0_140 = arith.constant 0 : index
    %357 = vector.load %arg27[%c0_139, %c0_140] : memref<1x256xf32, #tpu.memory_space<vmem>>, vector<1x256xf32>
    %358 = vector.broadcast %357 : vector<1x256xf32> to vector<16x256xf32>
    %359 = arith.addf %356, %358 : vector<16x256xf32>
    %360 = vector.shape_cast %359 : vector<16x256xf32> to vector<2x8x256xf32>
    %361 = arith.truncf %360 : vector<2x8x256xf32> to vector<2x8x256xbf16>
    %362 = arith.truncf %347 : vector<2x8x256xf32> to vector<2x8x256xbf16>
    "tpu.trace_start"() <{level = 10 : i32, message = "bnd,btd->bnt"}> : () -> ()
    %cst_141 = arith.constant dense<0.000000e+00> : vector<2x8x8xf32>
    %363 = tpu.matmul %361, %362, %cst_141 {dimension_numbers = #tpu.dot_dimension_numbers<[2], [2], [1], [1], [0, 0, 0, 1, 1, 1], [0], [0]>} : vector<2x8x256xbf16>, vector<2x8x256xbf16>, vector<2x8x8xf32> -> vector<2x8x8xf32>
    "tpu.trace_stop"() : () -> ()
    %364 = vector.broadcast %340 : f32 to vector<2x8x8xf32>
    %365 = arith.mulf %363, %364 : vector<2x8x8xf32>
    %cst_142 = arith.constant dense<0xFF800000> : vector<2x8xf32>
    %366 = vector.multi_reduction <maximumf>, %365, %cst_142 [2] : vector<2x8x8xf32> to vector<2x8xf32>
    %367 = vector.shape_cast %366 : vector<2x8xf32> to vector<2x8x1xf32>
    %368 = vector.broadcast %367 : vector<2x8x1xf32> to vector<2x8x8xf32>
    %369 = arith.subf %365, %368 : vector<2x8x8xf32>
    %370 = math.exp %369 : vector<2x8x8xf32>
    %cst_143 = arith.constant dense<0.000000e+00> : vector<2x8xf32>
    %371 = vector.multi_reduction <add>, %370, %cst_143 [2] : vector<2x8x8xf32> to vector<2x8xf32>
    %372 = vector.shape_cast %371 : vector<2x8xf32> to vector<2x8x1xf32>
    %373 = tpu.reciprocal %372 {approx = true} : vector<2x8x1xf32> -> vector<2x8x1xf32>
    %374 = vector.broadcast %373 : vector<2x8x1xf32> to vector<2x8x8xf32>
    %375 = arith.mulf %370, %374 : vector<2x8x8xf32>
    %376 = arith.truncf %375 : vector<2x8x8xf32> to vector<2x8x8xbf16>
    %377 = arith.truncf %349 : vector<2x8x256xf32> to vector<2x8x256xbf16>
    "tpu.trace_start"() <{level = 10 : i32, message = "bnt,btd->bnd"}> : () -> ()
    %cst_144 = arith.constant dense<0.000000e+00> : vector<2x8x256xf32>
    %378 = tpu.matmul %376, %377, %cst_144 {dimension_numbers = #tpu.dot_dimension_numbers<[2], [1], [1], [2], [0, 0, 0, 1, 1, 2], [0], [0]>} : vector<2x8x8xbf16>, vector<2x8x256xbf16>, vector<2x8x256xf32> -> vector<2x8x256xf32>
    "tpu.trace_stop"() : () -> ()
    %379 = arith.addf %339, %378 : vector<2x8x256xf32>
    %c0_145 = arith.constant 0 : index
    %c0_146 = arith.constant 0 : index
    %380 = vector.load %arg28[%c0_145, %c0_146] : memref<1x256xf32, #tpu.memory_space<vmem>>, vector<1x256xf32>
    %c0_147 = arith.constant 0 : index
    %c0_148 = arith.constant 0 : index
    %381 = vector.load %arg29[%c0_147, %c0_148] : memref<1x256xf32, #tpu.memory_space<vmem>>, vector<1x256xf32>
    %cst_149 = arith.constant dense<0.000000e+00> : vector<2x8xf32>
    %382 = vector.multi_reduction <add>, %379, %cst_149 [2] : vector<2x8x256xf32> to vector<2x8xf32>
    %383 = vector.shape_cast %382 : vector<2x8xf32> to vector<2x8x1xf32>
    %cst_150 = arith.constant 2.560000e+02 : f32
    %384 = vector.broadcast %cst_150 : f32 to vector<2x8x1xf32>
    %385 = arith.divf %383, %384 : vector<2x8x1xf32>
    %386 = vector.broadcast %385 : vector<2x8x1xf32> to vector<2x8x256xf32>
    %387 = arith.subf %379, %386 : vector<2x8x256xf32>
    %388 = arith.mulf %387, %387 : vector<2x8x256xf32>
    %cst_151 = arith.constant dense<0.000000e+00> : vector<2x8xf32>
    %389 = vector.multi_reduction <add>, %388, %cst_151 [2] : vector<2x8x256xf32> to vector<2x8xf32>
    %390 = vector.shape_cast %389 : vector<2x8xf32> to vector<2x8x1xf32>
    %cst_152 = arith.constant 2.560000e+02 : f32
    %391 = vector.broadcast %cst_152 : f32 to vector<2x8x1xf32>
    %392 = arith.divf %390, %391 : vector<2x8x1xf32>
    %cst_153 = arith.constant 9.99999974E-6 : f32
    %393 = vector.broadcast %cst_153 : f32 to vector<2x8x1xf32>
    %394 = arith.addf %392, %393 : vector<2x8x1xf32>
    %395 = math.rsqrt %394 : vector<2x8x1xf32>
    %396 = vector.broadcast %395 : vector<2x8x1xf32> to vector<2x8x256xf32>
    %397 = arith.mulf %387, %396 : vector<2x8x256xf32>
    %398 = vector.shape_cast %380 : vector<1x256xf32> to vector<1x1x256xf32>
    %399 = vector.broadcast %398 : vector<1x1x256xf32> to vector<2x8x256xf32>
    %400 = arith.mulf %397, %399 : vector<2x8x256xf32>
    %401 = vector.shape_cast %381 : vector<1x256xf32> to vector<1x1x256xf32>
    %402 = vector.broadcast %401 : vector<1x1x256xf32> to vector<2x8x256xf32>
    %403 = arith.addf %400, %402 : vector<2x8x256xf32>
    %404 = vector.shape_cast %403 : vector<2x8x256xf32> to vector<16x256xf32>
    %c0_154 = arith.constant 0 : index
    %c0_155 = arith.constant 0 : index
    %405 = vector.load %arg30[%c0_154, %c0_155] : memref<256x512xbf16, #tpu.memory_space<vmem>>, vector<256x512xbf16>
    %406 = arith.truncf %404 : vector<16x256xf32> to vector<16x256xbf16>
    %cst_156 = arith.constant dense<0.000000e+00> : vector<16x512xf32>
    %407 = tpu.matmul %406, %405, %cst_156 {dimension_numbers = #tpu.dot_dimension_numbers<[1], [0], [0], [1], [0, 0, 1, 1], [], []>} : vector<16x256xbf16>, vector<256x512xbf16>, vector<16x512xf32> -> vector<16x512xf32>
    %c0_157 = arith.constant 0 : index
    %c0_158 = arith.constant 0 : index
    %408 = vector.load %arg31[%c0_157, %c0_158] : memref<1x512xf32, #tpu.memory_space<vmem>>, vector<1x512xf32>
    %409 = vector.broadcast %408 : vector<1x512xf32> to vector<16x512xf32>
    %410 = arith.addf %407, %409 : vector<16x512xf32>
    %cst_159 = arith.constant 0.000000e+00 : f32
    %411 = vector.broadcast %cst_159 : f32 to vector<16x512xf32>
    %412 = arith.maximumf %410, %411 : vector<16x512xf32>
    %c0_160 = arith.constant 0 : index
    %c0_161 = arith.constant 0 : index
    %413 = vector.load %arg32[%c0_160, %c0_161] : memref<512x256xbf16, #tpu.memory_space<vmem>>, vector<512x256xbf16>
    %414 = arith.truncf %412 : vector<16x512xf32> to vector<16x512xbf16>
    %cst_162 = arith.constant dense<0.000000e+00> : vector<16x256xf32>
    %415 = tpu.matmul %414, %413, %cst_162 {dimension_numbers = #tpu.dot_dimension_numbers<[1], [0], [0], [1], [0, 0, 1, 1], [], []>} : vector<16x512xbf16>, vector<512x256xbf16>, vector<16x256xf32> -> vector<16x256xf32>
    %c0_163 = arith.constant 0 : index
    %c0_164 = arith.constant 0 : index
    %416 = vector.load %arg33[%c0_163, %c0_164] : memref<1x256xf32, #tpu.memory_space<vmem>>, vector<1x256xf32>
    %417 = vector.broadcast %416 : vector<1x256xf32> to vector<16x256xf32>
    %418 = arith.addf %415, %417 : vector<16x256xf32>
    %419 = vector.shape_cast %418 : vector<16x256xf32> to vector<2x8x256xf32>
    %420 = arith.addf %403, %419 : vector<2x8x256xf32>
    %c0_165 = arith.constant 0 : index
    %c0_166 = arith.constant 0 : index
    %421 = vector.load %arg34[%c0_165, %c0_166] : memref<1x256xf32, #tpu.memory_space<vmem>>, vector<1x256xf32>
    %c0_167 = arith.constant 0 : index
    %c0_168 = arith.constant 0 : index
    %422 = vector.load %arg35[%c0_167, %c0_168] : memref<1x256xf32, #tpu.memory_space<vmem>>, vector<1x256xf32>
    %cst_169 = arith.constant dense<0.000000e+00> : vector<2x8xf32>
    %423 = vector.multi_reduction <add>, %420, %cst_169 [2] : vector<2x8x256xf32> to vector<2x8xf32>
    %424 = vector.shape_cast %423 : vector<2x8xf32> to vector<2x8x1xf32>
    %cst_170 = arith.constant 2.560000e+02 : f32
    %425 = vector.broadcast %cst_170 : f32 to vector<2x8x1xf32>
    %426 = arith.divf %424, %425 : vector<2x8x1xf32>
    %427 = vector.broadcast %426 : vector<2x8x1xf32> to vector<2x8x256xf32>
    %428 = arith.subf %420, %427 : vector<2x8x256xf32>
    %429 = arith.mulf %428, %428 : vector<2x8x256xf32>
    %cst_171 = arith.constant dense<0.000000e+00> : vector<2x8xf32>
    %430 = vector.multi_reduction <add>, %429, %cst_171 [2] : vector<2x8x256xf32> to vector<2x8xf32>
    %431 = vector.shape_cast %430 : vector<2x8xf32> to vector<2x8x1xf32>
    %cst_172 = arith.constant 2.560000e+02 : f32
    %432 = vector.broadcast %cst_172 : f32 to vector<2x8x1xf32>
    %433 = arith.divf %431, %432 : vector<2x8x1xf32>
    %cst_173 = arith.constant 9.99999974E-6 : f32
    %434 = vector.broadcast %cst_173 : f32 to vector<2x8x1xf32>
    %435 = arith.addf %433, %434 : vector<2x8x1xf32>
    %436 = math.rsqrt %435 : vector<2x8x1xf32>
    %437 = vector.broadcast %436 : vector<2x8x1xf32> to vector<2x8x256xf32>
    %438 = arith.mulf %428, %437 : vector<2x8x256xf32>
    %439 = vector.shape_cast %421 : vector<1x256xf32> to vector<1x1x256xf32>
    %440 = vector.broadcast %439 : vector<1x1x256xf32> to vector<2x8x256xf32>
    %441 = arith.mulf %438, %440 : vector<2x8x256xf32>
    %442 = vector.shape_cast %422 : vector<1x256xf32> to vector<1x1x256xf32>
    %443 = vector.broadcast %442 : vector<1x1x256xf32> to vector<2x8x256xf32>
    %444 = arith.addf %441, %443 : vector<2x8x256xf32>
    %c0_174 = arith.constant 0 : index
    %c0_175 = arith.constant 0 : index
    %c0_176 = arith.constant 0 : index
    %445 = vector.load %arg36[%c0_174, %c0_175, %c0_176] : memref<2x8x256xf32, #tpu.memory_space<vmem>>, vector<2x8x256xf32>
    tpu.vector_store %arg36[%c0_174, %c0_175, %c0_176], %444 {strides = array<i32>} : memref<2x8x256xf32, #tpu.memory_space<vmem>>, vector<2x8x256xf32>,
    %c0_177 = arith.constant 0 : index
    %c0_178 = arith.constant 0 : index
    %c0_179 = arith.constant 0 : index
    %c0_180 = arith.constant 0 : index
    %446 = vector.load %arg37[%c0_177, %c0_178, %c0_179, %c0_180] : memref<2x2x8x8xf32, #tpu.memory_space<vmem>>, vector<2x1x8x8xf32>
    %447 = vector.shape_cast %446 : vector<2x1x8x8xf32> to vector<2x8x8xf32>
    %448 = vector.shape_cast %38 : vector<2x8x8xf32> to vector<2x1x8x8xf32>
    tpu.vector_store %arg37[%c0_177, %c0_178, %c0_179, %c0_180], %448 {strides = array<i32>} : memref<2x2x8x8xf32, #tpu.memory_space<vmem>>, vector<2x1x8x8xf32>,
    %c0_181 = arith.constant 0 : index
    %c1_182 = arith.constant 1 : index
    %c0_183 = arith.constant 0 : index
    %c0_184 = arith.constant 0 : index
    %449 = vector.load %arg37[%c0_181, %c1_182, %c0_183, %c0_184] : memref<2x2x8x8xf32, #tpu.memory_space<vmem>>, vector<2x1x8x8xf32>
    %450 = vector.shape_cast %449 : vector<2x1x8x8xf32> to vector<2x8x8xf32>
    %451 = vector.shape_cast %375 : vector<2x8x8xf32> to vector<2x1x8x8xf32>
    tpu.vector_store %arg37[%c0_181, %c1_182, %c0_183, %c0_184], %451 {strides = array<i32>} : memref<2x2x8x8xf32, #tpu.memory_space<vmem>>, vector<2x1x8x8xf32>,
    return
  }
  func.func @transform_0(%arg0: i32) -> i32 {
    %c0_i32 = arith.constant 0 : i32
    %c0_i32_0 = arith.constant 0 : i32
    return %c0_i32 : i32
  }
  func.func @transform_1(%arg0: i32) -> (i32, i32) {
    %c0_i32 = arith.constant 0 : i32
    %c0_i32_0 = arith.constant 0 : i32
    return %arg0, %c0_i32 : i32, i32
  }
  func.func @transform_2(%arg0: i32) -> (i32, i32) {
    %c0_i32 = arith.constant 0 : i32
    %c0_i32_0 = arith.constant 0 : i32
    %c0_i32_1 = arith.constant 0 : i32
    return %c0_i32, %c0_i32_0 : i32, i32
  }
  func.func @transform_3(%arg0: i32) -> (i32, i32) {
    %c0_i32 = arith.constant 0 : i32
    %c0_i32_0 = arith.constant 0 : i32
    %c0_i32_1 = arith.constant 0 : i32
    return %c0_i32, %c0_i32_0 : i32, i32
  }
  func.func @transform_4(%arg0: i32) -> (i32, i32) {
    %c0_i32 = arith.constant 0 : i32
    %c0_i32_0 = arith.constant 0 : i32
    %c0_i32_1 = arith.constant 0 : i32
    return %c0_i32, %c0_i32_0 : i32, i32
  }
  func.func @transform_5(%arg0: i32) -> (i32, i32) {
    %c0_i32 = arith.constant 0 : i32
    %c0_i32_0 = arith.constant 0 : i32
    %c0_i32_1 = arith.constant 0 : i32
    return %c0_i32, %c0_i32_0 : i32, i32
  }
  func.func @transform_6(%arg0: i32) -> (i32, i32) {
    %c0_i32 = arith.constant 0 : i32
    %c0_i32_0 = arith.constant 0 : i32
    %c0_i32_1 = arith.constant 0 : i32
    return %c0_i32, %c0_i32_0 : i32, i32
  }
  func.func @transform_7(%arg0: i32) -> (i32, i32) {
    %c0_i32 = arith.constant 0 : i32
    %c0_i32_0 = arith.constant 0 : i32
    %c0_i32_1 = arith.constant 0 : i32
    return %c0_i32, %c0_i32_0 : i32, i32
  }
  func.func @transform_8(%arg0: i32) -> (i32, i32) {
    %c0_i32 = arith.constant 0 : i32
    %c0_i32_0 = arith.constant 0 : i32
    %c0_i32_1 = arith.constant 0 : i32
    return %c0_i32, %c0_i32_0 : i32, i32
  }
  func.func @transform_9(%arg0: i32) -> (i32, i32) {
    %c0_i32 = arith.constant 0 : i32
    %c0_i32_0 = arith.constant 0 : i32
    %c0_i32_1 = arith.constant 0 : i32
    return %c0_i32, %c0_i32_0 : i32, i32
  }
  func.func @transform_10(%arg0: i32) -> (i32, i32) {
    %c0_i32 = arith.constant 0 : i32
    %c0_i32_0 = arith.constant 0 : i32
    %c0_i32_1 = arith.constant 0 : i32
    return %c0_i32, %c0_i32_0 : i32, i32
  }
  func.func @transform_11(%arg0: i32) -> (i32, i32) {
    %c0_i32 = arith.constant 0 : i32
    %c0_i32_0 = arith.constant 0 : i32
    %c0_i32_1 = arith.constant 0 : i32
    return %c0_i32, %c0_i32_0 : i32, i32
  }
  func.func @transform_12(%arg0: i32) -> (i32, i32) {
    %c0_i32 = arith.constant 0 : i32
    %c0_i32_0 = arith.constant 0 : i32
    %c0_i32_1 = arith.constant 0 : i32
    return %c0_i32, %c0_i32_0 : i32, i32
  }
  func.func @transform_13(%arg0: i32) -> (i32, i32) {
    %c0_i32 = arith.constant 0 : i32
    %c0_i32_0 = arith.constant 0 : i32
    %c0_i32_1 = arith.constant 0 : i32
    return %c0_i32, %c0_i32_0 : i32, i32
  }
  func.func @transform_14(%arg0: i32) -> (i32, i32) {
    %c0_i32 = arith.constant 0 : i32
    %c0_i32_0 = arith.constant 0 : i32
    %c0_i32_1 = arith.constant 0 : i32
    return %c0_i32, %c0_i32_0 : i32, i32
  }
  func.func @transform_15(%arg0: i32) -> (i32, i32) {
    %c0_i32 = arith.constant 0 : i32
    %c0_i32_0 = arith.constant 0 : i32
    %c0_i32_1 = arith.constant 0 : i32
    return %c0_i32, %c0_i32_0 : i32, i32
  }
  func.func @transform_16(%arg0: i32) -> (i32, i32) {
    %c0_i32 = arith.constant 0 : i32
    %c0_i32_0 = arith.constant 0 : i32
    %c0_i32_1 = arith.constant 0 : i32
    return %c0_i32, %c0_i32_0 : i32, i32
  }
  func.func @transform_17(%arg0: i32) -> (i32, i32) {
    %c0_i32 = arith.constant 0 : i32
    %c0_i32_0 = arith.constant 0 : i32
    %c0_i32_1 = arith.constant 0 : i32
    return %c0_i32, %c0_i32_0 : i32, i32
  }
  func.func @transform_18(%arg0: i32) -> (i32, i32) {
    %c0_i32 = arith.constant 0 : i32
    %c0_i32_0 = arith.constant 0 : i32
    %c0_i32_1 = arith.constant 0 : i32
    return %c0_i32, %c0_i32_0 : i32, i32
  }
  func.func @transform_19(%arg0: i32) -> (i32, i32) {
    %c0_i32 = arith.constant 0 : i32
    %c0_i32_0 = arith.constant 0 : i32
    %c0_i32_1 = arith.constant 0 : i32
    return %c0_i32, %c0_i32_0 : i32, i32
  }
  func.func @transform_20(%arg0: i32) -> (i32, i32) {
    %c0_i32 = arith.constant 0 : i32
    %c0_i32_0 = arith.constant 0 : i32
    %c0_i32_1 = arith.constant 0 : i32
    return %c0_i32, %c0_i32_0 : i32, i32
  }
  func.func @transform_21(%arg0: i32) -> (i32, i32) {
    %c0_i32 = arith.constant 0 : i32
    %c0_i32_0 = arith.constant 0 : i32
    %c0_i32_1 = arith.constant 0 : i32
    return %c0_i32, %c0_i32_0 : i32, i32
  }
  func.func @transform_22(%arg0: i32) -> (i32, i32) {
    %c0_i32 = arith.constant 0 : i32
    %c0_i32_0 = arith.constant 0 : i32
    %c0_i32_1 = arith.constant 0 : i32
    return %c0_i32, %c0_i32_0 : i32, i32
  }
  func.func @transform_23(%arg0: i32) -> (i32, i32) {
    %c0_i32 = arith.constant 0 : i32
    %c0_i32_0 = arith.constant 0 : i32
    %c0_i32_1 = arith.constant 0 : i32
    return %c0_i32, %c0_i32_0 : i32, i32
  }
  func.func @transform_24(%arg0: i32) -> (i32, i32) {
    %c0_i32 = arith.constant 0 : i32
    %c0_i32_0 = arith.constant 0 : i32
    %c0_i32_1 = arith.constant 0 : i32
    return %c0_i32, %c0_i32_0 : i32, i32
  }
  func.func @transform_25(%arg0: i32) -> (i32, i32) {
    %c0_i32 = arith.constant 0 : i32
    %c0_i32_0 = arith.constant 0 : i32
    %c0_i32_1 = arith.constant 0 : i32
    return %c0_i32, %c0_i32_0 : i32, i32
  }
  func.func @transform_26(%arg0: i32) -> (i32, i32) {
    %c0_i32 = arith.constant 0 : i32
    %c0_i32_0 = arith.constant 0 : i32
    %c0_i32_1 = arith.constant 0 : i32
    return %c0_i32, %c0_i32_0 : i32, i32
  }
  func.func @transform_27(%arg0: i32) -> (i32, i32) {
    %c0_i32 = arith.constant 0 : i32
    %c0_i32_0 = arith.constant 0 : i32
    %c0_i32_1 = arith.constant 0 : i32
    return %c0_i32, %c0_i32_0 : i32, i32
  }
  func.func @transform_28(%arg0: i32) -> (i32, i32) {
    %c0_i32 = arith.constant 0 : i32
    %c0_i32_0 = arith.constant 0 : i32
    %c0_i32_1 = arith.constant 0 : i32
    return %c0_i32, %c0_i32_0 : i32, i32
  }
  func.func @transform_29(%arg0: i32) -> (i32, i32) {
    %c0_i32 = arith.constant 0 : i32
    %c0_i32_0 = arith.constant 0 : i32
    %c0_i32_1 = arith.constant 0 : i32
    return %c0_i32, %c0_i32_0 : i32, i32
  }
  func.func @transform_30(%arg0: i32) -> (i32, i32) {
    %c0_i32 = arith.constant 0 : i32
    %c0_i32_0 = arith.constant 0 : i32
    %c0_i32_1 = arith.constant 0 : i32
    return %c0_i32, %c0_i32_0 : i32, i32
  }
  func.func @transform_31(%arg0: i32) -> (i32, i32) {
    %c0_i32 = arith.constant 0 : i32
    %c0_i32_0 = arith.constant 0 : i32
    %c0_i32_1 = arith.constant 0 : i32
    return %c0_i32, %c0_i32_0 : i32, i32
  }
  func.func @transform_32(%arg0: i32) -> (i32, i32) {
    %c0_i32 = arith.constant 0 : i32
    %c0_i32_0 = arith.constant 0 : i32
    %c0_i32_1 = arith.constant 0 : i32
    return %c0_i32, %c0_i32_0 : i32, i32
  }
  func.func @transform_33(%arg0: i32) -> (i32, i32) {
    %c0_i32 = arith.constant 0 : i32
    %c0_i32_0 = arith.constant 0 : i32
    %c0_i32_1 = arith.constant 0 : i32
    return %c0_i32, %c0_i32_0 : i32, i32
  }
  func.func @transform_34(%arg0: i32) -> (i32, i32) {
    %c0_i32 = arith.constant 0 : i32
    %c0_i32_0 = arith.constant 0 : i32
    %c0_i32_1 = arith.constant 0 : i32
    return %c0_i32, %c0_i32_0 : i32, i32
  }
  func.func @transform_35(%arg0: i32) -> (i32, i32, i32) {
    %c0_i32 = arith.constant 0 : i32
    %c0_i32_0 = arith.constant 0 : i32
    %c0_i32_1 = arith.constant 0 : i32
    return %arg0, %c0_i32, %c0_i32_0 : i32, i32, i32
  }
  func.func @transform_36(%arg0: i32) -> (i32, i32, i32, i32) {
    %c0_i32 = arith.constant 0 : i32
    %c0_i32_0 = arith.constant 0 : i32
    %c0_i32_1 = arith.constant 0 : i32
    %c0_i32_2 = arith.constant 0 : i32
    return %arg0, %c0_i32, %c0_i32_0, %c0_i32_1 : i32, i32, i32, i32
  }
}

</mosaic_0001>

<llo_original>
// kernel: action_decoder_forward.1
$region0: #{action_decoder_forward.1}
  #allocation0 [shape = 'u32[]', space=smem, size = 0x4, offset = 0x4, fixed_abs, tag = 'smem constant byte address 0x4 - core index']
  #allocation1 [shape = 'u32[144,128]{1,0:T(1,128)}', space=vmem, size = 0x12000, scoped, tag = 'internal scratch']
  #allocation2 [shape = 'f32[2,8,256]{2,1,0:T(8,128)}', space=vmem, size = 0x4000, scoped, tag = 'scratch operand']
  %s0 = inlined_call_operand.smem [shape: u32[37], index: -1, kind: input, shape index: {}]
  %s1 = sld [smem:[%s0]]
  %s2 = scalar_lea.smem %s0, 1
  %s3 = sld [smem:[%s2]]
  %s4 = scalar_lea.smem %s0, 2
  %s5 = sld [smem:[%s4]]
  %s6 = scalar_lea.smem %s0, 3
  %s7 = sld [smem:[%s6]]
  %s8 = scalar_lea.smem %s0, 4
  %s9 = sld [smem:[%s8]]
  %s10 = scalar_lea.smem %s0, 5
  %s11 = sld [smem:[%s10]]
  %s12 = scalar_lea.smem %s0, 6
  %s13 = sld [smem:[%s12]]
  %s14 = scalar_lea.smem %s0, 7
  %s15 = sld [smem:[%s14]]
  %s16 = scalar_lea.smem %s0, 8
  %s17 = sld [smem:[%s16]]
  %s18 = scalar_lea.smem %s0, 9
  %s19 = sld [smem:[%s18]]
  %s20 = scalar_lea.smem %s0, 10
  %s21 = sld [smem:[%s20]]
  %s22 = scalar_lea.smem %s0, 11
  %s23 = sld [smem:[%s22]]
  %s24 = scalar_lea.smem %s0, 12
  %s25 = sld [smem:[%s24]]
  %s26 = scalar_lea.smem %s0, 13
  %s27 = sld [smem:[%s26]]
  %s28 = scalar_lea.smem %s0, 14
  %s29 = sld [smem:[%s28]]
  %s30 = scalar_lea.smem %s0, 15
  %s31 = sld [smem:[%s30]]
  %s32 = scalar_lea.smem %s0, 16
  %s33 = sld [smem:[%s32]]
  %s34 = scalar_lea.smem %s0, 17
  %s35 = sld [smem:[%s34]]
  %s36 = scalar_lea.smem %s0, 18
  %s37 = sld [smem:[%s36]]
  %s38 = scalar_lea.smem %s0, 19
  %s39 = sld [smem:[%s38]]
  %s40 = scalar_lea.smem %s0, 20
  %s41 = sld [smem:[%s40]]
  %s42 = scalar_lea.smem %s0, 21
  %s43 = sld [smem:[%s42]]
  %s44 = scalar_lea.smem %s0, 22
  %s45 = sld [smem:[%s44]]
  %s46 = scalar_lea.smem %s0, 23
  %s47 = sld [smem:[%s46]]
  %s48 = scalar_lea.smem %s0, 24
  %s49 = sld [smem:[%s48]]
  %s50 = scalar_lea.smem %s0, 25
  %s51 = sld [smem:[%s50]]
  %s52 = scalar_lea.smem %s0, 26
  %s53 = sld [smem:[%s52]]
  %s54 = scalar_lea.smem %s0, 27
  %s55 = sld [smem:[%s54]]
  %s56 = scalar_lea.smem %s0, 28
  %s57 = sld [smem:[%s56]]
  %s58 = scalar_lea.smem %s0, 29
  %s59 = sld [smem:[%s58]]
  %s60 = scalar_lea.smem %s0, 30
  %s61 = sld [smem:[%s60]]
  %s62 = scalar_lea.smem %s0, 31
  %s63 = sld [smem:[%s62]]
  %s64 = scalar_lea.smem %s0, 32
  %s65 = sld [smem:[%s64]]
  %s66 = scalar_lea.smem %s0, 33
  %s67 = sld [smem:[%s66]]
  %s68 = scalar_lea.smem %s0, 34
  %s69 = sld [smem:[%s68]]
  %s70 = scalar_lea.smem %s0, 35
  %s71 = sld [smem:[%s70]]
  %s72 = scalar_lea.smem %s0, 36
  %s73 = sld [smem:[%s72]]
  %74 = xla_tuple %s71, %s73
  %s75 = sld [smem:[#allocation0]]
  $region226: #{action_decoder_forward.1} parent=0
    _
  %s77 = ssub.s32 1, %s75
  %s78 = scalar_select 0, %s77, %s75
  $region1: #{action_decoder_forward.1} parent=0
    #allocation3 [shape = 'u8[512]{0}', space=smem, size = 0x200, scoped, tag = 'input window, operand 0, single buffered']
    #allocation4 [shape = 's32[1]{0}', space=sflag, size = 0x4, scoped, tag = 'scoped memory for action_decoder_forward.1']
    #allocation5 [shape = 's32[1]{0}', space=sflag, size = 0x4, scoped, tag = 'scoped memory for action_decoder_forward.1']
    #allocation6 [shape = 's32[1]{0}', space=sflag, size = 0x4, scoped, tag = 'scoped memory for action_decoder_forward.1']
    #allocation7 [shape = 'u8[1048576]{0}', space=vmem, size = 0x100000, scoped, tag = 'input window, operand 3, single buffered']
    #allocation8 [shape = 'u8[262144]{0}', space=vmem, size = 0x40000, scoped, tag = 'input window, operand 9, single buffered']
    #allocation9 [shape = 's32[1]{0}', space=sflag, size = 0x4, scoped, tag = 'scoped memory for action_decoder_forward.1']
    #allocation10 [shape = 'u8[262144]{0}', space=vmem, size = 0x40000, scoped, tag = 'input window, operand 11, single buffered']
    #allocation11 [shape = 'u8[1024]{0}', space=vmem, size = 0x400, scoped, tag = 'input window, operand 13, single buffered']
    #allocation12 [shape = 's32[1]{0}', space=sflag, size = 0x4, scoped, tag = 'scoped memory for action_decoder_forward.1']
    #allocation13 [shape = 'u8[1024]{0}', space=vmem, size = 0x400, scoped, tag = 'input window, operand 14, single buffered']
    #allocation14 [shape = 'u8[262144]{0}', space=vmem, size = 0x40000, scoped, tag = 'input window, operand 15, single buffered']
    #allocation15 [shape = 's32[1]{0}', space=sflag, size = 0x4, scoped, tag = 'scoped memory for action_decoder_forward.1']
    #allocation16 [shape = 'u8[131072]{0}', space=vmem, size = 0x20000, scoped, tag = 'input window, operand 17, single buffered']
    #allocation17 [shape = 'u8[1024]{0}', space=vmem, size = 0x400, scoped, tag = 'input window, operand 18, single buffered']
    #allocation18 [shape = 's32[1]{0}', space=sflag, size = 0x4, scoped, tag = 'scoped memory for action_decoder_forward.1']
    #allocation19 [shape = 'u8[131072]{0}', space=vmem, size = 0x20000, scoped, tag = 'input window, operand 19, single buffered']
    #allocation20 [shape = 'u8[1024]{0}', space=vmem, size = 0x400, scoped, tag = 'input window, operand 20, single buffered']
    #allocation21 [shape = 's32[1]{0}', space=sflag, size = 0x4, scoped, tag = 'scoped memory for action_decoder_forward.1']
    #allocation22 [shape = 'u8[1024]{0}', space=vmem, size = 0x400, scoped, tag = 'input window, operand 21, single buffered']
    #allocation23 [shape = 'u8[1024]{0}', space=vmem, size = 0x400, scoped, tag = 'input window, operand 22, single buffered']
    #allocation24 [shape = 's32[1]{0}', space=sflag, size = 0x4, scoped, tag = 'scoped memory for action_decoder_forward.1']
    #allocation25 [shape = 'u8[1048576]{0}', space=vmem, size = 0x100000, scoped, tag = 'input window, operand 23, single buffered']
    #allocation26 [shape = 'u8[131072]{0}', space=vmem, size = 0x20000, scoped, tag = 'input window, operand 25, single buffered']
    #allocation27 [shape = 's32[1]{0}', space=sflag, size = 0x4, scoped, tag = 'scoped memory for action_decoder_forward.1']
    #allocation28 [shape = 'u8[262144]{0}', space=vmem, size = 0x40000, scoped, tag = 'input window, operand 29, single buffered']
    #allocation29 [shape = 'u8[262144]{0}', space=vmem, size = 0x40000, scoped, tag = 'input window, operand 31, single buffered']
    #allocation30 [shape = 's32[1]{0}', space=sflag, size = 0x4, scoped, tag = 'scoped memory for action_decoder_forward.1']
    #allocation31 [shape = 'u8[16384]{0}', space=vmem, size = 0x4000, scoped, tag = 'output window, operand 0, single buffered']
    %79 = vsyncpa [#allocation6], 0
    %80 = vsyncpa [#allocation4], 0
    %81 = vsyncpa [#allocation9], 0
    %82 = vsyncpa [#allocation12], 0
    %83 = vsyncpa [#allocation15], 0
    %84 = vsyncpa [#allocation18], 0
    %85 = vsyncpa [#allocation21], 0
    %86 = vsyncpa [#allocation24], 0
    %87 = vsyncpa [#allocation27], 0
    %88 = vsyncpa [#allocation30], 0
    %89 = vsyncpa [#allocation5], 0
    // Predicated region
    $region2: #{action_decoder_forward.1} parent=1 // pred_check
      _
    $region3: #{action_decoder_forward.1} parent=1 // pred_check_branch
      %91 = sbr.rel (0) target = $region5
    $region4: #{action_decoder_forward.1} parent=1 // pred_region
      %s93 = ssub.s32 16, 16
      %94 = vsyncadd [#allocation6], %s93
      %s96 = sshll.u32 %s1, 4
      %s97 = int_to_ptr.vmem [resolvable:$true] %s96
      %99 = dma.vmem_to_smem %s97, 16, [#allocation3], [#allocation6]
    $region5: #{action_decoder_forward.1} parent=1 // pred_fallthru
      _
    // Predicated region
    $region6: #{action_decoder_forward.1} parent=1 // pred_check
      _
    $region7: #{action_decoder_forward.1} parent=1 // pred_check_branch
      %101 = sbr.rel (0) target = $region9
    $region8: #{action_decoder_forward.1} parent=1 // pred_region
      _
    $region9: #{action_decoder_forward.1} parent=1 // pred_fallthru
      _
    // Predicated region
    $region10: #{action_decoder_forward.1} parent=1 // pred_check
      _
    $region11: #{action_decoder_forward.1} parent=1 // pred_check_branch
      %103 = sbr.rel (0) target = $region13
    $region12: #{action_decoder_forward.1} parent=1 // pred_region
      _
    $region13: #{action_decoder_forward.1} parent=1 // pred_fallthru
      _
    // Predicated region
    $region14: #{action_decoder_forward.1} parent=1 // pred_check
      _
    $region15: #{action_decoder_forward.1} parent=1 // pred_check_branch
      %105 = sbr.rel (0) target = $region17
    $region16: #{action_decoder_forward.1} parent=1 // pred_region
      %s107 = ssub.s32 32768, 32768
      %108 = vsyncadd [#allocation4], %s107
      %s109 = sshll.u32 [#allocation7], 4
      %s110 = int_to_ptr.vmem [resolvable:$true] %s109
      %115 = dma.hbm_to_vmem [thread:$0]  %s7, 32768, %s110, [#allocation4], 256, 256, 16
    $region17: #{action_decoder_forward.1} parent=1 // pred_fallthru
      _
    // Predicated region
    $region18: #{action_decoder_forward.1} parent=1 // pred_check
      _
    $region19: #{action_decoder_forward.1} parent=1 // pred_check_branch
      %117 = sbr.rel (0) target = $region21
    $region20: #{action_decoder_forward.1} parent=1 // pred_region
      _
    $region21: #{action_decoder_forward.1} parent=1 // pred_fallthru
      _
    // Predicated region
    $region22: #{action_decoder_forward.1} parent=1 // pred_check
      _
    $region23: #{action_decoder_forward.1} parent=1 // pred_check_branch
      %119 = sbr.rel (0) target = $region25
    $region24: #{action_decoder_forward.1} parent=1 // pred_region
      _
    $region25: #{action_decoder_forward.1} parent=1 // pred_fallthru
      _
    // Predicated region
    $region26: #{action_decoder_forward.1} parent=1 // pred_check
      _
    $region27: #{action_decoder_forward.1} parent=1 // pred_check_branch
      %121 = sbr.rel (0) target = $region29
    $region28: #{action_decoder_forward.1} parent=1 // pred_region
      _
    $region29: #{action_decoder_forward.1} parent=1 // pred_fallthru
      _
    // Predicated region
    $region30: #{action_decoder_forward.1} parent=1 // pred_check
      _
    $region31: #{action_decoder_forward.1} parent=1 // pred_check_branch
      %123 = sbr.rel (0) target = $region33
    $region32: #{action_decoder_forward.1} parent=1 // pred_region
      _
    $region33: #{action_decoder_forward.1} parent=1 // pred_fallthru
      _
    // Predicated region
    $region34: #{action_decoder_forward.1} parent=1 // pred_check
      _
    $region35: #{action_decoder_forward.1} parent=1 // pred_check_branch
      %125 = sbr.rel (0) target = $region37
    $region36: #{action_decoder_forward.1} parent=1 // pred_region
      _
    $region37: #{action_decoder_forward.1} parent=1 // pred_fallthru
      _
    // Predicated region
    $region38: #{action_decoder_forward.1} parent=1 // pred_check
      _
    $region39: #{action_decoder_forward.1} parent=1 // pred_check_branch
      %127 = sbr.rel (0) target = $region41
    $region40: #{action_decoder_forward.1} parent=1 // pred_region
      %s129 = ssub.s32 8192, 8192
      %130 = vsyncadd [#allocation9], %s129
      %s131 = sshll.u32 [#allocation8], 4
      %s132 = int_to_ptr.vmem [resolvable:$true] %s131
      %137 = dma.hbm_to_vmem [thread:$0]  %s19, 8192, %s132, [#allocation9], 256, 256, 16
    $region41: #{action_decoder_forward.1} parent=1 // pred_fallthru
      _
    // Predicated region
    $region42: #{action_decoder_forward.1} parent=1 // pred_check
      _
    $region43: #{action_decoder_forward.1} parent=1 // pred_check_branch
      %139 = sbr.rel (0) target = $region45
    $region44: #{action_decoder_forward.1} parent=1 // pred_region
      _
    $region45: #{action_decoder_forward.1} parent=1 // pred_fallthru
      _
    // Predicated region
    $region46: #{action_decoder_forward.1} parent=1 // pred_check
      _
    $region47: #{action_decoder_forward.1} parent=1 // pred_check_branch
      %141 = sbr.rel (0) target = $region49
    $region48: #{action_decoder_forward.1} parent=1 // pred_region
      %s143 = ssub.s32 8192, 8192
      %144 = vsyncadd [#allocation9], %s143
      %s145 = sshll.u32 [#allocation10], 4
      %s146 = int_to_ptr.vmem [resolvable:$true] %s145
      %151 = dma.hbm_to_vmem [thread:$0]  %s23, 8192, %s146, [#allocation9], 128, 128, 8
    $region49: #{action_decoder_forward.1} parent=1 // pred_fallthru
      _
    // Predicated region
    $region50: #{action_decoder_forward.1} parent=1 // pred_check
      _
    $region51: #{action_decoder_forward.1} parent=1 // pred_check_branch
      %153 = sbr.rel (0) target = $region53
    $region52: #{action_decoder_forward.1} parent=1 // pred_region
      _
    $region53: #{action_decoder_forward.1} parent=1 // pred_fallthru
      _
    // Predicated region
    $region54: #{action_decoder_forward.1} parent=1 // pred_check
      _
    $region55: #{action_decoder_forward.1} parent=1 // pred_check_branch
      %155 = sbr.rel (0) target = $region57
    $region56: #{action_decoder_forward.1} parent=1 // pred_region
      %s157 = ssub.s32 32, 32
      %158 = vsyncadd [#allocation12], %s157
      %s160 = sshll.u32 [#allocation11], 4
      %s161 = int_to_ptr.vmem [resolvable:$true] %s160
      %163 = dma.hbm_to_vmem [thread:$0]  %s27, 32, %s161, [#allocation12]
    $region57: #{action_decoder_forward.1} parent=1 // pred_fallthru
      _
    // Predicated region
    $region58: #{action_decoder_forward.1} parent=1 // pred_check
      _
    $region59: #{action_decoder_forward.1} parent=1 // pred_check_branch
      %165 = sbr.rel (0) target = $region61
    $region60: #{action_decoder_forward.1} parent=1 // pred_region
      %s167 = ssub.s32 32, 32
      %168 = vsyncadd [#allocation12], %s167
      %s170 = sshll.u32 [#allocation13], 4
      %s171 = int_to_ptr.vmem [resolvable:$true] %s170
      %173 = dma.hbm_to_vmem [thread:$0]  %s29, 32, %s171, [#allocation12]
    $region61: #{action_decoder_forward.1} parent=1 // pred_fallthru
      _
    // Predicated region
    $region62: #{action_decoder_forward.1} parent=1 // pred_check
      _
    $region63: #{action_decoder_forward.1} parent=1 // pred_check_branch
      %175 = sbr.rel (0) target = $region65
    $region64: #{action_decoder_forward.1} parent=1 // pred_region
      %s177 = ssub.s32 8192, 8192
      %178 = vsyncadd [#allocation15], %s177
      %s179 = sshll.u32 [#allocation14], 4
      %s180 = int_to_ptr.vmem [resolvable:$true] %s179
      %185 = dma.hbm_to_vmem [thread:$0]  %s31, 8192, %s180, [#allocation15], 256, 256, 16
    $region65: #{action_decoder_forward.1} parent=1 // pred_fallthru
      _
    // Predicated region
    $region66: #{action_decoder_forward.1} parent=1 // pred_check
      _
    $region67: #{action_decoder_forward.1} parent=1 // pred_check_branch
      %187 = sbr.rel (0) target = $region69
    $region68: #{action_decoder_forward.1} parent=1 // pred_region
      _
    $region69: #{action_decoder_forward.1} parent=1 // pred_fallthru
      _
    // Predicated region
    $region70: #{action_decoder_forward.1} parent=1 // pred_check
      _
    $region71: #{action_decoder_forward.1} parent=1 // pred_check_branch
      %189 = sbr.rel (0) target = $region73
    $region72: #{action_decoder_forward.1} parent=1 // pred_region
      %s191 = ssub.s32 4096, 4096
      %192 = vsyncadd [#allocation15], %s191
      %s193 = sshll.u32 [#allocation16], 4
      %s194 = int_to_ptr.vmem [resolvable:$true] %s193
      %199 = dma.hbm_to_vmem [thread:$0]  %s35, 4096, %s194, [#allocation15], 128, 128, 8
    $region73: #{action_decoder_forward.1} parent=1 // pred_fallthru
      _
    // Predicated region
    $region74: #{action_decoder_forward.1} parent=1 // pred_check
      _
    $region75: #{action_decoder_forward.1} parent=1 // pred_check_branch
      %201 = sbr.rel (0) target = $region77
    $region76: #{action_decoder_forward.1} parent=1 // pred_region
      %s203 = ssub.s32 32, 32
      %204 = vsyncadd [#allocation18], %s203
      %s206 = sshll.u32 [#allocation17], 4
      %s207 = int_to_ptr.vmem [resolvable:$true] %s206
      %209 = dma.hbm_to_vmem [thread:$0]  %s37, 32, %s207, [#allocation18]
    $region77: #{action_decoder_forward.1} parent=1 // pred_fallthru
      _
    // Predicated region
    $region78: #{action_decoder_forward.1} parent=1 // pred_check
      _
    $region79: #{action_decoder_forward.1} parent=1 // pred_check_branch
      %211 = sbr.rel (0) target = $region81
    $region80: #{action_decoder_forward.1} parent=1 // pred_region
      %s213 = ssub.s32 4096, 4096
      %214 = vsyncadd [#allocation18], %s213
      %s215 = sshll.u32 [#allocation19], 4
      %s216 = int_to_ptr.vmem [resolvable:$true] %s215
      %221 = dma.hbm_to_vmem [thread:$0]  %s39, 4096, %s216, [#allocation18], 128, 128, 8
    $region81: #{action_decoder_forward.1} parent=1 // pred_fallthru
      _
    // Predicated region
    $region82: #{action_decoder_forward.1} parent=1 // pred_check
      _
    $region83: #{action_decoder_forward.1} parent=1 // pred_check_branch
      %223 = sbr.rel (0) target = $region85
    $region84: #{action_decoder_forward.1} parent=1 // pred_region
      %s225 = ssub.s32 32, 32
      %226 = vsyncadd [#allocation21], %s225
      %s228 = sshll.u32 [#allocation20], 4
      %s229 = int_to_ptr.vmem [resolvable:$true] %s228
      %231 = dma.hbm_to_vmem [thread:$0]  %s41, 32, %s229, [#allocation21]
    $region85: #{action_decoder_forward.1} parent=1 // pred_fallthru
      _
    // Predicated region
    $region86: #{action_decoder_forward.1} parent=1 // pred_check
      _
    $region87: #{action_decoder_forward.1} parent=1 // pred_check_branch
      %233 = sbr.rel (0) target = $region89
    $region88: #{action_decoder_forward.1} parent=1 // pred_region
      %s235 = ssub.s32 32, 32
      %236 = vsyncadd [#allocation21], %s235
      %s238 = sshll.u32 [#allocation22], 4
      %s239 = int_to_ptr.vmem [resolvable:$true] %s238
      %241 = dma.hbm_to_vmem [thread:$0]  %s43, 32, %s239, [#allocation21]
    $region89: #{action_decoder_forward.1} parent=1 // pred_fallthru
      _
    // Predicated region
    $region90: #{action_decoder_forward.1} parent=1 // pred_check
      _
    $region91: #{action_decoder_forward.1} parent=1 // pred_check_branch
      %243 = sbr.rel (0) target = $region93
    $region92: #{action_decoder_forward.1} parent=1 // pred_region
      %s245 = ssub.s32 32, 32
      %246 = vsyncadd [#allocation24], %s245
      %s248 = sshll.u32 [#allocation23], 4
      %s249 = int_to_ptr.vmem [resolvable:$true] %s248
      %251 = dma.hbm_to_vmem [thread:$0]  %s45, 32, %s249, [#allocation24]
    $region93: #{action_decoder_forward.1} parent=1 // pred_fallthru
      _
    // Predicated region
    $region94: #{action_decoder_forward.1} parent=1 // pred_check
      _
    $region95: #{action_decoder_forward.1} parent=1 // pred_check_branch
      %253 = sbr.rel (0) target = $region97
    $region96: #{action_decoder_forward.1} parent=1 // pred_region
      %s255 = ssub.s32 32768, 32768
      %256 = vsyncadd [#allocation24], %s255
      %s257 = sshll.u32 [#allocation25], 4
      %s258 = int_to_ptr.vmem [resolvable:$true] %s257
      %263 = dma.hbm_to_vmem [thread:$0]  %s47, 32768, %s258, [#allocation24], 256, 256, 16
    $region97: #{action_decoder_forward.1} parent=1 // pred_fallthru
      _
    // Predicated region
    $region98: #{action_decoder_forward.1} parent=1 // pred_check
      _
    $region99: #{action_decoder_forward.1} parent=1 // pred_check_branch
      %265 = sbr.rel (0) target = $region101
    $region100: #{action_decoder_forward.1} parent=1 // pred_region
      _
    $region101: #{action_decoder_forward.1} parent=1 // pred_fallthru
      _
    // Predicated region
    $region102: #{action_decoder_forward.1} parent=1 // pred_check
      _
    $region103: #{action_decoder_forward.1} parent=1 // pred_check_branch
      %267 = sbr.rel (0) target = $region105
    $region104: #{action_decoder_forward.1} parent=1 // pred_region
      %s269 = ssub.s32 4096, 4096
      %270 = vsyncadd [#allocation27], %s269
      %s271 = sshll.u32 [#allocation26], 4
      %s272 = int_to_ptr.vmem [resolvable:$true] %s271
      %277 = dma.hbm_to_vmem [thread:$0]  %s51, 4096, %s272, [#allocation27], 128, 128, 8
    $region105: #{action_decoder_forward.1} parent=1 // pred_fallthru
      _
    // Predicated region
    $region106: #{action_decoder_forward.1} parent=1 // pred_check
      _
    $region107: #{action_decoder_forward.1} parent=1 // pred_check_branch
      %279 = sbr.rel (0) target = $region109
    $region108: #{action_decoder_forward.1} parent=1 // pred_region
      _
    $region109: #{action_decoder_forward.1} parent=1 // pred_fallthru
      _
    // Predicated region
    $region110: #{action_decoder_forward.1} parent=1 // pred_check
      _
    $region111: #{action_decoder_forward.1} parent=1 // pred_check_branch
      %281 = sbr.rel (0) target = $region113
    $region112: #{action_decoder_forward.1} parent=1 // pred_region
      _
    $region113: #{action_decoder_forward.1} parent=1 // pred_fallthru
      _
    // Predicated region
    $region114: #{action_decoder_forward.1} parent=1 // pred_check
      _
    $region115: #{action_decoder_forward.1} parent=1 // pred_check_branch
      %283 = sbr.rel (0) target = $region117
    $region116: #{action_decoder_forward.1} parent=1 // pred_region
      _
    $region117: #{action_decoder_forward.1} parent=1 // pred_fallthru
      _
    // Predicated region
    $region118: #{action_decoder_forward.1} parent=1 // pred_check
      _
    $region119: #{action_decoder_forward.1} parent=1 // pred_check_branch
      %285 = sbr.rel (0) target = $region121
    $region120: #{action_decoder_forward.1} parent=1 // pred_region
      %s287 = ssub.s32 8192, 8192
      %288 = vsyncadd [#allocation27], %s287
      %s289 = sshll.u32 [#allocation28], 4
      %s290 = int_to_ptr.vmem [resolvable:$true] %s289
      %295 = dma.hbm_to_vmem [thread:$0]  %s59, 8192, %s290, [#allocation27], 256, 256, 16
    $region121: #{action_decoder_forward.1} parent=1 // pred_fallthru
      _
    // Predicated region
    $region122: #{action_decoder_forward.1} parent=1 // pred_check
      _
    $region123: #{action_decoder_forward.1} parent=1 // pred_check_branch
      %297 = sbr.rel (0) target = $region125
    $region124: #{action_decoder_forward.1} parent=1 // pred_region
      _
    $region125: #{action_decoder_forward.1} parent=1 // pred_fallthru
      _
    // Predicated region
    $region126: #{action_decoder_forward.1} parent=1 // pred_check
      _
    $region127: #{action_decoder_forward.1} parent=1 // pred_check_branch
      %299 = sbr.rel (0) target = $region129
    $region128: #{action_decoder_forward.1} parent=1 // pred_region
      %s301 = ssub.s32 8192, 8192
      %302 = vsyncadd [#allocation30], %s301
      %s303 = sshll.u32 [#allocation29], 4
      %s304 = int_to_ptr.vmem [resolvable:$true] %s303
      %309 = dma.hbm_to_vmem [thread:$0]  %s63, 8192, %s304, [#allocation30], 128, 128, 8
    $region129: #{action_decoder_forward.1} parent=1 // pred_fallthru
      _
    // Predicated region
    $region130: #{action_decoder_forward.1} parent=1 // pred_check
      _
    $region131: #{action_decoder_forward.1} parent=1 // pred_check_branch
      %311 = sbr.rel (0) target = $region133
    $region132: #{action_decoder_forward.1} parent=1 // pred_region
      _
    $region133: #{action_decoder_forward.1} parent=1 // pred_fallthru
      _
    // Predicated region
    $region134: #{action_decoder_forward.1} parent=1 // pred_check
      _
    $region135: #{action_decoder_forward.1} parent=1 // pred_check_branch
      %313 = sbr.rel (0) target = $region137
    $region136: #{action_decoder_forward.1} parent=1 // pred_region
      _
    $region137: #{action_decoder_forward.1} parent=1 // pred_fallthru
      _
    // Predicated region
    $region138: #{action_decoder_forward.1} parent=1 // pred_check
      _
    $region139: #{action_decoder_forward.1} parent=1 // pred_check_branch
      %315 = sbr.rel (0) target = $region141
    $region140: #{action_decoder_forward.1} parent=1 // pred_region
      _
    $region141: #{action_decoder_forward.1} parent=1 // pred_fallthru
      _
    // Predicated region
    $region142: #{action_decoder_forward.1} parent=1 // pred_check
      _
    $region143: #{action_decoder_forward.1} parent=1 // pred_check_branch
      %317 = sbr.rel (0) target = $region145
    $region144: #{action_decoder_forward.1} parent=1 // pred_region
      %318 = dma.done [#allocation6], 16
    $region145: #{action_decoder_forward.1} parent=1 // pred_fallthru
      _
    // Predicated region
    $region146: #{action_decoder_forward.1} parent=1 // pred_check
      _
    $region147: #{action_decoder_forward.1} parent=1 // pred_check_branch
      %320 = sbr.rel (0) target = $region149
    $region148: #{action_decoder_forward.1} parent=1 // pred_region
      %321 = dma.done [#allocation4], 32768
    $region149: #{action_decoder_forward.1} parent=1 // pred_fallthru
      _
    // Predicated region
    $region150: #{action_decoder_forward.1} parent=1 // pred_check
      _
    $region151: #{action_decoder_forward.1} parent=1 // pred_check_branch
      %323 = sbr.rel (0) target = $region153
    $region152: #{action_decoder_forward.1} parent=1 // pred_region
      %324 = dma.done [#allocation9], 8192
    $region153: #{action_decoder_forward.1} parent=1 // pred_fallthru
      _
    // Predicated region
    $region154: #{action_decoder_forward.1} parent=1 // pred_check
      _
    $region155: #{action_decoder_forward.1} parent=1 // pred_check_branch
      %326 = sbr.rel (0) target = $region157
    $region156: #{action_decoder_forward.1} parent=1 // pred_region
      %327 = dma.done [#allocation9], 8192
    $region157: #{action_decoder_forward.1} parent=1 // pred_fallthru
      _
    // Predicated region
    $region158: #{action_decoder_forward.1} parent=1 // pred_check
      _
    $region159: #{action_decoder_forward.1} parent=1 // pred_check_branch
      %329 = sbr.rel (0) target = $region161
    $region160: #{action_decoder_forward.1} parent=1 // pred_region
      %330 = dma.done [#allocation12], 32
    $region161: #{action_decoder_forward.1} parent=1 // pred_fallthru
      _
    // Predicated region
    $region162: #{action_decoder_forward.1} parent=1 // pred_check
      _
    $region163: #{action_decoder_forward.1} parent=1 // pred_check_branch
      %332 = sbr.rel (0) target = $region165
    $region164: #{action_decoder_forward.1} parent=1 // pred_region
      %333 = dma.done [#allocation12], 32
    $region165: #{action_decoder_forward.1} parent=1 // pred_fallthru
      _
    // Predicated region
    $region166: #{action_decoder_forward.1} parent=1 // pred_check
      _
    $region167: #{action_decoder_forward.1} parent=1 // pred_check_branch
      %335 = sbr.rel (0) target = $region169
    $region168: #{action_decoder_forward.1} parent=1 // pred_region
      %336 = dma.done [#allocation15], 8192
    $region169: #{action_decoder_forward.1} parent=1 // pred_fallthru
      _
    // Predicated region
    $region170: #{action_decoder_forward.1} parent=1 // pred_check
      _
    $region171: #{action_decoder_forward.1} parent=1 // pred_check_branch
      %338 = sbr.rel (0) target = $region173
    $region172: #{action_decoder_forward.1} parent=1 // pred_region
      %339 = dma.done [#allocation15], 4096
    $region173: #{action_decoder_forward.1} parent=1 // pred_fallthru
      _
    // Predicated region
    $region174: #{action_decoder_forward.1} parent=1 // pred_check
      _
    $region175: #{action_decoder_forward.1} parent=1 // pred_check_branch
      %341 = sbr.rel (0) target = $region177
    $region176: #{action_decoder_forward.1} parent=1 // pred_region
      %342 = dma.done [#allocation18], 32
    $region177: #{action_decoder_forward.1} parent=1 // pred_fallthru
      _
    // Predicated region
    $region178: #{action_decoder_forward.1} parent=1 // pred_check
      _
    $region179: #{action_decoder_forward.1} parent=1 // pred_check_branch
      %344 = sbr.rel (0) target = $region181
    $region180: #{action_decoder_forward.1} parent=1 // pred_region
      %345 = dma.done [#allocation18], 4096
    $region181: #{action_decoder_forward.1} parent=1 // pred_fallthru
      _
    // Predicated region
    $region182: #{action_decoder_forward.1} parent=1 // pred_check
      _
    $region183: #{action_decoder_forward.1} parent=1 // pred_check_branch
      %347 = sbr.rel (0) target = $region185
    $region184: #{action_decoder_forward.1} parent=1 // pred_region
      %348 = dma.done [#allocation21], 32
    $region185: #{action_decoder_forward.1} parent=1 // pred_fallthru
      _
    // Predicated region
    $region186: #{action_decoder_forward.1} parent=1 // pred_check
      _
    $region187: #{action_decoder_forward.1} parent=1 // pred_check_branch
      %350 = sbr.rel (0) target = $region189
    $region188: #{action_decoder_forward.1} parent=1 // pred_region
      %351 = dma.done [#allocation21], 32
    $region189: #{action_decoder_forward.1} parent=1 // pred_fallthru
      _
    // Predicated region
    $region190: #{action_decoder_forward.1} parent=1 // pred_check
      _
    $region191: #{action_decoder_forward.1} parent=1 // pred_check_branch
      %353 = sbr.rel (0) target = $region193
    $region192: #{action_decoder_forward.1} parent=1 // pred_region
      %354 = dma.done [#allocation24], 32
    $region193: #{action_decoder_forward.1} parent=1 // pred_fallthru
      _
    // Predicated region
    $region194: #{action_decoder_forward.1} parent=1 // pred_check
      _
    $region195: #{action_decoder_forward.1} parent=1 // pred_check_branch
      %356 = sbr.rel (0) target = $region197
    $region196: #{action_decoder_forward.1} parent=1 // pred_region
      %357 = dma.done [#allocation24], 32768
    $region197: #{action_decoder_forward.1} parent=1 // pred_fallthru
      _
    // Predicated region
    $region198: #{action_decoder_forward.1} parent=1 // pred_check
      _
    $region199: #{action_decoder_forward.1} parent=1 // pred_check_branch
      %359 = sbr.rel (0) target = $region201
    $region200: #{action_decoder_forward.1} parent=1 // pred_region
      %360 = dma.done [#allocation27], 4096
    $region201: #{action_decoder_forward.1} parent=1 // pred_fallthru
      _
    // Predicated region
    $region202: #{action_decoder_forward.1} parent=1 // pred_check
      _
    $region203: #{action_decoder_forward.1} parent=1 // pred_check_branch
      %362 = sbr.rel (0) target = $region205
    $region204: #{action_decoder_forward.1} parent=1 // pred_region
      %363 = dma.done [#allocation27], 8192
    $region205: #{action_decoder_forward.1} parent=1 // pred_fallthru
      _
    // Predicated region
    $region206: #{action_decoder_forward.1} parent=1 // pred_check
      _
    $region207: #{action_decoder_forward.1} parent=1 // pred_check_branch
      %365 = sbr.rel (0) target = $region209
    $region208: #{action_decoder_forward.1} parent=1 // pred_region
      %366 = dma.done [#allocation30], 8192
    $region209: #{action_decoder_forward.1} parent=1 // pred_fallthru
      _
    %367 = sfence
    %v369 = vld [vmem:[%s3] sm:$0xff]
    %v370 = vld [vmem:[%s3 + $0x8] sm:$0xff]
    %v371 = vld [vmem:[%s3 + $0x10] sm:$0xff]
    %v372 = vld [vmem:[%s3 + $0x18] sm:$0xff]
    %v373 = vld [vmem:[%s3 + $0x20] sm:$0xff]
    %v374 = vld [vmem:[%s3 + $0x28] sm:$0xff]
    %v375 = vld [vmem:[%s3 + $0x30] sm:$0xff]
    %v376 = vld [vmem:[%s3 + $0x38] sm:$0xff]
    %v377 = vld [vmem:[%s5] sm:$0xff]
    %v378 = vld [vmem:[%s5 + $0x8] sm:$0xff]
    %s379 = sld [smem:[#allocation3]]
    %v380 = vld [vmem:[#allocation7] sm:$0xff]
    %v381 = vld [vmem:[#allocation7 + $0x8] sm:$0xff]
    %v382 = vld [vmem:[#allocation7 + $0x10] sm:$0xff]
    %v383 = vld [vmem:[#allocation7 + $0x18] sm:$0xff]
    %v384 = vld [vmem:[#allocation7 + $0x20] sm:$0xff]
    %v385 = vld [vmem:[#allocation7 + $0x28] sm:$0xff]
    %v386 = vld [vmem:[#allocation7 + $0x30] sm:$0xff]
    %v387 = vld [vmem:[#allocation7 + $0x38] sm:$0xff]
    %v388 = vld [vmem:[#allocation7 + $0x40] sm:$0xff]
    %v389 = vld [vmem:[#allocation7 + $0x48] sm:$0xff]
    %v390 = vld [vmem:[#allocation7 + $0x50] sm:$0xff]
    %v391 = vld [vmem:[#allocation7 + $0x58] sm:$0xff]
    %v392 = vld [vmem:[#allocation7 + $0x60] sm:$0xff]
    %v393 = vld [vmem:[#allocation7 + $0x68] sm:$0xff]
    %v394 = vld [vmem:[#allocation7 + $0x70] sm:$0xff]
    %v395 = vld [vmem:[#allocation7 + $0x78] sm:$0xff]
    %v396 = vld [vmem:[#allocation7 + $0x80] sm:$0xff]
    %v397 = vld [vmem:[#allocation7 + $0x88] sm:$0xff]
    %v398 = vld [vmem:[#allocation7 + $0x90] sm:$0xff]
    %v399 = vld [vmem:[#allocation7 + $0x98] sm:$0xff]
    %v400 = vld [vmem:[#allocation7 + $0xa0] sm:$0xff]
    %v401 = vld [vmem:[#allocation7 + $0xa8] sm:$0xff]
    %v402 = vld [vmem:[#allocation7 + $0xb0] sm:$0xff]
    %v403 = vld [vmem:[#allocation7 + $0xb8] sm:$0xff]
    %v404 = vld [vmem:[#allocation7 + $0xc0] sm:$0xff]
    %v405 = vld [vmem:[#allocation7 + $0xc8] sm:$0xff]
    %v406 = vld [vmem:[#allocation7 + $0xd0] sm:$0xff]
    %v407 = vld [vmem:[#allocation7 + $0xd8] sm:$0xff]
    %v408 = vld [vmem:[#allocation7 + $0xe0] sm:$0xff]
    %v409 = vld [vmem:[#allocation7 + $0xe8] sm:$0xff]
    %v410 = vld [vmem:[#allocation7 + $0xf0] sm:$0xff]
    %v411 = vld [vmem:[#allocation7 + $0xf8] sm:$0xff]
    %v412 = vld [vmem:[#allocation7 + $0x100] sm:$0xff]
    %v413 = vld [vmem:[#allocation7 + $0x108] sm:$0xff]
    %v414 = vld [vmem:[#allocation7 + $0x110] sm:$0xff]
    %v415 = vld [vmem:[#allocation7 + $0x118] sm:$0xff]
    %v416 = vld [vmem:[#allocation7 + $0x120] sm:$0xff]
    %v417 = vld [vmem:[#allocation7 + $0x128] sm:$0xff]
    %v418 = vld [vmem:[#allocation7 + $0x130] sm:$0xff]
    %v419 = vld [vmem:[#allocation7 + $0x138] sm:$0xff]
    %v420 = vld [vmem:[#allocation7 + $0x140] sm:$0xff]
    %v421 = vld [vmem:[#allocation7 + $0x148] sm:$0xff]
    %v422 = vld [vmem:[#allocation7 + $0x150] sm:$0xff]
    %v423 = vld [vmem:[#allocation7 + $0x158] sm:$0xff]
    %v424 = vld [vmem:[#allocation7 + $0x160] sm:$0xff]
    %v425 = vld [vmem:[#allocation7 + $0x168] sm:$0xff]
    %v426 = vld [vmem:[#allocation7 + $0x170] sm:$0xff]
    %v427 = vld [vmem:[#allocation7 + $0x178] sm:$0xff]
    %v428 = vld [vmem:[#allocation7 + $0x180] sm:$0xff]
    %v429 = vld [vmem:[#allocation7 + $0x188] sm:$0xff]
    %v430 = vld [vmem:[#allocation7 + $0x190] sm:$0xff]
    %v431 = vld [vmem:[#allocation7 + $0x198] sm:$0xff]
    %v432 = vld [vmem:[#allocation7 + $0x1a0] sm:$0xff]
    %v433 = vld [vmem:[#allocation7 + $0x1a8] sm:$0xff]
    %v434 = vld [vmem:[#allocation7 + $0x1b0] sm:$0xff]
    %v435 = vld [vmem:[#allocation7 + $0x1b8] sm:$0xff]
    %v436 = vld [vmem:[#allocation7 + $0x1c0] sm:$0xff]
    %v437 = vld [vmem:[#allocation7 + $0x1c8] sm:$0xff]
    %v438 = vld [vmem:[#allocation7 + $0x1d0] sm:$0xff]
    %v439 = vld [vmem:[#allocation7 + $0x1d8] sm:$0xff]
    %v440 = vld [vmem:[#allocation7 + $0x1e0] sm:$0xff]
    %v441 = vld [vmem:[#allocation7 + $0x1e8] sm:$0xff]
    %v442 = vld [vmem:[#allocation7 + $0x1f0] sm:$0xff]
    %v443 = vld [vmem:[#allocation7 + $0x1f8] sm:$0xff]
    %v444 = vld [vmem:[#allocation7 + $0x200] sm:$0xff]
    %v445 = vld [vmem:[#allocation7 + $0x208] sm:$0xff]
    %v446 = vld [vmem:[#allocation7 + $0x210] sm:$0xff]
    %v447 = vld [vmem:[#allocation7 + $0x218] sm:$0xff]
    %v448 = vld [vmem:[#allocation7 + $0x220] sm:$0xff]
    %v449 = vld [vmem:[#allocation7 + $0x228] sm:$0xff]
    %v450 = vld [vmem:[#allocation7 + $0x230] sm:$0xff]
    %v451 = vld [vmem:[#allocation7 + $0x238] sm:$0xff]
    %v452 = vld [vmem:[#allocation7 + $0x240] sm:$0xff]
    %v453 = vld [vmem:[#allocation7 + $0x248] sm:$0xff]
    %v454 = vld [vmem:[#allocation7 + $0x250] sm:$0xff]
    %v455 = vld [vmem:[#allocation7 + $0x258] sm:$0xff]
    %v456 = vld [vmem:[#allocation7 + $0x260] sm:$0xff]
    %v457 = vld [vmem:[#allocation7 + $0x268] sm:$0xff]
    %v458 = vld [vmem:[#allocation7 + $0x270] sm:$0xff]
    %v459 = vld [vmem:[#allocation7 + $0x278] sm:$0xff]
    %v460 = vld [vmem:[#allocation7 + $0x280] sm:$0xff]
    %v461 = vld [vmem:[#allocation7 + $0x288] sm:$0xff]
    %v462 = vld [vmem:[#allocation7 + $0x290] sm:$0xff]
    %v463 = vld [vmem:[#allocation7 + $0x298] sm:$0xff]
    %v464 = vld [vmem:[#allocation7 + $0x2a0] sm:$0xff]
    %v465 = vld [vmem:[#allocation7 + $0x2a8] sm:$0xff]
    %v466 = vld [vmem:[#allocation7 + $0x2b0] sm:$0xff]
    %v467 = vld [vmem:[#allocation7 + $0x2b8] sm:$0xff]
    %v468 = vld [vmem:[#allocation7 + $0x2c0] sm:$0xff]
    %v469 = vld [vmem:[#allocation7 + $0x2c8] sm:$0xff]
    %v470 = vld [vmem:[#allocation7 + $0x2d0] sm:$0xff]
    %v471 = vld [vmem:[#allocation7 + $0x2d8] sm:$0xff]
    %v472 = vld [vmem:[#allocation7 + $0x2e0] sm:$0xff]
    %v473 = vld [vmem:[#allocation7 + $0x2e8] sm:$0xff]
    %v474 = vld [vmem:[#allocation7 + $0x2f0] sm:$0xff]
    %v475 = vld [vmem:[#allocation7 + $0x2f8] sm:$0xff]
    %v476 = vld [vmem:[#allocation7 + $0x300] sm:$0xff]
    %v477 = vld [vmem:[#allocation7 + $0x308] sm:$0xff]
    %v478 = vld [vmem:[#allocation7 + $0x310] sm:$0xff]
    %v479 = vld [vmem:[#allocation7 + $0x318] sm:$0xff]
    %v480 = vld [vmem:[#allocation7 + $0x320] sm:$0xff]
    %v481 = vld [vmem:[#allocation7 + $0x328] sm:$0xff]
    %v482 = vld [vmem:[#allocation7 + $0x330] sm:$0xff]
    %v483 = vld [vmem:[#allocation7 + $0x338] sm:$0xff]
    %v484 = vld [vmem:[#allocation7 + $0x340] sm:$0xff]
    %v485 = vld [vmem:[#allocation7 + $0x348] sm:$0xff]
    %v486 = vld [vmem:[#allocation7 + $0x350] sm:$0xff]
    %v487 = vld [vmem:[#allocation7 + $0x358] sm:$0xff]
    %v488 = vld [vmem:[#allocation7 + $0x360] sm:$0xff]
    %v489 = vld [vmem:[#allocation7 + $0x368] sm:$0xff]
    %v490 = vld [vmem:[#allocation7 + $0x370] sm:$0xff]
    %v491 = vld [vmem:[#allocation7 + $0x378] sm:$0xff]
    %v492 = vld [vmem:[#allocation7 + $0x380] sm:$0xff]
    %v493 = vld [vmem:[#allocation7 + $0x388] sm:$0xff]
    %v494 = vld [vmem:[#allocation7 + $0x390] sm:$0xff]
    %v495 = vld [vmem:[#allocation7 + $0x398] sm:$0xff]
    %v496 = vld [vmem:[#allocation7 + $0x3a0] sm:$0xff]
    %v497 = vld [vmem:[#allocation7 + $0x3a8] sm:$0xff]
    %v498 = vld [vmem:[#allocation7 + $0x3b0] sm:$0xff]
    %v499 = vld [vmem:[#allocation7 + $0x3b8] sm:$0xff]
    %v500 = vld [vmem:[#allocation7 + $0x3c0] sm:$0xff]
    %v501 = vld [vmem:[#allocation7 + $0x3c8] sm:$0xff]
    %v502 = vld [vmem:[#allocation7 + $0x3d0] sm:$0xff]
    %v503 = vld [vmem:[#allocation7 + $0x3d8] sm:$0xff]
    %v504 = vld [vmem:[#allocation7 + $0x3e0] sm:$0xff]
    %v505 = vld [vmem:[#allocation7 + $0x3e8] sm:$0xff]
    %v506 = vld [vmem:[#allocation7 + $0x3f0] sm:$0xff]
    %v507 = vld [vmem:[#allocation7 + $0x3f8] sm:$0xff]
    %v508 = vld [vmem:[#allocation7 + $0x400] sm:$0xff]
    %v509 = vld [vmem:[#allocation7 + $0x408] sm:$0xff]
    %v510 = vld [vmem:[#allocation7 + $0x410] sm:$0xff]
    %v511 = vld [vmem:[#allocation7 + $0x418] sm:$0xff]
    %v512 = vld [vmem:[#allocation7 + $0x420] sm:$0xff]
    %v513 = vld [vmem:[#allocation7 + $0x428] sm:$0xff]
    %v514 = vld [vmem:[#allocation7 + $0x430] sm:$0xff]
    %v515 = vld [vmem:[#allocation7 + $0x438] sm:$0xff]
    %v516 = vld [vmem:[#allocation7 + $0x440] sm:$0xff]
    %v517 = vld [vmem:[#allocation7 + $0x448] sm:$0xff]
    %v518 = vld [vmem:[#allocation7 + $0x450] sm:$0xff]
    %v519 = vld [vmem:[#allocation7 + $0x458] sm:$0xff]
    %v520 = vld [vmem:[#allocation7 + $0x460] sm:$0xff]
    %v521 = vld [vmem:[#allocation7 + $0x468] sm:$0xff]
    %v522 = vld [vmem:[#allocation7 + $0x470] sm:$0xff]
    %v523 = vld [vmem:[#allocation7 + $0x478] sm:$0xff]
    %v524 = vld [vmem:[#allocation7 + $0x480] sm:$0xff]
    %v525 = vld [vmem:[#allocation7 + $0x488] sm:$0xff]
    %v526 = vld [vmem:[#allocation7 + $0x490] sm:$0xff]
    %v527 = vld [vmem:[#allocation7 + $0x498] sm:$0xff]
    %v528 = vld [vmem:[#allocation7 + $0x4a0] sm:$0xff]
    %v529 = vld [vmem:[#allocation7 + $0x4a8] sm:$0xff]
    %v530 = vld [vmem:[#allocation7 + $0x4b0] sm:$0xff]
    %v531 = vld [vmem:[#allocation7 + $0x4b8] sm:$0xff]
    %v532 = vld [vmem:[#allocation7 + $0x4c0] sm:$0xff]
    %v533 = vld [vmem:[#allocation7 + $0x4c8] sm:$0xff]
    %v534 = vld [vmem:[#allocation7 + $0x4d0] sm:$0xff]
    %v535 = vld [vmem:[#allocation7 + $0x4d8] sm:$0xff]
    %v536 = vld [vmem:[#allocation7 + $0x4e0] sm:$0xff]
    %v537 = vld [vmem:[#allocation7 + $0x4e8] sm:$0xff]
    %v538 = vld [vmem:[#allocation7 + $0x4f0] sm:$0xff]
    %v539 = vld [vmem:[#allocation7 + $0x4f8] sm:$0xff]
    %v540 = vld [vmem:[#allocation7 + $0x500] sm:$0xff]
    %v541 = vld [vmem:[#allocation7 + $0x508] sm:$0xff]
    %v542 = vld [vmem:[#allocation7 + $0x510] sm:$0xff]
    %v543 = vld [vmem:[#allocation7 + $0x518] sm:$0xff]
    %v544 = vld [vmem:[#allocation7 + $0x520] sm:$0xff]
    %v545 = vld [vmem:[#allocation7 + $0x528] sm:$0xff]
    %v546 = vld [vmem:[#allocation7 + $0x530] sm:$0xff]
    %v547 = vld [vmem:[#allocation7 + $0x538] sm:$0xff]
    %v548 = vld [vmem:[#allocation7 + $0x540] sm:$0xff]
    %v549 = vld [vmem:[#allocation7 + $0x548] sm:$0xff]
    %v550 = vld [vmem:[#allocation7 + $0x550] sm:$0xff]
    %v551 = vld [vmem:[#allocation7 + $0x558] sm:$0xff]
    %v552 = vld [vmem:[#allocation7 + $0x560] sm:$0xff]
    %v553 = vld [vmem:[#allocation7 + $0x568] sm:$0xff]
    %v554 = vld [vmem:[#allocation7 + $0x570] sm:$0xff]
    %v555 = vld [vmem:[#allocation7 + $0x578] sm:$0xff]
    %v556 = vld [vmem:[#allocation7 + $0x580] sm:$0xff]
    %v557 = vld [vmem:[#allocation7 + $0x588] sm:$0xff]
    %v558 = vld [vmem:[#allocation7 + $0x590] sm:$0xff]
    %v559 = vld [vmem:[#allocation7 + $0x598] sm:$0xff]
    %v560 = vld [vmem:[#allocation7 + $0x5a0] sm:$0xff]
    %v561 = vld [vmem:[#allocation7 + $0x5a8] sm:$0xff]
    %v562 = vld [vmem:[#allocation7 + $0x5b0] sm:$0xff]
    %v563 = vld [vmem:[#allocation7 + $0x5b8] sm:$0xff]
    %v564 = vld [vmem:[#allocation7 + $0x5c0] sm:$0xff]
    %v565 = vld [vmem:[#allocation7 + $0x5c8] sm:$0xff]
    %v566 = vld [vmem:[#allocation7 + $0x5d0] sm:$0xff]
    %v567 = vld [vmem:[#allocation7 + $0x5d8] sm:$0xff]
    %v568 = vld [vmem:[#allocation7 + $0x5e0] sm:$0xff]
    %v569 = vld [vmem:[#allocation7 + $0x5e8] sm:$0xff]
    %v570 = vld [vmem:[#allocation7 + $0x5f0] sm:$0xff]
    %v571 = vld [vmem:[#allocation7 + $0x5f8] sm:$0xff]
    %v572 = vld [vmem:[#allocation7 + $0x600] sm:$0xff]
    %v573 = vld [vmem:[#allocation7 + $0x608] sm:$0xff]
    %v574 = vld [vmem:[#allocation7 + $0x610] sm:$0xff]
    %v575 = vld [vmem:[#allocation7 + $0x618] sm:$0xff]
    %v576 = vld [vmem:[#allocation7 + $0x620] sm:$0xff]
    %v577 = vld [vmem:[#allocation7 + $0x628] sm:$0xff]
    %v578 = vld [vmem:[#allocation7 + $0x630] sm:$0xff]
    %v579 = vld [vmem:[#allocation7 + $0x638] sm:$0xff]
    %v580 = vld [vmem:[#allocation7 + $0x640] sm:$0xff]
    %v581 = vld [vmem:[#allocation7 + $0x648] sm:$0xff]
    %v582 = vld [vmem:[#allocation7 + $0x650] sm:$0xff]
    %v583 = vld [vmem:[#allocation7 + $0x658] sm:$0xff]
    %v584 = vld [vmem:[#allocation7 + $0x660] sm:$0xff]
    %v585 = vld [vmem:[#allocation7 + $0x668] sm:$0xff]
    %v586 = vld [vmem:[#allocation7 + $0x670] sm:$0xff]
    %v587 = vld [vmem:[#allocation7 + $0x678] sm:$0xff]
    %v588 = vld [vmem:[#allocation7 + $0x680] sm:$0xff]
    %v589 = vld [vmem:[#allocation7 + $0x688] sm:$0xff]
    %v590 = vld [vmem:[#allocation7 + $0x690] sm:$0xff]
    %v591 = vld [vmem:[#allocation7 + $0x698] sm:$0xff]
    %v592 = vld [vmem:[#allocation7 + $0x6a0] sm:$0xff]
    %v593 = vld [vmem:[#allocation7 + $0x6a8] sm:$0xff]
    %v594 = vld [vmem:[#allocation7 + $0x6b0] sm:$0xff]
    %v595 = vld [vmem:[#allocation7 + $0x6b8] sm:$0xff]
    %v596 = vld [vmem:[#allocation7 + $0x6c0] sm:$0xff]
    %v597 = vld [vmem:[#allocation7 + $0x6c8] sm:$0xff]
    %v598 = vld [vmem:[#allocation7 + $0x6d0] sm:$0xff]
    %v599 = vld [vmem:[#allocation7 + $0x6d8] sm:$0xff]
    %v600 = vld [vmem:[#allocation7 + $0x6e0] sm:$0xff]
    %v601 = vld [vmem:[#allocation7 + $0x6e8] sm:$0xff]
    %v602 = vld [vmem:[#allocation7 + $0x6f0] sm:$0xff]
    %v603 = vld [vmem:[#allocation7 + $0x6f8] sm:$0xff]
    %v604 = vld [vmem:[#allocation7 + $0x700] sm:$0xff]
    %v605 = vld [vmem:[#allocation7 + $0x708] sm:$0xff]
    %v606 = vld [vmem:[#allocation7 + $0x710] sm:$0xff]
    %v607 = vld [vmem:[#allocation7 + $0x718] sm:$0xff]
    %v608 = vld [vmem:[#allocation7 + $0x720] sm:$0xff]
    %v609 = vld [vmem:[#allocation7 + $0x728] sm:$0xff]
    %v610 = vld [vmem:[#allocation7 + $0x730] sm:$0xff]
    %v611 = vld [vmem:[#allocation7 + $0x738] sm:$0xff]
    %v612 = vld [vmem:[#allocation7 + $0x740] sm:$0xff]
    %v613 = vld [vmem:[#allocation7 + $0x748] sm:$0xff]
    %v614 = vld [vmem:[#allocation7 + $0x750] sm:$0xff]
    %v615 = vld [vmem:[#allocation7 + $0x758] sm:$0xff]
    %v616 = vld [vmem:[#allocation7 + $0x760] sm:$0xff]
    %v617 = vld [vmem:[#allocation7 + $0x768] sm:$0xff]
    %v618 = vld [vmem:[#allocation7 + $0x770] sm:$0xff]
    %v619 = vld [vmem:[#allocation7 + $0x778] sm:$0xff]
    %v620 = vld [vmem:[#allocation7 + $0x780] sm:$0xff]
    %v621 = vld [vmem:[#allocation7 + $0x788] sm:$0xff]
    %v622 = vld [vmem:[#allocation7 + $0x790] sm:$0xff]
    %v623 = vld [vmem:[#allocation7 + $0x798] sm:$0xff]
    %v624 = vld [vmem:[#allocation7 + $0x7a0] sm:$0xff]
    %v625 = vld [vmem:[#allocation7 + $0x7a8] sm:$0xff]
    %v626 = vld [vmem:[#allocation7 + $0x7b0] sm:$0xff]
    %v627 = vld [vmem:[#allocation7 + $0x7b8] sm:$0xff]
    %v628 = vld [vmem:[#allocation7 + $0x7c0] sm:$0xff]
    %v629 = vld [vmem:[#allocation7 + $0x7c8] sm:$0xff]
    %v630 = vld [vmem:[#allocation7 + $0x7d0] sm:$0xff]
    %v631 = vld [vmem:[#allocation7 + $0x7d8] sm:$0xff]
    %v632 = vld [vmem:[#allocation7 + $0x7e0] sm:$0xff]
    %v633 = vld [vmem:[#allocation7 + $0x7e8] sm:$0xff]
    %v634 = vld [vmem:[#allocation7 + $0x7f0] sm:$0xff]
    %v635 = vld [vmem:[#allocation7 + $0x7f8] sm:$0xff]
    %v636 = vld [vmem:[%s9] sm:$0xf]
    %v638 = vlaneseq
    %v639 = vshrl.u32 %v638, 7
    %v640 = vsub.s32 0, %v639
    %v641 = vrot.slane %v636, %v640
    %v642 = vlaneseq
    %v643 = vshrl.u32 %v642, 7
    %v644 = vsub.s32 1, %v643
    %v645 = vrot.slane %v636, %v644
    %v646 = vlaneseq
    %v647 = vshrl.u32 %v646, 7
    %v648 = vsub.s32 2, %v647
    %v649 = vrot.slane %v636, %v648
    %v650 = vlaneseq
    %v651 = vshrl.u32 %v650, 7
    %v652 = vsub.s32 3, %v651
    %v653 = vrot.slane %v636, %v652
    %v666 = vunpack.c.l.b16 %v369
    %v667 = vunpack.c.h.b16 %v369
    %v668 = vunpack.c.l.b16 %v370
    %v669 = vunpack.c.h.b16 %v370
    %v670 = vunpack.c.l.b16 %v371
    %v671 = vunpack.c.h.b16 %v371
    %v672 = vunpack.c.l.b16 %v372
    %v673 = vunpack.c.h.b16 %v372
    %v674 = vunpack.c.l.b16 %v373
    %v675 = vunpack.c.h.b16 %v373
    %v676 = vunpack.c.l.b16 %v374
    %v677 = vunpack.c.h.b16 %v374
    %v678 = vunpack.c.l.b16 %v375
    %v679 = vunpack.c.h.b16 %v375
    %v680 = vunpack.c.l.b16 %v376
    %v681 = vunpack.c.h.b16 %v376
    %v682 = vpack.c.b16 %v674, %v666
    %v683 = vpack.c.b16 %v675, %v667
    %v684 = vpack.c.b16 %v676, %v668
    %v685 = vpack.c.b16 %v677, %v669
    %v686 = vpack.c.b16 %v678, %v670
    %v687 = vpack.c.b16 %v679, %v671
    %v688 = vpack.c.b16 %v680, %v672
    %v689 = vpack.c.b16 %v681, %v673
    %v954 = vunpack.c.l.b16 %v380
    %v955 = vunpack.c.h.b16 %v380
    %v956 = vunpack.c.l.b16 %v381
    %v957 = vunpack.c.h.b16 %v381
    %v958 = vunpack.c.l.b16 %v382
    %v959 = vunpack.c.h.b16 %v382
    %v960 = vunpack.c.l.b16 %v383
    %v961 = vunpack.c.h.b16 %v383
    %v962 = vunpack.c.l.b16 %v384
    %v963 = vunpack.c.h.b16 %v384
    %v964 = vunpack.c.l.b16 %v385
    %v965 = vunpack.c.h.b16 %v385
    %v966 = vunpack.c.l.b16 %v386
    %v967 = vunpack.c.h.b16 %v386
    %v968 = vunpack.c.l.b16 %v387
    %v969 = vunpack.c.h.b16 %v387
    %v970 = vunpack.c.l.b16 %v388
    %v971 = vunpack.c.h.b16 %v388
    %v972 = vunpack.c.l.b16 %v389
    %v973 = vunpack.c.h.b16 %v389
    %v974 = vunpack.c.l.b16 %v390
    %v975 = vunpack.c.h.b16 %v390
    %v976 = vunpack.c.l.b16 %v391
    %v977 = vunpack.c.h.b16 %v391
    %v978 = vunpack.c.l.b16 %v392
    %v979 = vunpack.c.h.b16 %v392
    %v980 = vunpack.c.l.b16 %v393
    %v981 = vunpack.c.h.b16 %v393
    %v982 = vunpack.c.l.b16 %v394
    %v983 = vunpack.c.h.b16 %v394
    %v984 = vunpack.c.l.b16 %v395
    %v985 = vunpack.c.h.b16 %v395
    %v986 = vunpack.c.l.b16 %v396
    %v987 = vunpack.c.h.b16 %v396
    %v988 = vunpack.c.l.b16 %v397
    %v989 = vunpack.c.h.b16 %v397
    %v990 = vunpack.c.l.b16 %v398
    %v991 = vunpack.c.h.b16 %v398
    %v992 = vunpack.c.l.b16 %v399
    %v993 = vunpack.c.h.b16 %v399
    %v994 = vunpack.c.l.b16 %v400
    %v995 = vunpack.c.h.b16 %v400
    %v996 = vunpack.c.l.b16 %v401
    %v997 = vunpack.c.h.b16 %v401
    %v998 = vunpack.c.l.b16 %v402
    %v999 = vunpack.c.h.b16 %v402
    %v1000 = vunpack.c.l.b16 %v403
    %v1001 = vunpack.c.h.b16 %v403
    %v1002 = vunpack.c.l.b16 %v404
    %v1003 = vunpack.c.h.b16 %v404
    %v1004 = vunpack.c.l.b16 %v405
    %v1005 = vunpack.c.h.b16 %v405
    %v1006 = vunpack.c.l.b16 %v406
    %v1007 = vunpack.c.h.b16 %v406
    %v1008 = vunpack.c.l.b16 %v407
    %v1009 = vunpack.c.h.b16 %v407
    %v1010 = vunpack.c.l.b16 %v408
    %v1011 = vunpack.c.h.b16 %v408
    %v1012 = vunpack.c.l.b16 %v409
    %v1013 = vunpack.c.h.b16 %v409
    %v1014 = vunpack.c.l.b16 %v410
    %v1015 = vunpack.c.h.b16 %v410
    %v1016 = vunpack.c.l.b16 %v411
    %v1017 = vunpack.c.h.b16 %v411
    %v1018 = vunpack.c.l.b16 %v412
    %v1019 = vunpack.c.h.b16 %v412
    %v1020 = vunpack.c.l.b16 %v413
    %v1021 = vunpack.c.h.b16 %v413
    %v1022 = vunpack.c.l.b16 %v414
    %v1023 = vunpack.c.h.b16 %v414
    %v1024 = vunpack.c.l.b16 %v415
    %v1025 = vunpack.c.h.b16 %v415
    %v1026 = vunpack.c.l.b16 %v416
    %v1027 = vunpack.c.h.b16 %v416
    %v1028 = vunpack.c.l.b16 %v417
    %v1029 = vunpack.c.h.b16 %v417
    %v1030 = vunpack.c.l.b16 %v418
    %v1031 = vunpack.c.h.b16 %v418
    %v1032 = vunpack.c.l.b16 %v419
    %v1033 = vunpack.c.h.b16 %v419
    %v1034 = vunpack.c.l.b16 %v420
    %v1035 = vunpack.c.h.b16 %v420
    %v1036 = vunpack.c.l.b16 %v421
    %v1037 = vunpack.c.h.b16 %v421
    %v1038 = vunpack.c.l.b16 %v422
    %v1039 = vunpack.c.h.b16 %v422
    %v1040 = vunpack.c.l.b16 %v423
    %v1041 = vunpack.c.h.b16 %v423
    %v1042 = vunpack.c.l.b16 %v424
    %v1043 = vunpack.c.h.b16 %v424
    %v1044 = vunpack.c.l.b16 %v425
    %v1045 = vunpack.c.h.b16 %v425
    %v1046 = vunpack.c.l.b16 %v426
    %v1047 = vunpack.c.h.b16 %v426
    %v1048 = vunpack.c.l.b16 %v427
    %v1049 = vunpack.c.h.b16 %v427
    %v1050 = vunpack.c.l.b16 %v428
    %v1051 = vunpack.c.h.b16 %v428
    %v1052 = vunpack.c.l.b16 %v429
    %v1053 = vunpack.c.h.b16 %v429
    %v1054 = vunpack.c.l.b16 %v430
    %v1055 = vunpack.c.h.b16 %v430
    %v1056 = vunpack.c.l.b16 %v431
    %v1057 = vunpack.c.h.b16 %v431
    %v1058 = vunpack.c.l.b16 %v432
    %v1059 = vunpack.c.h.b16 %v432
    %v1060 = vunpack.c.l.b16 %v433
    %v1061 = vunpack.c.h.b16 %v433
    %v1062 = vunpack.c.l.b16 %v434
    %v1063 = vunpack.c.h.b16 %v434
    %v1064 = vunpack.c.l.b16 %v435
    %v1065 = vunpack.c.h.b16 %v435
    %v1066 = vunpack.c.l.b16 %v436
    %v1067 = vunpack.c.h.b16 %v436
    %v1068 = vunpack.c.l.b16 %v437
    %v1069 = vunpack.c.h.b16 %v437
    %v1070 = vunpack.c.l.b16 %v438
    %v1071 = vunpack.c.h.b16 %v438
    %v1072 = vunpack.c.l.b16 %v439
    %v1073 = vunpack.c.h.b16 %v439
    %v1074 = vunpack.c.l.b16 %v440
    %v1075 = vunpack.c.h.b16 %v440
    %v1076 = vunpack.c.l.b16 %v441
    %v1077 = vunpack.c.h.b16 %v441
    %v1078 = vunpack.c.l.b16 %v442
    %v1079 = vunpack.c.h.b16 %v442
    %v1080 = vunpack.c.l.b16 %v443
    %v1081 = vunpack.c.h.b16 %v443
    %v1082 = vunpack.c.l.b16 %v444
    %v1083 = vunpack.c.h.b16 %v444
    %v1084 = vunpack.c.l.b16 %v445
    %v1085 = vunpack.c.h.b16 %v445
    %v1086 = vunpack.c.l.b16 %v446
    %v1087 = vunpack.c.h.b16 %v446
    %v1088 = vunpack.c.l.b16 %v447
    %v1089 = vunpack.c.h.b16 %v447
    %v1090 = vunpack.c.l.b16 %v448
    %v1091 = vunpack.c.h.b16 %v448
    %v1092 = vunpack.c.l.b16 %v449
    %v1093 = vunpack.c.h.b16 %v449
    %v1094 = vunpack.c.l.b16 %v450
    %v1095 = vunpack.c.h.b16 %v450
    %v1096 = vunpack.c.l.b16 %v451
    %v1097 = vunpack.c.h.b16 %v451
    %v1098 = vunpack.c.l.b16 %v452
    %v1099 = vunpack.c.h.b16 %v452
    %v1100 = vunpack.c.l.b16 %v453
    %v1101 = vunpack.c.h.b16 %v453
    %v1102 = vunpack.c.l.b16 %v454
    %v1103 = vunpack.c.h.b16 %v454
    %v1104 = vunpack.c.l.b16 %v455
    %v1105 = vunpack.c.h.b16 %v455
    %v1106 = vunpack.c.l.b16 %v456
    %v1107 = vunpack.c.h.b16 %v456
    %v1108 = vunpack.c.l.b16 %v457
    %v1109 = vunpack.c.h.b16 %v457
    %v1110 = vunpack.c.l.b16 %v458
    %v1111 = vunpack.c.h.b16 %v458
    %v1112 = vunpack.c.l.b16 %v459
    %v1113 = vunpack.c.h.b16 %v459
    %v1114 = vunpack.c.l.b16 %v460
    %v1115 = vunpack.c.h.b16 %v460
    %v1116 = vunpack.c.l.b16 %v461
    %v1117 = vunpack.c.h.b16 %v461
    %v1118 = vunpack.c.l.b16 %v462
    %v1119 = vunpack.c.h.b16 %v462
    %v1120 = vunpack.c.l.b16 %v463
    %v1121 = vunpack.c.h.b16 %v463
    %v1122 = vunpack.c.l.b16 %v464
    %v1123 = vunpack.c.h.b16 %v464
    %v1124 = vunpack.c.l.b16 %v465
    %v1125 = vunpack.c.h.b16 %v465
    %v1126 = vunpack.c.l.b16 %v466
    %v1127 = vunpack.c.h.b16 %v466
    %v1128 = vunpack.c.l.b16 %v467
    %v1129 = vunpack.c.h.b16 %v467
    %v1130 = vunpack.c.l.b16 %v468
    %v1131 = vunpack.c.h.b16 %v468
    %v1132 = vunpack.c.l.b16 %v469
    %v1133 = vunpack.c.h.b16 %v469
    %v1134 = vunpack.c.l.b16 %v470
    %v1135 = vunpack.c.h.b16 %v470
    %v1136 = vunpack.c.l.b16 %v471
    %v1137 = vunpack.c.h.b16 %v471
    %v1138 = vunpack.c.l.b16 %v472
    %v1139 = vunpack.c.h.b16 %v472
    %v1140 = vunpack.c.l.b16 %v473
    %v1141 = vunpack.c.h.b16 %v473
    %v1142 = vunpack.c.l.b16 %v474
    %v1143 = vunpack.c.h.b16 %v474
    %v1144 = vunpack.c.l.b16 %v475
    %v1145 = vunpack.c.h.b16 %v475
    %v1146 = vunpack.c.l.b16 %v476
    %v1147 = vunpack.c.h.b16 %v476
    %v1148 = vunpack.c.l.b16 %v477
    %v1149 = vunpack.c.h.b16 %v477
    %v1150 = vunpack.c.l.b16 %v478
    %v1151 = vunpack.c.h.b16 %v478
    %v1152 = vunpack.c.l.b16 %v479
    %v1153 = vunpack.c.h.b16 %v479
    %v1154 = vunpack.c.l.b16 %v480
    %v1155 = vunpack.c.h.b16 %v480
    %v1156 = vunpack.c.l.b16 %v481
    %v1157 = vunpack.c.h.b16 %v481
    %v1158 = vunpack.c.l.b16 %v482
    %v1159 = vunpack.c.h.b16 %v482
    %v1160 = vunpack.c.l.b16 %v483
    %v1161 = vunpack.c.h.b16 %v483
    %v1162 = vunpack.c.l.b16 %v484
    %v1163 = vunpack.c.h.b16 %v484
    %v1164 = vunpack.c.l.b16 %v485
    %v1165 = vunpack.c.h.b16 %v485
    %v1166 = vunpack.c.l.b16 %v486
    %v1167 = vunpack.c.h.b16 %v486
    %v1168 = vunpack.c.l.b16 %v487
    %v1169 = vunpack.c.h.b16 %v487
    %v1170 = vunpack.c.l.b16 %v488
    %v1171 = vunpack.c.h.b16 %v488
    %v1172 = vunpack.c.l.b16 %v489
    %v1173 = vunpack.c.h.b16 %v489
    %v1174 = vunpack.c.l.b16 %v490
    %v1175 = vunpack.c.h.b16 %v490
    %v1176 = vunpack.c.l.b16 %v491
    %v1177 = vunpack.c.h.b16 %v491
    %v1178 = vunpack.c.l.b16 %v492
    %v1179 = vunpack.c.h.b16 %v492
    %v1180 = vunpack.c.l.b16 %v493
    %v1181 = vunpack.c.h.b16 %v493
    %v1182 = vunpack.c.l.b16 %v494
    %v1183 = vunpack.c.h.b16 %v494
    %v1184 = vunpack.c.l.b16 %v495
    %v1185 = vunpack.c.h.b16 %v495
    %v1186 = vunpack.c.l.b16 %v496
    %v1187 = vunpack.c.h.b16 %v496
    %v1188 = vunpack.c.l.b16 %v497
    %v1189 = vunpack.c.h.b16 %v497
    %v1190 = vunpack.c.l.b16 %v498
    %v1191 = vunpack.c.h.b16 %v498
    %v1192 = vunpack.c.l.b16 %v499
    %v1193 = vunpack.c.h.b16 %v499
    %v1194 = vunpack.c.l.b16 %v500
    %v1195 = vunpack.c.h.b16 %v500
    %v1196 = vunpack.c.l.b16 %v501
    %v1197 = vunpack.c.h.b16 %v501
    %v1198 = vunpack.c.l.b16 %v502
    %v1199 = vunpack.c.h.b16 %v502
    %v1200 = vunpack.c.l.b16 %v503
    %v1201 = vunpack.c.h.b16 %v503
    %v1202 = vunpack.c.l.b16 %v504
    %v1203 = vunpack.c.h.b16 %v504
    %v1204 = vunpack.c.l.b16 %v505
    %v1205 = vunpack.c.h.b16 %v505
    %v1206 = vunpack.c.l.b16 %v506
    %v1207 = vunpack.c.h.b16 %v506
    %v1208 = vunpack.c.l.b16 %v507
    %v1209 = vunpack.c.h.b16 %v507
    %v1210 = vunpack.c.l.b16 %v508
    %v1211 = vunpack.c.h.b16 %v508
    %v1212 = vunpack.c.l.b16 %v509
    %v1213 = vunpack.c.h.b16 %v509
    %v1214 = vunpack.c.l.b16 %v510
    %v1215 = vunpack.c.h.b16 %v510
    %v1216 = vunpack.c.l.b16 %v511
    %v1217 = vunpack.c.h.b16 %v511
    %v1218 = vunpack.c.l.b16 %v512
    %v1219 = vunpack.c.h.b16 %v512
    %v1220 = vunpack.c.l.b16 %v513
    %v1221 = vunpack.c.h.b16 %v513
    %v1222 = vunpack.c.l.b16 %v514
    %v1223 = vunpack.c.h.b16 %v514
    %v1224 = vunpack.c.l.b16 %v515
    %v1225 = vunpack.c.h.b16 %v515
    %v1226 = vunpack.c.l.b16 %v516
    %v1227 = vunpack.c.h.b16 %v516
    %v1228 = vunpack.c.l.b16 %v517
    %v1229 = vunpack.c.h.b16 %v517
    %v1230 = vunpack.c.l.b16 %v518
    %v1231 = vunpack.c.h.b16 %v518
    %v1232 = vunpack.c.l.b16 %v519
    %v1233 = vunpack.c.h.b16 %v519
    %v1234 = vunpack.c.l.b16 %v520
    %v1235 = vunpack.c.h.b16 %v520
    %v1236 = vunpack.c.l.b16 %v521
    %v1237 = vunpack.c.h.b16 %v521
    %v1238 = vunpack.c.l.b16 %v522
    %v1239 = vunpack.c.h.b16 %v522
    %v1240 = vunpack.c.l.b16 %v523
    %v1241 = vunpack.c.h.b16 %v523
    %v1242 = vunpack.c.l.b16 %v524
    %v1243 = vunpack.c.h.b16 %v524
    %v1244 = vunpack.c.l.b16 %v525
    %v1245 = vunpack.c.h.b16 %v525
    %v1246 = vunpack.c.l.b16 %v526
    %v1247 = vunpack.c.h.b16 %v526
    %v1248 = vunpack.c.l.b16 %v527
    %v1249 = vunpack.c.h.b16 %v527
    %v1250 = vunpack.c.l.b16 %v528
    %v1251 = vunpack.c.h.b16 %v528
    %v1252 = vunpack.c.l.b16 %v529
    %v1253 = vunpack.c.h.b16 %v529
    %v1254 = vunpack.c.l.b16 %v530
    %v1255 = vunpack.c.h.b16 %v530
    %v1256 = vunpack.c.l.b16 %v531
    %v1257 = vunpack.c.h.b16 %v531
    %v1258 = vunpack.c.l.b16 %v532
    %v1259 = vunpack.c.h.b16 %v532
    %v1260 = vunpack.c.l.b16 %v533
    %v1261 = vunpack.c.h.b16 %v533
    %v1262 = vunpack.c.l.b16 %v534
    %v1263 = vunpack.c.h.b16 %v534
    %v1264 = vunpack.c.l.b16 %v535
    %v1265 = vunpack.c.h.b16 %v535
    %v1266 = vunpack.c.l.b16 %v536
    %v1267 = vunpack.c.h.b16 %v536
    %v1268 = vunpack.c.l.b16 %v537
    %v1269 = vunpack.c.h.b16 %v537
    %v1270 = vunpack.c.l.b16 %v538
    %v1271 = vunpack.c.h.b16 %v538
    %v1272 = vunpack.c.l.b16 %v539
    %v1273 = vunpack.c.h.b16 %v539
    %v1274 = vunpack.c.l.b16 %v540
    %v1275 = vunpack.c.h.b16 %v540
    %v1276 = vunpack.c.l.b16 %v541
    %v1277 = vunpack.c.h.b16 %v541
    %v1278 = vunpack.c.l.b16 %v542
    %v1279 = vunpack.c.h.b16 %v542
    %v1280 = vunpack.c.l.b16 %v543
    %v1281 = vunpack.c.h.b16 %v543
    %v1282 = vunpack.c.l.b16 %v544
    %v1283 = vunpack.c.h.b16 %v544
    %v1284 = vunpack.c.l.b16 %v545
    %v1285 = vunpack.c.h.b16 %v545
    %v1286 = vunpack.c.l.b16 %v546
    %v1287 = vunpack.c.h.b16 %v546
    %v1288 = vunpack.c.l.b16 %v547
    %v1289 = vunpack.c.h.b16 %v547
    %v1290 = vunpack.c.l.b16 %v548
    %v1291 = vunpack.c.h.b16 %v548
    %v1292 = vunpack.c.l.b16 %v549
    %v1293 = vunpack.c.h.b16 %v549
    %v1294 = vunpack.c.l.b16 %v550
    %v1295 = vunpack.c.h.b16 %v550
    %v1296 = vunpack.c.l.b16 %v551
    %v1297 = vunpack.c.h.b16 %v551
    %v1298 = vunpack.c.l.b16 %v552
    %v1299 = vunpack.c.h.b16 %v552
    %v1300 = vunpack.c.l.b16 %v553
    %v1301 = vunpack.c.h.b16 %v553
    %v1302 = vunpack.c.l.b16 %v554
    %v1303 = vunpack.c.h.b16 %v554
    %v1304 = vunpack.c.l.b16 %v555
    %v1305 = vunpack.c.h.b16 %v555
    %v1306 = vunpack.c.l.b16 %v556
    %v1307 = vunpack.c.h.b16 %v556
    %v1308 = vunpack.c.l.b16 %v557
    %v1309 = vunpack.c.h.b16 %v557
    %v1310 = vunpack.c.l.b16 %v558
    %v1311 = vunpack.c.h.b16 %v558
    %v1312 = vunpack.c.l.b16 %v559
    %v1313 = vunpack.c.h.b16 %v559
    %v1314 = vunpack.c.l.b16 %v560
    %v1315 = vunpack.c.h.b16 %v560
    %v1316 = vunpack.c.l.b16 %v561
    %v1317 = vunpack.c.h.b16 %v561
    %v1318 = vunpack.c.l.b16 %v562
    %v1319 = vunpack.c.h.b16 %v562
    %v1320 = vunpack.c.l.b16 %v563
    %v1321 = vunpack.c.h.b16 %v563
    %v1322 = vunpack.c.l.b16 %v564
    %v1323 = vunpack.c.h.b16 %v564
    %v1324 = vunpack.c.l.b16 %v565
    %v1325 = vunpack.c.h.b16 %v565
    %v1326 = vunpack.c.l.b16 %v566
    %v1327 = vunpack.c.h.b16 %v566
    %v1328 = vunpack.c.l.b16 %v567
    %v1329 = vunpack.c.h.b16 %v567
    %v1330 = vunpack.c.l.b16 %v568
    %v1331 = vunpack.c.h.b16 %v568
    %v1332 = vunpack.c.l.b16 %v569
    %v1333 = vunpack.c.h.b16 %v569
    %v1334 = vunpack.c.l.b16 %v570
    %v1335 = vunpack.c.h.b16 %v570
    %v1336 = vunpack.c.l.b16 %v571
    %v1337 = vunpack.c.h.b16 %v571
    %v1338 = vunpack.c.l.b16 %v572
    %v1339 = vunpack.c.h.b16 %v572
    %v1340 = vunpack.c.l.b16 %v573
    %v1341 = vunpack.c.h.b16 %v573
    %v1342 = vunpack.c.l.b16 %v574
    %v1343 = vunpack.c.h.b16 %v574
    %v1344 = vunpack.c.l.b16 %v575
    %v1345 = vunpack.c.h.b16 %v575
    %v1346 = vunpack.c.l.b16 %v576
    %v1347 = vunpack.c.h.b16 %v576
    %v1348 = vunpack.c.l.b16 %v577
    %v1349 = vunpack.c.h.b16 %v577
    %v1350 = vunpack.c.l.b16 %v578
    %v1351 = vunpack.c.h.b16 %v578
    %v1352 = vunpack.c.l.b16 %v579
    %v1353 = vunpack.c.h.b16 %v579
    %v1354 = vunpack.c.l.b16 %v580
    %v1355 = vunpack.c.h.b16 %v580
    %v1356 = vunpack.c.l.b16 %v581
    %v1357 = vunpack.c.h.b16 %v581
    %v1358 = vunpack.c.l.b16 %v582
    %v1359 = vunpack.c.h.b16 %v582
    %v1360 = vunpack.c.l.b16 %v583
    %v1361 = vunpack.c.h.b16 %v583
    %v1362 = vunpack.c.l.b16 %v584
    %v1363 = vunpack.c.h.b16 %v584
    %v1364 = vunpack.c.l.b16 %v585
    %v1365 = vunpack.c.h.b16 %v585
    %v1366 = vunpack.c.l.b16 %v586
    %v1367 = vunpack.c.h.b16 %v586
    %v1368 = vunpack.c.l.b16 %v587
    %v1369 = vunpack.c.h.b16 %v587
    %v1370 = vunpack.c.l.b16 %v588
    %v1371 = vunpack.c.h.b16 %v588
    %v1372 = vunpack.c.l.b16 %v589
    %v1373 = vunpack.c.h.b16 %v589
    %v1374 = vunpack.c.l.b16 %v590
    %v1375 = vunpack.c.h.b16 %v590
    %v1376 = vunpack.c.l.b16 %v591
    %v1377 = vunpack.c.h.b16 %v591
    %v1378 = vunpack.c.l.b16 %v592
    %v1379 = vunpack.c.h.b16 %v592
    %v1380 = vunpack.c.l.b16 %v593
    %v1381 = vunpack.c.h.b16 %v593
    %v1382 = vunpack.c.l.b16 %v594
    %v1383 = vunpack.c.h.b16 %v594
    %v1384 = vunpack.c.l.b16 %v595
    %v1385 = vunpack.c.h.b16 %v595
    %v1386 = vunpack.c.l.b16 %v596
    %v1387 = vunpack.c.h.b16 %v596
    %v1388 = vunpack.c.l.b16 %v597
    %v1389 = vunpack.c.h.b16 %v597
    %v1390 = vunpack.c.l.b16 %v598
    %v1391 = vunpack.c.h.b16 %v598
    %v1392 = vunpack.c.l.b16 %v599
    %v1393 = vunpack.c.h.b16 %v599
    %v1394 = vunpack.c.l.b16 %v600
    %v1395 = vunpack.c.h.b16 %v600
    %v1396 = vunpack.c.l.b16 %v601
    %v1397 = vunpack.c.h.b16 %v601
    %v1398 = vunpack.c.l.b16 %v602
    %v1399 = vunpack.c.h.b16 %v602
    %v1400 = vunpack.c.l.b16 %v603
    %v1401 = vunpack.c.h.b16 %v603
    %v1402 = vunpack.c.l.b16 %v604
    %v1403 = vunpack.c.h.b16 %v604
    %v1404 = vunpack.c.l.b16 %v605
    %v1405 = vunpack.c.h.b16 %v605
    %v1406 = vunpack.c.l.b16 %v606
    %v1407 = vunpack.c.h.b16 %v606
    %v1408 = vunpack.c.l.b16 %v607
    %v1409 = vunpack.c.h.b16 %v607
    %v1410 = vunpack.c.l.b16 %v608
    %v1411 = vunpack.c.h.b16 %v608
    %v1412 = vunpack.c.l.b16 %v609
    %v1413 = vunpack.c.h.b16 %v609
    %v1414 = vunpack.c.l.b16 %v610
    %v1415 = vunpack.c.h.b16 %v610
    %v1416 = vunpack.c.l.b16 %v611
    %v1417 = vunpack.c.h.b16 %v611
    %v1418 = vunpack.c.l.b16 %v612
    %v1419 = vunpack.c.h.b16 %v612
    %v1420 = vunpack.c.l.b16 %v613
    %v1421 = vunpack.c.h.b16 %v613
    %v1422 = vunpack.c.l.b16 %v614
    %v1423 = vunpack.c.h.b16 %v614
    %v1424 = vunpack.c.l.b16 %v615
    %v1425 = vunpack.c.h.b16 %v615
    %v1426 = vunpack.c.l.b16 %v616
    %v1427 = vunpack.c.h.b16 %v616
    %v1428 = vunpack.c.l.b16 %v617
    %v1429 = vunpack.c.h.b16 %v617
    %v1430 = vunpack.c.l.b16 %v618
    %v1431 = vunpack.c.h.b16 %v618
    %v1432 = vunpack.c.l.b16 %v619
    %v1433 = vunpack.c.h.b16 %v619
    %v1434 = vunpack.c.l.b16 %v620
    %v1435 = vunpack.c.h.b16 %v620
    %v1436 = vunpack.c.l.b16 %v621
    %v1437 = vunpack.c.h.b16 %v621
    %v1438 = vunpack.c.l.b16 %v622
    %v1439 = vunpack.c.h.b16 %v622
    %v1440 = vunpack.c.l.b16 %v623
    %v1441 = vunpack.c.h.b16 %v623
    %v1442 = vunpack.c.l.b16 %v624
    %v1443 = vunpack.c.h.b16 %v624
    %v1444 = vunpack.c.l.b16 %v625
    %v1445 = vunpack.c.h.b16 %v625
    %v1446 = vunpack.c.l.b16 %v626
    %v1447 = vunpack.c.h.b16 %v626
    %v1448 = vunpack.c.l.b16 %v627
    %v1449 = vunpack.c.h.b16 %v627
    %v1450 = vunpack.c.l.b16 %v628
    %v1451 = vunpack.c.h.b16 %v628
    %v1452 = vunpack.c.l.b16 %v629
    %v1453 = vunpack.c.h.b16 %v629
    %v1454 = vunpack.c.l.b16 %v630
    %v1455 = vunpack.c.h.b16 %v630
    %v1456 = vunpack.c.l.b16 %v631
    %v1457 = vunpack.c.h.b16 %v631
    %v1458 = vunpack.c.l.b16 %v632
    %v1459 = vunpack.c.h.b16 %v632
    %v1460 = vunpack.c.l.b16 %v633
    %v1461 = vunpack.c.h.b16 %v633
    %v1462 = vunpack.c.l.b16 %v634
    %v1463 = vunpack.c.h.b16 %v634
    %v1464 = vunpack.c.l.b16 %v635
    %v1465 = vunpack.c.h.b16 %v635
    %v1466 = vpack.c.b16 %v958, %v954
    %v1467 = vpack.c.b16 %v959, %v955
    %v1468 = vpack.c.b16 %v960, %v956
    %v1469 = vpack.c.b16 %v961, %v957
    %v1470 = vpack.c.b16 %v966, %v962
    %v1471 = vpack.c.b16 %v967, %v963
    %v1472 = vpack.c.b16 %v968, %v964
    %v1473 = vpack.c.b16 %v969, %v965
    %v1474 = vpack.c.b16 %v974, %v970
    %v1475 = vpack.c.b16 %v975, %v971
    %v1476 = vpack.c.b16 %v976, %v972
    %v1477 = vpack.c.b16 %v977, %v973
    %v1478 = vpack.c.b16 %v982, %v978
    %v1479 = vpack.c.b16 %v983, %v979
    %v1480 = vpack.c.b16 %v984, %v980
    %v1481 = vpack.c.b16 %v985, %v981
    %v1482 = vpack.c.b16 %v990, %v986
    %v1483 = vpack.c.b16 %v991, %v987
    %v1484 = vpack.c.b16 %v992, %v988
    %v1485 = vpack.c.b16 %v993, %v989
    %v1486 = vpack.c.b16 %v998, %v994
    %v1487 = vpack.c.b16 %v999, %v995
    %v1488 = vpack.c.b16 %v1000, %v996
    %v1489 = vpack.c.b16 %v1001, %v997
    %v1490 = vpack.c.b16 %v1006, %v1002
    %v1491 = vpack.c.b16 %v1007, %v1003
    %v1492 = vpack.c.b16 %v1008, %v1004
    %v1493 = vpack.c.b16 %v1009, %v1005
    %v1494 = vpack.c.b16 %v1014, %v1010
    %v1495 = vpack.c.b16 %v1015, %v1011
    %v1496 = vpack.c.b16 %v1016, %v1012
    %v1497 = vpack.c.b16 %v1017, %v1013
    %v1498 = vpack.c.b16 %v1022, %v1018
    %v1499 = vpack.c.b16 %v1023, %v1019
    %v1500 = vpack.c.b16 %v1024, %v1020
    %v1501 = vpack.c.b16 %v1025, %v1021
    %v1502 = vpack.c.b16 %v1030, %v1026
    %v1503 = vpack.c.b16 %v1031, %v1027
    %v1504 = vpack.c.b16 %v1032, %v1028
    %v1505 = vpack.c.b16 %v1033, %v1029
    %v1506 = vpack.c.b16 %v1038, %v1034
    %v1507 = vpack.c.b16 %v1039, %v1035
    %v1508 = vpack.c.b16 %v1040, %v1036
    %v1509 = vpack.c.b16 %v1041, %v1037
    %v1510 = vpack.c.b16 %v1046, %v1042
    %v1511 = vpack.c.b16 %v1047, %v1043
    %v1512 = vpack.c.b16 %v1048, %v1044
    %v1513 = vpack.c.b16 %v1049, %v1045
    %v1514 = vpack.c.b16 %v1054, %v1050
    %v1515 = vpack.c.b16 %v1055, %v1051
    %v1516 = vpack.c.b16 %v1056, %v1052
    %v1517 = vpack.c.b16 %v1057, %v1053
    %v1518 = vpack.c.b16 %v1062, %v1058
    %v1519 = vpack.c.b16 %v1063, %v1059
    %v1520 = vpack.c.b16 %v1064, %v1060
    %v1521 = vpack.c.b16 %v1065, %v1061
    %v1522 = vpack.c.b16 %v1070, %v1066
    %v1523 = vpack.c.b16 %v1071, %v1067
    %v1524 = vpack.c.b16 %v1072, %v1068
    %v1525 = vpack.c.b16 %v1073, %v1069
    %v1526 = vpack.c.b16 %v1078, %v1074
    %v1527 = vpack.c.b16 %v1079, %v1075
    %v1528 = vpack.c.b16 %v1080, %v1076
    %v1529 = vpack.c.b16 %v1081, %v1077
    %v1530 = vpack.c.b16 %v1086, %v1082
    %v1531 = vpack.c.b16 %v1087, %v1083
    %v1532 = vpack.c.b16 %v1088, %v1084
    %v1533 = vpack.c.b16 %v1089, %v1085
    %v1534 = vpack.c.b16 %v1094, %v1090
    %v1535 = vpack.c.b16 %v1095, %v1091
    %v1536 = vpack.c.b16 %v1096, %v1092
    %v1537 = vpack.c.b16 %v1097, %v1093
    %v1538 = vpack.c.b16 %v1102, %v1098
    %v1539 = vpack.c.b16 %v1103, %v1099
    %v1540 = vpack.c.b16 %v1104, %v1100
    %v1541 = vpack.c.b16 %v1105, %v1101
    %v1542 = vpack.c.b16 %v1110, %v1106
    %v1543 = vpack.c.b16 %v1111, %v1107
    %v1544 = vpack.c.b16 %v1112, %v1108
    %v1545 = vpack.c.b16 %v1113, %v1109
    %v1546 = vpack.c.b16 %v1118, %v1114
    %v1547 = vpack.c.b16 %v1119, %v1115
    %v1548 = vpack.c.b16 %v1120, %v1116
    %v1549 = vpack.c.b16 %v1121, %v1117
    %v1550 = vpack.c.b16 %v1126, %v1122
    %v1551 = vpack.c.b16 %v1127, %v1123
    %v1552 = vpack.c.b16 %v1128, %v1124
    %v1553 = vpack.c.b16 %v1129, %v1125
    %v1554 = vpack.c.b16 %v1134, %v1130
    %v1555 = vpack.c.b16 %v1135, %v1131
    %v1556 = vpack.c.b16 %v1136, %v1132
    %v1557 = vpack.c.b16 %v1137, %v1133
    %v1558 = vpack.c.b16 %v1142, %v1138
    %v1559 = vpack.c.b16 %v1143, %v1139
    %v1560 = vpack.c.b16 %v1144, %v1140
    %v1561 = vpack.c.b16 %v1145, %v1141
    %v1562 = vpack.c.b16 %v1150, %v1146
    %v1563 = vpack.c.b16 %v1151, %v1147
    %v1564 = vpack.c.b16 %v1152, %v1148
    %v1565 = vpack.c.b16 %v1153, %v1149
    %v1566 = vpack.c.b16 %v1158, %v1154
    %v1567 = vpack.c.b16 %v1159, %v1155
    %v1568 = vpack.c.b16 %v1160, %v1156
    %v1569 = vpack.c.b16 %v1161, %v1157
    %v1570 = vpack.c.b16 %v1166, %v1162
    %v1571 = vpack.c.b16 %v1167, %v1163
    %v1572 = vpack.c.b16 %v1168, %v1164
    %v1573 = vpack.c.b16 %v1169, %v1165
    %v1574 = vpack.c.b16 %v1174, %v1170
    %v1575 = vpack.c.b16 %v1175, %v1171
    %v1576 = vpack.c.b16 %v1176, %v1172
    %v1577 = vpack.c.b16 %v1177, %v1173
    %v1578 = vpack.c.b16 %v1182, %v1178
    %v1579 = vpack.c.b16 %v1183, %v1179
    %v1580 = vpack.c.b16 %v1184, %v1180
    %v1581 = vpack.c.b16 %v1185, %v1181
    %v1582 = vpack.c.b16 %v1190, %v1186
    %v1583 = vpack.c.b16 %v1191, %v1187
    %v1584 = vpack.c.b16 %v1192, %v1188
    %v1585 = vpack.c.b16 %v1193, %v1189
    %v1586 = vpack.c.b16 %v1198, %v1194
    %v1587 = vpack.c.b16 %v1199, %v1195
    %v1588 = vpack.c.b16 %v1200, %v1196
    %v1589 = vpack.c.b16 %v1201, %v1197
    %v1590 = vpack.c.b16 %v1206, %v1202
    %v1591 = vpack.c.b16 %v1207, %v1203
    %v1592 = vpack.c.b16 %v1208, %v1204
    %v1593 = vpack.c.b16 %v1209, %v1205
    %v1594 = vpack.c.b16 %v1214, %v1210
    %v1595 = vpack.c.b16 %v1215, %v1211
    %v1596 = vpack.c.b16 %v1216, %v1212
    %v1597 = vpack.c.b16 %v1217, %v1213
    %v1598 = vpack.c.b16 %v1222, %v1218
    %v1599 = vpack.c.b16 %v1223, %v1219
    %v1600 = vpack.c.b16 %v1224, %v1220
    %v1601 = vpack.c.b16 %v1225, %v1221
    %v1602 = vpack.c.b16 %v1230, %v1226
    %v1603 = vpack.c.b16 %v1231, %v1227
    %v1604 = vpack.c.b16 %v1232, %v1228
    %v1605 = vpack.c.b16 %v1233, %v1229
    %v1606 = vpack.c.b16 %v1238, %v1234
    %v1607 = vpack.c.b16 %v1239, %v1235
    %v1608 = vpack.c.b16 %v1240, %v1236
    %v1609 = vpack.c.b16 %v1241, %v1237
    %v1610 = vpack.c.b16 %v1246, %v1242
    %v1611 = vpack.c.b16 %v1247, %v1243
    %v1612 = vpack.c.b16 %v1248, %v1244
    %v1613 = vpack.c.b16 %v1249, %v1245
    %v1614 = vpack.c.b16 %v1254, %v1250
    %v1615 = vpack.c.b16 %v1255, %v1251
    %v1616 = vpack.c.b16 %v1256, %v1252
    %v1617 = vpack.c.b16 %v1257, %v1253
    %v1618 = vpack.c.b16 %v1262, %v1258
    %v1619 = vpack.c.b16 %v1263, %v1259
    %v1620 = vpack.c.b16 %v1264, %v1260
    %v1621 = vpack.c.b16 %v1265, %v1261
    %v1622 = vpack.c.b16 %v1270, %v1266
    %v1623 = vpack.c.b16 %v1271, %v1267
    %v1624 = vpack.c.b16 %v1272, %v1268
    %v1625 = vpack.c.b16 %v1273, %v1269
    %v1626 = vpack.c.b16 %v1278, %v1274
    %v1627 = vpack.c.b16 %v1279, %v1275
    %v1628 = vpack.c.b16 %v1280, %v1276
    %v1629 = vpack.c.b16 %v1281, %v1277
    %v1630 = vpack.c.b16 %v1286, %v1282
    %v1631 = vpack.c.b16 %v1287, %v1283
    %v1632 = vpack.c.b16 %v1288, %v1284
    %v1633 = vpack.c.b16 %v1289, %v1285
    %v1634 = vpack.c.b16 %v1294, %v1290
    %v1635 = vpack.c.b16 %v1295, %v1291
    %v1636 = vpack.c.b16 %v1296, %v1292
    %v1637 = vpack.c.b16 %v1297, %v1293
    %v1638 = vpack.c.b16 %v1302, %v1298
    %v1639 = vpack.c.b16 %v1303, %v1299
    %v1640 = vpack.c.b16 %v1304, %v1300
    %v1641 = vpack.c.b16 %v1305, %v1301
    %v1642 = vpack.c.b16 %v1310, %v1306
    %v1643 = vpack.c.b16 %v1311, %v1307
    %v1644 = vpack.c.b16 %v1312, %v1308
    %v1645 = vpack.c.b16 %v1313, %v1309
    %v1646 = vpack.c.b16 %v1318, %v1314
    %v1647 = vpack.c.b16 %v1319, %v1315
    %v1648 = vpack.c.b16 %v1320, %v1316
    %v1649 = vpack.c.b16 %v1321, %v1317
    %v1650 = vpack.c.b16 %v1326, %v1322
    %v1651 = vpack.c.b16 %v1327, %v1323
    %v1652 = vpack.c.b16 %v1328, %v1324
    %v1653 = vpack.c.b16 %v1329, %v1325
    %v1654 = vpack.c.b16 %v1334, %v1330
    %v1655 = vpack.c.b16 %v1335, %v1331
    %v1656 = vpack.c.b16 %v1336, %v1332
    %v1657 = vpack.c.b16 %v1337, %v1333
    %v1658 = vpack.c.b16 %v1342, %v1338
    %v1659 = vpack.c.b16 %v1343, %v1339
    %v1660 = vpack.c.b16 %v1344, %v1340
    %v1661 = vpack.c.b16 %v1345, %v1341
    %v1662 = vpack.c.b16 %v1350, %v1346
    %v1663 = vpack.c.b16 %v1351, %v1347
    %v1664 = vpack.c.b16 %v1352, %v1348
    %v1665 = vpack.c.b16 %v1353, %v1349
    %v1666 = vpack.c.b16 %v1358, %v1354
    %v1667 = vpack.c.b16 %v1359, %v1355
    %v1668 = vpack.c.b16 %v1360, %v1356
    %v1669 = vpack.c.b16 %v1361, %v1357
    %v1670 = vpack.c.b16 %v1366, %v1362
    %v1671 = vpack.c.b16 %v1367, %v1363
    %v1672 = vpack.c.b16 %v1368, %v1364
    %v1673 = vpack.c.b16 %v1369, %v1365
    %v1674 = vpack.c.b16 %v1374, %v1370
    %v1675 = vpack.c.b16 %v1375, %v1371
    %v1676 = vpack.c.b16 %v1376, %v1372
    %v1677 = vpack.c.b16 %v1377, %v1373
    %v1678 = vpack.c.b16 %v1382, %v1378
    %v1679 = vpack.c.b16 %v1383, %v1379
    %v1680 = vpack.c.b16 %v1384, %v1380
    %v1681 = vpack.c.b16 %v1385, %v1381
    %v1682 = vpack.c.b16 %v1390, %v1386
    %v1683 = vpack.c.b16 %v1391, %v1387
    %v1684 = vpack.c.b16 %v1392, %v1388
    %v1685 = vpack.c.b16 %v1393, %v1389
    %v1686 = vpack.c.b16 %v1398, %v1394
    %v1687 = vpack.c.b16 %v1399, %v1395
    %v1688 = vpack.c.b16 %v1400, %v1396
    %v1689 = vpack.c.b16 %v1401, %v1397
    %v1690 = vpack.c.b16 %v1406, %v1402
    %v1691 = vpack.c.b16 %v1407, %v1403
    %v1692 = vpack.c.b16 %v1408, %v1404
    %v1693 = vpack.c.b16 %v1409, %v1405
    %v1694 = vpack.c.b16 %v1414, %v1410
    %v1695 = vpack.c.b16 %v1415, %v1411
    %v1696 = vpack.c.b16 %v1416, %v1412
    %v1697 = vpack.c.b16 %v1417, %v1413
    %v1698 = vpack.c.b16 %v1422, %v1418
    %v1699 = vpack.c.b16 %v1423, %v1419
    %v1700 = vpack.c.b16 %v1424, %v1420
    %v1701 = vpack.c.b16 %v1425, %v1421
    %v1702 = vpack.c.b16 %v1430, %v1426
    %v1703 = vpack.c.b16 %v1431, %v1427
    %v1704 = vpack.c.b16 %v1432, %v1428
    %v1705 = vpack.c.b16 %v1433, %v1429
    %v1706 = vpack.c.b16 %v1438, %v1434
    %v1707 = vpack.c.b16 %v1439, %v1435
    %v1708 = vpack.c.b16 %v1440, %v1436
    %v1709 = vpack.c.b16 %v1441, %v1437
    %v1710 = vpack.c.b16 %v1446, %v1442
    %v1711 = vpack.c.b16 %v1447, %v1443
    %v1712 = vpack.c.b16 %v1448, %v1444
    %v1713 = vpack.c.b16 %v1449, %v1445
    %v1714 = vpack.c.b16 %v1454, %v1450
    %v1715 = vpack.c.b16 %v1455, %v1451
    %v1716 = vpack.c.b16 %v1456, %v1452
    %v1717 = vpack.c.b16 %v1457, %v1453
    %v1718 = vpack.c.b16 %v1462, %v1458
    %v1719 = vpack.c.b16 %v1463, %v1459
    %v1720 = vpack.c.b16 %v1464, %v1460
    %v1721 = vpack.c.b16 %v1465, %v1461
    %1978 = vmatprep.subr.bf16.mxu0 %v1467
    %1979 = vmatpush1.bf16.msra.mxu0 %v1466
    %1980 = vmatprep.subr.bf16.mxu0 %v1471
    %1981 = vmatpush1.bf16.msra.mxu0 %v1470
    %1982 = vmatprep.subr.bf16.mxu0 %v1475
    %1983 = vmatpush1.bf16.msra.mxu0 %v1474
    %1984 = vmatprep.subr.bf16.mxu0 %v1479
    %1985 = vmatpush1.bf16.msra.mxu0 %v1478
    %1986 = vmatprep.subr.bf16.mxu0 %v1483
    %1987 = vmatpush1.bf16.msra.mxu0 %v1482
    %1988 = vmatprep.subr.bf16.mxu0 %v1487
    %1989 = vmatpush1.bf16.msra.mxu0 %v1486
    %1990 = vmatprep.subr.bf16.mxu0 %v1491
    %1991 = vmatpush1.bf16.msra.mxu0 %v1490
    %1992 = vmatprep.subr.bf16.mxu0 %v1495
    %1993 = vmatpush1.bf16.msra.mxu0 %v1494
    %1994 = vmatprep.subr.bf16.mxu0 %v1499
    %1995 = vmatpush1.bf16.msra.mxu0 %v1498
    %1996 = vmatprep.subr.bf16.mxu0 %v1503
    %1997 = vmatpush1.bf16.msra.mxu0 %v1502
    %1998 = vmatprep.subr.bf16.mxu0 %v1507
    %1999 = vmatpush1.bf16.msra.mxu0 %v1506
    %2000 = vmatprep.subr.bf16.mxu0 %v1511
    %2001 = vmatpush1.bf16.msra.mxu0 %v1510
    %2002 = vmatprep.subr.bf16.mxu0 %v1515
    %2003 = vmatpush1.bf16.msra.mxu0 %v1514
    %2004 = vmatprep.subr.bf16.mxu0 %v1519
    %2005 = vmatpush1.bf16.msra.mxu0 %v1518
    %2006 = vmatprep.subr.bf16.mxu0 %v1523
    %2007 = vmatpush1.bf16.msra.mxu0 %v1522
    %2008 = vmatprep.subr.bf16.mxu0 %v1527
    %2009 = vmatpush1.bf16.msra.mxu0 %v1526
    %2010 = vmatprep.mubr.bf16.mxu0 %v683
    %2011 = vmatmul.mubr.bf16.gmra.mrb[0].mxu0 %v682
    %v2012 = vpop.f32.mrb[0].mxu0
    %v2013 = vadd.f32 %v641, %v2012
    %v2014 = vpop.f32.mrb[0].mxu0
    %v2015 = vadd.f32 %v645, %v2014
    %v2016 = vpop.f32.mrb[0].mxu0
    %v2017 = vadd.f32 %v641, %v2016
    %v2018 = vpop.f32.mrb[0].mxu0
    %v2019 = vadd.f32 %v645, %v2018
    %2020 = vdwg.mxu0
    %2021 = vmatprep.subr.bf16.mxu0 %v1531
    %2022 = vmatpush1.bf16.msra.mxu0 %v1530
    %2023 = vmatprep.subr.bf16.mxu0 %v1535
    %2024 = vmatpush1.bf16.msra.mxu0 %v1534
    %2025 = vmatprep.subr.bf16.mxu0 %v1539
    %2026 = vmatpush1.bf16.msra.mxu0 %v1538
    %2027 = vmatprep.subr.bf16.mxu0 %v1543
    %2028 = vmatpush1.bf16.msra.mxu0 %v1542
    %2029 = vmatprep.subr.bf16.mxu0 %v1547
    %2030 = vmatpush1.bf16.msra.mxu0 %v1546
    %2031 = vmatprep.subr.bf16.mxu0 %v1551
    %2032 = vmatpush1.bf16.msra.mxu0 %v1550
    %2033 = vmatprep.subr.bf16.mxu0 %v1555
    %2034 = vmatpush1.bf16.msra.mxu0 %v1554
    %2035 = vmatprep.subr.bf16.mxu0 %v1559
    %2036 = vmatpush1.bf16.msra.mxu0 %v1558
    %2037 = vmatprep.subr.bf16.mxu0 %v1563
    %2038 = vmatpush1.bf16.msra.mxu0 %v1562
    %2039 = vmatprep.subr.bf16.mxu0 %v1567
    %2040 = vmatpush1.bf16.msra.mxu0 %v1566
    %2041 = vmatprep.subr.bf16.mxu0 %v1571
    %2042 = vmatpush1.bf16.msra.mxu0 %v1570
    %2043 = vmatprep.subr.bf16.mxu0 %v1575
    %2044 = vmatpush1.bf16.msra.mxu0 %v1574
    %2045 = vmatprep.subr.bf16.mxu0 %v1579
    %2046 = vmatpush1.bf16.msra.mxu0 %v1578
    %2047 = vmatprep.subr.bf16.mxu0 %v1583
    %2048 = vmatpush1.bf16.msra.mxu0 %v1582
    %2049 = vmatprep.subr.bf16.mxu0 %v1587
    %2050 = vmatpush1.bf16.msra.mxu0 %v1586
    %2051 = vmatprep.subr.bf16.mxu0 %v1591
    %2052 = vmatpush1.bf16.msra.mxu0 %v1590
    %2053 = vmatprep.mubr.bf16.mxu0 %v685
    %2054 = vmatmul.mubr.bf16.gmra.mrb[0].mxu0 %v684
    %v2055 = vpop.f32.mrb[0].mxu0
    %v2056 = vadd.f32 %v2013, %v2055
    %v2057 = vpop.f32.mrb[0].mxu0
    %v2058 = vadd.f32 %v2015, %v2057
    %v2059 = vpop.f32.mrb[0].mxu0
    %v2060 = vadd.f32 %v2017, %v2059
    %v2061 = vpop.f32.mrb[0].mxu0
    %v2062 = vadd.f32 %v2019, %v2061
    %2063 = vdwg.mxu0
    %2064 = vmatprep.subr.bf16.mxu0 %v1595
    %2065 = vmatpush1.bf16.msra.mxu0 %v1594
    %2066 = vmatprep.subr.bf16.mxu0 %v1599
    %2067 = vmatpush1.bf16.msra.mxu0 %v1598
    %2068 = vmatprep.subr.bf16.mxu0 %v1603
    %2069 = vmatpush1.bf16.msra.mxu0 %v1602
    %2070 = vmatprep.subr.bf16.mxu0 %v1607
    %2071 = vmatpush1.bf16.msra.mxu0 %v1606
    %2072 = vmatprep.subr.bf16.mxu0 %v1611
    %2073 = vmatpush1.bf16.msra.mxu0 %v1610
    %2074 = vmatprep.subr.bf16.mxu0 %v1615
    %2075 = vmatpush1.bf16.msra.mxu0 %v1614
    %2076 = vmatprep.subr.bf16.mxu0 %v1619
    %2077 = vmatpush1.bf16.msra.mxu0 %v1618
    %2078 = vmatprep.subr.bf16.mxu0 %v1623
    %2079 = vmatpush1.bf16.msra.mxu0 %v1622
    %2080 = vmatprep.subr.bf16.mxu0 %v1627
    %2081 = vmatpush1.bf16.msra.mxu0 %v1626
    %2082 = vmatprep.subr.bf16.mxu0 %v1631
    %2083 = vmatpush1.bf16.msra.mxu0 %v1630
    %2084 = vmatprep.subr.bf16.mxu0 %v1635
    %2085 = vmatpush1.bf16.msra.mxu0 %v1634
    %2086 = vmatprep.subr.bf16.mxu0 %v1639
    %2087 = vmatpush1.bf16.msra.mxu0 %v1638
    %2088 = vmatprep.subr.bf16.mxu0 %v1643
    %2089 = vmatpush1.bf16.msra.mxu0 %v1642
    %2090 = vmatprep.subr.bf16.mxu0 %v1647
    %2091 = vmatpush1.bf16.msra.mxu0 %v1646
    %2092 = vmatprep.subr.bf16.mxu0 %v1651
    %2093 = vmatpush1.bf16.msra.mxu0 %v1650
    %2094 = vmatprep.subr.bf16.mxu0 %v1655
    %2095 = vmatpush1.bf16.msra.mxu0 %v1654
    %2096 = vmatprep.mubr.bf16.mxu0 %v687
    %2097 = vmatmul.mubr.bf16.gmra.mrb[0].mxu0 %v686
    %v2098 = vpop.f32.mrb[0].mxu0
    %v2099 = vadd.f32 %v2056, %v2098
    %v2100 = vpop.f32.mrb[0].mxu0
    %v2101 = vadd.f32 %v2058, %v2100
    %v2102 = vpop.f32.mrb[0].mxu0
    %v2103 = vadd.f32 %v2060, %v2102
    %v2104 = vpop.f32.mrb[0].mxu0
    %v2105 = vadd.f32 %v2062, %v2104
    %2106 = vdwg.mxu0
    %2107 = vmatprep.subr.bf16.mxu0 %v1659
    %2108 = vmatpush1.bf16.msra.mxu0 %v1658
    %2109 = vmatprep.subr.bf16.mxu0 %v1663
    %2110 = vmatpush1.bf16.msra.mxu0 %v1662
    %2111 = vmatprep.subr.bf16.mxu0 %v1667
    %2112 = vmatpush1.bf16.msra.mxu0 %v1666
    %2113 = vmatprep.subr.bf16.mxu0 %v1671
    %2114 = vmatpush1.bf16.msra.mxu0 %v1670
    %2115 = vmatprep.subr.bf16.mxu0 %v1675
    %2116 = vmatpush1.bf16.msra.mxu0 %v1674
    %2117 = vmatprep.subr.bf16.mxu0 %v1679
    %2118 = vmatpush1.bf16.msra.mxu0 %v1678
    %2119 = vmatprep.subr.bf16.mxu0 %v1683
    %2120 = vmatpush1.bf16.msra.mxu0 %v1682
    %2121 = vmatprep.subr.bf16.mxu0 %v1687
    %2122 = vmatpush1.bf16.msra.mxu0 %v1686
    %2123 = vmatprep.subr.bf16.mxu0 %v1691
    %2124 = vmatpush1.bf16.msra.mxu0 %v1690
    %2125 = vmatprep.subr.bf16.mxu0 %v1695
    %2126 = vmatpush1.bf16.msra.mxu0 %v1694
    %2127 = vmatprep.subr.bf16.mxu0 %v1699
    %2128 = vmatpush1.bf16.msra.mxu0 %v1698
    %2129 = vmatprep.subr.bf16.mxu0 %v1703
    %2130 = vmatpush1.bf16.msra.mxu0 %v1702
    %2131 = vmatprep.subr.bf16.mxu0 %v1707
    %2132 = vmatpush1.bf16.msra.mxu0 %v1706
    %2133 = vmatprep.subr.bf16.mxu0 %v1711
    %2134 = vmatpush1.bf16.msra.mxu0 %v1710
    %2135 = vmatprep.subr.bf16.mxu0 %v1715
    %2136 = vmatpush1.bf16.msra.mxu0 %v1714
    %2137 = vmatprep.subr.bf16.mxu0 %v1719
    %2138 = vmatpush1.bf16.msra.mxu0 %v1718
    %2139 = vmatprep.mubr.bf16.mxu0 %v689
    %2140 = vmatmul.mubr.bf16.gmra.mrb[0].mxu0 %v688
    %v2141 = vpop.f32.mrb[0].mxu0
    %v2142 = vadd.f32 %v2099, %v2141
    %v2143 = vpop.f32.mrb[0].mxu0
    %v2144 = vadd.f32 %v2101, %v2143
    %v2145 = vpop.f32.mrb[0].mxu0
    %v2146 = vadd.f32 %v2103, %v2145
    %v2147 = vpop.f32.mrb[0].mxu0
    %v2148 = vadd.f32 %v2105, %v2147
    %2149 = vdwg.mxu0
    %2150 = vmatprep.subr.bf16.mxu0 %v1469
    %2151 = vmatpush1.bf16.msra.mxu0 %v1468
    %2152 = vmatprep.subr.bf16.mxu0 %v1473
    %2153 = vmatpush1.bf16.msra.mxu0 %v1472
    %2154 = vmatprep.subr.bf16.mxu0 %v1477
    %2155 = vmatpush1.bf16.msra.mxu0 %v1476
    %2156 = vmatprep.subr.bf16.mxu0 %v1481
    %2157 = vmatpush1.bf16.msra.mxu0 %v1480
    %2158 = vmatprep.subr.bf16.mxu0 %v1485
    %2159 = vmatpush1.bf16.msra.mxu0 %v1484
    %2160 = vmatprep.subr.bf16.mxu0 %v1489
    %2161 = vmatpush1.bf16.msra.mxu0 %v1488
    %2162 = vmatprep.subr.bf16.mxu0 %v1493
    %2163 = vmatpush1.bf16.msra.mxu0 %v1492
    %2164 = vmatprep.subr.bf16.mxu0 %v1497
    %2165 = vmatpush1.bf16.msra.mxu0 %v1496
    %2166 = vmatprep.subr.bf16.mxu0 %v1501
    %2167 = vmatpush1.bf16.msra.mxu0 %v1500
    %2168 = vmatprep.subr.bf16.mxu0 %v1505
    %2169 = vmatpush1.bf16.msra.mxu0 %v1504
    %2170 = vmatprep.subr.bf16.mxu0 %v1509
    %2171 = vmatpush1.bf16.msra.mxu0 %v1508
    %2172 = vmatprep.subr.bf16.mxu0 %v1513
    %2173 = vmatpush1.bf16.msra.mxu0 %v1512
    %2174 = vmatprep.subr.bf16.mxu0 %v1517
    %2175 = vmatpush1.bf16.msra.mxu0 %v1516
    %2176 = vmatprep.subr.bf16.mxu0 %v1521
    %2177 = vmatpush1.bf16.msra.mxu0 %v1520
    %2178 = vmatprep.subr.bf16.mxu0 %v1525
    %2179 = vmatpush1.bf16.msra.mxu0 %v1524
    %2180 = vmatprep.subr.bf16.mxu0 %v1529
    %2181 = vmatpush1.bf16.msra.mxu0 %v1528
    %2182 = vmatprep.mubr.bf16.mxu0 %v683
    %2183 = vmatmul.mubr.bf16.gmra.mrb[0].mxu0 %v682
    %v2184 = vpop.f32.mrb[0].mxu0
    %v2185 = vadd.f32 %v649, %v2184
    %v2186 = vpop.f32.mrb[0].mxu0
    %v2187 = vadd.f32 %v653, %v2186
    %v2188 = vpop.f32.mrb[0].mxu0
    %v2189 = vadd.f32 %v649, %v2188
    %v2190 = vpop.f32.mrb[0].mxu0
    %v2191 = vadd.f32 %v653, %v2190
    %2192 = vdwg.mxu0
    %2193 = vmatprep.subr.bf16.mxu0 %v1533
    %2194 = vmatpush1.bf16.msra.mxu0 %v1532
    %2195 = vmatprep.subr.bf16.mxu0 %v1537
    %2196 = vmatpush1.bf16.msra.mxu0 %v1536
    %2197 = vmatprep.subr.bf16.mxu0 %v1541
    %2198 = vmatpush1.bf16.msra.mxu0 %v1540
    %2199 = vmatprep.subr.bf16.mxu0 %v1545
    %2200 = vmatpush1.bf16.msra.mxu0 %v1544
    %2201 = vmatprep.subr.bf16.mxu0 %v1549
    %2202 = vmatpush1.bf16.msra.mxu0 %v1548
    %2203 = vmatprep.subr.bf16.mxu0 %v1553
    %2204 = vmatpush1.bf16.msra.mxu0 %v1552
    %2205 = vmatprep.subr.bf16.mxu0 %v1557
    %2206 = vmatpush1.bf16.msra.mxu0 %v1556
    %2207 = vmatprep.subr.bf16.mxu0 %v1561
    %2208 = vmatpush1.bf16.msra.mxu0 %v1560
    %2209 = vmatprep.subr.bf16.mxu0 %v1565
    %2210 = vmatpush1.bf16.msra.mxu0 %v1564
    %2211 = vmatprep.subr.bf16.mxu0 %v1569
    %2212 = vmatpush1.bf16.msra.mxu0 %v1568
    %2213 = vmatprep.subr.bf16.mxu0 %v1573
    %2214 = vmatpush1.bf16.msra.mxu0 %v1572
    %2215 = vmatprep.subr.bf16.mxu0 %v1577
    %2216 = vmatpush1.bf16.msra.mxu0 %v1576
    %2217 = vmatprep.subr.bf16.mxu0 %v1581
    %2218 = vmatpush1.bf16.msra.mxu0 %v1580
    %2219 = vmatprep.subr.bf16.mxu0 %v1585
    %2220 = vmatpush1.bf16.msra.mxu0 %v1584
    %2221 = vmatprep.subr.bf16.mxu0 %v1589
    %2222 = vmatpush1.bf16.msra.mxu0 %v1588
    %2223 = vmatprep.subr.bf16.mxu0 %v1593
    %2224 = vmatpush1.bf16.msra.mxu0 %v1592
    %2225 = vmatprep.mubr.bf16.mxu0 %v685
    %2226 = vmatmul.mubr.bf16.gmra.mrb[0].mxu0 %v684
    %v2227 = vpop.f32.mrb[0].mxu0
    %v2228 = vadd.f32 %v2185, %v2227
    %v2229 = vpop.f32.mrb[0].mxu0
    %v2230 = vadd.f32 %v2187, %v2229
    %v2231 = vpop.f32.mrb[0].mxu0
    %v2232 = vadd.f32 %v2189, %v2231
    %v2233 = vpop.f32.mrb[0].mxu0
    %v2234 = vadd.f32 %v2191, %v2233
    %2235 = vdwg.mxu0
    %2236 = vmatprep.subr.bf16.mxu0 %v1597
    %2237 = vmatpush1.bf16.msra.mxu0 %v1596
    %2238 = vmatprep.subr.bf16.mxu0 %v1601
    %2239 = vmatpush1.bf16.msra.mxu0 %v1600
    %2240 = vmatprep.subr.bf16.mxu0 %v1605
    %2241 = vmatpush1.bf16.msra.mxu0 %v1604
    %2242 = vmatprep.subr.bf16.mxu0 %v1609
    %2243 = vmatpush1.bf16.msra.mxu0 %v1608
    %2244 = vmatprep.subr.bf16.mxu0 %v1613
    %2245 = vmatpush1.bf16.msra.mxu0 %v1612
    %2246 = vmatprep.subr.bf16.mxu0 %v1617
    %2247 = vmatpush1.bf16.msra.mxu0 %v1616
    %2248 = vmatprep.subr.bf16.mxu0 %v1621
    %2249 = vmatpush1.bf16.msra.mxu0 %v1620
    %2250 = vmatprep.subr.bf16.mxu0 %v1625
    %2251 = vmatpush1.bf16.msra.mxu0 %v1624
    %2252 = vmatprep.subr.bf16.mxu0 %v1629
    %2253 = vmatpush1.bf16.msra.mxu0 %v1628
    %2254 = vmatprep.subr.bf16.mxu0 %v1633
    %2255 = vmatpush1.bf16.msra.mxu0 %v1632
    %2256 = vmatprep.subr.bf16.mxu0 %v1637
    %2257 = vmatpush1.bf16.msra.mxu0 %v1636
    %2258 = vmatprep.subr.bf16.mxu0 %v1641
    %2259 = vmatpush1.bf16.msra.mxu0 %v1640
    %2260 = vmatprep.subr.bf16.mxu0 %v1645
    %2261 = vmatpush1.bf16.msra.mxu0 %v1644
    %2262 = vmatprep.subr.bf16.mxu0 %v1649
    %2263 = vmatpush1.bf16.msra.mxu0 %v1648
    %2264 = vmatprep.subr.bf16.mxu0 %v1653
    %2265 = vmatpush1.bf16.msra.mxu0 %v1652
    %2266 = vmatprep.subr.bf16.mxu0 %v1657
    %2267 = vmatpush1.bf16.msra.mxu0 %v1656
    %2268 = vmatprep.mubr.bf16.mxu0 %v687
    %2269 = vmatmul.mubr.bf16.gmra.mrb[0].mxu0 %v686
    %v2270 = vpop.f32.mrb[0].mxu0
    %v2271 = vadd.f32 %v2228, %v2270
    %v2272 = vpop.f32.mrb[0].mxu0
    %v2273 = vadd.f32 %v2230, %v2272
    %v2274 = vpop.f32.mrb[0].mxu0
    %v2275 = vadd.f32 %v2232, %v2274
    %v2276 = vpop.f32.mrb[0].mxu0
    %v2277 = vadd.f32 %v2234, %v2276
    %2278 = vdwg.mxu0
    %2279 = vmatprep.subr.bf16.mxu0 %v1661
    %2280 = vmatpush1.bf16.msra.mxu0 %v1660
    %2281 = vmatprep.subr.bf16.mxu0 %v1665
    %2282 = vmatpush1.bf16.msra.mxu0 %v1664
    %2283 = vmatprep.subr.bf16.mxu0 %v1669
    %2284 = vmatpush1.bf16.msra.mxu0 %v1668
    %2285 = vmatprep.subr.bf16.mxu0 %v1673
    %2286 = vmatpush1.bf16.msra.mxu0 %v1672
    %2287 = vmatprep.subr.bf16.mxu0 %v1677
    %2288 = vmatpush1.bf16.msra.mxu0 %v1676
    %2289 = vmatprep.subr.bf16.mxu0 %v1681
    %2290 = vmatpush1.bf16.msra.mxu0 %v1680
    %2291 = vmatprep.subr.bf16.mxu0 %v1685
    %2292 = vmatpush1.bf16.msra.mxu0 %v1684
    %2293 = vmatprep.subr.bf16.mxu0 %v1689
    %2294 = vmatpush1.bf16.msra.mxu0 %v1688
    %2295 = vmatprep.subr.bf16.mxu0 %v1693
    %2296 = vmatpush1.bf16.msra.mxu0 %v1692
    %2297 = vmatprep.subr.bf16.mxu0 %v1697
    %2298 = vmatpush1.bf16.msra.mxu0 %v1696
    %2299 = vmatprep.subr.bf16.mxu0 %v1701
    %2300 = vmatpush1.bf16.msra.mxu0 %v1700
    %2301 = vmatprep.subr.bf16.mxu0 %v1705
    %2302 = vmatpush1.bf16.msra.mxu0 %v1704
    %2303 = vmatprep.subr.bf16.mxu0 %v1709
    %2304 = vmatpush1.bf16.msra.mxu0 %v1708
    %2305 = vmatprep.subr.bf16.mxu0 %v1713
    %2306 = vmatpush1.bf16.msra.mxu0 %v1712
    %2307 = vmatprep.subr.bf16.mxu0 %v1717
    %2308 = vmatpush1.bf16.msra.mxu0 %v1716
    %2309 = vmatprep.subr.bf16.mxu0 %v1721
    %2310 = vmatpush1.bf16.msra.mxu0 %v1720
    %2311 = vmatprep.mubr.bf16.mxu0 %v689
    %2312 = vmatmul.mubr.bf16.gmra.mrb[0].mxu0 %v688
    %v2313 = vpop.f32.mrb[0].mxu0
    %v2314 = vadd.f32 %v2271, %v2313
    %v2315 = vpop.f32.mrb[0].mxu0
    %v2316 = vadd.f32 %v2273, %v2315
    %v2317 = vpop.f32.mrb[0].mxu0
    %v2318 = vadd.f32 %v2275, %v2317
    %v2319 = vpop.f32.mrb[0].mxu0
    %v2320 = vadd.f32 %v2277, %v2319
    %2321 = vdwg.mxu0
    %v2322 = vadd.f32 %v377, 0.0
    %v2323 = vadd.f32 %v378, 0.0
    %v2324 = vld [vmem:[%s11] sm:$0xff]
    %v2325 = vld [vmem:[%s11 + $0x8] sm:$0xff]
    %v2326 = vld [vmem:[%s11 + $0x10] sm:$0xff]
    %v2327 = vld [vmem:[%s11 + $0x18] sm:$0xff]
    %v2328 = vld [vmem:[%s11 + $0x20] sm:$0xff]
    %v2329 = vld [vmem:[%s11 + $0x28] sm:$0xff]
    %v2330 = vld [vmem:[%s11 + $0x30] sm:$0xff]
    %v2331 = vld [vmem:[%s11 + $0x38] sm:$0xff]
    %v2332 = vld [vmem:[%s11 + $0x40] sm:$0xff]
    %v2333 = vld [vmem:[%s11 + $0x48] sm:$0xff]
    %v2334 = vld [vmem:[%s11 + $0x50] sm:$0xff]
    %v2335 = vld [vmem:[%s11 + $0x58] sm:$0xff]
    %v2336 = vld [vmem:[%s11 + $0x60] sm:$0xff]
    %v2337 = vld [vmem:[%s11 + $0x68] sm:$0xff]
    %v2338 = vld [vmem:[%s11 + $0x70] sm:$0xff]
    %v2339 = vld [vmem:[%s11 + $0x78] sm:$0xff]
    %v2340 = vld [vmem:[%s11 + $0x80] sm:$0xff]
    %v2341 = vld [vmem:[%s11 + $0x88] sm:$0xff]
    %v2342 = vld [vmem:[%s11 + $0x90] sm:$0xff]
    %v2343 = vld [vmem:[%s11 + $0x98] sm:$0xff]
    %v2344 = vld [vmem:[%s11 + $0xa0] sm:$0xff]
    %v2345 = vld [vmem:[%s11 + $0xa8] sm:$0xff]
    %v2346 = vld [vmem:[%s11 + $0xb0] sm:$0xff]
    %v2347 = vld [vmem:[%s11 + $0xb8] sm:$0xff]
    %v2348 = vld [vmem:[%s11 + $0xc0] sm:$0xff]
    %v2349 = vld [vmem:[%s11 + $0xc8] sm:$0xff]
    %v2350 = vld [vmem:[%s11 + $0xd0] sm:$0xff]
    %v2351 = vld [vmem:[%s11 + $0xd8] sm:$0xff]
    %v2352 = vld [vmem:[%s11 + $0xe0] sm:$0xff]
    %v2353 = vld [vmem:[%s11 + $0xe8] sm:$0xff]
    %v2354 = vld [vmem:[%s11 + $0xf0] sm:$0xff]
    %v2355 = vld [vmem:[%s11 + $0xf8] sm:$0xff]
    %v2356 = vpack.c.bf16 %v2322, %v2322
    %v2357 = vpack.c.bf16 %v2323, %v2323
    %v2358 = vld [vmem:[%s13] sm:$0x3]
    %v2360 = vlaneseq
    %v2361 = vshrl.u32 %v2360, 7
    %v2362 = vsub.s32 0, %v2361
    %v2363 = vrot.slane %v2358, %v2362
    %v2364 = vlaneseq
    %v2365 = vshrl.u32 %v2364, 7
    %v2366 = vsub.s32 1, %v2365
    %v2367 = vrot.slane %v2358, %v2366
    %v2402 = vunpack.c.l.b16 %v2324
    %v2403 = vunpack.c.h.b16 %v2324
    %v2404 = vunpack.c.l.b16 %v2325
    %v2405 = vunpack.c.h.b16 %v2325
    %v2406 = vunpack.c.l.b16 %v2326
    %v2407 = vunpack.c.h.b16 %v2326
    %v2408 = vunpack.c.l.b16 %v2327
    %v2409 = vunpack.c.h.b16 %v2327
    %v2410 = vunpack.c.l.b16 %v2328
    %v2411 = vunpack.c.h.b16 %v2328
    %v2412 = vunpack.c.l.b16 %v2329
    %v2413 = vunpack.c.h.b16 %v2329
    %v2414 = vunpack.c.l.b16 %v2330
    %v2415 = vunpack.c.h.b16 %v2330
    %v2416 = vunpack.c.l.b16 %v2331
    %v2417 = vunpack.c.h.b16 %v2331
    %v2418 = vunpack.c.l.b16 %v2332
    %v2419 = vunpack.c.h.b16 %v2332
    %v2420 = vunpack.c.l.b16 %v2333
    %v2421 = vunpack.c.h.b16 %v2333
    %v2422 = vunpack.c.l.b16 %v2334
    %v2423 = vunpack.c.h.b16 %v2334
    %v2424 = vunpack.c.l.b16 %v2335
    %v2425 = vunpack.c.h.b16 %v2335
    %v2426 = vunpack.c.l.b16 %v2336
    %v2427 = vunpack.c.h.b16 %v2336
    %v2428 = vunpack.c.l.b16 %v2337
    %v2429 = vunpack.c.h.b16 %v2337
    %v2430 = vunpack.c.l.b16 %v2338
    %v2431 = vunpack.c.h.b16 %v2338
    %v2432 = vunpack.c.l.b16 %v2339
    %v2433 = vunpack.c.h.b16 %v2339
    %v2434 = vunpack.c.l.b16 %v2340
    %v2435 = vunpack.c.h.b16 %v2340
    %v2436 = vunpack.c.l.b16 %v2341
    %v2437 = vunpack.c.h.b16 %v2341
    %v2438 = vunpack.c.l.b16 %v2342
    %v2439 = vunpack.c.h.b16 %v2342
    %v2440 = vunpack.c.l.b16 %v2343
    %v2441 = vunpack.c.h.b16 %v2343
    %v2442 = vunpack.c.l.b16 %v2344
    %v2443 = vunpack.c.h.b16 %v2344
    %v2444 = vunpack.c.l.b16 %v2345
    %v2445 = vunpack.c.h.b16 %v2345
    %v2446 = vunpack.c.l.b16 %v2346
    %v2447 = vunpack.c.h.b16 %v2346
    %v2448 = vunpack.c.l.b16 %v2347
    %v2449 = vunpack.c.h.b16 %v2347
    %v2450 = vunpack.c.l.b16 %v2348
    %v2451 = vunpack.c.h.b16 %v2348
    %v2452 = vunpack.c.l.b16 %v2349
    %v2453 = vunpack.c.h.b16 %v2349
    %v2454 = vunpack.c.l.b16 %v2350
    %v2455 = vunpack.c.h.b16 %v2350
    %v2456 = vunpack.c.l.b16 %v2351
    %v2457 = vunpack.c.h.b16 %v2351
    %v2458 = vunpack.c.l.b16 %v2352
    %v2459 = vunpack.c.h.b16 %v2352
    %v2460 = vunpack.c.l.b16 %v2353
    %v2461 = vunpack.c.h.b16 %v2353
    %v2462 = vunpack.c.l.b16 %v2354
    %v2463 = vunpack.c.h.b16 %v2354
    %v2464 = vunpack.c.l.b16 %v2355
    %v2465 = vunpack.c.h.b16 %v2355
    %v2466 = vpack.c.b16 %v2404, %v2402
    %v2467 = vpack.c.b16 %v2405, %v2403
    %v2468 = vpack.c.b16 %v2408, %v2406
    %v2469 = vpack.c.b16 %v2409, %v2407
    %v2470 = vpack.c.b16 %v2412, %v2410
    %v2471 = vpack.c.b16 %v2413, %v2411
    %v2472 = vpack.c.b16 %v2416, %v2414
    %v2473 = vpack.c.b16 %v2417, %v2415
    %v2474 = vpack.c.b16 %v2420, %v2418
    %v2475 = vpack.c.b16 %v2421, %v2419
    %v2476 = vpack.c.b16 %v2424, %v2422
    %v2477 = vpack.c.b16 %v2425, %v2423
    %v2478 = vpack.c.b16 %v2428, %v2426
    %v2479 = vpack.c.b16 %v2429, %v2427
    %v2480 = vpack.c.b16 %v2432, %v2430
    %v2481 = vpack.c.b16 %v2433, %v2431
    %v2482 = vpack.c.b16 %v2436, %v2434
    %v2483 = vpack.c.b16 %v2437, %v2435
    %v2484 = vpack.c.b16 %v2440, %v2438
    %v2485 = vpack.c.b16 %v2441, %v2439
    %v2486 = vpack.c.b16 %v2444, %v2442
    %v2487 = vpack.c.b16 %v2445, %v2443
    %v2488 = vpack.c.b16 %v2448, %v2446
    %v2489 = vpack.c.b16 %v2449, %v2447
    %v2490 = vpack.c.b16 %v2452, %v2450
    %v2491 = vpack.c.b16 %v2453, %v2451
    %v2492 = vpack.c.b16 %v2456, %v2454
    %v2493 = vpack.c.b16 %v2457, %v2455
    %v2494 = vpack.c.b16 %v2460, %v2458
    %v2495 = vpack.c.b16 %v2461, %v2459
    %v2496 = vpack.c.b16 %v2464, %v2462
    %v2497 = vpack.c.b16 %v2465, %v2463
    %2530 = vmatprep.subr.bf16.mxu0 %v2467
    %2531 = vmatpush1.bf16.msra.mxu0 %v2466
    %2532 = vmatprep.subr.bf16.mxu0 %v2469
    %2533 = vmatpush1.bf16.msra.mxu0 %v2468
    %2534 = vmatprep.subr.bf16.mxu0 %v2471
    %2535 = vmatpush1.bf16.msra.mxu0 %v2470
    %2536 = vmatprep.subr.bf16.mxu0 %v2473
    %2537 = vmatpush1.bf16.msra.mxu0 %v2472
    %2538 = vmatprep.subr.bf16.mxu0 %v2475
    %2539 = vmatpush1.bf16.msra.mxu0 %v2474
    %2540 = vmatprep.subr.bf16.mxu0 %v2477
    %2541 = vmatpush1.bf16.msra.mxu0 %v2476
    %2542 = vmatprep.subr.bf16.mxu0 %v2479
    %2543 = vmatpush1.bf16.msra.mxu0 %v2478
    %2544 = vmatprep.subr.bf16.mxu0 %v2481
    %2545 = vmatpush1.bf16.msra.mxu0 %v2480
    %2546 = vmatprep.subr.bf16.mxu0 %v2483
    %2547 = vmatpush1.bf16.msra.mxu0 %v2482
    %2548 = vmatprep.subr.bf16.mxu0 %v2485
    %2549 = vmatpush1.bf16.msra.mxu0 %v2484
    %2550 = vmatprep.subr.bf16.mxu0 %v2487
    %2551 = vmatpush1.bf16.msra.mxu0 %v2486
    %2552 = vmatprep.subr.bf16.mxu0 %v2489
    %2553 = vmatpush1.bf16.msra.mxu0 %v2488
    %2554 = vmatprep.subr.bf16.mxu0 %v2491
    %2555 = vmatpush1.bf16.msra.mxu0 %v2490
    %2556 = vmatprep.subr.bf16.mxu0 %v2493
    %2557 = vmatpush1.bf16.msra.mxu0 %v2492
    %2558 = vmatprep.subr.bf16.mxu0 %v2495
    %2559 = vmatpush1.bf16.msra.mxu0 %v2494
    %2560 = vmatprep.subr.bf16.mxu0 %v2497
    %2561 = vmatpush1.bf16.msra.mxu0 %v2496
    %2562 = vmatprep.mubr.bf16.mxu0 %v2357
    %2563 = vmatmul.mubr.bf16.gmra.mrb[0].mxu0 %v2356
    %v2564 = vpop.f32.mrb[0].mxu0
    %v2565 = vadd.f32 %v2363, %v2564
    %v2566 = vpop.f32.mrb[0].mxu0
    %v2567 = vadd.f32 %v2367, %v2566
    %v2568 = vpop.f32.mrb[0].mxu0
    %v2569 = vadd.f32 %v2363, %v2568
    %v2570 = vpop.f32.mrb[0].mxu0
    %v2571 = vadd.f32 %v2367, %v2570
    %2572 = vdwg.mxu0
    %v2573 = vpack.c.bf16 %v2565, %v2565
    %v2574 = vpack.c.bf16 %v2567, %v2567
    %v2575 = vpack.c.bf16 %v2569, %v2569
    %v2576 = vpack.c.bf16 %v2571, %v2571
    %v2577 = vpack.c.bf16 %v2142, %v2142
    %v2578 = vpack.c.bf16 %v2144, %v2144
    %v2579 = vpack.c.bf16 %v2146, %v2146
    %v2580 = vpack.c.bf16 %v2148, %v2148
    %2581 = vmatprep.subr.bf16.mxu0 %v2578
    %2582 = vmatpush1.bf16.xpose.msra.mxu0 %v2577
    %2583 = vmatprep.subr.bf16.mxu0 0
    %2584 = vmatpush1.bf16.xpose.msra.mxu0 0
    %2585 = vmatprep.subr.bf16.mxu0 0
    %2586 = vmatpush1.bf16.xpose.msra.mxu0 0
    %2587 = vmatprep.subr.bf16.mxu0 0
    %2588 = vmatpush1.bf16.xpose.msra.mxu0 0
    %2589 = vmatprep.subr.bf16.mxu0 0
    %2590 = vmatpush1.bf16.xpose.msra.mxu0 0
    %2591 = vmatprep.subr.bf16.mxu0 0
    %2592 = vmatpush1.bf16.xpose.msra.mxu0 0
    %2593 = vmatprep.subr.bf16.mxu0 0
    %2594 = vmatpush1.bf16.xpose.msra.mxu0 0
    %2595 = vmatprep.subr.bf16.mxu0 0
    %2596 = vmatpush1.bf16.xpose.msra.mxu0 0
    %2597 = vmatprep.subr.bf16.mxu0 0
    %2598 = vmatpush1.bf16.xpose.msra.mxu0 0
    %2599 = vmatprep.subr.bf16.mxu0 0
    %2600 = vmatpush1.bf16.xpose.msra.mxu0 0
    %2601 = vmatprep.subr.bf16.mxu0 0
    %2602 = vmatpush1.bf16.xpose.msra.mxu0 0
    %2603 = vmatprep.subr.bf16.mxu0 0
    %2604 = vmatpush1.bf16.xpose.msra.mxu0 0
    %2605 = vmatprep.subr.bf16.mxu0 0
    %2606 = vmatpush1.bf16.xpose.msra.mxu0 0
    %2607 = vmatprep.subr.bf16.mxu0 0
    %2608 = vmatpush1.bf16.xpose.msra.mxu0 0
    %2609 = vmatprep.subr.bf16.mxu0 0
    %2610 = vmatpush1.bf16.xpose.msra.mxu0 0
    %2611 = vmatprep.subr.bf16.mxu0 0
    %2612 = vmatpush1.bf16.xpose.msra.mxu0 0
    %2613 = vmatprep.mubr.bf16.mxu0 %v2574
    %2614 = vmatmul.mubr.bf16.gmra.mrb[0].mxu0 %v2573
    %v2615 = vpop.f32.mrb[0].mxu0
    %v2616 = vadd.f32 0.0, %v2615
    %v2617 = vpop.f32.mrb[0].mxu0
    %v2618 = vpop.f32.mrb[0].mxu0
    %v2619 = vpop.f32.mrb[0].mxu0
    %2620 = vdwg.mxu0
    %2621 = vmatprep.subr.bf16.mxu0 %v2580
    %2622 = vmatpush1.bf16.xpose.msra.mxu0 %v2579
    %2623 = vmatprep.subr.bf16.mxu0 0
    %2624 = vmatpush1.bf16.xpose.msra.mxu0 0
    %2625 = vmatprep.subr.bf16.mxu0 0
    %2626 = vmatpush1.bf16.xpose.msra.mxu0 0
    %2627 = vmatprep.subr.bf16.mxu0 0
    %2628 = vmatpush1.bf16.xpose.msra.mxu0 0
    %2629 = vmatprep.subr.bf16.mxu0 0
    %2630 = vmatpush1.bf16.xpose.msra.mxu0 0
    %2631 = vmatprep.subr.bf16.mxu0 0
    %2632 = vmatpush1.bf16.xpose.msra.mxu0 0
    %2633 = vmatprep.subr.bf16.mxu0 0
    %2634 = vmatpush1.bf16.xpose.msra.mxu0 0
    %2635 = vmatprep.subr.bf16.mxu0 0
    %2636 = vmatpush1.bf16.xpose.msra.mxu0 0
    %2637 = vmatprep.subr.bf16.mxu0 0
    %2638 = vmatpush1.bf16.xpose.msra.mxu0 0
    %2639 = vmatprep.subr.bf16.mxu0 0
    %2640 = vmatpush1.bf16.xpose.msra.mxu0 0
    %2641 = vmatprep.subr.bf16.mxu0 0
    %2642 = vmatpush1.bf16.xpose.msra.mxu0 0
    %2643 = vmatprep.subr.bf16.mxu0 0
    %2644 = vmatpush1.bf16.xpose.msra.mxu0 0
    %2645 = vmatprep.subr.bf16.mxu0 0
    %2646 = vmatpush1.bf16.xpose.msra.mxu0 0
    %2647 = vmatprep.subr.bf16.mxu0 0
    %2648 = vmatpush1.bf16.xpose.msra.mxu0 0
    %2649 = vmatprep.subr.bf16.mxu0 0
    %2650 = vmatpush1.bf16.xpose.msra.mxu0 0
    %2651 = vmatprep.subr.bf16.mxu0 0
    %2652 = vmatpush1.bf16.xpose.msra.mxu0 0
    %2653 = vmatprep.mubr.bf16.mxu0 %v2576
    %2654 = vmatmul.mubr.bf16.gmra.mrb[0].mxu0 %v2575
    %v2655 = vpop.f32.mrb[0].mxu0
    %v2656 = vadd.f32 0.0, %v2655
    %v2657 = vpop.f32.mrb[0].mxu0
    %v2658 = vpop.f32.mrb[0].mxu0
    %v2659 = vpop.f32.mrb[0].mxu0
    %2660 = vdwg.mxu0
    %v2661 = vstv %s379
    %v2662 = vmul.f32 %v2616, %v2661
    %v2663 = vmul.f32 %v2656, %v2661
    %vm2664 = vcmask 64512
    %v2665 = vsel %vm2664, %v2662, -inf
    %2666 = vmax.xlane.f32.xlu0 %v2665
    %v2667 = vpop.xlane.xlu0 %2666
    %v2668 = vsel %vm2664, %v2663, -inf
    %2669 = vmax.xlane.f32.xlu0 %v2668
    %v2670 = vpop.xlane.xlu0 %2669
    %v2671 = vsub.f32 %v2662, %v2667
    %v2672 = vsub.f32 %v2663, %v2670
    %v2673 = vmul.f32 %v2671, 1.442695
    %v2674 = vpow.pop %v2673
    %v2675 = vmul.f32 %v2672, 1.442695
    %v2676 = vpow.pop %v2675
    %v2677 = vsel %vm2664, %v2674, 0.0
    %2678 = vadd.xlane.f32.xlu0 %v2677
    %v2679 = vpop.xlane.xlu0 %2678
    %v2680 = vsel %vm2664, %v2676, 0.0
    %2681 = vadd.xlane.f32.xlu0 %v2680
    %v2682 = vpop.xlane.xlu0 %2681
    %v2683 = vrcp.pop %v2679
    %v2684 = vrcp.pop %v2682
    %v2685 = vmul.f32 %v2674, %v2683
    %v2686 = vmul.f32 %v2676, %v2684
    %v2687 = vpack.c.bf16 %v2685, %v2685
    %v2688 = vpack.c.bf16 %v2686, %v2686
    %v2689 = vpack.c.bf16 %v2314, %v2314
    %v2690 = vpack.c.bf16 %v2316, %v2316
    %v2691 = vpack.c.bf16 %v2318, %v2318
    %v2692 = vpack.c.bf16 %v2320, %v2320
    %v2694 = vsel %vm2664, %v2687, 0
    %vm2696 = vcmask 1043456
    %v2698 = vsel %vm2696, %v2689, 0
    %v2701 = vsel %vm2696, %v2690, 0
    %2703 = vmatprep.subr.bf16.mxu0 %v2701
    %2704 = vmatpush1.bf16.msra.mxu0 %v2698
    %2705 = vmatprep.subr.bf16.mxu0 0
    %2706 = vmatpush1.bf16.msra.mxu0 0
    %2707 = vmatprep.subr.bf16.mxu0 0
    %2708 = vmatpush1.bf16.msra.mxu0 0
    %2709 = vmatprep.subr.bf16.mxu0 0
    %2710 = vmatpush1.bf16.msra.mxu0 0
    %2711 = vmatprep.subr.bf16.mxu0 0
    %2712 = vmatpush1.bf16.msra.mxu0 0
    %2713 = vmatprep.subr.bf16.mxu0 0
    %2714 = vmatpush1.bf16.msra.mxu0 0
    %2715 = vmatprep.subr.bf16.mxu0 0
    %2716 = vmatpush1.bf16.msra.mxu0 0
    %2717 = vmatprep.subr.bf16.mxu0 0
    %2718 = vmatpush1.bf16.msra.mxu0 0
    %2719 = vmatprep.subr.bf16.mxu0 0
    %2720 = vmatpush1.bf16.msra.mxu0 0
    %2721 = vmatprep.subr.bf16.mxu0 0
    %2722 = vmatpush1.bf16.msra.mxu0 0
    %2723 = vmatprep.subr.bf16.mxu0 0
    %2724 = vmatpush1.bf16.msra.mxu0 0
    %2725 = vmatprep.subr.bf16.mxu0 0
    %2726 = vmatpush1.bf16.msra.mxu0 0
    %2727 = vmatprep.subr.bf16.mxu0 0
    %2728 = vmatpush1.bf16.msra.mxu0 0
    %2729 = vmatprep.subr.bf16.mxu0 0
    %2730 = vmatpush1.bf16.msra.mxu0 0
    %2731 = vmatprep.subr.bf16.mxu0 0
    %2732 = vmatpush1.bf16.msra.mxu0 0
    %2733 = vmatprep.subr.bf16.mxu0 0
    %2734 = vmatpush1.bf16.msra.mxu0 0
    %2735 = vmatprep.mubr.bf16.mxu0 0
    %2736 = vmatmul.mubr.bf16.gmra.mrb[0].mxu0 %v2694
    %v2737 = vpop.f32.mrb[0].mxu0
    %v2738 = vadd.f32 0.0, %v2737
    %v2739 = vpop.f32.mrb[0].mxu0
    %v2740 = vadd.f32 0.0, %v2739
    %v2741 = vpop.f32.mrb[0].mxu0
    %v2742 = vpop.f32.mrb[0].mxu0
    %2743 = vdwg.mxu0
    %v2745 = vsel %vm2664, %v2688, 0
    %v2748 = vsel %vm2696, %v2691, 0
    %v2751 = vsel %vm2696, %v2692, 0
    %2753 = vmatprep.subr.bf16.mxu0 %v2751
    %2754 = vmatpush1.bf16.msra.mxu0 %v2748
    %2755 = vmatprep.subr.bf16.mxu0 0
    %2756 = vmatpush1.bf16.msra.mxu0 0
    %2757 = vmatprep.subr.bf16.mxu0 0
    %2758 = vmatpush1.bf16.msra.mxu0 0
    %2759 = vmatprep.subr.bf16.mxu0 0
    %2760 = vmatpush1.bf16.msra.mxu0 0
    %2761 = vmatprep.subr.bf16.mxu0 0
    %2762 = vmatpush1.bf16.msra.mxu0 0
    %2763 = vmatprep.subr.bf16.mxu0 0
    %2764 = vmatpush1.bf16.msra.mxu0 0
    %2765 = vmatprep.subr.bf16.mxu0 0
    %2766 = vmatpush1.bf16.msra.mxu0 0
    %2767 = vmatprep.subr.bf16.mxu0 0
    %2768 = vmatpush1.bf16.msra.mxu0 0
    %2769 = vmatprep.subr.bf16.mxu0 0
    %2770 = vmatpush1.bf16.msra.mxu0 0
    %2771 = vmatprep.subr.bf16.mxu0 0
    %2772 = vmatpush1.bf16.msra.mxu0 0
    %2773 = vmatprep.subr.bf16.mxu0 0
    %2774 = vmatpush1.bf16.msra.mxu0 0
    %2775 = vmatprep.subr.bf16.mxu0 0
    %2776 = vmatpush1.bf16.msra.mxu0 0
    %2777 = vmatprep.subr.bf16.mxu0 0
    %2778 = vmatpush1.bf16.msra.mxu0 0
    %2779 = vmatprep.subr.bf16.mxu0 0
    %2780 = vmatpush1.bf16.msra.mxu0 0
    %2781 = vmatprep.subr.bf16.mxu0 0
    %2782 = vmatpush1.bf16.msra.mxu0 0
    %2783 = vmatprep.subr.bf16.mxu0 0
    %2784 = vmatpush1.bf16.msra.mxu0 0
    %2785 = vmatprep.mubr.bf16.mxu0 0
    %2786 = vmatmul.mubr.bf16.gmra.mrb[0].mxu0 %v2745
    %v2787 = vpop.f32.mrb[0].mxu0
    %v2788 = vadd.f32 0.0, %v2787
    %v2789 = vpop.f32.mrb[0].mxu0
    %v2790 = vadd.f32 0.0, %v2789
    %v2791 = vpop.f32.mrb[0].mxu0
    %v2792 = vpop.f32.mrb[0].mxu0
    %2793 = vdwg.mxu0
    %v2794 = vld [vmem:[%s15] sm:$0x3]
    %v2795 = vld [vmem:[%s17] sm:$0x3]
    %v2796 = vadd.f32 %v2738, %v2740
    %2797 = vadd.xlane.f32.xlu0 %v2796
    %v2798 = vpop.xlane.xlu0 %2797
    %v2799 = vadd.f32 %v2788, %v2790
    %2800 = vadd.xlane.f32.xlu0 %v2799
    %v2801 = vpop.xlane.xlu0 %2800
    %v2802 = vrcp.pop 256.0
    %v2803 = vmul.f32 %v2798, %v2802
    %v2804 = vmul.f32 %v2801, %v2802
    %v2805 = vsub.f32 %v2738, %v2803
    %v2806 = vsub.f32 %v2740, %v2803
    %v2807 = vsub.f32 %v2788, %v2804
    %v2808 = vsub.f32 %v2790, %v2804
    %v2809 = vmul.f32 %v2805, %v2805
    %v2810 = vmul.f32 %v2806, %v2806
    %v2811 = vmul.f32 %v2807, %v2807
    %v2812 = vmul.f32 %v2808, %v2808
    %v2813 = vadd.f32 %v2809, %v2810
    %2814 = vadd.xlane.f32.xlu0 %v2813
    %v2815 = vpop.xlane.xlu0 %2814
    %v2816 = vadd.f32 %v2811, %v2812
    %2817 = vadd.xlane.f32.xlu0 %v2816
    %v2818 = vpop.xlane.xlu0 %2817
    %v2819 = vmul.f32 %v2815, %v2802
    %v2820 = vmul.f32 %v2818, %v2802
    %v2821 = vadd.f32 %v2819, 1e-05
    %v2822 = vadd.f32 %v2820, 1e-05
    %v2823 = vrsqrt.pop %v2821
    %v2824 = vrsqrt.pop %v2822
    %v2825 = vmul.f32 %v2805, %v2823
    %v2826 = vmul.f32 %v2806, %v2823
    %v2827 = vmul.f32 %v2807, %v2824
    %v2828 = vmul.f32 %v2808, %v2824
    %v2830 = vlaneseq
    %v2831 = vshrl.u32 %v2830, 7
    %v2832 = vsub.s32 0, %v2831
    %v2833 = vrot.slane %v2794, %v2832
    %v2834 = vlaneseq
    %v2835 = vshrl.u32 %v2834, 7
    %v2836 = vsub.s32 1, %v2835
    %v2837 = vrot.slane %v2794, %v2836
    %v2840 = vmul.f32 %v2825, %v2833
    %v2841 = vmul.f32 %v2826, %v2837
    %v2842 = vmul.f32 %v2827, %v2833
    %v2843 = vmul.f32 %v2828, %v2837
    %v2845 = vlaneseq
    %v2846 = vshrl.u32 %v2845, 7
    %v2847 = vsub.s32 0, %v2846
    %v2848 = vrot.slane %v2795, %v2847
    %v2849 = vlaneseq
    %v2850 = vshrl.u32 %v2849, 7
    %v2851 = vsub.s32 1, %v2850
    %v2852 = vrot.slane %v2795, %v2851
    %v2855 = vadd.f32 %v2840, %v2848
    %v2856 = vadd.f32 %v2841, %v2852
    %v2857 = vadd.f32 %v2842, %v2848
    %v2858 = vadd.f32 %v2843, %v2852
    %v2859 = vld [vmem:[#allocation8] sm:$0xff]
    %v2860 = vld [vmem:[#allocation8 + $0x8] sm:$0xff]
    %v2861 = vld [vmem:[#allocation8 + $0x10] sm:$0xff]
    %v2862 = vld [vmem:[#allocation8 + $0x18] sm:$0xff]
    %v2863 = vld [vmem:[#allocation8 + $0x20] sm:$0xff]
    %v2864 = vld [vmem:[#allocation8 + $0x28] sm:$0xff]
    %v2865 = vld [vmem:[#allocation8 + $0x30] sm:$0xff]
    %v2866 = vld [vmem:[#allocation8 + $0x38] sm:$0xff]
    %v2867 = vld [vmem:[#allocation8 + $0x40] sm:$0xff]
    %v2868 = vld [vmem:[#allocation8 + $0x48] sm:$0xff]
    %v2869 = vld [vmem:[#allocation8 + $0x50] sm:$0xff]
    %v2870 = vld [vmem:[#allocation8 + $0x58] sm:$0xff]
    %v2871 = vld [vmem:[#allocation8 + $0x60] sm:$0xff]
    %v2872 = vld [vmem:[#allocation8 + $0x68] sm:$0xff]
    %v2873 = vld [vmem:[#allocation8 + $0x70] sm:$0xff]
    %v2874 = vld [vmem:[#allocation8 + $0x78] sm:$0xff]
    %v2875 = vld [vmem:[#allocation8 + $0x80] sm:$0xff]
    %v2876 = vld [vmem:[#allocation8 + $0x88] sm:$0xff]
    %v2877 = vld [vmem:[#allocation8 + $0x90] sm:$0xff]
    %v2878 = vld [vmem:[#allocation8 + $0x98] sm:$0xff]
    %v2879 = vld [vmem:[#allocation8 + $0xa0] sm:$0xff]
    %v2880 = vld [vmem:[#allocation8 + $0xa8] sm:$0xff]
    %v2881 = vld [vmem:[#allocation8 + $0xb0] sm:$0xff]
    %v2882 = vld [vmem:[#allocation8 + $0xb8] sm:$0xff]
    %v2883 = vld [vmem:[#allocation8 + $0xc0] sm:$0xff]
    %v2884 = vld [vmem:[#allocation8 + $0xc8] sm:$0xff]
    %v2885 = vld [vmem:[#allocation8 + $0xd0] sm:$0xff]
    %v2886 = vld [vmem:[#allocation8 + $0xd8] sm:$0xff]
    %v2887 = vld [vmem:[#allocation8 + $0xe0] sm:$0xff]
    %v2888 = vld [vmem:[#allocation8 + $0xe8] sm:$0xff]
    %v2889 = vld [vmem:[#allocation8 + $0xf0] sm:$0xff]
    %v2890 = vld [vmem:[#allocation8 + $0xf8] sm:$0xff]
    %v2891 = vld [vmem:[#allocation8 + $0x100] sm:$0xff]
    %v2892 = vld [vmem:[#allocation8 + $0x108] sm:$0xff]
    %v2893 = vld [vmem:[#allocation8 + $0x110] sm:$0xff]
    %v2894 = vld [vmem:[#allocation8 + $0x118] sm:$0xff]
    %v2895 = vld [vmem:[#allocation8 + $0x120] sm:$0xff]
    %v2896 = vld [vmem:[#allocation8 + $0x128] sm:$0xff]
    %v2897 = vld [vmem:[#allocation8 + $0x130] sm:$0xff]
    %v2898 = vld [vmem:[#allocation8 + $0x138] sm:$0xff]
    %v2899 = vld [vmem:[#allocation8 + $0x140] sm:$0xff]
    %v2900 = vld [vmem:[#allocation8 + $0x148] sm:$0xff]
    %v2901 = vld [vmem:[#allocation8 + $0x150] sm:$0xff]
    %v2902 = vld [vmem:[#allocation8 + $0x158] sm:$0xff]
    %v2903 = vld [vmem:[#allocation8 + $0x160] sm:$0xff]
    %v2904 = vld [vmem:[#allocation8 + $0x168] sm:$0xff]
    %v2905 = vld [vmem:[#allocation8 + $0x170] sm:$0xff]
    %v2906 = vld [vmem:[#allocation8 + $0x178] sm:$0xff]
    %v2907 = vld [vmem:[#allocation8 + $0x180] sm:$0xff]
    %v2908 = vld [vmem:[#allocation8 + $0x188] sm:$0xff]
    %v2909 = vld [vmem:[#allocation8 + $0x190] sm:$0xff]
    %v2910 = vld [vmem:[#allocation8 + $0x198] sm:$0xff]
    %v2911 = vld [vmem:[#allocation8 + $0x1a0] sm:$0xff]
    %v2912 = vld [vmem:[#allocation8 + $0x1a8] sm:$0xff]
    %v2913 = vld [vmem:[#allocation8 + $0x1b0] sm:$0xff]
    %v2914 = vld [vmem:[#allocation8 + $0x1b8] sm:$0xff]
    %v2915 = vld [vmem:[#allocation8 + $0x1c0] sm:$0xff]
    %v2916 = vld [vmem:[#allocation8 + $0x1c8] sm:$0xff]
    %v2917 = vld [vmem:[#allocation8 + $0x1d0] sm:$0xff]
    %v2918 = vld [vmem:[#allocation8 + $0x1d8] sm:$0xff]
    %v2919 = vld [vmem:[#allocation8 + $0x1e0] sm:$0xff]
    %v2920 = vld [vmem:[#allocation8 + $0x1e8] sm:$0xff]
    %v2921 = vld [vmem:[#allocation8 + $0x1f0] sm:$0xff]
    %v2922 = vld [vmem:[#allocation8 + $0x1f8] sm:$0xff]
    %v2923 = vpack.c.bf16 %v2857, %v2855
    %v2924 = vpack.c.bf16 %v2858, %v2856
    %v2925 = vld [vmem:[%s21] sm:$0xf]
    %v2927 = vlaneseq
    %v2928 = vshrl.u32 %v2927, 7
    %v2929 = vsub.s32 0, %v2928
    %v2930 = vrot.slane %v2925, %v2929
    %v2931 = vlaneseq
    %v2932 = vshrl.u32 %v2931, 7
    %v2933 = vsub.s32 1, %v2932
    %v2934 = vrot.slane %v2925, %v2933
    %v2935 = vlaneseq
    %v2936 = vshrl.u32 %v2935, 7
    %v2937 = vsub.s32 2, %v2936
    %v2938 = vrot.slane %v2925, %v2937
    %v2939 = vlaneseq
    %v2940 = vshrl.u32 %v2939, 7
    %v2941 = vsub.s32 3, %v2940
    %v2942 = vrot.slane %v2925, %v2941
    %v3011 = vunpack.c.l.b16 %v2859
    %v3012 = vunpack.c.h.b16 %v2859
    %v3013 = vunpack.c.l.b16 %v2860
    %v3014 = vunpack.c.h.b16 %v2860
    %v3015 = vunpack.c.l.b16 %v2861
    %v3016 = vunpack.c.h.b16 %v2861
    %v3017 = vunpack.c.l.b16 %v2862
    %v3018 = vunpack.c.h.b16 %v2862
    %v3019 = vunpack.c.l.b16 %v2863
    %v3020 = vunpack.c.h.b16 %v2863
    %v3021 = vunpack.c.l.b16 %v2864
    %v3022 = vunpack.c.h.b16 %v2864
    %v3023 = vunpack.c.l.b16 %v2865
    %v3024 = vunpack.c.h.b16 %v2865
    %v3025 = vunpack.c.l.b16 %v2866
    %v3026 = vunpack.c.h.b16 %v2866
    %v3027 = vunpack.c.l.b16 %v2867
    %v3028 = vunpack.c.h.b16 %v2867
    %v3029 = vunpack.c.l.b16 %v2868
    %v3030 = vunpack.c.h.b16 %v2868
    %v3031 = vunpack.c.l.b16 %v2869
    %v3032 = vunpack.c.h.b16 %v2869
    %v3033 = vunpack.c.l.b16 %v2870
    %v3034 = vunpack.c.h.b16 %v2870
    %v3035 = vunpack.c.l.b16 %v2871
    %v3036 = vunpack.c.h.b16 %v2871
    %v3037 = vunpack.c.l.b16 %v2872
    %v3038 = vunpack.c.h.b16 %v2872
    %v3039 = vunpack.c.l.b16 %v2873
    %v3040 = vunpack.c.h.b16 %v2873
    %v3041 = vunpack.c.l.b16 %v2874
    %v3042 = vunpack.c.h.b16 %v2874
    %v3043 = vunpack.c.l.b16 %v2875
    %v3044 = vunpack.c.h.b16 %v2875
    %v3045 = vunpack.c.l.b16 %v2876
    %v3046 = vunpack.c.h.b16 %v2876
    %v3047 = vunpack.c.l.b16 %v2877
    %v3048 = vunpack.c.h.b16 %v2877
    %v3049 = vunpack.c.l.b16 %v2878
    %v3050 = vunpack.c.h.b16 %v2878
    %v3051 = vunpack.c.l.b16 %v2879
    %v3052 = vunpack.c.h.b16 %v2879
    %v3053 = vunpack.c.l.b16 %v2880
    %v3054 = vunpack.c.h.b16 %v2880
    %v3055 = vunpack.c.l.b16 %v2881
    %v3056 = vunpack.c.h.b16 %v2881
    %v3057 = vunpack.c.l.b16 %v2882
    %v3058 = vunpack.c.h.b16 %v2882
    %v3059 = vunpack.c.l.b16 %v2883
    %v3060 = vunpack.c.h.b16 %v2883
    %v3061 = vunpack.c.l.b16 %v2884
    %v3062 = vunpack.c.h.b16 %v2884
    %v3063 = vunpack.c.l.b16 %v2885
    %v3064 = vunpack.c.h.b16 %v2885
    %v3065 = vunpack.c.l.b16 %v2886
    %v3066 = vunpack.c.h.b16 %v2886
    %v3067 = vunpack.c.l.b16 %v2887
    %v3068 = vunpack.c.h.b16 %v2887
    %v3069 = vunpack.c.l.b16 %v2888
    %v3070 = vunpack.c.h.b16 %v2888
    %v3071 = vunpack.c.l.b16 %v2889
    %v3072 = vunpack.c.h.b16 %v2889
    %v3073 = vunpack.c.l.b16 %v2890
    %v3074 = vunpack.c.h.b16 %v2890
    %v3075 = vunpack.c.l.b16 %v2891
    %v3076 = vunpack.c.h.b16 %v2891
    %v3077 = vunpack.c.l.b16 %v2892
    %v3078 = vunpack.c.h.b16 %v2892
    %v3079 = vunpack.c.l.b16 %v2893
    %v3080 = vunpack.c.h.b16 %v2893
    %v3081 = vunpack.c.l.b16 %v2894
    %v3082 = vunpack.c.h.b16 %v2894
    %v3083 = vunpack.c.l.b16 %v2895
    %v3084 = vunpack.c.h.b16 %v2895
    %v3085 = vunpack.c.l.b16 %v2896
    %v3086 = vunpack.c.h.b16 %v2896
    %v3087 = vunpack.c.l.b16 %v2897
    %v3088 = vunpack.c.h.b16 %v2897
    %v3089 = vunpack.c.l.b16 %v2898
    %v3090 = vunpack.c.h.b16 %v2898
    %v3091 = vunpack.c.l.b16 %v2899
    %v3092 = vunpack.c.h.b16 %v2899
    %v3093 = vunpack.c.l.b16 %v2900
    %v3094 = vunpack.c.h.b16 %v2900
    %v3095 = vunpack.c.l.b16 %v2901
    %v3096 = vunpack.c.h.b16 %v2901
    %v3097 = vunpack.c.l.b16 %v2902
    %v3098 = vunpack.c.h.b16 %v2902
    %v3099 = vunpack.c.l.b16 %v2903
    %v3100 = vunpack.c.h.b16 %v2903
    %v3101 = vunpack.c.l.b16 %v2904
    %v3102 = vunpack.c.h.b16 %v2904
    %v3103 = vunpack.c.l.b16 %v2905
    %v3104 = vunpack.c.h.b16 %v2905
    %v3105 = vunpack.c.l.b16 %v2906
    %v3106 = vunpack.c.h.b16 %v2906
    %v3107 = vunpack.c.l.b16 %v2907
    %v3108 = vunpack.c.h.b16 %v2907
    %v3109 = vunpack.c.l.b16 %v2908
    %v3110 = vunpack.c.h.b16 %v2908
    %v3111 = vunpack.c.l.b16 %v2909
    %v3112 = vunpack.c.h.b16 %v2909
    %v3113 = vunpack.c.l.b16 %v2910
    %v3114 = vunpack.c.h.b16 %v2910
    %v3115 = vunpack.c.l.b16 %v2911
    %v3116 = vunpack.c.h.b16 %v2911
    %v3117 = vunpack.c.l.b16 %v2912
    %v3118 = vunpack.c.h.b16 %v2912
    %v3119 = vunpack.c.l.b16 %v2913
    %v3120 = vunpack.c.h.b16 %v2913
    %v3121 = vunpack.c.l.b16 %v2914
    %v3122 = vunpack.c.h.b16 %v2914
    %v3123 = vunpack.c.l.b16 %v2915
    %v3124 = vunpack.c.h.b16 %v2915
    %v3125 = vunpack.c.l.b16 %v2916
    %v3126 = vunpack.c.h.b16 %v2916
    %v3127 = vunpack.c.l.b16 %v2917
    %v3128 = vunpack.c.h.b16 %v2917
    %v3129 = vunpack.c.l.b16 %v2918
    %v3130 = vunpack.c.h.b16 %v2918
    %v3131 = vunpack.c.l.b16 %v2919
    %v3132 = vunpack.c.h.b16 %v2919
    %v3133 = vunpack.c.l.b16 %v2920
    %v3134 = vunpack.c.h.b16 %v2920
    %v3135 = vunpack.c.l.b16 %v2921
    %v3136 = vunpack.c.h.b16 %v2921
    %v3137 = vunpack.c.l.b16 %v2922
    %v3138 = vunpack.c.h.b16 %v2922
    %v3139 = vpack.c.b16 %v3015, %v3011
    %v3140 = vpack.c.b16 %v3016, %v3012
    %v3141 = vpack.c.b16 %v3017, %v3013
    %v3142 = vpack.c.b16 %v3018, %v3014
    %v3143 = vpack.c.b16 %v3023, %v3019
    %v3144 = vpack.c.b16 %v3024, %v3020
    %v3145 = vpack.c.b16 %v3025, %v3021
    %v3146 = vpack.c.b16 %v3026, %v3022
    %v3147 = vpack.c.b16 %v3031, %v3027
    %v3148 = vpack.c.b16 %v3032, %v3028
    %v3149 = vpack.c.b16 %v3033, %v3029
    %v3150 = vpack.c.b16 %v3034, %v3030
    %v3151 = vpack.c.b16 %v3039, %v3035
    %v3152 = vpack.c.b16 %v3040, %v3036
    %v3153 = vpack.c.b16 %v3041, %v3037
    %v3154 = vpack.c.b16 %v3042, %v3038
    %v3155 = vpack.c.b16 %v3047, %v3043
    %v3156 = vpack.c.b16 %v3048, %v3044
    %v3157 = vpack.c.b16 %v3049, %v3045
    %v3158 = vpack.c.b16 %v3050, %v3046
    %v3159 = vpack.c.b16 %v3055, %v3051
    %v3160 = vpack.c.b16 %v3056, %v3052
    %v3161 = vpack.c.b16 %v3057, %v3053
    %v3162 = vpack.c.b16 %v3058, %v3054
    %v3163 = vpack.c.b16 %v3063, %v3059
    %v3164 = vpack.c.b16 %v3064, %v3060
    %v3165 = vpack.c.b16 %v3065, %v3061
    %v3166 = vpack.c.b16 %v3066, %v3062
    %v3167 = vpack.c.b16 %v3071, %v3067
    %v3168 = vpack.c.b16 %v3072, %v3068
    %v3169 = vpack.c.b16 %v3073, %v3069
    %v3170 = vpack.c.b16 %v3074, %v3070
    %v3171 = vpack.c.b16 %v3079, %v3075
    %v3172 = vpack.c.b16 %v3080, %v3076
    %v3173 = vpack.c.b16 %v3081, %v3077
    %v3174 = vpack.c.b16 %v3082, %v3078
    %v3175 = vpack.c.b16 %v3087, %v3083
    %v3176 = vpack.c.b16 %v3088, %v3084
    %v3177 = vpack.c.b16 %v3089, %v3085
    %v3178 = vpack.c.b16 %v3090, %v3086
    %v3179 = vpack.c.b16 %v3095, %v3091
    %v3180 = vpack.c.b16 %v3096, %v3092
    %v3181 = vpack.c.b16 %v3097, %v3093
    %v3182 = vpack.c.b16 %v3098, %v3094
    %v3183 = vpack.c.b16 %v3103, %v3099
    %v3184 = vpack.c.b16 %v3104, %v3100
    %v3185 = vpack.c.b16 %v3105, %v3101
    %v3186 = vpack.c.b16 %v3106, %v3102
    %v3187 = vpack.c.b16 %v3111, %v3107
    %v3188 = vpack.c.b16 %v3112, %v3108
    %v3189 = vpack.c.b16 %v3113, %v3109
    %v3190 = vpack.c.b16 %v3114, %v3110
    %v3191 = vpack.c.b16 %v3119, %v3115
    %v3192 = vpack.c.b16 %v3120, %v3116
    %v3193 = vpack.c.b16 %v3121, %v3117
    %v3194 = vpack.c.b16 %v3122, %v3118
    %v3195 = vpack.c.b16 %v3127, %v3123
    %v3196 = vpack.c.b16 %v3128, %v3124
    %v3197 = vpack.c.b16 %v3129, %v3125
    %v3198 = vpack.c.b16 %v3130, %v3126
    %v3199 = vpack.c.b16 %v3135, %v3131
    %v3200 = vpack.c.b16 %v3136, %v3132
    %v3201 = vpack.c.b16 %v3137, %v3133
    %v3202 = vpack.c.b16 %v3138, %v3134
    %3267 = vmatprep.subr.bf16.mxu0 %v3140
    %3268 = vmatpush1.bf16.msra.mxu0 %v3139
    %3269 = vmatprep.subr.bf16.mxu0 %v3144
    %3270 = vmatpush1.bf16.msra.mxu0 %v3143
    %3271 = vmatprep.subr.bf16.mxu0 %v3148
    %3272 = vmatpush1.bf16.msra.mxu0 %v3147
    %3273 = vmatprep.subr.bf16.mxu0 %v3152
    %3274 = vmatpush1.bf16.msra.mxu0 %v3151
    %3275 = vmatprep.subr.bf16.mxu0 %v3156
    %3276 = vmatpush1.bf16.msra.mxu0 %v3155
    %3277 = vmatprep.subr.bf16.mxu0 %v3160
    %3278 = vmatpush1.bf16.msra.mxu0 %v3159
    %3279 = vmatprep.subr.bf16.mxu0 %v3164
    %3280 = vmatpush1.bf16.msra.mxu0 %v3163
    %3281 = vmatprep.subr.bf16.mxu0 %v3168
    %3282 = vmatpush1.bf16.msra.mxu0 %v3167
    %3283 = vmatprep.subr.bf16.mxu0 %v3172
    %3284 = vmatpush1.bf16.msra.mxu0 %v3171
    %3285 = vmatprep.subr.bf16.mxu0 %v3176
    %3286 = vmatpush1.bf16.msra.mxu0 %v3175
    %3287 = vmatprep.subr.bf16.mxu0 %v3180
    %3288 = vmatpush1.bf16.msra.mxu0 %v3179
    %3289 = vmatprep.subr.bf16.mxu0 %v3184
    %3290 = vmatpush1.bf16.msra.mxu0 %v3183
    %3291 = vmatprep.subr.bf16.mxu0 %v3188
    %3292 = vmatpush1.bf16.msra.mxu0 %v3187
    %3293 = vmatprep.subr.bf16.mxu0 %v3192
    %3294 = vmatpush1.bf16.msra.mxu0 %v3191
    %3295 = vmatprep.subr.bf16.mxu0 %v3196
    %3296 = vmatpush1.bf16.msra.mxu0 %v3195
    %3297 = vmatprep.subr.bf16.mxu0 %v3200
    %3298 = vmatpush1.bf16.msra.mxu0 %v3199
    %3299 = vmatprep.mubr.bf16.mxu0 %v2924
    %3300 = vmatmul.mubr.bf16.gmra.mrb[0].mxu0 %v2923
    %v3301 = vpop.f32.mrb[0].mxu0
    %v3302 = vadd.f32 %v2930, %v3301
    %v3303 = vpop.f32.mrb[0].mxu0
    %v3304 = vadd.f32 %v2934, %v3303
    %v3305 = vpop.f32.mrb[0].mxu0
    %v3306 = vadd.f32 %v2930, %v3305
    %v3307 = vpop.f32.mrb[0].mxu0
    %v3308 = vadd.f32 %v2934, %v3307
    %3309 = vdwg.mxu0
    %3310 = vmatprep.subr.bf16.mxu0 %v3142
    %3311 = vmatpush1.bf16.msra.mxu0 %v3141
    %3312 = vmatprep.subr.bf16.mxu0 %v3146
    %3313 = vmatpush1.bf16.msra.mxu0 %v3145
    %3314 = vmatprep.subr.bf16.mxu0 %v3150
    %3315 = vmatpush1.bf16.msra.mxu0 %v3149
    %3316 = vmatprep.subr.bf16.mxu0 %v3154
    %3317 = vmatpush1.bf16.msra.mxu0 %v3153
    %3318 = vmatprep.subr.bf16.mxu0 %v3158
    %3319 = vmatpush1.bf16.msra.mxu0 %v3157
    %3320 = vmatprep.subr.bf16.mxu0 %v3162
    %3321 = vmatpush1.bf16.msra.mxu0 %v3161
    %3322 = vmatprep.subr.bf16.mxu0 %v3166
    %3323 = vmatpush1.bf16.msra.mxu0 %v3165
    %3324 = vmatprep.subr.bf16.mxu0 %v3170
    %3325 = vmatpush1.bf16.msra.mxu0 %v3169
    %3326 = vmatprep.subr.bf16.mxu0 %v3174
    %3327 = vmatpush1.bf16.msra.mxu0 %v3173
    %3328 = vmatprep.subr.bf16.mxu0 %v3178
    %3329 = vmatpush1.bf16.msra.mxu0 %v3177
    %3330 = vmatprep.subr.bf16.mxu0 %v3182
    %3331 = vmatpush1.bf16.msra.mxu0 %v3181
    %3332 = vmatprep.subr.bf16.mxu0 %v3186
    %3333 = vmatpush1.bf16.msra.mxu0 %v3185
    %3334 = vmatprep.subr.bf16.mxu0 %v3190
    %3335 = vmatpush1.bf16.msra.mxu0 %v3189
    %3336 = vmatprep.subr.bf16.mxu0 %v3194
    %3337 = vmatpush1.bf16.msra.mxu0 %v3193
    %3338 = vmatprep.subr.bf16.mxu0 %v3198
    %3339 = vmatpush1.bf16.msra.mxu0 %v3197
    %3340 = vmatprep.subr.bf16.mxu0 %v3202
    %3341 = vmatpush1.bf16.msra.mxu0 %v3201
    %3342 = vmatprep.mubr.bf16.mxu0 %v2924
    %3343 = vmatmul.mubr.bf16.gmra.mrb[0].mxu0 %v2923
    %v3344 = vpop.f32.mrb[0].mxu0
    %v3345 = vadd.f32 %v2938, %v3344
    %v3346 = vpop.f32.mrb[0].mxu0
    %v3347 = vadd.f32 %v2942, %v3346
    %v3348 = vpop.f32.mrb[0].mxu0
    %v3349 = vadd.f32 %v2938, %v3348
    %v3350 = vpop.f32.mrb[0].mxu0
    %v3351 = vadd.f32 %v2942, %v3350
    %3352 = vdwg.mxu0
    %v3353 = vmax.f32 %v3302, 0.0
    %v3354 = vmax.f32 %v3304, 0.0
    %v3355 = vmax.f32 %v3345, 0.0
    %v3356 = vmax.f32 %v3347, 0.0
    %v3357 = vmax.f32 %v3306, 0.0
    %v3358 = vmax.f32 %v3308, 0.0
    %v3359 = vmax.f32 %v3349, 0.0
    %v3360 = vmax.f32 %v3351, 0.0
    %v3361 = vld [vmem:[#allocation10] sm:$0xff]
    %v3362 = vld [vmem:[#allocation10 + $0x8] sm:$0xff]
    %v3363 = vld [vmem:[#allocation10 + $0x10] sm:$0xff]
    %v3364 = vld [vmem:[#allocation10 + $0x18] sm:$0xff]
    %v3365 = vld [vmem:[#allocation10 + $0x20] sm:$0xff]
    %v3366 = vld [vmem:[#allocation10 + $0x28] sm:$0xff]
    %v3367 = vld [vmem:[#allocation10 + $0x30] sm:$0xff]
    %v3368 = vld [vmem:[#allocation10 + $0x38] sm:$0xff]
    %v3369 = vld [vmem:[#allocation10 + $0x40] sm:$0xff]
    %v3370 = vld [vmem:[#allocation10 + $0x48] sm:$0xff]
    %v3371 = vld [vmem:[#allocation10 + $0x50] sm:$0xff]
    %v3372 = vld [vmem:[#allocation10 + $0x58] sm:$0xff]
    %v3373 = vld [vmem:[#allocation10 + $0x60] sm:$0xff]
    %v3374 = vld [vmem:[#allocation10 + $0x68] sm:$0xff]
    %v3375 = vld [vmem:[#allocation10 + $0x70] sm:$0xff]
    %v3376 = vld [vmem:[#allocation10 + $0x78] sm:$0xff]
    %v3377 = vld [vmem:[#allocation10 + $0x80] sm:$0xff]
    %v3378 = vld [vmem:[#allocation10 + $0x88] sm:$0xff]
    %v3379 = vld [vmem:[#allocation10 + $0x90] sm:$0xff]
    %v3380 = vld [vmem:[#allocation10 + $0x98] sm:$0xff]
    %v3381 = vld [vmem:[#allocation10 + $0xa0] sm:$0xff]
    %v3382 = vld [vmem:[#allocation10 + $0xa8] sm:$0xff]
    %v3383 = vld [vmem:[#allocation10 + $0xb0] sm:$0xff]
    %v3384 = vld [vmem:[#allocation10 + $0xb8] sm:$0xff]
    %v3385 = vld [vmem:[#allocation10 + $0xc0] sm:$0xff]
    %v3386 = vld [vmem:[#allocation10 + $0xc8] sm:$0xff]
    %v3387 = vld [vmem:[#allocation10 + $0xd0] sm:$0xff]
    %v3388 = vld [vmem:[#allocation10 + $0xd8] sm:$0xff]
    %v3389 = vld [vmem:[#allocation10 + $0xe0] sm:$0xff]
    %v3390 = vld [vmem:[#allocation10 + $0xe8] sm:$0xff]
    %v3391 = vld [vmem:[#allocation10 + $0xf0] sm:$0xff]
    %v3392 = vld [vmem:[#allocation10 + $0xf8] sm:$0xff]
    %v3393 = vld [vmem:[#allocation10 + $0x100] sm:$0xff]
    %v3394 = vld [vmem:[#allocation10 + $0x108] sm:$0xff]
    %v3395 = vld [vmem:[#allocation10 + $0x110] sm:$0xff]
    %v3396 = vld [vmem:[#allocation10 + $0x118] sm:$0xff]
    %v3397 = vld [vmem:[#allocation10 + $0x120] sm:$0xff]
    %v3398 = vld [vmem:[#allocation10 + $0x128] sm:$0xff]
    %v3399 = vld [vmem:[#allocation10 + $0x130] sm:$0xff]
    %v3400 = vld [vmem:[#allocation10 + $0x138] sm:$0xff]
    %v3401 = vld [vmem:[#allocation10 + $0x140] sm:$0xff]
    %v3402 = vld [vmem:[#allocation10 + $0x148] sm:$0xff]
    %v3403 = vld [vmem:[#allocation10 + $0x150] sm:$0xff]
    %v3404 = vld [vmem:[#allocation10 + $0x158] sm:$0xff]
    %v3405 = vld [vmem:[#allocation10 + $0x160] sm:$0xff]
    %v3406 = vld [vmem:[#allocation10 + $0x168] sm:$0xff]
    %v3407 = vld [vmem:[#allocation10 + $0x170] sm:$0xff]
    %v3408 = vld [vmem:[#allocation10 + $0x178] sm:$0xff]
    %v3409 = vld [vmem:[#allocation10 + $0x180] sm:$0xff]
    %v3410 = vld [vmem:[#allocation10 + $0x188] sm:$0xff]
    %v3411 = vld [vmem:[#allocation10 + $0x190] sm:$0xff]
    %v3412 = vld [vmem:[#allocation10 + $0x198] sm:$0xff]
    %v3413 = vld [vmem:[#allocation10 + $0x1a0] sm:$0xff]
    %v3414 = vld [vmem:[#allocation10 + $0x1a8] sm:$0xff]
    %v3415 = vld [vmem:[#allocation10 + $0x1b0] sm:$0xff]
    %v3416 = vld [vmem:[#allocation10 + $0x1b8] sm:$0xff]
    %v3417 = vld [vmem:[#allocation10 + $0x1c0] sm:$0xff]
    %v3418 = vld [vmem:[#allocation10 + $0x1c8] sm:$0xff]
    %v3419 = vld [vmem:[#allocation10 + $0x1d0] sm:$0xff]
    %v3420 = vld [vmem:[#allocation10 + $0x1d8] sm:$0xff]
    %v3421 = vld [vmem:[#allocation10 + $0x1e0] sm:$0xff]
    %v3422 = vld [vmem:[#allocation10 + $0x1e8] sm:$0xff]
    %v3423 = vld [vmem:[#allocation10 + $0x1f0] sm:$0xff]
    %v3424 = vld [vmem:[#allocation10 + $0x1f8] sm:$0xff]
    %v3425 = vpack.c.bf16 %v3357, %v3353
    %v3426 = vpack.c.bf16 %v3358, %v3354
    %v3427 = vpack.c.bf16 %v3359, %v3355
    %v3428 = vpack.c.bf16 %v3360, %v3356
    %v3429 = vld [vmem:[%s25] sm:$0x3]
    %v3431 = vlaneseq
    %v3432 = vshrl.u32 %v3431, 7
    %v3433 = vsub.s32 0, %v3432
    %v3434 = vrot.slane %v3429, %v3433
    %v3435 = vlaneseq
    %v3436 = vshrl.u32 %v3435, 7
    %v3437 = vsub.s32 1, %v3436
    %v3438 = vrot.slane %v3429, %v3437
    %v3505 = vunpack.c.l.b16 %v3361
    %v3506 = vunpack.c.h.b16 %v3361
    %v3507 = vunpack.c.l.b16 %v3362
    %v3508 = vunpack.c.h.b16 %v3362
    %v3509 = vunpack.c.l.b16 %v3363
    %v3510 = vunpack.c.h.b16 %v3363
    %v3511 = vunpack.c.l.b16 %v3364
    %v3512 = vunpack.c.h.b16 %v3364
    %v3513 = vunpack.c.l.b16 %v3365
    %v3514 = vunpack.c.h.b16 %v3365
    %v3515 = vunpack.c.l.b16 %v3366
    %v3516 = vunpack.c.h.b16 %v3366
    %v3517 = vunpack.c.l.b16 %v3367
    %v3518 = vunpack.c.h.b16 %v3367
    %v3519 = vunpack.c.l.b16 %v3368
    %v3520 = vunpack.c.h.b16 %v3368
    %v3521 = vunpack.c.l.b16 %v3369
    %v3522 = vunpack.c.h.b16 %v3369
    %v3523 = vunpack.c.l.b16 %v3370
    %v3524 = vunpack.c.h.b16 %v3370
    %v3525 = vunpack.c.l.b16 %v3371
    %v3526 = vunpack.c.h.b16 %v3371
    %v3527 = vunpack.c.l.b16 %v3372
    %v3528 = vunpack.c.h.b16 %v3372
    %v3529 = vunpack.c.l.b16 %v3373
    %v3530 = vunpack.c.h.b16 %v3373
    %v3531 = vunpack.c.l.b16 %v3374
    %v3532 = vunpack.c.h.b16 %v3374
    %v3533 = vunpack.c.l.b16 %v3375
    %v3534 = vunpack.c.h.b16 %v3375
    %v3535 = vunpack.c.l.b16 %v3376
    %v3536 = vunpack.c.h.b16 %v3376
    %v3537 = vunpack.c.l.b16 %v3377
    %v3538 = vunpack.c.h.b16 %v3377
    %v3539 = vunpack.c.l.b16 %v3378
    %v3540 = vunpack.c.h.b16 %v3378
    %v3541 = vunpack.c.l.b16 %v3379
    %v3542 = vunpack.c.h.b16 %v3379
    %v3543 = vunpack.c.l.b16 %v3380
    %v3544 = vunpack.c.h.b16 %v3380
    %v3545 = vunpack.c.l.b16 %v3381
    %v3546 = vunpack.c.h.b16 %v3381
    %v3547 = vunpack.c.l.b16 %v3382
    %v3548 = vunpack.c.h.b16 %v3382
    %v3549 = vunpack.c.l.b16 %v3383
    %v3550 = vunpack.c.h.b16 %v3383
    %v3551 = vunpack.c.l.b16 %v3384
    %v3552 = vunpack.c.h.b16 %v3384
    %v3553 = vunpack.c.l.b16 %v3385
    %v3554 = vunpack.c.h.b16 %v3385
    %v3555 = vunpack.c.l.b16 %v3386
    %v3556 = vunpack.c.h.b16 %v3386
    %v3557 = vunpack.c.l.b16 %v3387
    %v3558 = vunpack.c.h.b16 %v3387
    %v3559 = vunpack.c.l.b16 %v3388
    %v3560 = vunpack.c.h.b16 %v3388
    %v3561 = vunpack.c.l.b16 %v3389
    %v3562 = vunpack.c.h.b16 %v3389
    %v3563 = vunpack.c.l.b16 %v3390
    %v3564 = vunpack.c.h.b16 %v3390
    %v3565 = vunpack.c.l.b16 %v3391
    %v3566 = vunpack.c.h.b16 %v3391
    %v3567 = vunpack.c.l.b16 %v3392
    %v3568 = vunpack.c.h.b16 %v3392
    %v3569 = vunpack.c.l.b16 %v3393
    %v3570 = vunpack.c.h.b16 %v3393
    %v3571 = vunpack.c.l.b16 %v3394
    %v3572 = vunpack.c.h.b16 %v3394
    %v3573 = vunpack.c.l.b16 %v3395
    %v3574 = vunpack.c.h.b16 %v3395
    %v3575 = vunpack.c.l.b16 %v3396
    %v3576 = vunpack.c.h.b16 %v3396
    %v3577 = vunpack.c.l.b16 %v3397
    %v3578 = vunpack.c.h.b16 %v3397
    %v3579 = vunpack.c.l.b16 %v3398
    %v3580 = vunpack.c.h.b16 %v3398
    %v3581 = vunpack.c.l.b16 %v3399
    %v3582 = vunpack.c.h.b16 %v3399
    %v3583 = vunpack.c.l.b16 %v3400
    %v3584 = vunpack.c.h.b16 %v3400
    %v3585 = vunpack.c.l.b16 %v3401
    %v3586 = vunpack.c.h.b16 %v3401
    %v3587 = vunpack.c.l.b16 %v3402
    %v3588 = vunpack.c.h.b16 %v3402
    %v3589 = vunpack.c.l.b16 %v3403
    %v3590 = vunpack.c.h.b16 %v3403
    %v3591 = vunpack.c.l.b16 %v3404
    %v3592 = vunpack.c.h.b16 %v3404
    %v3593 = vunpack.c.l.b16 %v3405
    %v3594 = vunpack.c.h.b16 %v3405
    %v3595 = vunpack.c.l.b16 %v3406
    %v3596 = vunpack.c.h.b16 %v3406
    %v3597 = vunpack.c.l.b16 %v3407
    %v3598 = vunpack.c.h.b16 %v3407
    %v3599 = vunpack.c.l.b16 %v3408
    %v3600 = vunpack.c.h.b16 %v3408
    %v3601 = vunpack.c.l.b16 %v3409
    %v3602 = vunpack.c.h.b16 %v3409
    %v3603 = vunpack.c.l.b16 %v3410
    %v3604 = vunpack.c.h.b16 %v3410
    %v3605 = vunpack.c.l.b16 %v3411
    %v3606 = vunpack.c.h.b16 %v3411
    %v3607 = vunpack.c.l.b16 %v3412
    %v3608 = vunpack.c.h.b16 %v3412
    %v3609 = vunpack.c.l.b16 %v3413
    %v3610 = vunpack.c.h.b16 %v3413
    %v3611 = vunpack.c.l.b16 %v3414
    %v3612 = vunpack.c.h.b16 %v3414
    %v3613 = vunpack.c.l.b16 %v3415
    %v3614 = vunpack.c.h.b16 %v3415
    %v3615 = vunpack.c.l.b16 %v3416
    %v3616 = vunpack.c.h.b16 %v3416
    %v3617 = vunpack.c.l.b16 %v3417
    %v3618 = vunpack.c.h.b16 %v3417
    %v3619 = vunpack.c.l.b16 %v3418
    %v3620 = vunpack.c.h.b16 %v3418
    %v3621 = vunpack.c.l.b16 %v3419
    %v3622 = vunpack.c.h.b16 %v3419
    %v3623 = vunpack.c.l.b16 %v3420
    %v3624 = vunpack.c.h.b16 %v3420
    %v3625 = vunpack.c.l.b16 %v3421
    %v3626 = vunpack.c.h.b16 %v3421
    %v3627 = vunpack.c.l.b16 %v3422
    %v3628 = vunpack.c.h.b16 %v3422
    %v3629 = vunpack.c.l.b16 %v3423
    %v3630 = vunpack.c.h.b16 %v3423
    %v3631 = vunpack.c.l.b16 %v3424
    %v3632 = vunpack.c.h.b16 %v3424
    %v3633 = vpack.c.b16 %v3507, %v3505
    %v3634 = vpack.c.b16 %v3508, %v3506
    %v3635 = vpack.c.b16 %v3511, %v3509
    %v3636 = vpack.c.b16 %v3512, %v3510
    %v3637 = vpack.c.b16 %v3515, %v3513
    %v3638 = vpack.c.b16 %v3516, %v3514
    %v3639 = vpack.c.b16 %v3519, %v3517
    %v3640 = vpack.c.b16 %v3520, %v3518
    %v3641 = vpack.c.b16 %v3523, %v3521
    %v3642 = vpack.c.b16 %v3524, %v3522
    %v3643 = vpack.c.b16 %v3527, %v3525
    %v3644 = vpack.c.b16 %v3528, %v3526
    %v3645 = vpack.c.b16 %v3531, %v3529
    %v3646 = vpack.c.b16 %v3532, %v3530
    %v3647 = vpack.c.b16 %v3535, %v3533
    %v3648 = vpack.c.b16 %v3536, %v3534
    %v3649 = vpack.c.b16 %v3539, %v3537
    %v3650 = vpack.c.b16 %v3540, %v3538
    %v3651 = vpack.c.b16 %v3543, %v3541
    %v3652 = vpack.c.b16 %v3544, %v3542
    %v3653 = vpack.c.b16 %v3547, %v3545
    %v3654 = vpack.c.b16 %v3548, %v3546
    %v3655 = vpack.c.b16 %v3551, %v3549
    %v3656 = vpack.c.b16 %v3552, %v3550
    %v3657 = vpack.c.b16 %v3555, %v3553
    %v3658 = vpack.c.b16 %v3556, %v3554
    %v3659 = vpack.c.b16 %v3559, %v3557
    %v3660 = vpack.c.b16 %v3560, %v3558
    %v3661 = vpack.c.b16 %v3563, %v3561
    %v3662 = vpack.c.b16 %v3564, %v3562
    %v3663 = vpack.c.b16 %v3567, %v3565
    %v3664 = vpack.c.b16 %v3568, %v3566
    %v3665 = vpack.c.b16 %v3571, %v3569
    %v3666 = vpack.c.b16 %v3572, %v3570
    %v3667 = vpack.c.b16 %v3575, %v3573
    %v3668 = vpack.c.b16 %v3576, %v3574
    %v3669 = vpack.c.b16 %v3579, %v3577
    %v3670 = vpack.c.b16 %v3580, %v3578
    %v3671 = vpack.c.b16 %v3583, %v3581
    %v3672 = vpack.c.b16 %v3584, %v3582
    %v3673 = vpack.c.b16 %v3587, %v3585
    %v3674 = vpack.c.b16 %v3588, %v3586
    %v3675 = vpack.c.b16 %v3591, %v3589
    %v3676 = vpack.c.b16 %v3592, %v3590
    %v3677 = vpack.c.b16 %v3595, %v3593
    %v3678 = vpack.c.b16 %v3596, %v3594
    %v3679 = vpack.c.b16 %v3599, %v3597
    %v3680 = vpack.c.b16 %v3600, %v3598
    %v3681 = vpack.c.b16 %v3603, %v3601
    %v3682 = vpack.c.b16 %v3604, %v3602
    %v3683 = vpack.c.b16 %v3607, %v3605
    %v3684 = vpack.c.b16 %v3608, %v3606
    %v3685 = vpack.c.b16 %v3611, %v3609
    %v3686 = vpack.c.b16 %v3612, %v3610
    %v3687 = vpack.c.b16 %v3615, %v3613
    %v3688 = vpack.c.b16 %v3616, %v3614
    %v3689 = vpack.c.b16 %v3619, %v3617
    %v3690 = vpack.c.b16 %v3620, %v3618
    %v3691 = vpack.c.b16 %v3623, %v3621
    %v3692 = vpack.c.b16 %v3624, %v3622
    %v3693 = vpack.c.b16 %v3627, %v3625
    %v3694 = vpack.c.b16 %v3628, %v3626
    %v3695 = vpack.c.b16 %v3631, %v3629
    %v3696 = vpack.c.b16 %v3632, %v3630
    %3761 = vmatprep.subr.bf16.mxu0 %v3634
    %3762 = vmatpush1.bf16.msra.mxu0 %v3633
    %3763 = vmatprep.subr.bf16.mxu0 %v3636
    %3764 = vmatpush1.bf16.msra.mxu0 %v3635
    %3765 = vmatprep.subr.bf16.mxu0 %v3638
    %3766 = vmatpush1.bf16.msra.mxu0 %v3637
    %3767 = vmatprep.subr.bf16.mxu0 %v3640
    %3768 = vmatpush1.bf16.msra.mxu0 %v3639
    %3769 = vmatprep.subr.bf16.mxu0 %v3642
    %3770 = vmatpush1.bf16.msra.mxu0 %v3641
    %3771 = vmatprep.subr.bf16.mxu0 %v3644
    %3772 = vmatpush1.bf16.msra.mxu0 %v3643
    %3773 = vmatprep.subr.bf16.mxu0 %v3646
    %3774 = vmatpush1.bf16.msra.mxu0 %v3645
    %3775 = vmatprep.subr.bf16.mxu0 %v3648
    %3776 = vmatpush1.bf16.msra.mxu0 %v3647
    %3777 = vmatprep.subr.bf16.mxu0 %v3650
    %3778 = vmatpush1.bf16.msra.mxu0 %v3649
    %3779 = vmatprep.subr.bf16.mxu0 %v3652
    %3780 = vmatpush1.bf16.msra.mxu0 %v3651
    %3781 = vmatprep.subr.bf16.mxu0 %v3654
    %3782 = vmatpush1.bf16.msra.mxu0 %v3653
    %3783 = vmatprep.subr.bf16.mxu0 %v3656
    %3784 = vmatpush1.bf16.msra.mxu0 %v3655
    %3785 = vmatprep.subr.bf16.mxu0 %v3658
    %3786 = vmatpush1.bf16.msra.mxu0 %v3657
    %3787 = vmatprep.subr.bf16.mxu0 %v3660
    %3788 = vmatpush1.bf16.msra.mxu0 %v3659
    %3789 = vmatprep.subr.bf16.mxu0 %v3662
    %3790 = vmatpush1.bf16.msra.mxu0 %v3661
    %3791 = vmatprep.subr.bf16.mxu0 %v3664
    %3792 = vmatpush1.bf16.msra.mxu0 %v3663
    %3793 = vmatprep.mubr.bf16.mxu0 %v3426
    %3794 = vmatmul.mubr.bf16.gmra.mrb[0].mxu0 %v3425
    %v3795 = vpop.f32.mrb[0].mxu0
    %v3796 = vadd.f32 %v3434, %v3795
    %v3797 = vpop.f32.mrb[0].mxu0
    %v3798 = vadd.f32 %v3438, %v3797
    %v3799 = vpop.f32.mrb[0].mxu0
    %v3800 = vadd.f32 %v3434, %v3799
    %v3801 = vpop.f32.mrb[0].mxu0
    %v3802 = vadd.f32 %v3438, %v3801
    %3803 = vdwg.mxu0
    %3804 = vmatprep.subr.bf16.mxu0 %v3666
    %3805 = vmatpush1.bf16.msra.mxu0 %v3665
    %3806 = vmatprep.subr.bf16.mxu0 %v3668
    %3807 = vmatpush1.bf16.msra.mxu0 %v3667
    %3808 = vmatprep.subr.bf16.mxu0 %v3670
    %3809 = vmatpush1.bf16.msra.mxu0 %v3669
    %3810 = vmatprep.subr.bf16.mxu0 %v3672
    %3811 = vmatpush1.bf16.msra.mxu0 %v3671
    %3812 = vmatprep.subr.bf16.mxu0 %v3674
    %3813 = vmatpush1.bf16.msra.mxu0 %v3673
    %3814 = vmatprep.subr.bf16.mxu0 %v3676
    %3815 = vmatpush1.bf16.msra.mxu0 %v3675
    %3816 = vmatprep.subr.bf16.mxu0 %v3678
    %3817 = vmatpush1.bf16.msra.mxu0 %v3677
    %3818 = vmatprep.subr.bf16.mxu0 %v3680
    %3819 = vmatpush1.bf16.msra.mxu0 %v3679
    %3820 = vmatprep.subr.bf16.mxu0 %v3682
    %3821 = vmatpush1.bf16.msra.mxu0 %v3681
    %3822 = vmatprep.subr.bf16.mxu0 %v3684
    %3823 = vmatpush1.bf16.msra.mxu0 %v3683
    %3824 = vmatprep.subr.bf16.mxu0 %v3686
    %3825 = vmatpush1.bf16.msra.mxu0 %v3685
    %3826 = vmatprep.subr.bf16.mxu0 %v3688
    %3827 = vmatpush1.bf16.msra.mxu0 %v3687
    %3828 = vmatprep.subr.bf16.mxu0 %v3690
    %3829 = vmatpush1.bf16.msra.mxu0 %v3689
    %3830 = vmatprep.subr.bf16.mxu0 %v3692
    %3831 = vmatpush1.bf16.msra.mxu0 %v3691
    %3832 = vmatprep.subr.bf16.mxu0 %v3694
    %3833 = vmatpush1.bf16.msra.mxu0 %v3693
    %3834 = vmatprep.subr.bf16.mxu0 %v3696
    %3835 = vmatpush1.bf16.msra.mxu0 %v3695
    %3836 = vmatprep.mubr.bf16.mxu0 %v3428
    %3837 = vmatmul.mubr.bf16.gmra.mrb[0].mxu0 %v3427
    %v3838 = vpop.f32.mrb[0].mxu0
    %v3839 = vadd.f32 %v3796, %v3838
    %v3840 = vpop.f32.mrb[0].mxu0
    %v3841 = vadd.f32 %v3798, %v3840
    %v3842 = vpop.f32.mrb[0].mxu0
    %v3843 = vadd.f32 %v3800, %v3842
    %v3844 = vpop.f32.mrb[0].mxu0
    %v3845 = vadd.f32 %v3802, %v3844
    %3846 = vdwg.mxu0
    %v3847 = vadd.f32 %v2855, %v3839
    %v3848 = vadd.f32 %v2856, %v3841
    %v3849 = vadd.f32 %v2857, %v3843
    %v3850 = vadd.f32 %v2858, %v3845
    %v3851 = vld [vmem:[#allocation11] sm:$0x3]
    %v3852 = vld [vmem:[#allocation13] sm:$0x3]
    %v3853 = vadd.f32 %v3847, %v3848
    %3854 = vadd.xlane.f32.xlu0 %v3853
    %v3855 = vpop.xlane.xlu0 %3854
    %v3856 = vadd.f32 %v3849, %v3850
    %3857 = vadd.xlane.f32.xlu0 %v3856
    %v3858 = vpop.xlane.xlu0 %3857
    %v3859 = vmul.f32 %v3855, %v2802
    %v3860 = vmul.f32 %v3858, %v2802
    %v3861 = vsub.f32 %v3847, %v3859
    %v3862 = vsub.f32 %v3848, %v3859
    %v3863 = vsub.f32 %v3849, %v3860
    %v3864 = vsub.f32 %v3850, %v3860
    %v3865 = vmul.f32 %v3861, %v3861
    %v3866 = vmul.f32 %v3862, %v3862
    %v3867 = vmul.f32 %v3863, %v3863
    %v3868 = vmul.f32 %v3864, %v3864
    %v3869 = vadd.f32 %v3865, %v3866
    %3870 = vadd.xlane.f32.xlu0 %v3869
    %v3871 = vpop.xlane.xlu0 %3870
    %v3872 = vadd.f32 %v3867, %v3868
    %3873 = vadd.xlane.f32.xlu0 %v3872
    %v3874 = vpop.xlane.xlu0 %3873
    %v3875 = vmul.f32 %v3871, %v2802
    %v3876 = vmul.f32 %v3874, %v2802
    %v3877 = vadd.f32 %v3875, 1e-05
    %v3878 = vadd.f32 %v3876, 1e-05
    %v3879 = vrsqrt.pop %v3877
    %v3880 = vrsqrt.pop %v3878
    %v3881 = vmul.f32 %v3861, %v3879
    %v3882 = vmul.f32 %v3862, %v3879
    %v3883 = vmul.f32 %v3863, %v3880
    %v3884 = vmul.f32 %v3864, %v3880
    %v3886 = vlaneseq
    %v3887 = vshrl.u32 %v3886, 7
    %v3888 = vsub.s32 0, %v3887
    %v3889 = vrot.slane %v3851, %v3888
    %v3890 = vlaneseq
    %v3891 = vshrl.u32 %v3890, 7
    %v3892 = vsub.s32 1, %v3891
    %v3893 = vrot.slane %v3851, %v3892
    %v3896 = vmul.f32 %v3881, %v3889
    %v3897 = vmul.f32 %v3882, %v3893
    %v3898 = vmul.f32 %v3883, %v3889
    %v3899 = vmul.f32 %v3884, %v3893
    %v3901 = vlaneseq
    %v3902 = vshrl.u32 %v3901, 7
    %v3903 = vsub.s32 0, %v3902
    %v3904 = vrot.slane %v3852, %v3903
    %v3905 = vlaneseq
    %v3906 = vshrl.u32 %v3905, 7
    %v3907 = vsub.s32 1, %v3906
    %v3908 = vrot.slane %v3852, %v3907
    %v3911 = vadd.f32 %v3896, %v3904
    %v3912 = vadd.f32 %v3897, %v3908
    %v3913 = vadd.f32 %v3898, %v3904
    %v3914 = vadd.f32 %v3899, %v3908
    %v3915 = vadd.f32 %v3911, %v377
    %v3916 = vadd.f32 %v3912, %v378
    %v3917 = vadd.f32 %v3913, %v377
    %v3918 = vadd.f32 %v3914, %v378
    %v3919 = vld [vmem:[#allocation14] sm:$0xff]
    %v3920 = vld [vmem:[#allocation14 + $0x8] sm:$0xff]
    %v3921 = vld [vmem:[#allocation14 + $0x10] sm:$0xff]
    %v3922 = vld [vmem:[#allocation14 + $0x18] sm:$0xff]
    %v3923 = vld [vmem:[#allocation14 + $0x20] sm:$0xff]
    %v3924 = vld [vmem:[#allocation14 + $0x28] sm:$0xff]
    %v3925 = vld [vmem:[#allocation14 + $0x30] sm:$0xff]
    %v3926 = vld [vmem:[#allocation14 + $0x38] sm:$0xff]
    %v3927 = vld [vmem:[#allocation14 + $0x40] sm:$0xff]
    %v3928 = vld [vmem:[#allocation14 + $0x48] sm:$0xff]
    %v3929 = vld [vmem:[#allocation14 + $0x50] sm:$0xff]
    %v3930 = vld [vmem:[#allocation14 + $0x58] sm:$0xff]
    %v3931 = vld [vmem:[#allocation14 + $0x60] sm:$0xff]
    %v3932 = vld [vmem:[#allocation14 + $0x68] sm:$0xff]
    %v3933 = vld [vmem:[#allocation14 + $0x70] sm:$0xff]
    %v3934 = vld [vmem:[#allocation14 + $0x78] sm:$0xff]
    %v3935 = vld [vmem:[#allocation14 + $0x80] sm:$0xff]
    %v3936 = vld [vmem:[#allocation14 + $0x88] sm:$0xff]
    %v3937 = vld [vmem:[#allocation14 + $0x90] sm:$0xff]
    %v3938 = vld [vmem:[#allocation14 + $0x98] sm:$0xff]
    %v3939 = vld [vmem:[#allocation14 + $0xa0] sm:$0xff]
    %v3940 = vld [vmem:[#allocation14 + $0xa8] sm:$0xff]
    %v3941 = vld [vmem:[#allocation14 + $0xb0] sm:$0xff]
    %v3942 = vld [vmem:[#allocation14 + $0xb8] sm:$0xff]
    %v3943 = vld [vmem:[#allocation14 + $0xc0] sm:$0xff]
    %v3944 = vld [vmem:[#allocation14 + $0xc8] sm:$0xff]
    %v3945 = vld [vmem:[#allocation14 + $0xd0] sm:$0xff]
    %v3946 = vld [vmem:[#allocation14 + $0xd8] sm:$0xff]
    %v3947 = vld [vmem:[#allocation14 + $0xe0] sm:$0xff]
    %v3948 = vld [vmem:[#allocation14 + $0xe8] sm:$0xff]
    %v3949 = vld [vmem:[#allocation14 + $0xf0] sm:$0xff]
    %v3950 = vld [vmem:[#allocation14 + $0xf8] sm:$0xff]
    %v3951 = vld [vmem:[#allocation14 + $0x100] sm:$0xff]
    %v3952 = vld [vmem:[#allocation14 + $0x108] sm:$0xff]
    %v3953 = vld [vmem:[#allocation14 + $0x110] sm:$0xff]
    %v3954 = vld [vmem:[#allocation14 + $0x118] sm:$0xff]
    %v3955 = vld [vmem:[#allocation14 + $0x120] sm:$0xff]
    %v3956 = vld [vmem:[#allocation14 + $0x128] sm:$0xff]
    %v3957 = vld [vmem:[#allocation14 + $0x130] sm:$0xff]
    %v3958 = vld [vmem:[#allocation14 + $0x138] sm:$0xff]
    %v3959 = vld [vmem:[#allocation14 + $0x140] sm:$0xff]
    %v3960 = vld [vmem:[#allocation14 + $0x148] sm:$0xff]
    %v3961 = vld [vmem:[#allocation14 + $0x150] sm:$0xff]
    %v3962 = vld [vmem:[#allocation14 + $0x158] sm:$0xff]
    %v3963 = vld [vmem:[#allocation14 + $0x160] sm:$0xff]
    %v3964 = vld [vmem:[#allocation14 + $0x168] sm:$0xff]
    %v3965 = vld [vmem:[#allocation14 + $0x170] sm:$0xff]
    %v3966 = vld [vmem:[#allocation14 + $0x178] sm:$0xff]
    %v3967 = vld [vmem:[#allocation14 + $0x180] sm:$0xff]
    %v3968 = vld [vmem:[#allocation14 + $0x188] sm:$0xff]
    %v3969 = vld [vmem:[#allocation14 + $0x190] sm:$0xff]
    %v3970 = vld [vmem:[#allocation14 + $0x198] sm:$0xff]
    %v3971 = vld [vmem:[#allocation14 + $0x1a0] sm:$0xff]
    %v3972 = vld [vmem:[#allocation14 + $0x1a8] sm:$0xff]
    %v3973 = vld [vmem:[#allocation14 + $0x1b0] sm:$0xff]
    %v3974 = vld [vmem:[#allocation14 + $0x1b8] sm:$0xff]
    %v3975 = vld [vmem:[#allocation14 + $0x1c0] sm:$0xff]
    %v3976 = vld [vmem:[#allocation14 + $0x1c8] sm:$0xff]
    %v3977 = vld [vmem:[#allocation14 + $0x1d0] sm:$0xff]
    %v3978 = vld [vmem:[#allocation14 + $0x1d8] sm:$0xff]
    %v3979 = vld [vmem:[#allocation14 + $0x1e0] sm:$0xff]
    %v3980 = vld [vmem:[#allocation14 + $0x1e8] sm:$0xff]
    %v3981 = vld [vmem:[#allocation14 + $0x1f0] sm:$0xff]
    %v3982 = vld [vmem:[#allocation14 + $0x1f8] sm:$0xff]
    %v3983 = vpack.c.bf16 %v3917, %v3915
    %v3984 = vpack.c.bf16 %v3918, %v3916
    %v3985 = vld [vmem:[%s33] sm:$0xf]
    %v3987 = vlaneseq
    %v3988 = vshrl.u32 %v3987, 7
    %v3989 = vsub.s32 0, %v3988
    %v3990 = vrot.slane %v3985, %v3989
    %v3991 = vlaneseq
    %v3992 = vshrl.u32 %v3991, 7
    %v3993 = vsub.s32 1, %v3992
    %v3994 = vrot.slane %v3985, %v3993
    %v3995 = vlaneseq
    %v3996 = vshrl.u32 %v3995, 7
    %v3997 = vsub.s32 2, %v3996
    %v3998 = vrot.slane %v3985, %v3997
    %v3999 = vlaneseq
    %v4000 = vshrl.u32 %v3999, 7
    %v4001 = vsub.s32 3, %v4000
    %v4002 = vrot.slane %v3985, %v4001
    %v4071 = vunpack.c.l.b16 %v3919
    %v4072 = vunpack.c.h.b16 %v3919
    %v4073 = vunpack.c.l.b16 %v3920
    %v4074 = vunpack.c.h.b16 %v3920
    %v4075 = vunpack.c.l.b16 %v3921
    %v4076 = vunpack.c.h.b16 %v3921
    %v4077 = vunpack.c.l.b16 %v3922
    %v4078 = vunpack.c.h.b16 %v3922
    %v4079 = vunpack.c.l.b16 %v3923
    %v4080 = vunpack.c.h.b16 %v3923
    %v4081 = vunpack.c.l.b16 %v3924
    %v4082 = vunpack.c.h.b16 %v3924
    %v4083 = vunpack.c.l.b16 %v3925
    %v4084 = vunpack.c.h.b16 %v3925
    %v4085 = vunpack.c.l.b16 %v3926
    %v4086 = vunpack.c.h.b16 %v3926
    %v4087 = vunpack.c.l.b16 %v3927
    %v4088 = vunpack.c.h.b16 %v3927
    %v4089 = vunpack.c.l.b16 %v3928
    %v4090 = vunpack.c.h.b16 %v3928
    %v4091 = vunpack.c.l.b16 %v3929
    %v4092 = vunpack.c.h.b16 %v3929
    %v4093 = vunpack.c.l.b16 %v3930
    %v4094 = vunpack.c.h.b16 %v3930
    %v4095 = vunpack.c.l.b16 %v3931
    %v4096 = vunpack.c.h.b16 %v3931
    %v4097 = vunpack.c.l.b16 %v3932
    %v4098 = vunpack.c.h.b16 %v3932
    %v4099 = vunpack.c.l.b16 %v3933
    %v4100 = vunpack.c.h.b16 %v3933
    %v4101 = vunpack.c.l.b16 %v3934
    %v4102 = vunpack.c.h.b16 %v3934
    %v4103 = vunpack.c.l.b16 %v3935
    %v4104 = vunpack.c.h.b16 %v3935
    %v4105 = vunpack.c.l.b16 %v3936
    %v4106 = vunpack.c.h.b16 %v3936
    %v4107 = vunpack.c.l.b16 %v3937
    %v4108 = vunpack.c.h.b16 %v3937
    %v4109 = vunpack.c.l.b16 %v3938
    %v4110 = vunpack.c.h.b16 %v3938
    %v4111 = vunpack.c.l.b16 %v3939
    %v4112 = vunpack.c.h.b16 %v3939
    %v4113 = vunpack.c.l.b16 %v3940
    %v4114 = vunpack.c.h.b16 %v3940
    %v4115 = vunpack.c.l.b16 %v3941
    %v4116 = vunpack.c.h.b16 %v3941
    %v4117 = vunpack.c.l.b16 %v3942
    %v4118 = vunpack.c.h.b16 %v3942
    %v4119 = vunpack.c.l.b16 %v3943
    %v4120 = vunpack.c.h.b16 %v3943
    %v4121 = vunpack.c.l.b16 %v3944
    %v4122 = vunpack.c.h.b16 %v3944
    %v4123 = vunpack.c.l.b16 %v3945
    %v4124 = vunpack.c.h.b16 %v3945
    %v4125 = vunpack.c.l.b16 %v3946
    %v4126 = vunpack.c.h.b16 %v3946
    %v4127 = vunpack.c.l.b16 %v3947
    %v4128 = vunpack.c.h.b16 %v3947
    %v4129 = vunpack.c.l.b16 %v3948
    %v4130 = vunpack.c.h.b16 %v3948
    %v4131 = vunpack.c.l.b16 %v3949
    %v4132 = vunpack.c.h.b16 %v3949
    %v4133 = vunpack.c.l.b16 %v3950
    %v4134 = vunpack.c.h.b16 %v3950
    %v4135 = vunpack.c.l.b16 %v3951
    %v4136 = vunpack.c.h.b16 %v3951
    %v4137 = vunpack.c.l.b16 %v3952
    %v4138 = vunpack.c.h.b16 %v3952
    %v4139 = vunpack.c.l.b16 %v3953
    %v4140 = vunpack.c.h.b16 %v3953
    %v4141 = vunpack.c.l.b16 %v3954
    %v4142 = vunpack.c.h.b16 %v3954
    %v4143 = vunpack.c.l.b16 %v3955
    %v4144 = vunpack.c.h.b16 %v3955
    %v4145 = vunpack.c.l.b16 %v3956
    %v4146 = vunpack.c.h.b16 %v3956
    %v4147 = vunpack.c.l.b16 %v3957
    %v4148 = vunpack.c.h.b16 %v3957
    %v4149 = vunpack.c.l.b16 %v3958
    %v4150 = vunpack.c.h.b16 %v3958
    %v4151 = vunpack.c.l.b16 %v3959
    %v4152 = vunpack.c.h.b16 %v3959
    %v4153 = vunpack.c.l.b16 %v3960
    %v4154 = vunpack.c.h.b16 %v3960
    %v4155 = vunpack.c.l.b16 %v3961
    %v4156 = vunpack.c.h.b16 %v3961
    %v4157 = vunpack.c.l.b16 %v3962
    %v4158 = vunpack.c.h.b16 %v3962
    %v4159 = vunpack.c.l.b16 %v3963
    %v4160 = vunpack.c.h.b16 %v3963
    %v4161 = vunpack.c.l.b16 %v3964
    %v4162 = vunpack.c.h.b16 %v3964
    %v4163 = vunpack.c.l.b16 %v3965
    %v4164 = vunpack.c.h.b16 %v3965
    %v4165 = vunpack.c.l.b16 %v3966
    %v4166 = vunpack.c.h.b16 %v3966
    %v4167 = vunpack.c.l.b16 %v3967
    %v4168 = vunpack.c.h.b16 %v3967
    %v4169 = vunpack.c.l.b16 %v3968
    %v4170 = vunpack.c.h.b16 %v3968
    %v4171 = vunpack.c.l.b16 %v3969
    %v4172 = vunpack.c.h.b16 %v3969
    %v4173 = vunpack.c.l.b16 %v3970
    %v4174 = vunpack.c.h.b16 %v3970
    %v4175 = vunpack.c.l.b16 %v3971
    %v4176 = vunpack.c.h.b16 %v3971
    %v4177 = vunpack.c.l.b16 %v3972
    %v4178 = vunpack.c.h.b16 %v3972
    %v4179 = vunpack.c.l.b16 %v3973
    %v4180 = vunpack.c.h.b16 %v3973
    %v4181 = vunpack.c.l.b16 %v3974
    %v4182 = vunpack.c.h.b16 %v3974
    %v4183 = vunpack.c.l.b16 %v3975
    %v4184 = vunpack.c.h.b16 %v3975
    %v4185 = vunpack.c.l.b16 %v3976
    %v4186 = vunpack.c.h.b16 %v3976
    %v4187 = vunpack.c.l.b16 %v3977
    %v4188 = vunpack.c.h.b16 %v3977
    %v4189 = vunpack.c.l.b16 %v3978
    %v4190 = vunpack.c.h.b16 %v3978
    %v4191 = vunpack.c.l.b16 %v3979
    %v4192 = vunpack.c.h.b16 %v3979
    %v4193 = vunpack.c.l.b16 %v3980
    %v4194 = vunpack.c.h.b16 %v3980
    %v4195 = vunpack.c.l.b16 %v3981
    %v4196 = vunpack.c.h.b16 %v3981
    %v4197 = vunpack.c.l.b16 %v3982
    %v4198 = vunpack.c.h.b16 %v3982
    %v4199 = vpack.c.b16 %v4075, %v4071
    %v4200 = vpack.c.b16 %v4076, %v4072
    %v4201 = vpack.c.b16 %v4077, %v4073
    %v4202 = vpack.c.b16 %v4078, %v4074
    %v4203 = vpack.c.b16 %v4083, %v4079
    %v4204 = vpack.c.b16 %v4084, %v4080
    %v4205 = vpack.c.b16 %v4085, %v4081
    %v4206 = vpack.c.b16 %v4086, %v4082
    %v4207 = vpack.c.b16 %v4091, %v4087
    %v4208 = vpack.c.b16 %v4092, %v4088
    %v4209 = vpack.c.b16 %v4093, %v4089
    %v4210 = vpack.c.b16 %v4094, %v4090
    %v4211 = vpack.c.b16 %v4099, %v4095
    %v4212 = vpack.c.b16 %v4100, %v4096
    %v4213 = vpack.c.b16 %v4101, %v4097
    %v4214 = vpack.c.b16 %v4102, %v4098
    %v4215 = vpack.c.b16 %v4107, %v4103
    %v4216 = vpack.c.b16 %v4108, %v4104
    %v4217 = vpack.c.b16 %v4109, %v4105
    %v4218 = vpack.c.b16 %v4110, %v4106
    %v4219 = vpack.c.b16 %v4115, %v4111
    %v4220 = vpack.c.b16 %v4116, %v4112
    %v4221 = vpack.c.b16 %v4117, %v4113
    %v4222 = vpack.c.b16 %v4118, %v4114
    %v4223 = vpack.c.b16 %v4123, %v4119
    %v4224 = vpack.c.b16 %v4124, %v4120
    %v4225 = vpack.c.b16 %v4125, %v4121
    %v4226 = vpack.c.b16 %v4126, %v4122
    %v4227 = vpack.c.b16 %v4131, %v4127
    %v4228 = vpack.c.b16 %v4132, %v4128
    %v4229 = vpack.c.b16 %v4133, %v4129
    %v4230 = vpack.c.b16 %v4134, %v4130
    %v4231 = vpack.c.b16 %v4139, %v4135
    %v4232 = vpack.c.b16 %v4140, %v4136
    %v4233 = vpack.c.b16 %v4141, %v4137
    %v4234 = vpack.c.b16 %v4142, %v4138
    %v4235 = vpack.c.b16 %v4147, %v4143
    %v4236 = vpack.c.b16 %v4148, %v4144
    %v4237 = vpack.c.b16 %v4149, %v4145
    %v4238 = vpack.c.b16 %v4150, %v4146
    %v4239 = vpack.c.b16 %v4155, %v4151
    %v4240 = vpack.c.b16 %v4156, %v4152
    %v4241 = vpack.c.b16 %v4157, %v4153
    %v4242 = vpack.c.b16 %v4158, %v4154
    %v4243 = vpack.c.b16 %v4163, %v4159
    %v4244 = vpack.c.b16 %v4164, %v4160
    %v4245 = vpack.c.b16 %v4165, %v4161
    %v4246 = vpack.c.b16 %v4166, %v4162
    %v4247 = vpack.c.b16 %v4171, %v4167
    %v4248 = vpack.c.b16 %v4172, %v4168
    %v4249 = vpack.c.b16 %v4173, %v4169
    %v4250 = vpack.c.b16 %v4174, %v4170
    %v4251 = vpack.c.b16 %v4179, %v4175
    %v4252 = vpack.c.b16 %v4180, %v4176
    %v4253 = vpack.c.b16 %v4181, %v4177
    %v4254 = vpack.c.b16 %v4182, %v4178
    %v4255 = vpack.c.b16 %v4187, %v4183
    %v4256 = vpack.c.b16 %v4188, %v4184
    %v4257 = vpack.c.b16 %v4189, %v4185
    %v4258 = vpack.c.b16 %v4190, %v4186
    %v4259 = vpack.c.b16 %v4195, %v4191
    %v4260 = vpack.c.b16 %v4196, %v4192
    %v4261 = vpack.c.b16 %v4197, %v4193
    %v4262 = vpack.c.b16 %v4198, %v4194
    %4327 = vmatprep.subr.bf16.mxu0 %v4200
    %4328 = vmatpush1.bf16.msra.mxu0 %v4199
    %4329 = vmatprep.subr.bf16.mxu0 %v4204
    %4330 = vmatpush1.bf16.msra.mxu0 %v4203
    %4331 = vmatprep.subr.bf16.mxu0 %v4208
    %4332 = vmatpush1.bf16.msra.mxu0 %v4207
    %4333 = vmatprep.subr.bf16.mxu0 %v4212
    %4334 = vmatpush1.bf16.msra.mxu0 %v4211
    %4335 = vmatprep.subr.bf16.mxu0 %v4216
    %4336 = vmatpush1.bf16.msra.mxu0 %v4215
    %4337 = vmatprep.subr.bf16.mxu0 %v4220
    %4338 = vmatpush1.bf16.msra.mxu0 %v4219
    %4339 = vmatprep.subr.bf16.mxu0 %v4224
    %4340 = vmatpush1.bf16.msra.mxu0 %v4223
    %4341 = vmatprep.subr.bf16.mxu0 %v4228
    %4342 = vmatpush1.bf16.msra.mxu0 %v4227
    %4343 = vmatprep.subr.bf16.mxu0 %v4232
    %4344 = vmatpush1.bf16.msra.mxu0 %v4231
    %4345 = vmatprep.subr.bf16.mxu0 %v4236
    %4346 = vmatpush1.bf16.msra.mxu0 %v4235
    %4347 = vmatprep.subr.bf16.mxu0 %v4240
    %4348 = vmatpush1.bf16.msra.mxu0 %v4239
    %4349 = vmatprep.subr.bf16.mxu0 %v4244
    %4350 = vmatpush1.bf16.msra.mxu0 %v4243
    %4351 = vmatprep.subr.bf16.mxu0 %v4248
    %4352 = vmatpush1.bf16.msra.mxu0 %v4247
    %4353 = vmatprep.subr.bf16.mxu0 %v4252
    %4354 = vmatpush1.bf16.msra.mxu0 %v4251
    %4355 = vmatprep.subr.bf16.mxu0 %v4256
    %4356 = vmatpush1.bf16.msra.mxu0 %v4255
    %4357 = vmatprep.subr.bf16.mxu0 %v4260
    %4358 = vmatpush1.bf16.msra.mxu0 %v4259
    %4359 = vmatprep.mubr.bf16.mxu0 %v3984
    %4360 = vmatmul.mubr.bf16.gmra.mrb[0].mxu0 %v3983
    %v4361 = vpop.f32.mrb[0].mxu0
    %v4362 = vadd.f32 %v3990, %v4361
    %v4363 = vpop.f32.mrb[0].mxu0
    %v4364 = vadd.f32 %v3994, %v4363
    %v4365 = vpop.f32.mrb[0].mxu0
    %v4366 = vadd.f32 %v3990, %v4365
    %v4367 = vpop.f32.mrb[0].mxu0
    %v4368 = vadd.f32 %v3994, %v4367
    %4369 = vdwg.mxu0
    %4370 = vmatprep.subr.bf16.mxu0 %v4202
    %4371 = vmatpush1.bf16.msra.mxu0 %v4201
    %4372 = vmatprep.subr.bf16.mxu0 %v4206
    %4373 = vmatpush1.bf16.msra.mxu0 %v4205
    %4374 = vmatprep.subr.bf16.mxu0 %v4210
    %4375 = vmatpush1.bf16.msra.mxu0 %v4209
    %4376 = vmatprep.subr.bf16.mxu0 %v4214
    %4377 = vmatpush1.bf16.msra.mxu0 %v4213
    %4378 = vmatprep.subr.bf16.mxu0 %v4218
    %4379 = vmatpush1.bf16.msra.mxu0 %v4217
    %4380 = vmatprep.subr.bf16.mxu0 %v4222
    %4381 = vmatpush1.bf16.msra.mxu0 %v4221
    %4382 = vmatprep.subr.bf16.mxu0 %v4226
    %4383 = vmatpush1.bf16.msra.mxu0 %v4225
    %4384 = vmatprep.subr.bf16.mxu0 %v4230
    %4385 = vmatpush1.bf16.msra.mxu0 %v4229
    %4386 = vmatprep.subr.bf16.mxu0 %v4234
    %4387 = vmatpush1.bf16.msra.mxu0 %v4233
    %4388 = vmatprep.subr.bf16.mxu0 %v4238
    %4389 = vmatpush1.bf16.msra.mxu0 %v4237
    %4390 = vmatprep.subr.bf16.mxu0 %v4242
    %4391 = vmatpush1.bf16.msra.mxu0 %v4241
    %4392 = vmatprep.subr.bf16.mxu0 %v4246
    %4393 = vmatpush1.bf16.msra.mxu0 %v4245
    %4394 = vmatprep.subr.bf16.mxu0 %v4250
    %4395 = vmatpush1.bf16.msra.mxu0 %v4249
    %4396 = vmatprep.subr.bf16.mxu0 %v4254
    %4397 = vmatpush1.bf16.msra.mxu0 %v4253
    %4398 = vmatprep.subr.bf16.mxu0 %v4258
    %4399 = vmatpush1.bf16.msra.mxu0 %v4257
    %4400 = vmatprep.subr.bf16.mxu0 %v4262
    %4401 = vmatpush1.bf16.msra.mxu0 %v4261
    %4402 = vmatprep.mubr.bf16.mxu0 %v3984
    %4403 = vmatmul.mubr.bf16.gmra.mrb[0].mxu0 %v3983
    %v4404 = vpop.f32.mrb[0].mxu0
    %v4405 = vadd.f32 %v3998, %v4404
    %v4406 = vpop.f32.mrb[0].mxu0
    %v4407 = vadd.f32 %v4002, %v4406
    %v4408 = vpop.f32.mrb[0].mxu0
    %v4409 = vadd.f32 %v3998, %v4408
    %v4410 = vpop.f32.mrb[0].mxu0
    %v4411 = vadd.f32 %v4002, %v4410
    %4412 = vdwg.mxu0
    %v4413 = vld [vmem:[#allocation16] sm:$0xff]
    %v4414 = vld [vmem:[#allocation16 + $0x8] sm:$0xff]
    %v4415 = vld [vmem:[#allocation16 + $0x10] sm:$0xff]
    %v4416 = vld [vmem:[#allocation16 + $0x18] sm:$0xff]
    %v4417 = vld [vmem:[#allocation16 + $0x20] sm:$0xff]
    %v4418 = vld [vmem:[#allocation16 + $0x28] sm:$0xff]
    %v4419 = vld [vmem:[#allocation16 + $0x30] sm:$0xff]
    %v4420 = vld [vmem:[#allocation16 + $0x38] sm:$0xff]
    %v4421 = vld [vmem:[#allocation16 + $0x40] sm:$0xff]
    %v4422 = vld [vmem:[#allocation16 + $0x48] sm:$0xff]
    %v4423 = vld [vmem:[#allocation16 + $0x50] sm:$0xff]
    %v4424 = vld [vmem:[#allocation16 + $0x58] sm:$0xff]
    %v4425 = vld [vmem:[#allocation16 + $0x60] sm:$0xff]
    %v4426 = vld [vmem:[#allocation16 + $0x68] sm:$0xff]
    %v4427 = vld [vmem:[#allocation16 + $0x70] sm:$0xff]
    %v4428 = vld [vmem:[#allocation16 + $0x78] sm:$0xff]
    %v4429 = vld [vmem:[#allocation16 + $0x80] sm:$0xff]
    %v4430 = vld [vmem:[#allocation16 + $0x88] sm:$0xff]
    %v4431 = vld [vmem:[#allocation16 + $0x90] sm:$0xff]
    %v4432 = vld [vmem:[#allocation16 + $0x98] sm:$0xff]
    %v4433 = vld [vmem:[#allocation16 + $0xa0] sm:$0xff]
    %v4434 = vld [vmem:[#allocation16 + $0xa8] sm:$0xff]
    %v4435 = vld [vmem:[#allocation16 + $0xb0] sm:$0xff]
    %v4436 = vld [vmem:[#allocation16 + $0xb8] sm:$0xff]
    %v4437 = vld [vmem:[#allocation16 + $0xc0] sm:$0xff]
    %v4438 = vld [vmem:[#allocation16 + $0xc8] sm:$0xff]
    %v4439 = vld [vmem:[#allocation16 + $0xd0] sm:$0xff]
    %v4440 = vld [vmem:[#allocation16 + $0xd8] sm:$0xff]
    %v4441 = vld [vmem:[#allocation16 + $0xe0] sm:$0xff]
    %v4442 = vld [vmem:[#allocation16 + $0xe8] sm:$0xff]
    %v4443 = vld [vmem:[#allocation16 + $0xf0] sm:$0xff]
    %v4444 = vld [vmem:[#allocation16 + $0xf8] sm:$0xff]
    %v4445 = vpack.c.bf16 %v3913, %v3911
    %v4446 = vpack.c.bf16 %v3914, %v3912
    %v4447 = vld [vmem:[#allocation17] sm:$0x3]
    %v4449 = vlaneseq
    %v4450 = vshrl.u32 %v4449, 7
    %v4451 = vsub.s32 0, %v4450
    %v4452 = vrot.slane %v4447, %v4451
    %v4453 = vlaneseq
    %v4454 = vshrl.u32 %v4453, 7
    %v4455 = vsub.s32 1, %v4454
    %v4456 = vrot.slane %v4447, %v4455
    %v4491 = vunpack.c.l.b16 %v4413
    %v4492 = vunpack.c.h.b16 %v4413
    %v4493 = vunpack.c.l.b16 %v4414
    %v4494 = vunpack.c.h.b16 %v4414
    %v4495 = vunpack.c.l.b16 %v4415
    %v4496 = vunpack.c.h.b16 %v4415
    %v4497 = vunpack.c.l.b16 %v4416
    %v4498 = vunpack.c.h.b16 %v4416
    %v4499 = vunpack.c.l.b16 %v4417
    %v4500 = vunpack.c.h.b16 %v4417
    %v4501 = vunpack.c.l.b16 %v4418
    %v4502 = vunpack.c.h.b16 %v4418
    %v4503 = vunpack.c.l.b16 %v4419
    %v4504 = vunpack.c.h.b16 %v4419
    %v4505 = vunpack.c.l.b16 %v4420
    %v4506 = vunpack.c.h.b16 %v4420
    %v4507 = vunpack.c.l.b16 %v4421
    %v4508 = vunpack.c.h.b16 %v4421
    %v4509 = vunpack.c.l.b16 %v4422
    %v4510 = vunpack.c.h.b16 %v4422
    %v4511 = vunpack.c.l.b16 %v4423
    %v4512 = vunpack.c.h.b16 %v4423
    %v4513 = vunpack.c.l.b16 %v4424
    %v4514 = vunpack.c.h.b16 %v4424
    %v4515 = vunpack.c.l.b16 %v4425
    %v4516 = vunpack.c.h.b16 %v4425
    %v4517 = vunpack.c.l.b16 %v4426
    %v4518 = vunpack.c.h.b16 %v4426
    %v4519 = vunpack.c.l.b16 %v4427
    %v4520 = vunpack.c.h.b16 %v4427
    %v4521 = vunpack.c.l.b16 %v4428
    %v4522 = vunpack.c.h.b16 %v4428
    %v4523 = vunpack.c.l.b16 %v4429
    %v4524 = vunpack.c.h.b16 %v4429
    %v4525 = vunpack.c.l.b16 %v4430
    %v4526 = vunpack.c.h.b16 %v4430
    %v4527 = vunpack.c.l.b16 %v4431
    %v4528 = vunpack.c.h.b16 %v4431
    %v4529 = vunpack.c.l.b16 %v4432
    %v4530 = vunpack.c.h.b16 %v4432
    %v4531 = vunpack.c.l.b16 %v4433
    %v4532 = vunpack.c.h.b16 %v4433
    %v4533 = vunpack.c.l.b16 %v4434
    %v4534 = vunpack.c.h.b16 %v4434
    %v4535 = vunpack.c.l.b16 %v4435
    %v4536 = vunpack.c.h.b16 %v4435
    %v4537 = vunpack.c.l.b16 %v4436
    %v4538 = vunpack.c.h.b16 %v4436
    %v4539 = vunpack.c.l.b16 %v4437
    %v4540 = vunpack.c.h.b16 %v4437
    %v4541 = vunpack.c.l.b16 %v4438
    %v4542 = vunpack.c.h.b16 %v4438
    %v4543 = vunpack.c.l.b16 %v4439
    %v4544 = vunpack.c.h.b16 %v4439
    %v4545 = vunpack.c.l.b16 %v4440
    %v4546 = vunpack.c.h.b16 %v4440
    %v4547 = vunpack.c.l.b16 %v4441
    %v4548 = vunpack.c.h.b16 %v4441
    %v4549 = vunpack.c.l.b16 %v4442
    %v4550 = vunpack.c.h.b16 %v4442
    %v4551 = vunpack.c.l.b16 %v4443
    %v4552 = vunpack.c.h.b16 %v4443
    %v4553 = vunpack.c.l.b16 %v4444
    %v4554 = vunpack.c.h.b16 %v4444
    %v4555 = vpack.c.b16 %v4493, %v4491
    %v4556 = vpack.c.b16 %v4494, %v4492
    %v4557 = vpack.c.b16 %v4497, %v4495
    %v4558 = vpack.c.b16 %v4498, %v4496
    %v4559 = vpack.c.b16 %v4501, %v4499
    %v4560 = vpack.c.b16 %v4502, %v4500
    %v4561 = vpack.c.b16 %v4505, %v4503
    %v4562 = vpack.c.b16 %v4506, %v4504
    %v4563 = vpack.c.b16 %v4509, %v4507
    %v4564 = vpack.c.b16 %v4510, %v4508
    %v4565 = vpack.c.b16 %v4513, %v4511
    %v4566 = vpack.c.b16 %v4514, %v4512
    %v4567 = vpack.c.b16 %v4517, %v4515
    %v4568 = vpack.c.b16 %v4518, %v4516
    %v4569 = vpack.c.b16 %v4521, %v4519
    %v4570 = vpack.c.b16 %v4522, %v4520
    %v4571 = vpack.c.b16 %v4525, %v4523
    %v4572 = vpack.c.b16 %v4526, %v4524
    %v4573 = vpack.c.b16 %v4529, %v4527
    %v4574 = vpack.c.b16 %v4530, %v4528
    %v4575 = vpack.c.b16 %v4533, %v4531
    %v4576 = vpack.c.b16 %v4534, %v4532
    %v4577 = vpack.c.b16 %v4537, %v4535
    %v4578 = vpack.c.b16 %v4538, %v4536
    %v4579 = vpack.c.b16 %v4541, %v4539
    %v4580 = vpack.c.b16 %v4542, %v4540
    %v4581 = vpack.c.b16 %v4545, %v4543
    %v4582 = vpack.c.b16 %v4546, %v4544
    %v4583 = vpack.c.b16 %v4549, %v4547
    %v4584 = vpack.c.b16 %v4550, %v4548
    %v4585 = vpack.c.b16 %v4553, %v4551
    %v4586 = vpack.c.b16 %v4554, %v4552
    %4619 = vmatprep.subr.bf16.mxu0 %v4556
    %4620 = vmatpush1.bf16.msra.mxu0 %v4555
    %4621 = vmatprep.subr.bf16.mxu0 %v4558
    %4622 = vmatpush1.bf16.msra.mxu0 %v4557
    %4623 = vmatprep.subr.bf16.mxu0 %v4560
    %4624 = vmatpush1.bf16.msra.mxu0 %v4559
    %4625 = vmatprep.subr.bf16.mxu0 %v4562
    %4626 = vmatpush1.bf16.msra.mxu0 %v4561
    %4627 = vmatprep.subr.bf16.mxu0 %v4564
    %4628 = vmatpush1.bf16.msra.mxu0 %v4563
    %4629 = vmatprep.subr.bf16.mxu0 %v4566
    %4630 = vmatpush1.bf16.msra.mxu0 %v4565
    %4631 = vmatprep.subr.bf16.mxu0 %v4568
    %4632 = vmatpush1.bf16.msra.mxu0 %v4567
    %4633 = vmatprep.subr.bf16.mxu0 %v4570
    %4634 = vmatpush1.bf16.msra.mxu0 %v4569
    %4635 = vmatprep.subr.bf16.mxu0 %v4572
    %4636 = vmatpush1.bf16.msra.mxu0 %v4571
    %4637 = vmatprep.subr.bf16.mxu0 %v4574
    %4638 = vmatpush1.bf16.msra.mxu0 %v4573
    %4639 = vmatprep.subr.bf16.mxu0 %v4576
    %4640 = vmatpush1.bf16.msra.mxu0 %v4575
    %4641 = vmatprep.subr.bf16.mxu0 %v4578
    %4642 = vmatpush1.bf16.msra.mxu0 %v4577
    %4643 = vmatprep.subr.bf16.mxu0 %v4580
    %4644 = vmatpush1.bf16.msra.mxu0 %v4579
    %4645 = vmatprep.subr.bf16.mxu0 %v4582
    %4646 = vmatpush1.bf16.msra.mxu0 %v4581
    %4647 = vmatprep.subr.bf16.mxu0 %v4584
    %4648 = vmatpush1.bf16.msra.mxu0 %v4583
    %4649 = vmatprep.subr.bf16.mxu0 %v4586
    %4650 = vmatpush1.bf16.msra.mxu0 %v4585
    %4651 = vmatprep.mubr.bf16.mxu0 %v4446
    %4652 = vmatmul.mubr.bf16.gmra.mrb[0].mxu0 %v4445
    %v4653 = vpop.f32.mrb[0].mxu0
    %v4654 = vadd.f32 %v4452, %v4653
    %v4655 = vpop.f32.mrb[0].mxu0
    %v4656 = vadd.f32 %v4456, %v4655
    %v4657 = vpop.f32.mrb[0].mxu0
    %v4658 = vadd.f32 %v4452, %v4657
    %v4659 = vpop.f32.mrb[0].mxu0
    %v4660 = vadd.f32 %v4456, %v4659
    %4661 = vdwg.mxu0
    %v4662 = vmul.f32 %v4362, 0.17677669
    %v4663 = vmul.f32 %v4366, 0.17677669
    %v4664 = vpack.c.bf16 %v4662, %v4662
    %v4665 = vpack.c.bf16 %v4663, %v4663
    %v4666 = vpack.c.bf16 %v4405, %v4405
    %v4667 = vpack.c.bf16 %v4409, %v4409
    %vm4668 = vcmask 261120
    %v4670 = vsel %vm4668, %v4664, 0
    %v4673 = vsel %vm4668, %v4666, 0
    %4675 = vmatprep.subr.bf16.mxu0 0
    %4676 = vmatpush1.bf16.xpose.msra.mxu0 %v4673
    %4677 = vmatprep.subr.bf16.mxu0 0
    %4678 = vmatpush1.bf16.xpose.msra.mxu0 0
    %4679 = vmatprep.subr.bf16.mxu0 0
    %4680 = vmatpush1.bf16.xpose.msra.mxu0 0
    %4681 = vmatprep.subr.bf16.mxu0 0
    %4682 = vmatpush1.bf16.xpose.msra.mxu0 0
    %4683 = vmatprep.subr.bf16.mxu0 0
    %4684 = vmatpush1.bf16.xpose.msra.mxu0 0
    %4685 = vmatprep.subr.bf16.mxu0 0
    %4686 = vmatpush1.bf16.xpose.msra.mxu0 0
    %4687 = vmatprep.subr.bf16.mxu0 0
    %4688 = vmatpush1.bf16.xpose.msra.mxu0 0
    %4689 = vmatprep.subr.bf16.mxu0 0
    %4690 = vmatpush1.bf16.xpose.msra.mxu0 0
    %4691 = vmatprep.subr.bf16.mxu0 0
    %4692 = vmatpush1.bf16.xpose.msra.mxu0 0
    %4693 = vmatprep.subr.bf16.mxu0 0
    %4694 = vmatpush1.bf16.xpose.msra.mxu0 0
    %4695 = vmatprep.subr.bf16.mxu0 0
    %4696 = vmatpush1.bf16.xpose.msra.mxu0 0
    %4697 = vmatprep.subr.bf16.mxu0 0
    %4698 = vmatpush1.bf16.xpose.msra.mxu0 0
    %4699 = vmatprep.subr.bf16.mxu0 0
    %4700 = vmatpush1.bf16.xpose.msra.mxu0 0
    %4701 = vmatprep.subr.bf16.mxu0 0
    %4702 = vmatpush1.bf16.xpose.msra.mxu0 0
    %4703 = vmatprep.subr.bf16.mxu0 0
    %4704 = vmatpush1.bf16.xpose.msra.mxu0 0
    %4705 = vmatprep.subr.bf16.mxu0 0
    %4706 = vmatpush1.bf16.xpose.msra.mxu0 0
    %4707 = vmatprep.mubr.bf16.mxu0 0
    %4708 = vmatmul.mubr.bf16.gmra.mrb[0].mxu0 %v4670
    %v4709 = vpop.f32.mrb[0].mxu0
    %v4710 = vadd.f32 0.0, %v4709
    %v4711 = vpop.f32.mrb[0].mxu0
    %v4712 = vpop.f32.mrb[0].mxu0
    %v4713 = vpop.f32.mrb[0].mxu0
    %4714 = vdwg.mxu0
    %v4716 = vsel %vm4668, %v4665, 0
    %v4719 = vsel %vm4668, %v4667, 0
    %4721 = vmatprep.subr.bf16.mxu0 0
    %4722 = vmatpush1.bf16.xpose.msra.mxu0 %v4719
    %4723 = vmatprep.subr.bf16.mxu0 0
    %4724 = vmatpush1.bf16.xpose.msra.mxu0 0
    %4725 = vmatprep.subr.bf16.mxu0 0
    %4726 = vmatpush1.bf16.xpose.msra.mxu0 0
    %4727 = vmatprep.subr.bf16.mxu0 0
    %4728 = vmatpush1.bf16.xpose.msra.mxu0 0
    %4729 = vmatprep.subr.bf16.mxu0 0
    %4730 = vmatpush1.bf16.xpose.msra.mxu0 0
    %4731 = vmatprep.subr.bf16.mxu0 0
    %4732 = vmatpush1.bf16.xpose.msra.mxu0 0
    %4733 = vmatprep.subr.bf16.mxu0 0
    %4734 = vmatpush1.bf16.xpose.msra.mxu0 0
    %4735 = vmatprep.subr.bf16.mxu0 0
    %4736 = vmatpush1.bf16.xpose.msra.mxu0 0
    %4737 = vmatprep.subr.bf16.mxu0 0
    %4738 = vmatpush1.bf16.xpose.msra.mxu0 0
    %4739 = vmatprep.subr.bf16.mxu0 0
    %4740 = vmatpush1.bf16.xpose.msra.mxu0 0
    %4741 = vmatprep.subr.bf16.mxu0 0
    %4742 = vmatpush1.bf16.xpose.msra.mxu0 0
    %4743 = vmatprep.subr.bf16.mxu0 0
    %4744 = vmatpush1.bf16.xpose.msra.mxu0 0
    %4745 = vmatprep.subr.bf16.mxu0 0
    %4746 = vmatpush1.bf16.xpose.msra.mxu0 0
    %4747 = vmatprep.subr.bf16.mxu0 0
    %4748 = vmatpush1.bf16.xpose.msra.mxu0 0
    %4749 = vmatprep.subr.bf16.mxu0 0
    %4750 = vmatpush1.bf16.xpose.msra.mxu0 0
    %4751 = vmatprep.subr.bf16.mxu0 0
    %4752 = vmatpush1.bf16.xpose.msra.mxu0 0
    %4753 = vmatprep.mubr.bf16.mxu0 0
    %4754 = vmatmul.mubr.bf16.gmra.mrb[0].mxu0 %v4716
    %v4755 = vpop.f32.mrb[0].mxu0
    %v4756 = vadd.f32 0.0, %v4755
    %v4757 = vpop.f32.mrb[0].mxu0
    %v4758 = vpop.f32.mrb[0].mxu0
    %v4759 = vpop.f32.mrb[0].mxu0
    %4760 = vdwg.mxu0
    %v4761 = vsel %vm2664, %v4710, -inf
    %4762 = vmax.xlane.f32.xlu0 %v4761
    %v4763 = vpop.xlane.xlu0 %4762
    %v4764 = vsel %vm2664, %v4756, -inf
    %4765 = vmax.xlane.f32.xlu0 %v4764
    %v4766 = vpop.xlane.xlu0 %4765
    %v4767 = vsub.f32 %v4710, %v4763
    %v4768 = vsub.f32 %v4756, %v4766
    %v4769 = vmul.f32 %v4767, 1.442695
    %v4770 = vpow.pop %v4769
    %v4771 = vmul.f32 %v4768, 1.442695
    %v4772 = vpow.pop %v4771
    %v4773 = vsel %vm2664, %v4770, 0.0
    %4774 = vadd.xlane.f32.xlu0 %v4773
    %v4775 = vpop.xlane.xlu0 %4774
    %v4776 = vsel %vm2664, %v4772, 0.0
    %4777 = vadd.xlane.f32.xlu0 %v4776
    %v4778 = vpop.xlane.xlu0 %4777
    %v4779 = vrcp.pop %v4775
    %v4780 = vrcp.pop %v4778
    %v4781 = vmul.f32 %v4770, %v4779
    %v4782 = vmul.f32 %v4772, %v4780
    %v4783 = vpack.c.bf16 %v4781, %v4781
    %v4784 = vpack.c.bf16 %v4782, %v4782
    %v4785 = vpack.c.bf16 %v4654, %v4654
    %v4786 = vpack.c.bf16 %v4658, %v4658
    %v4788 = vsel %vm2664, %v4783, 0
    %v4791 = vsel %vm2696, %v4785, 0
    %4793 = vmatprep.subr.bf16.mxu0 0
    %4794 = vmatpush1.bf16.msra.mxu0 %v4791
    %4795 = vmatprep.subr.bf16.mxu0 0
    %4796 = vmatpush1.bf16.msra.mxu0 0
    %4797 = vmatprep.subr.bf16.mxu0 0
    %4798 = vmatpush1.bf16.msra.mxu0 0
    %4799 = vmatprep.subr.bf16.mxu0 0
    %4800 = vmatpush1.bf16.msra.mxu0 0
    %4801 = vmatprep.subr.bf16.mxu0 0
    %4802 = vmatpush1.bf16.msra.mxu0 0
    %4803 = vmatprep.subr.bf16.mxu0 0
    %4804 = vmatpush1.bf16.msra.mxu0 0
    %4805 = vmatprep.subr.bf16.mxu0 0
    %4806 = vmatpush1.bf16.msra.mxu0 0
    %4807 = vmatprep.subr.bf16.mxu0 0
    %4808 = vmatpush1.bf16.msra.mxu0 0
    %4809 = vmatprep.subr.bf16.mxu0 0
    %4810 = vmatpush1.bf16.msra.mxu0 0
    %4811 = vmatprep.subr.bf16.mxu0 0
    %4812 = vmatpush1.bf16.msra.mxu0 0
    %4813 = vmatprep.subr.bf16.mxu0 0
    %4814 = vmatpush1.bf16.msra.mxu0 0
    %4815 = vmatprep.subr.bf16.mxu0 0
    %4816 = vmatpush1.bf16.msra.mxu0 0
    %4817 = vmatprep.subr.bf16.mxu0 0
    %4818 = vmatpush1.bf16.msra.mxu0 0
    %4819 = vmatprep.subr.bf16.mxu0 0
    %4820 = vmatpush1.bf16.msra.mxu0 0
    %4821 = vmatprep.subr.bf16.mxu0 0
    %4822 = vmatpush1.bf16.msra.mxu0 0
    %4823 = vmatprep.subr.bf16.mxu0 0
    %4824 = vmatpush1.bf16.msra.mxu0 0
    %4825 = vmatprep.mubr.bf16.mxu0 0
    %4826 = vmatmul.mubr.bf16.gmra.mrb[0].mxu0 %v4788
    %v4827 = vpop.f32.mrb[0].mxu0
    %v4828 = vadd.f32 0.0, %v4827
    %v4829 = vpop.f32.mrb[0].mxu0
    %v4830 = vpop.f32.mrb[0].mxu0
    %v4831 = vpop.f32.mrb[0].mxu0
    %4832 = vdwg.mxu0
    %v4834 = vsel %vm2664, %v4784, 0
    %v4837 = vsel %vm2696, %v4786, 0
    %4839 = vmatprep.subr.bf16.mxu0 0
    %4840 = vmatpush1.bf16.msra.mxu0 %v4837
    %4841 = vmatprep.subr.bf16.mxu0 0
    %4842 = vmatpush1.bf16.msra.mxu0 0
    %4843 = vmatprep.subr.bf16.mxu0 0
    %4844 = vmatpush1.bf16.msra.mxu0 0
    %4845 = vmatprep.subr.bf16.mxu0 0
    %4846 = vmatpush1.bf16.msra.mxu0 0
    %4847 = vmatprep.subr.bf16.mxu0 0
    %4848 = vmatpush1.bf16.msra.mxu0 0
    %4849 = vmatprep.subr.bf16.mxu0 0
    %4850 = vmatpush1.bf16.msra.mxu0 0
    %4851 = vmatprep.subr.bf16.mxu0 0
    %4852 = vmatpush1.bf16.msra.mxu0 0
    %4853 = vmatprep.subr.bf16.mxu0 0
    %4854 = vmatpush1.bf16.msra.mxu0 0
    %4855 = vmatprep.subr.bf16.mxu0 0
    %4856 = vmatpush1.bf16.msra.mxu0 0
    %4857 = vmatprep.subr.bf16.mxu0 0
    %4858 = vmatpush1.bf16.msra.mxu0 0
    %4859 = vmatprep.subr.bf16.mxu0 0
    %4860 = vmatpush1.bf16.msra.mxu0 0
    %4861 = vmatprep.subr.bf16.mxu0 0
    %4862 = vmatpush1.bf16.msra.mxu0 0
    %4863 = vmatprep.subr.bf16.mxu0 0
    %4864 = vmatpush1.bf16.msra.mxu0 0
    %4865 = vmatprep.subr.bf16.mxu0 0
    %4866 = vmatpush1.bf16.msra.mxu0 0
    %4867 = vmatprep.subr.bf16.mxu0 0
    %4868 = vmatpush1.bf16.msra.mxu0 0
    %4869 = vmatprep.subr.bf16.mxu0 0
    %4870 = vmatpush1.bf16.msra.mxu0 0
    %4871 = vmatprep.mubr.bf16.mxu0 0
    %4872 = vmatmul.mubr.bf16.gmra.mrb[0].mxu0 %v4834
    %v4873 = vpop.f32.mrb[0].mxu0
    %v4874 = vadd.f32 0.0, %v4873
    %v4875 = vpop.f32.mrb[0].mxu0
    %v4876 = vpop.f32.mrb[0].mxu0
    %v4877 = vpop.f32.mrb[0].mxu0
    %4878 = vdwg.mxu0
    %4879 = vst.msk [vmem:[#allocation2] sm:$0xff] %vm4668, %v4828
    %4880 = vst.msk [vmem:[#allocation2 + $0x10] sm:$0xff] %vm4668, %v4874
    %4882 = vrot.lane.b32.xlu0 %v4664, 96
    %v4883 = vpop.permute.xlu0 %4882
    %4885 = vrot.lane.b32.xlu0 %v4666, 96
    %v4886 = vpop.permute.xlu0 %4885
    %v4888 = vsel %vm4668, %v4883, 0
    %v4891 = vsel %vm4668, %v4886, 0
    %4893 = vmatprep.subr.bf16.mxu0 0
    %4894 = vmatpush1.bf16.xpose.msra.mxu0 %v4891
    %4895 = vmatprep.subr.bf16.mxu0 0
    %4896 = vmatpush1.bf16.xpose.msra.mxu0 0
    %4897 = vmatprep.subr.bf16.mxu0 0
    %4898 = vmatpush1.bf16.xpose.msra.mxu0 0
    %4899 = vmatprep.subr.bf16.mxu0 0
    %4900 = vmatpush1.bf16.xpose.msra.mxu0 0
    %4901 = vmatprep.subr.bf16.mxu0 0
    %4902 = vmatpush1.bf16.xpose.msra.mxu0 0
    %4903 = vmatprep.subr.bf16.mxu0 0
    %4904 = vmatpush1.bf16.xpose.msra.mxu0 0
    %4905 = vmatprep.subr.bf16.mxu0 0
    %4906 = vmatpush1.bf16.xpose.msra.mxu0 0
    %4907 = vmatprep.subr.bf16.mxu0 0
    %4908 = vmatpush1.bf16.xpose.msra.mxu0 0
    %4909 = vmatprep.subr.bf16.mxu0 0
    %4910 = vmatpush1.bf16.xpose.msra.mxu0 0
    %4911 = vmatprep.subr.bf16.mxu0 0
    %4912 = vmatpush1.bf16.xpose.msra.mxu0 0
    %4913 = vmatprep.subr.bf16.mxu0 0
    %4914 = vmatpush1.bf16.xpose.msra.mxu0 0
    %4915 = vmatprep.subr.bf16.mxu0 0
    %4916 = vmatpush1.bf16.xpose.msra.mxu0 0
    %4917 = vmatprep.subr.bf16.mxu0 0
    %4918 = vmatpush1.bf16.xpose.msra.mxu0 0
    %4919 = vmatprep.subr.bf16.mxu0 0
    %4920 = vmatpush1.bf16.xpose.msra.mxu0 0
    %4921 = vmatprep.subr.bf16.mxu0 0
    %4922 = vmatpush1.bf16.xpose.msra.mxu0 0
    %4923 = vmatprep.subr.bf16.mxu0 0
    %4924 = vmatpush1.bf16.xpose.msra.mxu0 0
    %4925 = vmatprep.mubr.bf16.mxu0 0
    %4926 = vmatmul.mubr.bf16.gmra.mrb[0].mxu0 %v4888
    %v4927 = vpop.f32.mrb[0].mxu0
    %v4928 = vadd.f32 0.0, %v4927
    %v4929 = vpop.f32.mrb[0].mxu0
    %v4930 = vpop.f32.mrb[0].mxu0
    %v4931 = vpop.f32.mrb[0].mxu0
    %4932 = vdwg.mxu0
    %4934 = vrot.lane.b32.xlu0 %v4665, 96
    %v4935 = vpop.permute.xlu0 %4934
    %4937 = vrot.lane.b32.xlu0 %v4667, 96
    %v4938 = vpop.permute.xlu0 %4937
    %v4940 = vsel %vm4668, %v4935, 0
    %v4943 = vsel %vm4668, %v4938, 0
    %4945 = vmatprep.subr.bf16.mxu0 0
    %4946 = vmatpush1.bf16.xpose.msra.mxu0 %v4943
    %4947 = vmatprep.subr.bf16.mxu0 0
    %4948 = vmatpush1.bf16.xpose.msra.mxu0 0
    %4949 = vmatprep.subr.bf16.mxu0 0
    %4950 = vmatpush1.bf16.xpose.msra.mxu0 0
    %4951 = vmatprep.subr.bf16.mxu0 0
    %4952 = vmatpush1.bf16.xpose.msra.mxu0 0
    %4953 = vmatprep.subr.bf16.mxu0 0
    %4954 = vmatpush1.bf16.xpose.msra.mxu0 0
    %4955 = vmatprep.subr.bf16.mxu0 0
    %4956 = vmatpush1.bf16.xpose.msra.mxu0 0
    %4957 = vmatprep.subr.bf16.mxu0 0
    %4958 = vmatpush1.bf16.xpose.msra.mxu0 0
    %4959 = vmatprep.subr.bf16.mxu0 0
    %4960 = vmatpush1.bf16.xpose.msra.mxu0 0
    %4961 = vmatprep.subr.bf16.mxu0 0
    %4962 = vmatpush1.bf16.xpose.msra.mxu0 0
    %4963 = vmatprep.subr.bf16.mxu0 0
    %4964 = vmatpush1.bf16.xpose.msra.mxu0 0
    %4965 = vmatprep.subr.bf16.mxu0 0
    %4966 = vmatpush1.bf16.xpose.msra.mxu0 0
    %4967 = vmatprep.subr.bf16.mxu0 0
    %4968 = vmatpush1.bf16.xpose.msra.mxu0 0
    %4969 = vmatprep.subr.bf16.mxu0 0
    %4970 = vmatpush1.bf16.xpose.msra.mxu0 0
    %4971 = vmatprep.subr.bf16.mxu0 0
    %4972 = vmatpush1.bf16.xpose.msra.mxu0 0
    %4973 = vmatprep.subr.bf16.mxu0 0
    %4974 = vmatpush1.bf16.xpose.msra.mxu0 0
    %4975 = vmatprep.subr.bf16.mxu0 0
    %4976 = vmatpush1.bf16.xpose.msra.mxu0 0
    %4977 = vmatprep.mubr.bf16.mxu0 0
    %4978 = vmatmul.mubr.bf16.gmra.mrb[0].mxu0 %v4940
    %v4979 = vpop.f32.mrb[0].mxu0
    %v4980 = vadd.f32 0.0, %v4979
    %v4981 = vpop.f32.mrb[0].mxu0
    %v4982 = vpop.f32.mrb[0].mxu0
    %v4983 = vpop.f32.mrb[0].mxu0
    %4984 = vdwg.mxu0
    %v4985 = vsel %vm2664, %v4928, -inf
    %4986 = vmax.xlane.f32.xlu0 %v4985
    %v4987 = vpop.xlane.xlu0 %4986
    %v4988 = vsel %vm2664, %v4980, -inf
    %4989 = vmax.xlane.f32.xlu0 %v4988
    %v4990 = vpop.xlane.xlu0 %4989
    %v4991 = vsub.f32 %v4928, %v4987
    %v4992 = vsub.f32 %v4980, %v4990
    %v4993 = vmul.f32 %v4991, 1.442695
    %v4994 = vpow.pop %v4993
    %v4995 = vmul.f32 %v4992, 1.442695
    %v4996 = vpow.pop %v4995
    %v4997 = vsel %vm2664, %v4994, 0.0
    %4998 = vadd.xlane.f32.xlu0 %v4997
    %v4999 = vpop.xlane.xlu0 %4998
    %v5000 = vsel %vm2664, %v4996, 0.0
    %5001 = vadd.xlane.f32.xlu0 %v5000
    %v5002 = vpop.xlane.xlu0 %5001
    %v5003 = vrcp.pop %v4999
    %v5004 = vrcp.pop %v5002
    %v5005 = vmul.f32 %v4994, %v5003
    %v5006 = vmul.f32 %v4996, %v5004
    %v5007 = vpack.c.bf16 %v5005, %v5005
    %v5008 = vpack.c.bf16 %v5006, %v5006
    %5010 = vrot.lane.b32.xlu0 %v4785, 96
    %v5011 = vpop.permute.xlu0 %5010
    %v5013 = vsel %vm2664, %v5007, 0
    %v5016 = vsel %vm2696, %v5011, 0
    %5018 = vmatprep.subr.bf16.mxu0 0
    %5019 = vmatpush1.bf16.msra.mxu0 %v5016
    %5020 = vmatprep.subr.bf16.mxu0 0
    %5021 = vmatpush1.bf16.msra.mxu0 0
    %5022 = vmatprep.subr.bf16.mxu0 0
    %5023 = vmatpush1.bf16.msra.mxu0 0
    %5024 = vmatprep.subr.bf16.mxu0 0
    %5025 = vmatpush1.bf16.msra.mxu0 0
    %5026 = vmatprep.subr.bf16.mxu0 0
    %5027 = vmatpush1.bf16.msra.mxu0 0
    %5028 = vmatprep.subr.bf16.mxu0 0
    %5029 = vmatpush1.bf16.msra.mxu0 0
    %5030 = vmatprep.subr.bf16.mxu0 0
    %5031 = vmatpush1.bf16.msra.mxu0 0
    %5032 = vmatprep.subr.bf16.mxu0 0
    %5033 = vmatpush1.bf16.msra.mxu0 0
    %5034 = vmatprep.subr.bf16.mxu0 0
    %5035 = vmatpush1.bf16.msra.mxu0 0
    %5036 = vmatprep.subr.bf16.mxu0 0
    %5037 = vmatpush1.bf16.msra.mxu0 0
    %5038 = vmatprep.subr.bf16.mxu0 0
    %5039 = vmatpush1.bf16.msra.mxu0 0
    %5040 = vmatprep.subr.bf16.mxu0 0
    %5041 = vmatpush1.bf16.msra.mxu0 0
    %5042 = vmatprep.subr.bf16.mxu0 0
    %5043 = vmatpush1.bf16.msra.mxu0 0
    %5044 = vmatprep.subr.bf16.mxu0 0
    %5045 = vmatpush1.bf16.msra.mxu0 0
    %5046 = vmatprep.subr.bf16.mxu0 0
    %5047 = vmatpush1.bf16.msra.mxu0 0
    %5048 = vmatprep.subr.bf16.mxu0 0
    %5049 = vmatpush1.bf16.msra.mxu0 0
    %5050 = vmatprep.mubr.bf16.mxu0 0
    %5051 = vmatmul.mubr.bf16.gmra.mrb[0].mxu0 %v5013
    %v5052 = vpop.f32.mrb[0].mxu0
    %v5053 = vadd.f32 0.0, %v5052
    %v5054 = vpop.f32.mrb[0].mxu0
    %v5055 = vpop.f32.mrb[0].mxu0
    %v5056 = vpop.f32.mrb[0].mxu0
    %5057 = vdwg.mxu0
    %5059 = vrot.lane.b32.xlu0 %v4786, 96
    %v5060 = vpop.permute.xlu0 %5059
    %v5062 = vsel %vm2664, %v5008, 0
    %v5065 = vsel %vm2696, %v5060, 0
    %5067 = vmatprep.subr.bf16.mxu0 0
    %5068 = vmatpush1.bf16.msra.mxu0 %v5065
    %5069 = vmatprep.subr.bf16.mxu0 0
    %5070 = vmatpush1.bf16.msra.mxu0 0
    %5071 = vmatprep.subr.bf16.mxu0 0
    %5072 = vmatpush1.bf16.msra.mxu0 0
    %5073 = vmatprep.subr.bf16.mxu0 0
    %5074 = vmatpush1.bf16.msra.mxu0 0
    %5075 = vmatprep.subr.bf16.mxu0 0
    %5076 = vmatpush1.bf16.msra.mxu0 0
    %5077 = vmatprep.subr.bf16.mxu0 0
    %5078 = vmatpush1.bf16.msra.mxu0 0
    %5079 = vmatprep.subr.bf16.mxu0 0
    %5080 = vmatpush1.bf16.msra.mxu0 0
    %5081 = vmatprep.subr.bf16.mxu0 0
    %5082 = vmatpush1.bf16.msra.mxu0 0
    %5083 = vmatprep.subr.bf16.mxu0 0
    %5084 = vmatpush1.bf16.msra.mxu0 0
    %5085 = vmatprep.subr.bf16.mxu0 0
    %5086 = vmatpush1.bf16.msra.mxu0 0
    %5087 = vmatprep.subr.bf16.mxu0 0
    %5088 = vmatpush1.bf16.msra.mxu0 0
    %5089 = vmatprep.subr.bf16.mxu0 0
    %5090 = vmatpush1.bf16.msra.mxu0 0
    %5091 = vmatprep.subr.bf16.mxu0 0
    %5092 = vmatpush1.bf16.msra.mxu0 0
    %5093 = vmatprep.subr.bf16.mxu0 0
    %5094 = vmatpush1.bf16.msra.mxu0 0
    %5095 = vmatprep.subr.bf16.mxu0 0
    %5096 = vmatpush1.bf16.msra.mxu0 0
    %5097 = vmatprep.subr.bf16.mxu0 0
    %5098 = vmatpush1.bf16.msra.mxu0 0
    %5099 = vmatprep.mubr.bf16.mxu0 0
    %5100 = vmatmul.mubr.bf16.gmra.mrb[0].mxu0 %v5062
    %v5101 = vpop.f32.mrb[0].mxu0
    %v5102 = vadd.f32 0.0, %v5101
    %v5103 = vpop.f32.mrb[0].mxu0
    %v5104 = vpop.f32.mrb[0].mxu0
    %v5105 = vpop.f32.mrb[0].mxu0
    %5106 = vdwg.mxu0
    %5109 = vrot.lane.b32.xlu0 %v5053, 32
    %v5110 = vpop.permute.xlu0 %5109
    %5111 = vrot.lane.b32.xlu0 %v5102, 32
    %v5112 = vpop.permute.xlu0 %5111
    %vm5115 = vcmask 523520
    %5116 = vst.msk [vmem:[#allocation2] sm:$0xff] %vm5115, %v5110
    %5117 = vst.msk [vmem:[#allocation2 + $0x10] sm:$0xff] %vm5115, %v5112
    %5118 = vrot.lane.b32.xlu0 %v4664, 64
    %v5119 = vpop.permute.xlu0 %5118
    %5120 = vrot.lane.b32.xlu0 %v4666, 64
    %v5121 = vpop.permute.xlu0 %5120
    %v5123 = vsel %vm4668, %v5119, 0
    %v5126 = vsel %vm4668, %v5121, 0
    %5128 = vmatprep.subr.bf16.mxu0 0
    %5129 = vmatpush1.bf16.xpose.msra.mxu0 %v5126
    %5130 = vmatprep.subr.bf16.mxu0 0
    %5131 = vmatpush1.bf16.xpose.msra.mxu0 0
    %5132 = vmatprep.subr.bf16.mxu0 0
    %5133 = vmatpush1.bf16.xpose.msra.mxu0 0
    %5134 = vmatprep.subr.bf16.mxu0 0
    %5135 = vmatpush1.bf16.xpose.msra.mxu0 0
    %5136 = vmatprep.subr.bf16.mxu0 0
    %5137 = vmatpush1.bf16.xpose.msra.mxu0 0
    %5138 = vmatprep.subr.bf16.mxu0 0
    %5139 = vmatpush1.bf16.xpose.msra.mxu0 0
    %5140 = vmatprep.subr.bf16.mxu0 0
    %5141 = vmatpush1.bf16.xpose.msra.mxu0 0
    %5142 = vmatprep.subr.bf16.mxu0 0
    %5143 = vmatpush1.bf16.xpose.msra.mxu0 0
    %5144 = vmatprep.subr.bf16.mxu0 0
    %5145 = vmatpush1.bf16.xpose.msra.mxu0 0
    %5146 = vmatprep.subr.bf16.mxu0 0
    %5147 = vmatpush1.bf16.xpose.msra.mxu0 0
    %5148 = vmatprep.subr.bf16.mxu0 0
    %5149 = vmatpush1.bf16.xpose.msra.mxu0 0
    %5150 = vmatprep.subr.bf16.mxu0 0
    %5151 = vmatpush1.bf16.xpose.msra.mxu0 0
    %5152 = vmatprep.subr.bf16.mxu0 0
    %5153 = vmatpush1.bf16.xpose.msra.mxu0 0
    %5154 = vmatprep.subr.bf16.mxu0 0
    %5155 = vmatpush1.bf16.xpose.msra.mxu0 0
    %5156 = vmatprep.subr.bf16.mxu0 0
    %5157 = vmatpush1.bf16.xpose.msra.mxu0 0
    %5158 = vmatprep.subr.bf16.mxu0 0
    %5159 = vmatpush1.bf16.xpose.msra.mxu0 0
    %5160 = vmatprep.mubr.bf16.mxu0 0
    %5161 = vmatmul.mubr.bf16.gmra.mrb[0].mxu0 %v5123
    %v5162 = vpop.f32.mrb[0].mxu0
    %v5163 = vadd.f32 0.0, %v5162
    %v5164 = vpop.f32.mrb[0].mxu0
    %v5165 = vpop.f32.mrb[0].mxu0
    %v5166 = vpop.f32.mrb[0].mxu0
    %5167 = vdwg.mxu0
    %5168 = vrot.lane.b32.xlu0 %v4665, 64
    %v5169 = vpop.permute.xlu0 %5168
    %5170 = vrot.lane.b32.xlu0 %v4667, 64
    %v5171 = vpop.permute.xlu0 %5170
    %v5173 = vsel %vm4668, %v5169, 0
    %v5176 = vsel %vm4668, %v5171, 0
    %5178 = vmatprep.subr.bf16.mxu0 0
    %5179 = vmatpush1.bf16.xpose.msra.mxu0 %v5176
    %5180 = vmatprep.subr.bf16.mxu0 0
    %5181 = vmatpush1.bf16.xpose.msra.mxu0 0
    %5182 = vmatprep.subr.bf16.mxu0 0
    %5183 = vmatpush1.bf16.xpose.msra.mxu0 0
    %5184 = vmatprep.subr.bf16.mxu0 0
    %5185 = vmatpush1.bf16.xpose.msra.mxu0 0
    %5186 = vmatprep.subr.bf16.mxu0 0
    %5187 = vmatpush1.bf16.xpose.msra.mxu0 0
    %5188 = vmatprep.subr.bf16.mxu0 0
    %5189 = vmatpush1.bf16.xpose.msra.mxu0 0
    %5190 = vmatprep.subr.bf16.mxu0 0
    %5191 = vmatpush1.bf16.xpose.msra.mxu0 0
    %5192 = vmatprep.subr.bf16.mxu0 0
    %5193 = vmatpush1.bf16.xpose.msra.mxu0 0
    %5194 = vmatprep.subr.bf16.mxu0 0
    %5195 = vmatpush1.bf16.xpose.msra.mxu0 0
    %5196 = vmatprep.subr.bf16.mxu0 0
    %5197 = vmatpush1.bf16.xpose.msra.mxu0 0
    %5198 = vmatprep.subr.bf16.mxu0 0
    %5199 = vmatpush1.bf16.xpose.msra.mxu0 0
    %5200 = vmatprep.subr.bf16.mxu0 0
    %5201 = vmatpush1.bf16.xpose.msra.mxu0 0
    %5202 = vmatprep.subr.bf16.mxu0 0
    %5203 = vmatpush1.bf16.xpose.msra.mxu0 0
    %5204 = vmatprep.subr.bf16.mxu0 0
    %5205 = vmatpush1.bf16.xpose.msra.mxu0 0
    %5206 = vmatprep.subr.bf16.mxu0 0
    %5207 = vmatpush1.bf16.xpose.msra.mxu0 0
    %5208 = vmatprep.subr.bf16.mxu0 0
    %5209 = vmatpush1.bf16.xpose.msra.mxu0 0
    %5210 = vmatprep.mubr.bf16.mxu0 0
    %5211 = vmatmul.mubr.bf16.gmra.mrb[0].mxu0 %v5173
    %v5212 = vpop.f32.mrb[0].mxu0
    %v5213 = vadd.f32 0.0, %v5212
    %v5214 = vpop.f32.mrb[0].mxu0
    %v5215 = vpop.f32.mrb[0].mxu0
    %v5216 = vpop.f32.mrb[0].mxu0
    %5217 = vdwg.mxu0
    %v5218 = vsel %vm2664, %v5163, -inf
    %5219 = vmax.xlane.f32.xlu0 %v5218
    %v5220 = vpop.xlane.xlu0 %5219
    %v5221 = vsel %vm2664, %v5213, -inf
    %5222 = vmax.xlane.f32.xlu0 %v5221
    %v5223 = vpop.xlane.xlu0 %5222
    %v5224 = vsub.f32 %v5163, %v5220
    %v5225 = vsub.f32 %v5213, %v5223
    %v5226 = vmul.f32 %v5224, 1.442695
    %v5227 = vpow.pop %v5226
    %v5228 = vmul.f32 %v5225, 1.442695
    %v5229 = vpow.pop %v5228
    %v5230 = vsel %vm2664, %v5227, 0.0
    %5231 = vadd.xlane.f32.xlu0 %v5230
    %v5232 = vpop.xlane.xlu0 %5231
    %v5233 = vsel %vm2664, %v5229, 0.0
    %5234 = vadd.xlane.f32.xlu0 %v5233
    %v5235 = vpop.xlane.xlu0 %5234
    %v5236 = vrcp.pop %v5232
    %v5237 = vrcp.pop %v5235
    %v5238 = vmul.f32 %v5227, %v5236
    %v5239 = vmul.f32 %v5229, %v5237
    %v5240 = vpack.c.bf16 %v5238, %v5238
    %v5241 = vpack.c.bf16 %v5239, %v5239
    %5242 = vrot.lane.b32.xlu0 %v4785, 64
    %v5243 = vpop.permute.xlu0 %5242
    %v5245 = vsel %vm2664, %v5240, 0
    %v5248 = vsel %vm2696, %v5243, 0
    %5250 = vmatprep.subr.bf16.mxu0 0
    %5251 = vmatpush1.bf16.msra.mxu0 %v5248
    %5252 = vmatprep.subr.bf16.mxu0 0
    %5253 = vmatpush1.bf16.msra.mxu0 0
    %5254 = vmatprep.subr.bf16.mxu0 0
    %5255 = vmatpush1.bf16.msra.mxu0 0
    %5256 = vmatprep.subr.bf16.mxu0 0
    %5257 = vmatpush1.bf16.msra.mxu0 0
    %5258 = vmatprep.subr.bf16.mxu0 0
    %5259 = vmatpush1.bf16.msra.mxu0 0
    %5260 = vmatprep.subr.bf16.mxu0 0
    %5261 = vmatpush1.bf16.msra.mxu0 0
    %5262 = vmatprep.subr.bf16.mxu0 0
    %5263 = vmatpush1.bf16.msra.mxu0 0
    %5264 = vmatprep.subr.bf16.mxu0 0
    %5265 = vmatpush1.bf16.msra.mxu0 0
    %5266 = vmatprep.subr.bf16.mxu0 0
    %5267 = vmatpush1.bf16.msra.mxu0 0
    %5268 = vmatprep.subr.bf16.mxu0 0
    %5269 = vmatpush1.bf16.msra.mxu0 0
    %5270 = vmatprep.subr.bf16.mxu0 0
    %5271 = vmatpush1.bf16.msra.mxu0 0
    %5272 = vmatprep.subr.bf16.mxu0 0
    %5273 = vmatpush1.bf16.msra.mxu0 0
    %5274 = vmatprep.subr.bf16.mxu0 0
    %5275 = vmatpush1.bf16.msra.mxu0 0
    %5276 = vmatprep.subr.bf16.mxu0 0
    %5277 = vmatpush1.bf16.msra.mxu0 0
    %5278 = vmatprep.subr.bf16.mxu0 0
    %5279 = vmatpush1.bf16.msra.mxu0 0
    %5280 = vmatprep.subr.bf16.mxu0 0
    %5281 = vmatpush1.bf16.msra.mxu0 0
    %5282 = vmatprep.mubr.bf16.mxu0 0
    %5283 = vmatmul.mubr.bf16.gmra.mrb[0].mxu0 %v5245
    %v5284 = vpop.f32.mrb[0].mxu0
    %v5285 = vadd.f32 0.0, %v5284
    %v5286 = vpop.f32.mrb[0].mxu0
    %v5287 = vpop.f32.mrb[0].mxu0
    %v5288 = vpop.f32.mrb[0].mxu0
    %5289 = vdwg.mxu0
    %5290 = vrot.lane.b32.xlu0 %v4786, 64
    %v5291 = vpop.permute.xlu0 %5290
    %v5293 = vsel %vm2664, %v5241, 0
    %v5296 = vsel %vm2696, %v5291, 0
    %5298 = vmatprep.subr.bf16.mxu0 0
    %5299 = vmatpush1.bf16.msra.mxu0 %v5296
    %5300 = vmatprep.subr.bf16.mxu0 0
    %5301 = vmatpush1.bf16.msra.mxu0 0
    %5302 = vmatprep.subr.bf16.mxu0 0
    %5303 = vmatpush1.bf16.msra.mxu0 0
    %5304 = vmatprep.subr.bf16.mxu0 0
    %5305 = vmatpush1.bf16.msra.mxu0 0
    %5306 = vmatprep.subr.bf16.mxu0 0
    %5307 = vmatpush1.bf16.msra.mxu0 0
    %5308 = vmatprep.subr.bf16.mxu0 0
    %5309 = vmatpush1.bf16.msra.mxu0 0
    %5310 = vmatprep.subr.bf16.mxu0 0
    %5311 = vmatpush1.bf16.msra.mxu0 0
    %5312 = vmatprep.subr.bf16.mxu0 0
    %5313 = vmatpush1.bf16.msra.mxu0 0
    %5314 = vmatprep.subr.bf16.mxu0 0
    %5315 = vmatpush1.bf16.msra.mxu0 0
    %5316 = vmatprep.subr.bf16.mxu0 0
    %5317 = vmatpush1.bf16.msra.mxu0 0
    %5318 = vmatprep.subr.bf16.mxu0 0
    %5319 = vmatpush1.bf16.msra.mxu0 0
    %5320 = vmatprep.subr.bf16.mxu0 0
    %5321 = vmatpush1.bf16.msra.mxu0 0
    %5322 = vmatprep.subr.bf16.mxu0 0
    %5323 = vmatpush1.bf16.msra.mxu0 0
    %5324 = vmatprep.subr.bf16.mxu0 0
    %5325 = vmatpush1.bf16.msra.mxu0 0
    %5326 = vmatprep.subr.bf16.mxu0 0
    %5327 = vmatpush1.bf16.msra.mxu0 0
    %5328 = vmatprep.subr.bf16.mxu0 0
    %5329 = vmatpush1.bf16.msra.mxu0 0
    %5330 = vmatprep.mubr.bf16.mxu0 0
    %5331 = vmatmul.mubr.bf16.gmra.mrb[0].mxu0 %v5293
    %v5332 = vpop.f32.mrb[0].mxu0
    %v5333 = vadd.f32 0.0, %v5332
    %v5334 = vpop.f32.mrb[0].mxu0
    %v5335 = vpop.f32.mrb[0].mxu0
    %v5336 = vpop.f32.mrb[0].mxu0
    %5337 = vdwg.mxu0
    %5340 = vrot.lane.b32.xlu0 %v5285, 64
    %v5341 = vpop.permute.xlu0 %5340
    %5342 = vrot.lane.b32.xlu0 %v5333, 64
    %v5343 = vpop.permute.xlu0 %5342
    %vm5346 = vcmask 785920
    %5347 = vst.msk [vmem:[#allocation2] sm:$0xff] %vm5346, %v5341
    %5348 = vst.msk [vmem:[#allocation2 + $0x10] sm:$0xff] %vm5346, %v5343
    %5349 = vrot.lane.b32.xlu0 %v4664, 32
    %v5350 = vpop.permute.xlu0 %5349
    %5351 = vrot.lane.b32.xlu0 %v4666, 32
    %v5352 = vpop.permute.xlu0 %5351
    %v5354 = vsel %vm4668, %v5350, 0
    %v5357 = vsel %vm4668, %v5352, 0
    %5359 = vmatprep.subr.bf16.mxu0 0
    %5360 = vmatpush1.bf16.xpose.msra.mxu0 %v5357
    %5361 = vmatprep.subr.bf16.mxu0 0
    %5362 = vmatpush1.bf16.xpose.msra.mxu0 0
    %5363 = vmatprep.subr.bf16.mxu0 0
    %5364 = vmatpush1.bf16.xpose.msra.mxu0 0
    %5365 = vmatprep.subr.bf16.mxu0 0
    %5366 = vmatpush1.bf16.xpose.msra.mxu0 0
    %5367 = vmatprep.subr.bf16.mxu0 0
    %5368 = vmatpush1.bf16.xpose.msra.mxu0 0
    %5369 = vmatprep.subr.bf16.mxu0 0
    %5370 = vmatpush1.bf16.xpose.msra.mxu0 0
    %5371 = vmatprep.subr.bf16.mxu0 0
    %5372 = vmatpush1.bf16.xpose.msra.mxu0 0
    %5373 = vmatprep.subr.bf16.mxu0 0
    %5374 = vmatpush1.bf16.xpose.msra.mxu0 0
    %5375 = vmatprep.subr.bf16.mxu0 0
    %5376 = vmatpush1.bf16.xpose.msra.mxu0 0
    %5377 = vmatprep.subr.bf16.mxu0 0
    %5378 = vmatpush1.bf16.xpose.msra.mxu0 0
    %5379 = vmatprep.subr.bf16.mxu0 0
    %5380 = vmatpush1.bf16.xpose.msra.mxu0 0
    %5381 = vmatprep.subr.bf16.mxu0 0
    %5382 = vmatpush1.bf16.xpose.msra.mxu0 0
    %5383 = vmatprep.subr.bf16.mxu0 0
    %5384 = vmatpush1.bf16.xpose.msra.mxu0 0
    %5385 = vmatprep.subr.bf16.mxu0 0
    %5386 = vmatpush1.bf16.xpose.msra.mxu0 0
    %5387 = vmatprep.subr.bf16.mxu0 0
    %5388 = vmatpush1.bf16.xpose.msra.mxu0 0
    %5389 = vmatprep.subr.bf16.mxu0 0
    %5390 = vmatpush1.bf16.xpose.msra.mxu0 0
    %5391 = vmatprep.mubr.bf16.mxu0 0
    %5392 = vmatmul.mubr.bf16.gmra.mrb[0].mxu0 %v5354
    %v5393 = vpop.f32.mrb[0].mxu0
    %v5394 = vadd.f32 0.0, %v5393
    %v5395 = vpop.f32.mrb[0].mxu0
    %v5396 = vpop.f32.mrb[0].mxu0
    %v5397 = vpop.f32.mrb[0].mxu0
    %5398 = vdwg.mxu0
    %5399 = vrot.lane.b32.xlu0 %v4665, 32
    %v5400 = vpop.permute.xlu0 %5399
    %5401 = vrot.lane.b32.xlu0 %v4667, 32
    %v5402 = vpop.permute.xlu0 %5401
    %v5404 = vsel %vm4668, %v5400, 0
    %v5407 = vsel %vm4668, %v5402, 0
    %5409 = vmatprep.subr.bf16.mxu0 0
    %5410 = vmatpush1.bf16.xpose.msra.mxu0 %v5407
    %5411 = vmatprep.subr.bf16.mxu0 0
    %5412 = vmatpush1.bf16.xpose.msra.mxu0 0
    %5413 = vmatprep.subr.bf16.mxu0 0
    %5414 = vmatpush1.bf16.xpose.msra.mxu0 0
    %5415 = vmatprep.subr.bf16.mxu0 0
    %5416 = vmatpush1.bf16.xpose.msra.mxu0 0
    %5417 = vmatprep.subr.bf16.mxu0 0
    %5418 = vmatpush1.bf16.xpose.msra.mxu0 0
    %5419 = vmatprep.subr.bf16.mxu0 0
    %5420 = vmatpush1.bf16.xpose.msra.mxu0 0
    %5421 = vmatprep.subr.bf16.mxu0 0
    %5422 = vmatpush1.bf16.xpose.msra.mxu0 0
    %5423 = vmatprep.subr.bf16.mxu0 0
    %5424 = vmatpush1.bf16.xpose.msra.mxu0 0
    %5425 = vmatprep.subr.bf16.mxu0 0
    %5426 = vmatpush1.bf16.xpose.msra.mxu0 0
    %5427 = vmatprep.subr.bf16.mxu0 0
    %5428 = vmatpush1.bf16.xpose.msra.mxu0 0
    %5429 = vmatprep.subr.bf16.mxu0 0
    %5430 = vmatpush1.bf16.xpose.msra.mxu0 0
    %5431 = vmatprep.subr.bf16.mxu0 0
    %5432 = vmatpush1.bf16.xpose.msra.mxu0 0
    %5433 = vmatprep.subr.bf16.mxu0 0
    %5434 = vmatpush1.bf16.xpose.msra.mxu0 0
    %5435 = vmatprep.subr.bf16.mxu0 0
    %5436 = vmatpush1.bf16.xpose.msra.mxu0 0
    %5437 = vmatprep.subr.bf16.mxu0 0
    %5438 = vmatpush1.bf16.xpose.msra.mxu0 0
    %5439 = vmatprep.subr.bf16.mxu0 0
    %5440 = vmatpush1.bf16.xpose.msra.mxu0 0
    %5441 = vmatprep.mubr.bf16.mxu0 0
    %5442 = vmatmul.mubr.bf16.gmra.mrb[0].mxu0 %v5404
    %v5443 = vpop.f32.mrb[0].mxu0
    %v5444 = vadd.f32 0.0, %v5443
    %v5445 = vpop.f32.mrb[0].mxu0
    %v5446 = vpop.f32.mrb[0].mxu0
    %v5447 = vpop.f32.mrb[0].mxu0
    %5448 = vdwg.mxu0
    %v5449 = vsel %vm2664, %v5394, -inf
    %5450 = vmax.xlane.f32.xlu0 %v5449
    %v5451 = vpop.xlane.xlu0 %5450
    %v5452 = vsel %vm2664, %v5444, -inf
    %5453 = vmax.xlane.f32.xlu0 %v5452
    %v5454 = vpop.xlane.xlu0 %5453
    %v5455 = vsub.f32 %v5394, %v5451
    %v5456 = vsub.f32 %v5444, %v5454
    %v5457 = vmul.f32 %v5455, 1.442695
    %v5458 = vpow.pop %v5457
    %v5459 = vmul.f32 %v5456, 1.442695
    %v5460 = vpow.pop %v5459
    %v5461 = vsel %vm2664, %v5458, 0.0
    %5462 = vadd.xlane.f32.xlu0 %v5461
    %v5463 = vpop.xlane.xlu0 %5462
    %v5464 = vsel %vm2664, %v5460, 0.0
    %5465 = vadd.xlane.f32.xlu0 %v5464
    %v5466 = vpop.xlane.xlu0 %5465
    %v5467 = vrcp.pop %v5463
    %v5468 = vrcp.pop %v5466
    %v5469 = vmul.f32 %v5458, %v5467
    %v5470 = vmul.f32 %v5460, %v5468
    %v5471 = vpack.c.bf16 %v5469, %v5469
    %v5472 = vpack.c.bf16 %v5470, %v5470
    %5473 = vrot.lane.b32.xlu0 %v4785, 32
    %v5474 = vpop.permute.xlu0 %5473
    %v5476 = vsel %vm2664, %v5471, 0
    %v5479 = vsel %vm2696, %v5474, 0
    %5481 = vmatprep.subr.bf16.mxu0 0
    %5482 = vmatpush1.bf16.msra.mxu0 %v5479
    %5483 = vmatprep.subr.bf16.mxu0 0
    %5484 = vmatpush1.bf16.msra.mxu0 0
    %5485 = vmatprep.subr.bf16.mxu0 0
    %5486 = vmatpush1.bf16.msra.mxu0 0
    %5487 = vmatprep.subr.bf16.mxu0 0
    %5488 = vmatpush1.bf16.msra.mxu0 0
    %5489 = vmatprep.subr.bf16.mxu0 0
    %5490 = vmatpush1.bf16.msra.mxu0 0
    %5491 = vmatprep.subr.bf16.mxu0 0
    %5492 = vmatpush1.bf16.msra.mxu0 0
    %5493 = vmatprep.subr.bf16.mxu0 0
    %5494 = vmatpush1.bf16.msra.mxu0 0
    %5495 = vmatprep.subr.bf16.mxu0 0
    %5496 = vmatpush1.bf16.msra.mxu0 0
    %5497 = vmatprep.subr.bf16.mxu0 0
    %5498 = vmatpush1.bf16.msra.mxu0 0
    %5499 = vmatprep.subr.bf16.mxu0 0
    %5500 = vmatpush1.bf16.msra.mxu0 0
    %5501 = vmatprep.subr.bf16.mxu0 0
    %5502 = vmatpush1.bf16.msra.mxu0 0
    %5503 = vmatprep.subr.bf16.mxu0 0
    %5504 = vmatpush1.bf16.msra.mxu0 0
    %5505 = vmatprep.subr.bf16.mxu0 0
    %5506 = vmatpush1.bf16.msra.mxu0 0
    %5507 = vmatprep.subr.bf16.mxu0 0
    %5508 = vmatpush1.bf16.msra.mxu0 0
    %5509 = vmatprep.subr.bf16.mxu0 0
    %5510 = vmatpush1.bf16.msra.mxu0 0
    %5511 = vmatprep.subr.bf16.mxu0 0
    %5512 = vmatpush1.bf16.msra.mxu0 0
    %5513 = vmatprep.mubr.bf16.mxu0 0
    %5514 = vmatmul.mubr.bf16.gmra.mrb[0].mxu0 %v5476
    %v5515 = vpop.f32.mrb[0].mxu0
    %v5516 = vadd.f32 0.0, %v5515
    %v5517 = vpop.f32.mrb[0].mxu0
    %v5518 = vpop.f32.mrb[0].mxu0
    %v5519 = vpop.f32.mrb[0].mxu0
    %5520 = vdwg.mxu0
    %5521 = vrot.lane.b32.xlu0 %v4786, 32
    %v5522 = vpop.permute.xlu0 %5521
    %v5524 = vsel %vm2664, %v5472, 0
    %v5527 = vsel %vm2696, %v5522, 0
    %5529 = vmatprep.subr.bf16.mxu0 0
    %5530 = vmatpush1.bf16.msra.mxu0 %v5527
    %5531 = vmatprep.subr.bf16.mxu0 0
    %5532 = vmatpush1.bf16.msra.mxu0 0
    %5533 = vmatprep.subr.bf16.mxu0 0
    %5534 = vmatpush1.bf16.msra.mxu0 0
    %5535 = vmatprep.subr.bf16.mxu0 0
    %5536 = vmatpush1.bf16.msra.mxu0 0
    %5537 = vmatprep.subr.bf16.mxu0 0
    %5538 = vmatpush1.bf16.msra.mxu0 0
    %5539 = vmatprep.subr.bf16.mxu0 0
    %5540 = vmatpush1.bf16.msra.mxu0 0
    %5541 = vmatprep.subr.bf16.mxu0 0
    %5542 = vmatpush1.bf16.msra.mxu0 0
    %5543 = vmatprep.subr.bf16.mxu0 0
    %5544 = vmatpush1.bf16.msra.mxu0 0
    %5545 = vmatprep.subr.bf16.mxu0 0
    %5546 = vmatpush1.bf16.msra.mxu0 0
    %5547 = vmatprep.subr.bf16.mxu0 0
    %5548 = vmatpush1.bf16.msra.mxu0 0
    %5549 = vmatprep.subr.bf16.mxu0 0
    %5550 = vmatpush1.bf16.msra.mxu0 0
    %5551 = vmatprep.subr.bf16.mxu0 0
    %5552 = vmatpush1.bf16.msra.mxu0 0
    %5553 = vmatprep.subr.bf16.mxu0 0
    %5554 = vmatpush1.bf16.msra.mxu0 0
    %5555 = vmatprep.subr.bf16.mxu0 0
    %5556 = vmatpush1.bf16.msra.mxu0 0
    %5557 = vmatprep.subr.bf16.mxu0 0
    %5558 = vmatpush1.bf16.msra.mxu0 0
    %5559 = vmatprep.subr.bf16.mxu0 0
    %5560 = vmatpush1.bf16.msra.mxu0 0
    %5561 = vmatprep.mubr.bf16.mxu0 0
    %5562 = vmatmul.mubr.bf16.gmra.mrb[0].mxu0 %v5524
    %v5563 = vpop.f32.mrb[0].mxu0
    %v5564 = vadd.f32 0.0, %v5563
    %v5565 = vpop.f32.mrb[0].mxu0
    %v5566 = vpop.f32.mrb[0].mxu0
    %v5567 = vpop.f32.mrb[0].mxu0
    %5568 = vdwg.mxu0
    %5571 = vrot.lane.b32.xlu0 %v5516, 96
    %v5572 = vpop.permute.xlu0 %5571
    %5573 = vrot.lane.b32.xlu0 %v5564, 96
    %v5574 = vpop.permute.xlu0 %5573
    %vm5577 = vcmask 1048320
    %5578 = vst.msk [vmem:[#allocation2] sm:$0xff] %vm5577, %v5572
    %5579 = vst.msk [vmem:[#allocation2 + $0x10] sm:$0xff] %vm5577, %v5574
    %v5580 = vmul.f32 %v4364, 0.17677669
    %v5581 = vmul.f32 %v4368, 0.17677669
    %v5582 = vpack.c.bf16 %v5580, %v5580
    %v5583 = vpack.c.bf16 %v5581, %v5581
    %v5584 = vpack.c.bf16 %v4407, %v4407
    %v5585 = vpack.c.bf16 %v4411, %v4411
    %v5587 = vsel %vm4668, %v5582, 0
    %v5590 = vsel %vm4668, %v5584, 0
    %5592 = vmatprep.subr.bf16.mxu0 0
    %5593 = vmatpush1.bf16.xpose.msra.mxu0 %v5590
    %5594 = vmatprep.subr.bf16.mxu0 0
    %5595 = vmatpush1.bf16.xpose.msra.mxu0 0
    %5596 = vmatprep.subr.bf16.mxu0 0
    %5597 = vmatpush1.bf16.xpose.msra.mxu0 0
    %5598 = vmatprep.subr.bf16.mxu0 0
    %5599 = vmatpush1.bf16.xpose.msra.mxu0 0
    %5600 = vmatprep.subr.bf16.mxu0 0
    %5601 = vmatpush1.bf16.xpose.msra.mxu0 0
    %5602 = vmatprep.subr.bf16.mxu0 0
    %5603 = vmatpush1.bf16.xpose.msra.mxu0 0
    %5604 = vmatprep.subr.bf16.mxu0 0
    %5605 = vmatpush1.bf16.xpose.msra.mxu0 0
    %5606 = vmatprep.subr.bf16.mxu0 0
    %5607 = vmatpush1.bf16.xpose.msra.mxu0 0
    %5608 = vmatprep.subr.bf16.mxu0 0
    %5609 = vmatpush1.bf16.xpose.msra.mxu0 0
    %5610 = vmatprep.subr.bf16.mxu0 0
    %5611 = vmatpush1.bf16.xpose.msra.mxu0 0
    %5612 = vmatprep.subr.bf16.mxu0 0
    %5613 = vmatpush1.bf16.xpose.msra.mxu0 0
    %5614 = vmatprep.subr.bf16.mxu0 0
    %5615 = vmatpush1.bf16.xpose.msra.mxu0 0
    %5616 = vmatprep.subr.bf16.mxu0 0
    %5617 = vmatpush1.bf16.xpose.msra.mxu0 0
    %5618 = vmatprep.subr.bf16.mxu0 0
    %5619 = vmatpush1.bf16.xpose.msra.mxu0 0
    %5620 = vmatprep.subr.bf16.mxu0 0
    %5621 = vmatpush1.bf16.xpose.msra.mxu0 0
    %5622 = vmatprep.subr.bf16.mxu0 0
    %5623 = vmatpush1.bf16.xpose.msra.mxu0 0
    %5624 = vmatprep.mubr.bf16.mxu0 0
    %5625 = vmatmul.mubr.bf16.gmra.mrb[0].mxu0 %v5587
    %v5626 = vpop.f32.mrb[0].mxu0
    %v5627 = vadd.f32 0.0, %v5626
    %v5628 = vpop.f32.mrb[0].mxu0
    %v5629 = vpop.f32.mrb[0].mxu0
    %v5630 = vpop.f32.mrb[0].mxu0
    %5631 = vdwg.mxu0
    %v5633 = vsel %vm4668, %v5583, 0
    %v5636 = vsel %vm4668, %v5585, 0
    %5638 = vmatprep.subr.bf16.mxu0 0
    %5639 = vmatpush1.bf16.xpose.msra.mxu0 %v5636
    %5640 = vmatprep.subr.bf16.mxu0 0
    %5641 = vmatpush1.bf16.xpose.msra.mxu0 0
    %5642 = vmatprep.subr.bf16.mxu0 0
    %5643 = vmatpush1.bf16.xpose.msra.mxu0 0
    %5644 = vmatprep.subr.bf16.mxu0 0
    %5645 = vmatpush1.bf16.xpose.msra.mxu0 0
    %5646 = vmatprep.subr.bf16.mxu0 0
    %5647 = vmatpush1.bf16.xpose.msra.mxu0 0
    %5648 = vmatprep.subr.bf16.mxu0 0
    %5649 = vmatpush1.bf16.xpose.msra.mxu0 0
    %5650 = vmatprep.subr.bf16.mxu0 0
    %5651 = vmatpush1.bf16.xpose.msra.mxu0 0
    %5652 = vmatprep.subr.bf16.mxu0 0
    %5653 = vmatpush1.bf16.xpose.msra.mxu0 0
    %5654 = vmatprep.subr.bf16.mxu0 0
    %5655 = vmatpush1.bf16.xpose.msra.mxu0 0
    %5656 = vmatprep.subr.bf16.mxu0 0
    %5657 = vmatpush1.bf16.xpose.msra.mxu0 0
    %5658 = vmatprep.subr.bf16.mxu0 0
    %5659 = vmatpush1.bf16.xpose.msra.mxu0 0
    %5660 = vmatprep.subr.bf16.mxu0 0
    %5661 = vmatpush1.bf16.xpose.msra.mxu0 0
    %5662 = vmatprep.subr.bf16.mxu0 0
    %5663 = vmatpush1.bf16.xpose.msra.mxu0 0
    %5664 = vmatprep.subr.bf16.mxu0 0
    %5665 = vmatpush1.bf16.xpose.msra.mxu0 0
    %5666 = vmatprep.subr.bf16.mxu0 0
    %5667 = vmatpush1.bf16.xpose.msra.mxu0 0
    %5668 = vmatprep.subr.bf16.mxu0 0
    %5669 = vmatpush1.bf16.xpose.msra.mxu0 0
    %5670 = vmatprep.mubr.bf16.mxu0 0
    %5671 = vmatmul.mubr.bf16.gmra.mrb[0].mxu0 %v5633
    %v5672 = vpop.f32.mrb[0].mxu0
    %v5673 = vadd.f32 0.0, %v5672
    %v5674 = vpop.f32.mrb[0].mxu0
    %v5675 = vpop.f32.mrb[0].mxu0
    %v5676 = vpop.f32.mrb[0].mxu0
    %5677 = vdwg.mxu0
    %v5678 = vsel %vm2664, %v5627, -inf
    %5679 = vmax.xlane.f32.xlu0 %v5678
    %v5680 = vpop.xlane.xlu0 %5679
    %v5681 = vsel %vm2664, %v5673, -inf
    %5682 = vmax.xlane.f32.xlu0 %v5681
    %v5683 = vpop.xlane.xlu0 %5682
    %v5684 = vsub.f32 %v5627, %v5680
    %v5685 = vsub.f32 %v5673, %v5683
    %v5686 = vmul.f32 %v5684, 1.442695
    %v5687 = vpow.pop %v5686
    %v5688 = vmul.f32 %v5685, 1.442695
    %v5689 = vpow.pop %v5688
    %v5690 = vsel %vm2664, %v5687, 0.0
    %5691 = vadd.xlane.f32.xlu0 %v5690
    %v5692 = vpop.xlane.xlu0 %5691
    %v5693 = vsel %vm2664, %v5689, 0.0
    %5694 = vadd.xlane.f32.xlu0 %v5693
    %v5695 = vpop.xlane.xlu0 %5694
    %v5696 = vrcp.pop %v5692
    %v5697 = vrcp.pop %v5695
    %v5698 = vmul.f32 %v5687, %v5696
    %v5699 = vmul.f32 %v5689, %v5697
    %v5700 = vpack.c.bf16 %v5698, %v5698
    %v5701 = vpack.c.bf16 %v5699, %v5699
    %v5702 = vpack.c.bf16 %v4656, %v4656
    %v5703 = vpack.c.bf16 %v4660, %v4660
    %v5705 = vsel %vm2664, %v5700, 0
    %v5708 = vsel %vm2696, %v5702, 0
    %5710 = vmatprep.subr.bf16.mxu0 0
    %5711 = vmatpush1.bf16.msra.mxu0 %v5708
    %5712 = vmatprep.subr.bf16.mxu0 0
    %5713 = vmatpush1.bf16.msra.mxu0 0
    %5714 = vmatprep.subr.bf16.mxu0 0
    %5715 = vmatpush1.bf16.msra.mxu0 0
    %5716 = vmatprep.subr.bf16.mxu0 0
    %5717 = vmatpush1.bf16.msra.mxu0 0
    %5718 = vmatprep.subr.bf16.mxu0 0
    %5719 = vmatpush1.bf16.msra.mxu0 0
    %5720 = vmatprep.subr.bf16.mxu0 0
    %5721 = vmatpush1.bf16.msra.mxu0 0
    %5722 = vmatprep.subr.bf16.mxu0 0
    %5723 = vmatpush1.bf16.msra.mxu0 0
    %5724 = vmatprep.subr.bf16.mxu0 0
    %5725 = vmatpush1.bf16.msra.mxu0 0
    %5726 = vmatprep.subr.bf16.mxu0 0
    %5727 = vmatpush1.bf16.msra.mxu0 0
    %5728 = vmatprep.subr.bf16.mxu0 0
    %5729 = vmatpush1.bf16.msra.mxu0 0
    %5730 = vmatprep.subr.bf16.mxu0 0
    %5731 = vmatpush1.bf16.msra.mxu0 0
    %5732 = vmatprep.subr.bf16.mxu0 0
    %5733 = vmatpush1.bf16.msra.mxu0 0
    %5734 = vmatprep.subr.bf16.mxu0 0
    %5735 = vmatpush1.bf16.msra.mxu0 0
    %5736 = vmatprep.subr.bf16.mxu0 0
    %5737 = vmatpush1.bf16.msra.mxu0 0
    %5738 = vmatprep.subr.bf16.mxu0 0
    %5739 = vmatpush1.bf16.msra.mxu0 0
    %5740 = vmatprep.subr.bf16.mxu0 0
    %5741 = vmatpush1.bf16.msra.mxu0 0
    %5742 = vmatprep.mubr.bf16.mxu0 0
    %5743 = vmatmul.mubr.bf16.gmra.mrb[0].mxu0 %v5705
    %v5744 = vpop.f32.mrb[0].mxu0
    %v5745 = vadd.f32 0.0, %v5744
    %v5746 = vpop.f32.mrb[0].mxu0
    %v5747 = vpop.f32.mrb[0].mxu0
    %v5748 = vpop.f32.mrb[0].mxu0
    %5749 = vdwg.mxu0
    %v5751 = vsel %vm2664, %v5701, 0
    %v5754 = vsel %vm2696, %v5703, 0
    %5756 = vmatprep.subr.bf16.mxu0 0
    %5757 = vmatpush1.bf16.msra.mxu0 %v5754
    %5758 = vmatprep.subr.bf16.mxu0 0
    %5759 = vmatpush1.bf16.msra.mxu0 0
    %5760 = vmatprep.subr.bf16.mxu0 0
    %5761 = vmatpush1.bf16.msra.mxu0 0
    %5762 = vmatprep.subr.bf16.mxu0 0
    %5763 = vmatpush1.bf16.msra.mxu0 0
    %5764 = vmatprep.subr.bf16.mxu0 0
    %5765 = vmatpush1.bf16.msra.mxu0 0
    %5766 = vmatprep.subr.bf16.mxu0 0
    %5767 = vmatpush1.bf16.msra.mxu0 0
    %5768 = vmatprep.subr.bf16.mxu0 0
    %5769 = vmatpush1.bf16.msra.mxu0 0
    %5770 = vmatprep.subr.bf16.mxu0 0
    %5771 = vmatpush1.bf16.msra.mxu0 0
    %5772 = vmatprep.subr.bf16.mxu0 0
    %5773 = vmatpush1.bf16.msra.mxu0 0
    %5774 = vmatprep.subr.bf16.mxu0 0
    %5775 = vmatpush1.bf16.msra.mxu0 0
    %5776 = vmatprep.subr.bf16.mxu0 0
    %5777 = vmatpush1.bf16.msra.mxu0 0
    %5778 = vmatprep.subr.bf16.mxu0 0
    %5779 = vmatpush1.bf16.msra.mxu0 0
    %5780 = vmatprep.subr.bf16.mxu0 0
    %5781 = vmatpush1.bf16.msra.mxu0 0
    %5782 = vmatprep.subr.bf16.mxu0 0
    %5783 = vmatpush1.bf16.msra.mxu0 0
    %5784 = vmatprep.subr.bf16.mxu0 0
    %5785 = vmatpush1.bf16.msra.mxu0 0
    %5786 = vmatprep.subr.bf16.mxu0 0
    %5787 = vmatpush1.bf16.msra.mxu0 0
    %5788 = vmatprep.mubr.bf16.mxu0 0
    %5789 = vmatmul.mubr.bf16.gmra.mrb[0].mxu0 %v5751
    %v5790 = vpop.f32.mrb[0].mxu0
    %v5791 = vadd.f32 0.0, %v5790
    %v5792 = vpop.f32.mrb[0].mxu0
    %v5793 = vpop.f32.mrb[0].mxu0
    %v5794 = vpop.f32.mrb[0].mxu0
    %5795 = vdwg.mxu0
    %5796 = vst.msk [vmem:[#allocation2 + $0x8] sm:$0xff] %vm4668, %v5745
    %5797 = vst.msk [vmem:[#allocation2 + $0x18] sm:$0xff] %vm4668, %v5791
    %5799 = vrot.lane.b32.xlu0 %v5582, 96
    %v5800 = vpop.permute.xlu0 %5799
    %5802 = vrot.lane.b32.xlu0 %v5584, 96
    %v5803 = vpop.permute.xlu0 %5802
    %v5805 = vsel %vm4668, %v5800, 0
    %v5808 = vsel %vm4668, %v5803, 0
    %5810 = vmatprep.subr.bf16.mxu0 0
    %5811 = vmatpush1.bf16.xpose.msra.mxu0 %v5808
    %5812 = vmatprep.subr.bf16.mxu0 0
    %5813 = vmatpush1.bf16.xpose.msra.mxu0 0
    %5814 = vmatprep.subr.bf16.mxu0 0
    %5815 = vmatpush1.bf16.xpose.msra.mxu0 0
    %5816 = vmatprep.subr.bf16.mxu0 0
    %5817 = vmatpush1.bf16.xpose.msra.mxu0 0
    %5818 = vmatprep.subr.bf16.mxu0 0
    %5819 = vmatpush1.bf16.xpose.msra.mxu0 0
    %5820 = vmatprep.subr.bf16.mxu0 0
    %5821 = vmatpush1.bf16.xpose.msra.mxu0 0
    %5822 = vmatprep.subr.bf16.mxu0 0
    %5823 = vmatpush1.bf16.xpose.msra.mxu0 0
    %5824 = vmatprep.subr.bf16.mxu0 0
    %5825 = vmatpush1.bf16.xpose.msra.mxu0 0
    %5826 = vmatprep.subr.bf16.mxu0 0
    %5827 = vmatpush1.bf16.xpose.msra.mxu0 0
    %5828 = vmatprep.subr.bf16.mxu0 0
    %5829 = vmatpush1.bf16.xpose.msra.mxu0 0
    %5830 = vmatprep.subr.bf16.mxu0 0
    %5831 = vmatpush1.bf16.xpose.msra.mxu0 0
    %5832 = vmatprep.subr.bf16.mxu0 0
    %5833 = vmatpush1.bf16.xpose.msra.mxu0 0
    %5834 = vmatprep.subr.bf16.mxu0 0
    %5835 = vmatpush1.bf16.xpose.msra.mxu0 0
    %5836 = vmatprep.subr.bf16.mxu0 0
    %5837 = vmatpush1.bf16.xpose.msra.mxu0 0
    %5838 = vmatprep.subr.bf16.mxu0 0
    %5839 = vmatpush1.bf16.xpose.msra.mxu0 0
    %5840 = vmatprep.subr.bf16.mxu0 0
    %5841 = vmatpush1.bf16.xpose.msra.mxu0 0
    %5842 = vmatprep.mubr.bf16.mxu0 0
    %5843 = vmatmul.mubr.bf16.gmra.mrb[0].mxu0 %v5805
    %v5844 = vpop.f32.mrb[0].mxu0
    %v5845 = vadd.f32 0.0, %v5844
    %v5846 = vpop.f32.mrb[0].mxu0
    %v5847 = vpop.f32.mrb[0].mxu0
    %v5848 = vpop.f32.mrb[0].mxu0
    %5849 = vdwg.mxu0
    %5851 = vrot.lane.b32.xlu0 %v5583, 96
    %v5852 = vpop.permute.xlu0 %5851
    %5854 = vrot.lane.b32.xlu0 %v5585, 96
    %v5855 = vpop.permute.xlu0 %5854
    %v5857 = vsel %vm4668, %v5852, 0
    %v5860 = vsel %vm4668, %v5855, 0
    %5862 = vmatprep.subr.bf16.mxu0 0
    %5863 = vmatpush1.bf16.xpose.msra.mxu0 %v5860
    %5864 = vmatprep.subr.bf16.mxu0 0
    %5865 = vmatpush1.bf16.xpose.msra.mxu0 0
    %5866 = vmatprep.subr.bf16.mxu0 0
    %5867 = vmatpush1.bf16.xpose.msra.mxu0 0
    %5868 = vmatprep.subr.bf16.mxu0 0
    %5869 = vmatpush1.bf16.xpose.msra.mxu0 0
    %5870 = vmatprep.subr.bf16.mxu0 0
    %5871 = vmatpush1.bf16.xpose.msra.mxu0 0
    %5872 = vmatprep.subr.bf16.mxu0 0
    %5873 = vmatpush1.bf16.xpose.msra.mxu0 0
    %5874 = vmatprep.subr.bf16.mxu0 0
    %5875 = vmatpush1.bf16.xpose.msra.mxu0 0
    %5876 = vmatprep.subr.bf16.mxu0 0
    %5877 = vmatpush1.bf16.xpose.msra.mxu0 0
    %5878 = vmatprep.subr.bf16.mxu0 0
    %5879 = vmatpush1.bf16.xpose.msra.mxu0 0
    %5880 = vmatprep.subr.bf16.mxu0 0
    %5881 = vmatpush1.bf16.xpose.msra.mxu0 0
    %5882 = vmatprep.subr.bf16.mxu0 0
    %5883 = vmatpush1.bf16.xpose.msra.mxu0 0
    %5884 = vmatprep.subr.bf16.mxu0 0
    %5885 = vmatpush1.bf16.xpose.msra.mxu0 0
    %5886 = vmatprep.subr.bf16.mxu0 0
    %5887 = vmatpush1.bf16.xpose.msra.mxu0 0
    %5888 = vmatprep.subr.bf16.mxu0 0
    %5889 = vmatpush1.bf16.xpose.msra.mxu0 0
    %5890 = vmatprep.subr.bf16.mxu0 0
    %5891 = vmatpush1.bf16.xpose.msra.mxu0 0
    %5892 = vmatprep.subr.bf16.mxu0 0
    %5893 = vmatpush1.bf16.xpose.msra.mxu0 0
    %5894 = vmatprep.mubr.bf16.mxu0 0
    %5895 = vmatmul.mubr.bf16.gmra.mrb[0].mxu0 %v5857
    %v5896 = vpop.f32.mrb[0].mxu0
    %v5897 = vadd.f32 0.0, %v5896
    %v5898 = vpop.f32.mrb[0].mxu0
    %v5899 = vpop.f32.mrb[0].mxu0
    %v5900 = vpop.f32.mrb[0].mxu0
    %5901 = vdwg.mxu0
    %v5902 = vsel %vm2664, %v5845, -inf
    %5903 = vmax.xlane.f32.xlu0 %v5902
    %v5904 = vpop.xlane.xlu0 %5903
    %v5905 = vsel %vm2664, %v5897, -inf
    %5906 = vmax.xlane.f32.xlu0 %v5905
    %v5907 = vpop.xlane.xlu0 %5906
    %v5908 = vsub.f32 %v5845, %v5904
    %v5909 = vsub.f32 %v5897, %v5907
    %v5910 = vmul.f32 %v5908, 1.442695
    %v5911 = vpow.pop %v5910
    %v5912 = vmul.f32 %v5909, 1.442695
    %v5913 = vpow.pop %v5912
    %v5914 = vsel %vm2664, %v5911, 0.0
    %5915 = vadd.xlane.f32.xlu0 %v5914
    %v5916 = vpop.xlane.xlu0 %5915
    %v5917 = vsel %vm2664, %v5913, 0.0
    %5918 = vadd.xlane.f32.xlu0 %v5917
    %v5919 = vpop.xlane.xlu0 %5918
    %v5920 = vrcp.pop %v5916
    %v5921 = vrcp.pop %v5919
    %v5922 = vmul.f32 %v5911, %v5920
    %v5923 = vmul.f32 %v5913, %v5921
    %v5924 = vpack.c.bf16 %v5922, %v5922
    %v5925 = vpack.c.bf16 %v5923, %v5923
    %5927 = vrot.lane.b32.xlu0 %v5702, 96
    %v5928 = vpop.permute.xlu0 %5927
    %v5930 = vsel %vm2664, %v5924, 0
    %v5933 = vsel %vm2696, %v5928, 0
    %5935 = vmatprep.subr.bf16.mxu0 0
    %5936 = vmatpush1.bf16.msra.mxu0 %v5933
    %5937 = vmatprep.subr.bf16.mxu0 0
    %5938 = vmatpush1.bf16.msra.mxu0 0
    %5939 = vmatprep.subr.bf16.mxu0 0
    %5940 = vmatpush1.bf16.msra.mxu0 0
    %5941 = vmatprep.subr.bf16.mxu0 0
    %5942 = vmatpush1.bf16.msra.mxu0 0
    %5943 = vmatprep.subr.bf16.mxu0 0
    %5944 = vmatpush1.bf16.msra.mxu0 0
    %5945 = vmatprep.subr.bf16.mxu0 0
    %5946 = vmatpush1.bf16.msra.mxu0 0
    %5947 = vmatprep.subr.bf16.mxu0 0
    %5948 = vmatpush1.bf16.msra.mxu0 0
    %5949 = vmatprep.subr.bf16.mxu0 0
    %5950 = vmatpush1.bf16.msra.mxu0 0
    %5951 = vmatprep.subr.bf16.mxu0 0
    %5952 = vmatpush1.bf16.msra.mxu0 0
    %5953 = vmatprep.subr.bf16.mxu0 0
    %5954 = vmatpush1.bf16.msra.mxu0 0
    %5955 = vmatprep.subr.bf16.mxu0 0
    %5956 = vmatpush1.bf16.msra.mxu0 0
    %5957 = vmatprep.subr.bf16.mxu0 0
    %5958 = vmatpush1.bf16.msra.mxu0 0
    %5959 = vmatprep.subr.bf16.mxu0 0
    %5960 = vmatpush1.bf16.msra.mxu0 0
    %5961 = vmatprep.subr.bf16.mxu0 0
    %5962 = vmatpush1.bf16.msra.mxu0 0
    %5963 = vmatprep.subr.bf16.mxu0 0
    %5964 = vmatpush1.bf16.msra.mxu0 0
    %5965 = vmatprep.subr.bf16.mxu0 0
    %5966 = vmatpush1.bf16.msra.mxu0 0
    %5967 = vmatprep.mubr.bf16.mxu0 0
    %5968 = vmatmul.mubr.bf16.gmra.mrb[0].mxu0 %v5930
    %v5969 = vpop.f32.mrb[0].mxu0
    %v5970 = vadd.f32 0.0, %v5969
    %v5971 = vpop.f32.mrb[0].mxu0
    %v5972 = vpop.f32.mrb[0].mxu0
    %v5973 = vpop.f32.mrb[0].mxu0
    %5974 = vdwg.mxu0
    %5976 = vrot.lane.b32.xlu0 %v5703, 96
    %v5977 = vpop.permute.xlu0 %5976
    %v5979 = vsel %vm2664, %v5925, 0
    %v5982 = vsel %vm2696, %v5977, 0
    %5984 = vmatprep.subr.bf16.mxu0 0
    %5985 = vmatpush1.bf16.msra.mxu0 %v5982
    %5986 = vmatprep.subr.bf16.mxu0 0
    %5987 = vmatpush1.bf16.msra.mxu0 0
    %5988 = vmatprep.subr.bf16.mxu0 0
    %5989 = vmatpush1.bf16.msra.mxu0 0
    %5990 = vmatprep.subr.bf16.mxu0 0
    %5991 = vmatpush1.bf16.msra.mxu0 0
    %5992 = vmatprep.subr.bf16.mxu0 0
    %5993 = vmatpush1.bf16.msra.mxu0 0
    %5994 = vmatprep.subr.bf16.mxu0 0
    %5995 = vmatpush1.bf16.msra.mxu0 0
    %5996 = vmatprep.subr.bf16.mxu0 0
    %5997 = vmatpush1.bf16.msra.mxu0 0
    %5998 = vmatprep.subr.bf16.mxu0 0
    %5999 = vmatpush1.bf16.msra.mxu0 0
    %6000 = vmatprep.subr.bf16.mxu0 0
    %6001 = vmatpush1.bf16.msra.mxu0 0
    %6002 = vmatprep.subr.bf16.mxu0 0
    %6003 = vmatpush1.bf16.msra.mxu0 0
    %6004 = vmatprep.subr.bf16.mxu0 0
    %6005 = vmatpush1.bf16.msra.mxu0 0
    %6006 = vmatprep.subr.bf16.mxu0 0
    %6007 = vmatpush1.bf16.msra.mxu0 0
    %6008 = vmatprep.subr.bf16.mxu0 0
    %6009 = vmatpush1.bf16.msra.mxu0 0
    %6010 = vmatprep.subr.bf16.mxu0 0
    %6011 = vmatpush1.bf16.msra.mxu0 0
    %6012 = vmatprep.subr.bf16.mxu0 0
    %6013 = vmatpush1.bf16.msra.mxu0 0
    %6014 = vmatprep.subr.bf16.mxu0 0
    %6015 = vmatpush1.bf16.msra.mxu0 0
    %6016 = vmatprep.mubr.bf16.mxu0 0
    %6017 = vmatmul.mubr.bf16.gmra.mrb[0].mxu0 %v5979
    %v6018 = vpop.f32.mrb[0].mxu0
    %v6019 = vadd.f32 0.0, %v6018
    %v6020 = vpop.f32.mrb[0].mxu0
    %v6021 = vpop.f32.mrb[0].mxu0
    %v6022 = vpop.f32.mrb[0].mxu0
    %6023 = vdwg.mxu0
    %6026 = vrot.lane.b32.xlu0 %v5970, 32
    %v6027 = vpop.permute.xlu0 %6026
    %6028 = vrot.lane.b32.xlu0 %v6019, 32
    %v6029 = vpop.permute.xlu0 %6028
    %6032 = vst.msk [vmem:[#allocation2 + $0x8] sm:$0xff] %vm5115, %v6027
    %6033 = vst.msk [vmem:[#allocation2 + $0x18] sm:$0xff] %vm5115, %v6029
    %6034 = vrot.lane.b32.xlu0 %v5582, 64
    %v6035 = vpop.permute.xlu0 %6034
    %6036 = vrot.lane.b32.xlu0 %v5584, 64
    %v6037 = vpop.permute.xlu0 %6036
    %v6039 = vsel %vm4668, %v6035, 0
    %v6042 = vsel %vm4668, %v6037, 0
    %6044 = vmatprep.subr.bf16.mxu0 0
    %6045 = vmatpush1.bf16.xpose.msra.mxu0 %v6042
    %6046 = vmatprep.subr.bf16.mxu0 0
    %6047 = vmatpush1.bf16.xpose.msra.mxu0 0
    %6048 = vmatprep.subr.bf16.mxu0 0
    %6049 = vmatpush1.bf16.xpose.msra.mxu0 0
    %6050 = vmatprep.subr.bf16.mxu0 0
    %6051 = vmatpush1.bf16.xpose.msra.mxu0 0
    %6052 = vmatprep.subr.bf16.mxu0 0
    %6053 = vmatpush1.bf16.xpose.msra.mxu0 0
    %6054 = vmatprep.subr.bf16.mxu0 0
    %6055 = vmatpush1.bf16.xpose.msra.mxu0 0
    %6056 = vmatprep.subr.bf16.mxu0 0
    %6057 = vmatpush1.bf16.xpose.msra.mxu0 0
    %6058 = vmatprep.subr.bf16.mxu0 0
    %6059 = vmatpush1.bf16.xpose.msra.mxu0 0
    %6060 = vmatprep.subr.bf16.mxu0 0
    %6061 = vmatpush1.bf16.xpose.msra.mxu0 0
    %6062 = vmatprep.subr.bf16.mxu0 0
    %6063 = vmatpush1.bf16.xpose.msra.mxu0 0
    %6064 = vmatprep.subr.bf16.mxu0 0
    %6065 = vmatpush1.bf16.xpose.msra.mxu0 0
    %6066 = vmatprep.subr.bf16.mxu0 0
    %6067 = vmatpush1.bf16.xpose.msra.mxu0 0
    %6068 = vmatprep.subr.bf16.mxu0 0
    %6069 = vmatpush1.bf16.xpose.msra.mxu0 0
    %6070 = vmatprep.subr.bf16.mxu0 0
    %6071 = vmatpush1.bf16.xpose.msra.mxu0 0
    %6072 = vmatprep.subr.bf16.mxu0 0
    %6073 = vmatpush1.bf16.xpose.msra.mxu0 0
    %6074 = vmatprep.subr.bf16.mxu0 0
    %6075 = vmatpush1.bf16.xpose.msra.mxu0 0
    %6076 = vmatprep.mubr.bf16.mxu0 0
    %6077 = vmatmul.mubr.bf16.gmra.mrb[0].mxu0 %v6039
    %v6078 = vpop.f32.mrb[0].mxu0
    %v6079 = vadd.f32 0.0, %v6078
    %v6080 = vpop.f32.mrb[0].mxu0
    %v6081 = vpop.f32.mrb[0].mxu0
    %v6082 = vpop.f32.mrb[0].mxu0
    %6083 = vdwg.mxu0
    %6084 = vrot.lane.b32.xlu0 %v5583, 64
    %v6085 = vpop.permute.xlu0 %6084
    %6086 = vrot.lane.b32.xlu0 %v5585, 64
    %v6087 = vpop.permute.xlu0 %6086
    %v6089 = vsel %vm4668, %v6085, 0
    %v6092 = vsel %vm4668, %v6087, 0
    %6094 = vmatprep.subr.bf16.mxu0 0
    %6095 = vmatpush1.bf16.xpose.msra.mxu0 %v6092
    %6096 = vmatprep.subr.bf16.mxu0 0
    %6097 = vmatpush1.bf16.xpose.msra.mxu0 0
    %6098 = vmatprep.subr.bf16.mxu0 0
    %6099 = vmatpush1.bf16.xpose.msra.mxu0 0
    %6100 = vmatprep.subr.bf16.mxu0 0
    %6101 = vmatpush1.bf16.xpose.msra.mxu0 0
    %6102 = vmatprep.subr.bf16.mxu0 0
    %6103 = vmatpush1.bf16.xpose.msra.mxu0 0
    %6104 = vmatprep.subr.bf16.mxu0 0
    %6105 = vmatpush1.bf16.xpose.msra.mxu0 0
    %6106 = vmatprep.subr.bf16.mxu0 0
    %6107 = vmatpush1.bf16.xpose.msra.mxu0 0
    %6108 = vmatprep.subr.bf16.mxu0 0
    %6109 = vmatpush1.bf16.xpose.msra.mxu0 0
    %6110 = vmatprep.subr.bf16.mxu0 0
    %6111 = vmatpush1.bf16.xpose.msra.mxu0 0
    %6112 = vmatprep.subr.bf16.mxu0 0
    %6113 = vmatpush1.bf16.xpose.msra.mxu0 0
    %6114 = vmatprep.subr.bf16.mxu0 0
    %6115 = vmatpush1.bf16.xpose.msra.mxu0 0
    %6116 = vmatprep.subr.bf16.mxu0 0
    %6117 = vmatpush1.bf16.xpose.msra.mxu0 0
    %6118 = vmatprep.subr.bf16.mxu0 0
    %6119 = vmatpush1.bf16.xpose.msra.mxu0 0
    %6120 = vmatprep.subr.bf16.mxu0 0
    %6121 = vmatpush1.bf16.xpose.msra.mxu0 0
    %6122 = vmatprep.subr.bf16.mxu0 0
    %6123 = vmatpush1.bf16.xpose.msra.mxu0 0
    %6124 = vmatprep.subr.bf16.mxu0 0
    %6125 = vmatpush1.bf16.xpose.msra.mxu0 0
    %6126 = vmatprep.mubr.bf16.mxu0 0
    %6127 = vmatmul.mubr.bf16.gmra.mrb[0].mxu0 %v6089
    %v6128 = vpop.f32.mrb[0].mxu0
    %v6129 = vadd.f32 0.0, %v6128
    %v6130 = vpop.f32.mrb[0].mxu0
    %v6131 = vpop.f32.mrb[0].mxu0
    %v6132 = vpop.f32.mrb[0].mxu0
    %6133 = vdwg.mxu0
    %v6134 = vsel %vm2664, %v6079, -inf
    %6135 = vmax.xlane.f32.xlu0 %v6134
    %v6136 = vpop.xlane.xlu0 %6135
    %v6137 = vsel %vm2664, %v6129, -inf
    %6138 = vmax.xlane.f32.xlu0 %v6137
    %v6139 = vpop.xlane.xlu0 %6138
    %v6140 = vsub.f32 %v6079, %v6136
    %v6141 = vsub.f32 %v6129, %v6139
    %v6142 = vmul.f32 %v6140, 1.442695
    %v6143 = vpow.pop %v6142
    %v6144 = vmul.f32 %v6141, 1.442695
    %v6145 = vpow.pop %v6144
    %v6146 = vsel %vm2664, %v6143, 0.0
    %6147 = vadd.xlane.f32.xlu0 %v6146
    %v6148 = vpop.xlane.xlu0 %6147
    %v6149 = vsel %vm2664, %v6145, 0.0
    %6150 = vadd.xlane.f32.xlu0 %v6149
    %v6151 = vpop.xlane.xlu0 %6150
    %v6152 = vrcp.pop %v6148
    %v6153 = vrcp.pop %v6151
    %v6154 = vmul.f32 %v6143, %v6152
    %v6155 = vmul.f32 %v6145, %v6153
    %v6156 = vpack.c.bf16 %v6154, %v6154
    %v6157 = vpack.c.bf16 %v6155, %v6155
    %6158 = vrot.lane.b32.xlu0 %v5702, 64
    %v6159 = vpop.permute.xlu0 %6158
    %v6161 = vsel %vm2664, %v6156, 0
    %v6164 = vsel %vm2696, %v6159, 0
    %6166 = vmatprep.subr.bf16.mxu0 0
    %6167 = vmatpush1.bf16.msra.mxu0 %v6164
    %6168 = vmatprep.subr.bf16.mxu0 0
    %6169 = vmatpush1.bf16.msra.mxu0 0
    %6170 = vmatprep.subr.bf16.mxu0 0
    %6171 = vmatpush1.bf16.msra.mxu0 0
    %6172 = vmatprep.subr.bf16.mxu0 0
    %6173 = vmatpush1.bf16.msra.mxu0 0
    %6174 = vmatprep.subr.bf16.mxu0 0
    %6175 = vmatpush1.bf16.msra.mxu0 0
    %6176 = vmatprep.subr.bf16.mxu0 0
    %6177 = vmatpush1.bf16.msra.mxu0 0
    %6178 = vmatprep.subr.bf16.mxu0 0
    %6179 = vmatpush1.bf16.msra.mxu0 0
    %6180 = vmatprep.subr.bf16.mxu0 0
    %6181 = vmatpush1.bf16.msra.mxu0 0
    %6182 = vmatprep.subr.bf16.mxu0 0
    %6183 = vmatpush1.bf16.msra.mxu0 0
    %6184 = vmatprep.subr.bf16.mxu0 0
    %6185 = vmatpush1.bf16.msra.mxu0 0
    %6186 = vmatprep.subr.bf16.mxu0 0
    %6187 = vmatpush1.bf16.msra.mxu0 0
    %6188 = vmatprep.subr.bf16.mxu0 0
    %6189 = vmatpush1.bf16.msra.mxu0 0
    %6190 = vmatprep.subr.bf16.mxu0 0
    %6191 = vmatpush1.bf16.msra.mxu0 0
    %6192 = vmatprep.subr.bf16.mxu0 0
    %6193 = vmatpush1.bf16.msra.mxu0 0
    %6194 = vmatprep.subr.bf16.mxu0 0
    %6195 = vmatpush1.bf16.msra.mxu0 0
    %6196 = vmatprep.subr.bf16.mxu0 0
    %6197 = vmatpush1.bf16.msra.mxu0 0
    %6198 = vmatprep.mubr.bf16.mxu0 0
    %6199 = vmatmul.mubr.bf16.gmra.mrb[0].mxu0 %v6161
    %v6200 = vpop.f32.mrb[0].mxu0
    %v6201 = vadd.f32 0.0, %v6200
    %v6202 = vpop.f32.mrb[0].mxu0
    %v6203 = vpop.f32.mrb[0].mxu0
    %v6204 = vpop.f32.mrb[0].mxu0
    %6205 = vdwg.mxu0
    %6206 = vrot.lane.b32.xlu0 %v5703, 64
    %v6207 = vpop.permute.xlu0 %6206
    %v6209 = vsel %vm2664, %v6157, 0
    %v6212 = vsel %vm2696, %v6207, 0
    %6214 = vmatprep.subr.bf16.mxu0 0
    %6215 = vmatpush1.bf16.msra.mxu0 %v6212
    %6216 = vmatprep.subr.bf16.mxu0 0
    %6217 = vmatpush1.bf16.msra.mxu0 0
    %6218 = vmatprep.subr.bf16.mxu0 0
    %6219 = vmatpush1.bf16.msra.mxu0 0
    %6220 = vmatprep.subr.bf16.mxu0 0
    %6221 = vmatpush1.bf16.msra.mxu0 0
    %6222 = vmatprep.subr.bf16.mxu0 0
    %6223 = vmatpush1.bf16.msra.mxu0 0
    %6224 = vmatprep.subr.bf16.mxu0 0
    %6225 = vmatpush1.bf16.msra.mxu0 0
    %6226 = vmatprep.subr.bf16.mxu0 0
    %6227 = vmatpush1.bf16.msra.mxu0 0
    %6228 = vmatprep.subr.bf16.mxu0 0
    %6229 = vmatpush1.bf16.msra.mxu0 0
    %6230 = vmatprep.subr.bf16.mxu0 0
    %6231 = vmatpush1.bf16.msra.mxu0 0
    %6232 = vmatprep.subr.bf16.mxu0 0
    %6233 = vmatpush1.bf16.msra.mxu0 0
    %6234 = vmatprep.subr.bf16.mxu0 0
    %6235 = vmatpush1.bf16.msra.mxu0 0
    %6236 = vmatprep.subr.bf16.mxu0 0
    %6237 = vmatpush1.bf16.msra.mxu0 0
    %6238 = vmatprep.subr.bf16.mxu0 0
    %6239 = vmatpush1.bf16.msra.mxu0 0
    %6240 = vmatprep.subr.bf16.mxu0 0
    %6241 = vmatpush1.bf16.msra.mxu0 0
    %6242 = vmatprep.subr.bf16.mxu0 0
    %6243 = vmatpush1.bf16.msra.mxu0 0
    %6244 = vmatprep.subr.bf16.mxu0 0
    %6245 = vmatpush1.bf16.msra.mxu0 0
    %6246 = vmatprep.mubr.bf16.mxu0 0
    %6247 = vmatmul.mubr.bf16.gmra.mrb[0].mxu0 %v6209
    %v6248 = vpop.f32.mrb[0].mxu0
    %v6249 = vadd.f32 0.0, %v6248
    %v6250 = vpop.f32.mrb[0].mxu0
    %v6251 = vpop.f32.mrb[0].mxu0
    %v6252 = vpop.f32.mrb[0].mxu0
    %6253 = vdwg.mxu0
    %6256 = vrot.lane.b32.xlu0 %v6201, 64
    %v6257 = vpop.permute.xlu0 %6256
    %6258 = vrot.lane.b32.xlu0 %v6249, 64
    %v6259 = vpop.permute.xlu0 %6258
    %6262 = vst.msk [vmem:[#allocation2 + $0x8] sm:$0xff] %vm5346, %v6257
    %6263 = vst.msk [vmem:[#allocation2 + $0x18] sm:$0xff] %vm5346, %v6259
    %6264 = vrot.lane.b32.xlu0 %v5582, 32
    %v6265 = vpop.permute.xlu0 %6264
    %6266 = vrot.lane.b32.xlu0 %v5584, 32
    %v6267 = vpop.permute.xlu0 %6266
    %v6269 = vsel %vm4668, %v6265, 0
    %v6272 = vsel %vm4668, %v6267, 0
    %6274 = vmatprep.subr.bf16.mxu0 0
    %6275 = vmatpush1.bf16.xpose.msra.mxu0 %v6272
    %6276 = vmatprep.subr.bf16.mxu0 0
    %6277 = vmatpush1.bf16.xpose.msra.mxu0 0
    %6278 = vmatprep.subr.bf16.mxu0 0
    %6279 = vmatpush1.bf16.xpose.msra.mxu0 0
    %6280 = vmatprep.subr.bf16.mxu0 0
    %6281 = vmatpush1.bf16.xpose.msra.mxu0 0
    %6282 = vmatprep.subr.bf16.mxu0 0
    %6283 = vmatpush1.bf16.xpose.msra.mxu0 0
    %6284 = vmatprep.subr.bf16.mxu0 0
    %6285 = vmatpush1.bf16.xpose.msra.mxu0 0
    %6286 = vmatprep.subr.bf16.mxu0 0
    %6287 = vmatpush1.bf16.xpose.msra.mxu0 0
    %6288 = vmatprep.subr.bf16.mxu0 0
    %6289 = vmatpush1.bf16.xpose.msra.mxu0 0
    %6290 = vmatprep.subr.bf16.mxu0 0
    %6291 = vmatpush1.bf16.xpose.msra.mxu0 0
    %6292 = vmatprep.subr.bf16.mxu0 0
    %6293 = vmatpush1.bf16.xpose.msra.mxu0 0
    %6294 = vmatprep.subr.bf16.mxu0 0
    %6295 = vmatpush1.bf16.xpose.msra.mxu0 0
    %6296 = vmatprep.subr.bf16.mxu0 0
    %6297 = vmatpush1.bf16.xpose.msra.mxu0 0
    %6298 = vmatprep.subr.bf16.mxu0 0
    %6299 = vmatpush1.bf16.xpose.msra.mxu0 0
    %6300 = vmatprep.subr.bf16.mxu0 0
    %6301 = vmatpush1.bf16.xpose.msra.mxu0 0
    %6302 = vmatprep.subr.bf16.mxu0 0
    %6303 = vmatpush1.bf16.xpose.msra.mxu0 0
    %6304 = vmatprep.subr.bf16.mxu0 0
    %6305 = vmatpush1.bf16.xpose.msra.mxu0 0
    %6306 = vmatprep.mubr.bf16.mxu0 0
    %6307 = vmatmul.mubr.bf16.gmra.mrb[0].mxu0 %v6269
    %v6308 = vpop.f32.mrb[0].mxu0
    %v6309 = vadd.f32 0.0, %v6308
    %v6310 = vpop.f32.mrb[0].mxu0
    %v6311 = vpop.f32.mrb[0].mxu0
    %v6312 = vpop.f32.mrb[0].mxu0
    %6313 = vdwg.mxu0
    %6314 = vrot.lane.b32.xlu0 %v5583, 32
    %v6315 = vpop.permute.xlu0 %6314
    %6316 = vrot.lane.b32.xlu0 %v5585, 32
    %v6317 = vpop.permute.xlu0 %6316
    %v6319 = vsel %vm4668, %v6315, 0
    %v6322 = vsel %vm4668, %v6317, 0
    %6324 = vmatprep.subr.bf16.mxu0 0
    %6325 = vmatpush1.bf16.xpose.msra.mxu0 %v6322
    %6326 = vmatprep.subr.bf16.mxu0 0
    %6327 = vmatpush1.bf16.xpose.msra.mxu0 0
    %6328 = vmatprep.subr.bf16.mxu0 0
    %6329 = vmatpush1.bf16.xpose.msra.mxu0 0
    %6330 = vmatprep.subr.bf16.mxu0 0
    %6331 = vmatpush1.bf16.xpose.msra.mxu0 0
    %6332 = vmatprep.subr.bf16.mxu0 0
    %6333 = vmatpush1.bf16.xpose.msra.mxu0 0
    %6334 = vmatprep.subr.bf16.mxu0 0
    %6335 = vmatpush1.bf16.xpose.msra.mxu0 0
    %6336 = vmatprep.subr.bf16.mxu0 0
    %6337 = vmatpush1.bf16.xpose.msra.mxu0 0
    %6338 = vmatprep.subr.bf16.mxu0 0
    %6339 = vmatpush1.bf16.xpose.msra.mxu0 0
    %6340 = vmatprep.subr.bf16.mxu0 0
    %6341 = vmatpush1.bf16.xpose.msra.mxu0 0
    %6342 = vmatprep.subr.bf16.mxu0 0
    %6343 = vmatpush1.bf16.xpose.msra.mxu0 0
    %6344 = vmatprep.subr.bf16.mxu0 0
    %6345 = vmatpush1.bf16.xpose.msra.mxu0 0
    %6346 = vmatprep.subr.bf16.mxu0 0
    %6347 = vmatpush1.bf16.xpose.msra.mxu0 0
    %6348 = vmatprep.subr.bf16.mxu0 0
    %6349 = vmatpush1.bf16.xpose.msra.mxu0 0
    %6350 = vmatprep.subr.bf16.mxu0 0
    %6351 = vmatpush1.bf16.xpose.msra.mxu0 0
    %6352 = vmatprep.subr.bf16.mxu0 0
    %6353 = vmatpush1.bf16.xpose.msra.mxu0 0
    %6354 = vmatprep.subr.bf16.mxu0 0
    %6355 = vmatpush1.bf16.xpose.msra.mxu0 0
    %6356 = vmatprep.mubr.bf16.mxu0 0
    %6357 = vmatmul.mubr.bf16.gmra.mrb[0].mxu0 %v6319
    %v6358 = vpop.f32.mrb[0].mxu0
    %v6359 = vadd.f32 0.0, %v6358
    %v6360 = vpop.f32.mrb[0].mxu0
    %v6361 = vpop.f32.mrb[0].mxu0
    %v6362 = vpop.f32.mrb[0].mxu0
    %6363 = vdwg.mxu0
    %v6364 = vsel %vm2664, %v6309, -inf
    %6365 = vmax.xlane.f32.xlu0 %v6364
    %v6366 = vpop.xlane.xlu0 %6365
    %v6367 = vsel %vm2664, %v6359, -inf
    %6368 = vmax.xlane.f32.xlu0 %v6367
    %v6369 = vpop.xlane.xlu0 %6368
    %v6370 = vsub.f32 %v6309, %v6366
    %v6371 = vsub.f32 %v6359, %v6369
    %v6372 = vmul.f32 %v6370, 1.442695
    %v6373 = vpow.pop %v6372
    %v6374 = vmul.f32 %v6371, 1.442695
    %v6375 = vpow.pop %v6374
    %v6376 = vsel %vm2664, %v6373, 0.0
    %6377 = vadd.xlane.f32.xlu0 %v6376
    %v6378 = vpop.xlane.xlu0 %6377
    %v6379 = vsel %vm2664, %v6375, 0.0
    %6380 = vadd.xlane.f32.xlu0 %v6379
    %v6381 = vpop.xlane.xlu0 %6380
    %v6382 = vrcp.pop %v6378
    %v6383 = vrcp.pop %v6381
    %v6384 = vmul.f32 %v6373, %v6382
    %v6385 = vmul.f32 %v6375, %v6383
    %v6386 = vpack.c.bf16 %v6384, %v6384
    %v6387 = vpack.c.bf16 %v6385, %v6385
    %6388 = vrot.lane.b32.xlu0 %v5702, 32
    %v6389 = vpop.permute.xlu0 %6388
    %v6391 = vsel %vm2664, %v6386, 0
    %v6394 = vsel %vm2696, %v6389, 0
    %6396 = vmatprep.subr.bf16.mxu0 0
    %6397 = vmatpush1.bf16.msra.mxu0 %v6394
    %6398 = vmatprep.subr.bf16.mxu0 0
    %6399 = vmatpush1.bf16.msra.mxu0 0
    %6400 = vmatprep.subr.bf16.mxu0 0
    %6401 = vmatpush1.bf16.msra.mxu0 0
    %6402 = vmatprep.subr.bf16.mxu0 0
    %6403 = vmatpush1.bf16.msra.mxu0 0
    %6404 = vmatprep.subr.bf16.mxu0 0
    %6405 = vmatpush1.bf16.msra.mxu0 0
    %6406 = vmatprep.subr.bf16.mxu0 0
    %6407 = vmatpush1.bf16.msra.mxu0 0
    %6408 = vmatprep.subr.bf16.mxu0 0
    %6409 = vmatpush1.bf16.msra.mxu0 0
    %6410 = vmatprep.subr.bf16.mxu0 0
    %6411 = vmatpush1.bf16.msra.mxu0 0
    %6412 = vmatprep.subr.bf16.mxu0 0
    %6413 = vmatpush1.bf16.msra.mxu0 0
    %6414 = vmatprep.subr.bf16.mxu0 0
    %6415 = vmatpush1.bf16.msra.mxu0 0
    %6416 = vmatprep.subr.bf16.mxu0 0
    %6417 = vmatpush1.bf16.msra.mxu0 0
    %6418 = vmatprep.subr.bf16.mxu0 0
    %6419 = vmatpush1.bf16.msra.mxu0 0
    %6420 = vmatprep.subr.bf16.mxu0 0
    %6421 = vmatpush1.bf16.msra.mxu0 0
    %6422 = vmatprep.subr.bf16.mxu0 0
    %6423 = vmatpush1.bf16.msra.mxu0 0
    %6424 = vmatprep.subr.bf16.mxu0 0
    %6425 = vmatpush1.bf16.msra.mxu0 0
    %6426 = vmatprep.subr.bf16.mxu0 0
    %6427 = vmatpush1.bf16.msra.mxu0 0
    %6428 = vmatprep.mubr.bf16.mxu0 0
    %6429 = vmatmul.mubr.bf16.gmra.mrb[0].mxu0 %v6391
    %v6430 = vpop.f32.mrb[0].mxu0
    %v6431 = vadd.f32 0.0, %v6430
    %v6432 = vpop.f32.mrb[0].mxu0
    %v6433 = vpop.f32.mrb[0].mxu0
    %v6434 = vpop.f32.mrb[0].mxu0
    %6435 = vdwg.mxu0
    %6436 = vrot.lane.b32.xlu0 %v5703, 32
    %v6437 = vpop.permute.xlu0 %6436
    %v6439 = vsel %vm2664, %v6387, 0
    %v6442 = vsel %vm2696, %v6437, 0
    %6444 = vmatprep.subr.bf16.mxu0 0
    %6445 = vmatpush1.bf16.msra.mxu0 %v6442
    %6446 = vmatprep.subr.bf16.mxu0 0
    %6447 = vmatpush1.bf16.msra.mxu0 0
    %6448 = vmatprep.subr.bf16.mxu0 0
    %6449 = vmatpush1.bf16.msra.mxu0 0
    %6450 = vmatprep.subr.bf16.mxu0 0
    %6451 = vmatpush1.bf16.msra.mxu0 0
    %6452 = vmatprep.subr.bf16.mxu0 0
    %6453 = vmatpush1.bf16.msra.mxu0 0
    %6454 = vmatprep.subr.bf16.mxu0 0
    %6455 = vmatpush1.bf16.msra.mxu0 0
    %6456 = vmatprep.subr.bf16.mxu0 0
    %6457 = vmatpush1.bf16.msra.mxu0 0
    %6458 = vmatprep.subr.bf16.mxu0 0
    %6459 = vmatpush1.bf16.msra.mxu0 0
    %6460 = vmatprep.subr.bf16.mxu0 0
    %6461 = vmatpush1.bf16.msra.mxu0 0
    %6462 = vmatprep.subr.bf16.mxu0 0
    %6463 = vmatpush1.bf16.msra.mxu0 0
    %6464 = vmatprep.subr.bf16.mxu0 0
    %6465 = vmatpush1.bf16.msra.mxu0 0
    %6466 = vmatprep.subr.bf16.mxu0 0
    %6467 = vmatpush1.bf16.msra.mxu0 0
    %6468 = vmatprep.subr.bf16.mxu0 0
    %6469 = vmatpush1.bf16.msra.mxu0 0
    %6470 = vmatprep.subr.bf16.mxu0 0
    %6471 = vmatpush1.bf16.msra.mxu0 0
    %6472 = vmatprep.subr.bf16.mxu0 0
    %6473 = vmatpush1.bf16.msra.mxu0 0
    %6474 = vmatprep.subr.bf16.mxu0 0
    %6475 = vmatpush1.bf16.msra.mxu0 0
    %6476 = vmatprep.mubr.bf16.mxu0 0
    %6477 = vmatmul.mubr.bf16.gmra.mrb[0].mxu0 %v6439
    %v6478 = vpop.f32.mrb[0].mxu0
    %v6479 = vadd.f32 0.0, %v6478
    %v6480 = vpop.f32.mrb[0].mxu0
    %v6481 = vpop.f32.mrb[0].mxu0
    %v6482 = vpop.f32.mrb[0].mxu0
    %6483 = vdwg.mxu0
    %6486 = vrot.lane.b32.xlu0 %v6431, 96
    %v6487 = vpop.permute.xlu0 %6486
    %6488 = vrot.lane.b32.xlu0 %v6479, 96
    %v6489 = vpop.permute.xlu0 %6488
    %6492 = vst.msk [vmem:[#allocation2 + $0x8] sm:$0xff] %vm5577, %v6487
    %6493 = vst.msk [vmem:[#allocation2 + $0x18] sm:$0xff] %vm5577, %v6489
    %v6494 = vld [vmem:[#allocation2] sm:$0xff]
    %v6495 = vld [vmem:[#allocation2 + $0x8] sm:$0xff]
    %v6496 = vld [vmem:[#allocation2 + $0x10] sm:$0xff]
    %v6497 = vld [vmem:[#allocation2 + $0x18] sm:$0xff]
    %v6498 = vld [vmem:[#allocation19] sm:$0xff]
    %v6499 = vld [vmem:[#allocation19 + $0x8] sm:$0xff]
    %v6500 = vld [vmem:[#allocation19 + $0x10] sm:$0xff]
    %v6501 = vld [vmem:[#allocation19 + $0x18] sm:$0xff]
    %v6502 = vld [vmem:[#allocation19 + $0x20] sm:$0xff]
    %v6503 = vld [vmem:[#allocation19 + $0x28] sm:$0xff]
    %v6504 = vld [vmem:[#allocation19 + $0x30] sm:$0xff]
    %v6505 = vld [vmem:[#allocation19 + $0x38] sm:$0xff]
    %v6506 = vld [vmem:[#allocation19 + $0x40] sm:$0xff]
    %v6507 = vld [vmem:[#allocation19 + $0x48] sm:$0xff]
    %v6508 = vld [vmem:[#allocation19 + $0x50] sm:$0xff]
    %v6509 = vld [vmem:[#allocation19 + $0x58] sm:$0xff]
    %v6510 = vld [vmem:[#allocation19 + $0x60] sm:$0xff]
    %v6511 = vld [vmem:[#allocation19 + $0x68] sm:$0xff]
    %v6512 = vld [vmem:[#allocation19 + $0x70] sm:$0xff]
    %v6513 = vld [vmem:[#allocation19 + $0x78] sm:$0xff]
    %v6514 = vld [vmem:[#allocation19 + $0x80] sm:$0xff]
    %v6515 = vld [vmem:[#allocation19 + $0x88] sm:$0xff]
    %v6516 = vld [vmem:[#allocation19 + $0x90] sm:$0xff]
    %v6517 = vld [vmem:[#allocation19 + $0x98] sm:$0xff]
    %v6518 = vld [vmem:[#allocation19 + $0xa0] sm:$0xff]
    %v6519 = vld [vmem:[#allocation19 + $0xa8] sm:$0xff]
    %v6520 = vld [vmem:[#allocation19 + $0xb0] sm:$0xff]
    %v6521 = vld [vmem:[#allocation19 + $0xb8] sm:$0xff]
    %v6522 = vld [vmem:[#allocation19 + $0xc0] sm:$0xff]
    %v6523 = vld [vmem:[#allocation19 + $0xc8] sm:$0xff]
    %v6524 = vld [vmem:[#allocation19 + $0xd0] sm:$0xff]
    %v6525 = vld [vmem:[#allocation19 + $0xd8] sm:$0xff]
    %v6526 = vld [vmem:[#allocation19 + $0xe0] sm:$0xff]
    %v6527 = vld [vmem:[#allocation19 + $0xe8] sm:$0xff]
    %v6528 = vld [vmem:[#allocation19 + $0xf0] sm:$0xff]
    %v6529 = vld [vmem:[#allocation19 + $0xf8] sm:$0xff]
    %v6530 = vpack.c.bf16 %v6496, %v6494
    %v6531 = vpack.c.bf16 %v6497, %v6495
    %v6532 = vld [vmem:[#allocation20] sm:$0x3]
    %v6534 = vlaneseq
    %v6535 = vshrl.u32 %v6534, 7
    %v6536 = vsub.s32 0, %v6535
    %v6537 = vrot.slane %v6532, %v6536
    %v6538 = vlaneseq
    %v6539 = vshrl.u32 %v6538, 7
    %v6540 = vsub.s32 1, %v6539
    %v6541 = vrot.slane %v6532, %v6540
    %v6576 = vunpack.c.l.b16 %v6498
    %v6577 = vunpack.c.h.b16 %v6498
    %v6578 = vunpack.c.l.b16 %v6499
    %v6579 = vunpack.c.h.b16 %v6499
    %v6580 = vunpack.c.l.b16 %v6500
    %v6581 = vunpack.c.h.b16 %v6500
    %v6582 = vunpack.c.l.b16 %v6501
    %v6583 = vunpack.c.h.b16 %v6501
    %v6584 = vunpack.c.l.b16 %v6502
    %v6585 = vunpack.c.h.b16 %v6502
    %v6586 = vunpack.c.l.b16 %v6503
    %v6587 = vunpack.c.h.b16 %v6503
    %v6588 = vunpack.c.l.b16 %v6504
    %v6589 = vunpack.c.h.b16 %v6504
    %v6590 = vunpack.c.l.b16 %v6505
    %v6591 = vunpack.c.h.b16 %v6505
    %v6592 = vunpack.c.l.b16 %v6506
    %v6593 = vunpack.c.h.b16 %v6506
    %v6594 = vunpack.c.l.b16 %v6507
    %v6595 = vunpack.c.h.b16 %v6507
    %v6596 = vunpack.c.l.b16 %v6508
    %v6597 = vunpack.c.h.b16 %v6508
    %v6598 = vunpack.c.l.b16 %v6509
    %v6599 = vunpack.c.h.b16 %v6509
    %v6600 = vunpack.c.l.b16 %v6510
    %v6601 = vunpack.c.h.b16 %v6510
    %v6602 = vunpack.c.l.b16 %v6511
    %v6603 = vunpack.c.h.b16 %v6511
    %v6604 = vunpack.c.l.b16 %v6512
    %v6605 = vunpack.c.h.b16 %v6512
    %v6606 = vunpack.c.l.b16 %v6513
    %v6607 = vunpack.c.h.b16 %v6513
    %v6608 = vunpack.c.l.b16 %v6514
    %v6609 = vunpack.c.h.b16 %v6514
    %v6610 = vunpack.c.l.b16 %v6515
    %v6611 = vunpack.c.h.b16 %v6515
    %v6612 = vunpack.c.l.b16 %v6516
    %v6613 = vunpack.c.h.b16 %v6516
    %v6614 = vunpack.c.l.b16 %v6517
    %v6615 = vunpack.c.h.b16 %v6517
    %v6616 = vunpack.c.l.b16 %v6518
    %v6617 = vunpack.c.h.b16 %v6518
    %v6618 = vunpack.c.l.b16 %v6519
    %v6619 = vunpack.c.h.b16 %v6519
    %v6620 = vunpack.c.l.b16 %v6520
    %v6621 = vunpack.c.h.b16 %v6520
    %v6622 = vunpack.c.l.b16 %v6521
    %v6623 = vunpack.c.h.b16 %v6521
    %v6624 = vunpack.c.l.b16 %v6522
    %v6625 = vunpack.c.h.b16 %v6522
    %v6626 = vunpack.c.l.b16 %v6523
    %v6627 = vunpack.c.h.b16 %v6523
    %v6628 = vunpack.c.l.b16 %v6524
    %v6629 = vunpack.c.h.b16 %v6524
    %v6630 = vunpack.c.l.b16 %v6525
    %v6631 = vunpack.c.h.b16 %v6525
    %v6632 = vunpack.c.l.b16 %v6526
    %v6633 = vunpack.c.h.b16 %v6526
    %v6634 = vunpack.c.l.b16 %v6527
    %v6635 = vunpack.c.h.b16 %v6527
    %v6636 = vunpack.c.l.b16 %v6528
    %v6637 = vunpack.c.h.b16 %v6528
    %v6638 = vunpack.c.l.b16 %v6529
    %v6639 = vunpack.c.h.b16 %v6529
    %v6640 = vpack.c.b16 %v6578, %v6576
    %v6641 = vpack.c.b16 %v6579, %v6577
    %v6642 = vpack.c.b16 %v6582, %v6580
    %v6643 = vpack.c.b16 %v6583, %v6581
    %v6644 = vpack.c.b16 %v6586, %v6584
    %v6645 = vpack.c.b16 %v6587, %v6585
    %v6646 = vpack.c.b16 %v6590, %v6588
    %v6647 = vpack.c.b16 %v6591, %v6589
    %v6648 = vpack.c.b16 %v6594, %v6592
    %v6649 = vpack.c.b16 %v6595, %v6593
    %v6650 = vpack.c.b16 %v6598, %v6596
    %v6651 = vpack.c.b16 %v6599, %v6597
    %v6652 = vpack.c.b16 %v6602, %v6600
    %v6653 = vpack.c.b16 %v6603, %v6601
    %v6654 = vpack.c.b16 %v6606, %v6604
    %v6655 = vpack.c.b16 %v6607, %v6605
    %v6656 = vpack.c.b16 %v6610, %v6608
    %v6657 = vpack.c.b16 %v6611, %v6609
    %v6658 = vpack.c.b16 %v6614, %v6612
    %v6659 = vpack.c.b16 %v6615, %v6613
    %v6660 = vpack.c.b16 %v6618, %v6616
    %v6661 = vpack.c.b16 %v6619, %v6617
    %v6662 = vpack.c.b16 %v6622, %v6620
    %v6663 = vpack.c.b16 %v6623, %v6621
    %v6664 = vpack.c.b16 %v6626, %v6624
    %v6665 = vpack.c.b16 %v6627, %v6625
    %v6666 = vpack.c.b16 %v6630, %v6628
    %v6667 = vpack.c.b16 %v6631, %v6629
    %v6668 = vpack.c.b16 %v6634, %v6632
    %v6669 = vpack.c.b16 %v6635, %v6633
    %v6670 = vpack.c.b16 %v6638, %v6636
    %v6671 = vpack.c.b16 %v6639, %v6637
    %6704 = vmatprep.subr.bf16.mxu0 %v6641
    %6705 = vmatpush1.bf16.msra.mxu0 %v6640
    %6706 = vmatprep.subr.bf16.mxu0 %v6643
    %6707 = vmatpush1.bf16.msra.mxu0 %v6642
    %6708 = vmatprep.subr.bf16.mxu0 %v6645
    %6709 = vmatpush1.bf16.msra.mxu0 %v6644
    %6710 = vmatprep.subr.bf16.mxu0 %v6647
    %6711 = vmatpush1.bf16.msra.mxu0 %v6646
    %6712 = vmatprep.subr.bf16.mxu0 %v6649
    %6713 = vmatpush1.bf16.msra.mxu0 %v6648
    %6714 = vmatprep.subr.bf16.mxu0 %v6651
    %6715 = vmatpush1.bf16.msra.mxu0 %v6650
    %6716 = vmatprep.subr.bf16.mxu0 %v6653
    %6717 = vmatpush1.bf16.msra.mxu0 %v6652
    %6718 = vmatprep.subr.bf16.mxu0 %v6655
    %6719 = vmatpush1.bf16.msra.mxu0 %v6654
    %6720 = vmatprep.subr.bf16.mxu0 %v6657
    %6721 = vmatpush1.bf16.msra.mxu0 %v6656
    %6722 = vmatprep.subr.bf16.mxu0 %v6659
    %6723 = vmatpush1.bf16.msra.mxu0 %v6658
    %6724 = vmatprep.subr.bf16.mxu0 %v6661
    %6725 = vmatpush1.bf16.msra.mxu0 %v6660
    %6726 = vmatprep.subr.bf16.mxu0 %v6663
    %6727 = vmatpush1.bf16.msra.mxu0 %v6662
    %6728 = vmatprep.subr.bf16.mxu0 %v6665
    %6729 = vmatpush1.bf16.msra.mxu0 %v6664
    %6730 = vmatprep.subr.bf16.mxu0 %v6667
    %6731 = vmatpush1.bf16.msra.mxu0 %v6666
    %6732 = vmatprep.subr.bf16.mxu0 %v6669
    %6733 = vmatpush1.bf16.msra.mxu0 %v6668
    %6734 = vmatprep.subr.bf16.mxu0 %v6671
    %6735 = vmatpush1.bf16.msra.mxu0 %v6670
    %6736 = vmatprep.mubr.bf16.mxu0 %v6531
    %6737 = vmatmul.mubr.bf16.gmra.mrb[0].mxu0 %v6530
    %v6738 = vpop.f32.mrb[0].mxu0
    %v6739 = vadd.f32 %v6537, %v6738
    %v6740 = vpop.f32.mrb[0].mxu0
    %v6741 = vadd.f32 %v6541, %v6740
    %v6742 = vpop.f32.mrb[0].mxu0
    %v6743 = vadd.f32 %v6537, %v6742
    %v6744 = vpop.f32.mrb[0].mxu0
    %v6745 = vadd.f32 %v6541, %v6744
    %6746 = vdwg.mxu0
    %v6747 = vadd.f32 %v3911, %v6739
    %v6748 = vadd.f32 %v3912, %v6741
    %v6749 = vadd.f32 %v3913, %v6743
    %v6750 = vadd.f32 %v3914, %v6745
    %v6751 = vld [vmem:[#allocation22] sm:$0x3]
    %v6752 = vld [vmem:[#allocation23] sm:$0x3]
    %v6753 = vadd.f32 %v6747, %v6748
    %6754 = vadd.xlane.f32.xlu0 %v6753
    %v6755 = vpop.xlane.xlu0 %6754
    %v6756 = vadd.f32 %v6749, %v6750
    %6757 = vadd.xlane.f32.xlu0 %v6756
    %v6758 = vpop.xlane.xlu0 %6757
    %v6759 = vmul.f32 %v6755, %v2802
    %v6760 = vmul.f32 %v6758, %v2802
    %v6761 = vsub.f32 %v6747, %v6759
    %v6762 = vsub.f32 %v6748, %v6759
    %v6763 = vsub.f32 %v6749, %v6760
    %v6764 = vsub.f32 %v6750, %v6760
    %v6765 = vmul.f32 %v6761, %v6761
    %v6766 = vmul.f32 %v6762, %v6762
    %v6767 = vmul.f32 %v6763, %v6763
    %v6768 = vmul.f32 %v6764, %v6764
    %v6769 = vadd.f32 %v6765, %v6766
    %6770 = vadd.xlane.f32.xlu0 %v6769
    %v6771 = vpop.xlane.xlu0 %6770
    %v6772 = vadd.f32 %v6767, %v6768
    %6773 = vadd.xlane.f32.xlu0 %v6772
    %v6774 = vpop.xlane.xlu0 %6773
    %v6775 = vmul.f32 %v6771, %v2802
    %v6776 = vmul.f32 %v6774, %v2802
    %v6777 = vadd.f32 %v6775, 1e-05
    %v6778 = vadd.f32 %v6776, 1e-05
    %v6779 = vrsqrt.pop %v6777
    %v6780 = vrsqrt.pop %v6778
    %v6781 = vmul.f32 %v6761, %v6779
    %v6782 = vmul.f32 %v6762, %v6779
    %v6783 = vmul.f32 %v6763, %v6780
    %v6784 = vmul.f32 %v6764, %v6780
    %v6786 = vlaneseq
    %v6787 = vshrl.u32 %v6786, 7
    %v6788 = vsub.s32 0, %v6787
    %v6789 = vrot.slane %v6751, %v6788
    %v6790 = vlaneseq
    %v6791 = vshrl.u32 %v6790, 7
    %v6792 = vsub.s32 1, %v6791
    %v6793 = vrot.slane %v6751, %v6792
    %v6796 = vmul.f32 %v6781, %v6789
    %v6797 = vmul.f32 %v6782, %v6793
    %v6798 = vmul.f32 %v6783, %v6789
    %v6799 = vmul.f32 %v6784, %v6793
    %v6801 = vlaneseq
    %v6802 = vshrl.u32 %v6801, 7
    %v6803 = vsub.s32 0, %v6802
    %v6804 = vrot.slane %v6752, %v6803
    %v6805 = vlaneseq
    %v6806 = vshrl.u32 %v6805, 7
    %v6807 = vsub.s32 1, %v6806
    %v6808 = vrot.slane %v6752, %v6807
    %v6811 = vadd.f32 %v6796, %v6804
    %v6812 = vadd.f32 %v6797, %v6808
    %v6813 = vadd.f32 %v6798, %v6804
    %v6814 = vadd.f32 %v6799, %v6808
    %s6815 = sld [smem:[#allocation3 + $0x1]]
    %v6816 = vld [vmem:[#allocation25] sm:$0xff]
    %v6817 = vld [vmem:[#allocation25 + $0x8] sm:$0xff]
    %v6818 = vld [vmem:[#allocation25 + $0x10] sm:$0xff]
    %v6819 = vld [vmem:[#allocation25 + $0x18] sm:$0xff]
    %v6820 = vld [vmem:[#allocation25 + $0x20] sm:$0xff]
    %v6821 = vld [vmem:[#allocation25 + $0x28] sm:$0xff]
    %v6822 = vld [vmem:[#allocation25 + $0x30] sm:$0xff]
    %v6823 = vld [vmem:[#allocation25 + $0x38] sm:$0xff]
    %v6824 = vld [vmem:[#allocation25 + $0x40] sm:$0xff]
    %v6825 = vld [vmem:[#allocation25 + $0x48] sm:$0xff]
    %v6826 = vld [vmem:[#allocation25 + $0x50] sm:$0xff]
    %v6827 = vld [vmem:[#allocation25 + $0x58] sm:$0xff]
    %v6828 = vld [vmem:[#allocation25 + $0x60] sm:$0xff]
    %v6829 = vld [vmem:[#allocation25 + $0x68] sm:$0xff]
    %v6830 = vld [vmem:[#allocation25 + $0x70] sm:$0xff]
    %v6831 = vld [vmem:[#allocation25 + $0x78] sm:$0xff]
    %v6832 = vld [vmem:[#allocation25 + $0x80] sm:$0xff]
    %v6833 = vld [vmem:[#allocation25 + $0x88] sm:$0xff]
    %v6834 = vld [vmem:[#allocation25 + $0x90] sm:$0xff]
    %v6835 = vld [vmem:[#allocation25 + $0x98] sm:$0xff]
    %v6836 = vld [vmem:[#allocation25 + $0xa0] sm:$0xff]
    %v6837 = vld [vmem:[#allocation25 + $0xa8] sm:$0xff]
    %v6838 = vld [vmem:[#allocation25 + $0xb0] sm:$0xff]
    %v6839 = vld [vmem:[#allocation25 + $0xb8] sm:$0xff]
    %v6840 = vld [vmem:[#allocation25 + $0xc0] sm:$0xff]
    %v6841 = vld [vmem:[#allocation25 + $0xc8] sm:$0xff]
    %v6842 = vld [vmem:[#allocation25 + $0xd0] sm:$0xff]
    %v6843 = vld [vmem:[#allocation25 + $0xd8] sm:$0xff]
    %v6844 = vld [vmem:[#allocation25 + $0xe0] sm:$0xff]
    %v6845 = vld [vmem:[#allocation25 + $0xe8] sm:$0xff]
    %v6846 = vld [vmem:[#allocation25 + $0xf0] sm:$0xff]
    %v6847 = vld [vmem:[#allocation25 + $0xf8] sm:$0xff]
    %v6848 = vld [vmem:[#allocation25 + $0x100] sm:$0xff]
    %v6849 = vld [vmem:[#allocation25 + $0x108] sm:$0xff]
    %v6850 = vld [vmem:[#allocation25 + $0x110] sm:$0xff]
    %v6851 = vld [vmem:[#allocation25 + $0x118] sm:$0xff]
    %v6852 = vld [vmem:[#allocation25 + $0x120] sm:$0xff]
    %v6853 = vld [vmem:[#allocation25 + $0x128] sm:$0xff]
    %v6854 = vld [vmem:[#allocation25 + $0x130] sm:$0xff]
    %v6855 = vld [vmem:[#allocation25 + $0x138] sm:$0xff]
    %v6856 = vld [vmem:[#allocation25 + $0x140] sm:$0xff]
    %v6857 = vld [vmem:[#allocation25 + $0x148] sm:$0xff]
    %v6858 = vld [vmem:[#allocation25 + $0x150] sm:$0xff]
    %v6859 = vld [vmem:[#allocation25 + $0x158] sm:$0xff]
    %v6860 = vld [vmem:[#allocation25 + $0x160] sm:$0xff]
    %v6861 = vld [vmem:[#allocation25 + $0x168] sm:$0xff]
    %v6862 = vld [vmem:[#allocation25 + $0x170] sm:$0xff]
    %v6863 = vld [vmem:[#allocation25 + $0x178] sm:$0xff]
    %v6864 = vld [vmem:[#allocation25 + $0x180] sm:$0xff]
    %v6865 = vld [vmem:[#allocation25 + $0x188] sm:$0xff]
    %v6866 = vld [vmem:[#allocation25 + $0x190] sm:$0xff]
    %v6867 = vld [vmem:[#allocation25 + $0x198] sm:$0xff]
    %v6868 = vld [vmem:[#allocation25 + $0x1a0] sm:$0xff]
    %v6869 = vld [vmem:[#allocation25 + $0x1a8] sm:$0xff]
    %v6870 = vld [vmem:[#allocation25 + $0x1b0] sm:$0xff]
    %v6871 = vld [vmem:[#allocation25 + $0x1b8] sm:$0xff]
    %v6872 = vld [vmem:[#allocation25 + $0x1c0] sm:$0xff]
    %v6873 = vld [vmem:[#allocation25 + $0x1c8] sm:$0xff]
    %v6874 = vld [vmem:[#allocation25 + $0x1d0] sm:$0xff]
    %v6875 = vld [vmem:[#allocation25 + $0x1d8] sm:$0xff]
    %v6876 = vld [vmem:[#allocation25 + $0x1e0] sm:$0xff]
    %v6877 = vld [vmem:[#allocation25 + $0x1e8] sm:$0xff]
    %v6878 = vld [vmem:[#allocation25 + $0x1f0] sm:$0xff]
    %v6879 = vld [vmem:[#allocation25 + $0x1f8] sm:$0xff]
    %v6880 = vld [vmem:[#allocation25 + $0x200] sm:$0xff]
    %v6881 = vld [vmem:[#allocation25 + $0x208] sm:$0xff]
    %v6882 = vld [vmem:[#allocation25 + $0x210] sm:$0xff]
    %v6883 = vld [vmem:[#allocation25 + $0x218] sm:$0xff]
    %v6884 = vld [vmem:[#allocation25 + $0x220] sm:$0xff]
    %v6885 = vld [vmem:[#allocation25 + $0x228] sm:$0xff]
    %v6886 = vld [vmem:[#allocation25 + $0x230] sm:$0xff]
    %v6887 = vld [vmem:[#allocation25 + $0x238] sm:$0xff]
    %v6888 = vld [vmem:[#allocation25 + $0x240] sm:$0xff]
    %v6889 = vld [vmem:[#allocation25 + $0x248] sm:$0xff]
    %v6890 = vld [vmem:[#allocation25 + $0x250] sm:$0xff]
    %v6891 = vld [vmem:[#allocation25 + $0x258] sm:$0xff]
    %v6892 = vld [vmem:[#allocation25 + $0x260] sm:$0xff]
    %v6893 = vld [vmem:[#allocation25 + $0x268] sm:$0xff]
    %v6894 = vld [vmem:[#allocation25 + $0x270] sm:$0xff]
    %v6895 = vld [vmem:[#allocation25 + $0x278] sm:$0xff]
    %v6896 = vld [vmem:[#allocation25 + $0x280] sm:$0xff]
    %v6897 = vld [vmem:[#allocation25 + $0x288] sm:$0xff]
    %v6898 = vld [vmem:[#allocation25 + $0x290] sm:$0xff]
    %v6899 = vld [vmem:[#allocation25 + $0x298] sm:$0xff]
    %v6900 = vld [vmem:[#allocation25 + $0x2a0] sm:$0xff]
    %v6901 = vld [vmem:[#allocation25 + $0x2a8] sm:$0xff]
    %v6902 = vld [vmem:[#allocation25 + $0x2b0] sm:$0xff]
    %v6903 = vld [vmem:[#allocation25 + $0x2b8] sm:$0xff]
    %v6904 = vld [vmem:[#allocation25 + $0x2c0] sm:$0xff]
    %v6905 = vld [vmem:[#allocation25 + $0x2c8] sm:$0xff]
    %v6906 = vld [vmem:[#allocation25 + $0x2d0] sm:$0xff]
    %v6907 = vld [vmem:[#allocation25 + $0x2d8] sm:$0xff]
    %v6908 = vld [vmem:[#allocation25 + $0x2e0] sm:$0xff]
    %v6909 = vld [vmem:[#allocation25 + $0x2e8] sm:$0xff]
    %v6910 = vld [vmem:[#allocation25 + $0x2f0] sm:$0xff]
    %v6911 = vld [vmem:[#allocation25 + $0x2f8] sm:$0xff]
    %v6912 = vld [vmem:[#allocation25 + $0x300] sm:$0xff]
    %v6913 = vld [vmem:[#allocation25 + $0x308] sm:$0xff]
    %v6914 = vld [vmem:[#allocation25 + $0x310] sm:$0xff]
    %v6915 = vld [vmem:[#allocation25 + $0x318] sm:$0xff]
    %v6916 = vld [vmem:[#allocation25 + $0x320] sm:$0xff]
    %v6917 = vld [vmem:[#allocation25 + $0x328] sm:$0xff]
    %v6918 = vld [vmem:[#allocation25 + $0x330] sm:$0xff]
    %v6919 = vld [vmem:[#allocation25 + $0x338] sm:$0xff]
    %v6920 = vld [vmem:[#allocation25 + $0x340] sm:$0xff]
    %v6921 = vld [vmem:[#allocation25 + $0x348] sm:$0xff]
    %v6922 = vld [vmem:[#allocation25 + $0x350] sm:$0xff]
    %v6923 = vld [vmem:[#allocation25 + $0x358] sm:$0xff]
    %v6924 = vld [vmem:[#allocation25 + $0x360] sm:$0xff]
    %v6925 = vld [vmem:[#allocation25 + $0x368] sm:$0xff]
    %v6926 = vld [vmem:[#allocation25 + $0x370] sm:$0xff]
    %v6927 = vld [vmem:[#allocation25 + $0x378] sm:$0xff]
    %v6928 = vld [vmem:[#allocation25 + $0x380] sm:$0xff]
    %v6929 = vld [vmem:[#allocation25 + $0x388] sm:$0xff]
    %v6930 = vld [vmem:[#allocation25 + $0x390] sm:$0xff]
    %v6931 = vld [vmem:[#allocation25 + $0x398] sm:$0xff]
    %v6932 = vld [vmem:[#allocation25 + $0x3a0] sm:$0xff]
    %v6933 = vld [vmem:[#allocation25 + $0x3a8] sm:$0xff]
    %v6934 = vld [vmem:[#allocation25 + $0x3b0] sm:$0xff]
    %v6935 = vld [vmem:[#allocation25 + $0x3b8] sm:$0xff]
    %v6936 = vld [vmem:[#allocation25 + $0x3c0] sm:$0xff]
    %v6937 = vld [vmem:[#allocation25 + $0x3c8] sm:$0xff]
    %v6938 = vld [vmem:[#allocation25 + $0x3d0] sm:$0xff]
    %v6939 = vld [vmem:[#allocation25 + $0x3d8] sm:$0xff]
    %v6940 = vld [vmem:[#allocation25 + $0x3e0] sm:$0xff]
    %v6941 = vld [vmem:[#allocation25 + $0x3e8] sm:$0xff]
    %v6942 = vld [vmem:[#allocation25 + $0x3f0] sm:$0xff]
    %v6943 = vld [vmem:[#allocation25 + $0x3f8] sm:$0xff]
    %v6944 = vld [vmem:[#allocation25 + $0x400] sm:$0xff]
    %v6945 = vld [vmem:[#allocation25 + $0x408] sm:$0xff]
    %v6946 = vld [vmem:[#allocation25 + $0x410] sm:$0xff]
    %v6947 = vld [vmem:[#allocation25 + $0x418] sm:$0xff]
    %v6948 = vld [vmem:[#allocation25 + $0x420] sm:$0xff]
    %v6949 = vld [vmem:[#allocation25 + $0x428] sm:$0xff]
    %v6950 = vld [vmem:[#allocation25 + $0x430] sm:$0xff]
    %v6951 = vld [vmem:[#allocation25 + $0x438] sm:$0xff]
    %v6952 = vld [vmem:[#allocation25 + $0x440] sm:$0xff]
    %v6953 = vld [vmem:[#allocation25 + $0x448] sm:$0xff]
    %v6954 = vld [vmem:[#allocation25 + $0x450] sm:$0xff]
    %v6955 = vld [vmem:[#allocation25 + $0x458] sm:$0xff]
    %v6956 = vld [vmem:[#allocation25 + $0x460] sm:$0xff]
    %v6957 = vld [vmem:[#allocation25 + $0x468] sm:$0xff]
    %v6958 = vld [vmem:[#allocation25 + $0x470] sm:$0xff]
    %v6959 = vld [vmem:[#allocation25 + $0x478] sm:$0xff]
    %v6960 = vld [vmem:[#allocation25 + $0x480] sm:$0xff]
    %v6961 = vld [vmem:[#allocation25 + $0x488] sm:$0xff]
    %v6962 = vld [vmem:[#allocation25 + $0x490] sm:$0xff]
    %v6963 = vld [vmem:[#allocation25 + $0x498] sm:$0xff]
    %v6964 = vld [vmem:[#allocation25 + $0x4a0] sm:$0xff]
    %v6965 = vld [vmem:[#allocation25 + $0x4a8] sm:$0xff]
    %v6966 = vld [vmem:[#allocation25 + $0x4b0] sm:$0xff]
    %v6967 = vld [vmem:[#allocation25 + $0x4b8] sm:$0xff]
    %v6968 = vld [vmem:[#allocation25 + $0x4c0] sm:$0xff]
    %v6969 = vld [vmem:[#allocation25 + $0x4c8] sm:$0xff]
    %v6970 = vld [vmem:[#allocation25 + $0x4d0] sm:$0xff]
    %v6971 = vld [vmem:[#allocation25 + $0x4d8] sm:$0xff]
    %v6972 = vld [vmem:[#allocation25 + $0x4e0] sm:$0xff]
    %v6973 = vld [vmem:[#allocation25 + $0x4e8] sm:$0xff]
    %v6974 = vld [vmem:[#allocation25 + $0x4f0] sm:$0xff]
    %v6975 = vld [vmem:[#allocation25 + $0x4f8] sm:$0xff]
    %v6976 = vld [vmem:[#allocation25 + $0x500] sm:$0xff]
    %v6977 = vld [vmem:[#allocation25 + $0x508] sm:$0xff]
    %v6978 = vld [vmem:[#allocation25 + $0x510] sm:$0xff]
    %v6979 = vld [vmem:[#allocation25 + $0x518] sm:$0xff]
    %v6980 = vld [vmem:[#allocation25 + $0x520] sm:$0xff]
    %v6981 = vld [vmem:[#allocation25 + $0x528] sm:$0xff]
    %v6982 = vld [vmem:[#allocation25 + $0x530] sm:$0xff]
    %v6983 = vld [vmem:[#allocation25 + $0x538] sm:$0xff]
    %v6984 = vld [vmem:[#allocation25 + $0x540] sm:$0xff]
    %v6985 = vld [vmem:[#allocation25 + $0x548] sm:$0xff]
    %v6986 = vld [vmem:[#allocation25 + $0x550] sm:$0xff]
    %v6987 = vld [vmem:[#allocation25 + $0x558] sm:$0xff]
    %v6988 = vld [vmem:[#allocation25 + $0x560] sm:$0xff]
    %v6989 = vld [vmem:[#allocation25 + $0x568] sm:$0xff]
    %v6990 = vld [vmem:[#allocation25 + $0x570] sm:$0xff]
    %v6991 = vld [vmem:[#allocation25 + $0x578] sm:$0xff]
    %v6992 = vld [vmem:[#allocation25 + $0x580] sm:$0xff]
    %v6993 = vld [vmem:[#allocation25 + $0x588] sm:$0xff]
    %v6994 = vld [vmem:[#allocation25 + $0x590] sm:$0xff]
    %v6995 = vld [vmem:[#allocation25 + $0x598] sm:$0xff]
    %v6996 = vld [vmem:[#allocation25 + $0x5a0] sm:$0xff]
    %v6997 = vld [vmem:[#allocation25 + $0x5a8] sm:$0xff]
    %v6998 = vld [vmem:[#allocation25 + $0x5b0] sm:$0xff]
    %v6999 = vld [vmem:[#allocation25 + $0x5b8] sm:$0xff]
    %v7000 = vld [vmem:[#allocation25 + $0x5c0] sm:$0xff]
    %v7001 = vld [vmem:[#allocation25 + $0x5c8] sm:$0xff]
    %v7002 = vld [vmem:[#allocation25 + $0x5d0] sm:$0xff]
    %v7003 = vld [vmem:[#allocation25 + $0x5d8] sm:$0xff]
    %v7004 = vld [vmem:[#allocation25 + $0x5e0] sm:$0xff]
    %v7005 = vld [vmem:[#allocation25 + $0x5e8] sm:$0xff]
    %v7006 = vld [vmem:[#allocation25 + $0x5f0] sm:$0xff]
    %v7007 = vld [vmem:[#allocation25 + $0x5f8] sm:$0xff]
    %v7008 = vld [vmem:[#allocation25 + $0x600] sm:$0xff]
    %v7009 = vld [vmem:[#allocation25 + $0x608] sm:$0xff]
    %v7010 = vld [vmem:[#allocation25 + $0x610] sm:$0xff]
    %v7011 = vld [vmem:[#allocation25 + $0x618] sm:$0xff]
    %v7012 = vld [vmem:[#allocation25 + $0x620] sm:$0xff]
    %v7013 = vld [vmem:[#allocation25 + $0x628] sm:$0xff]
    %v7014 = vld [vmem:[#allocation25 + $0x630] sm:$0xff]
    %v7015 = vld [vmem:[#allocation25 + $0x638] sm:$0xff]
    %v7016 = vld [vmem:[#allocation25 + $0x640] sm:$0xff]
    %v7017 = vld [vmem:[#allocation25 + $0x648] sm:$0xff]
    %v7018 = vld [vmem:[#allocation25 + $0x650] sm:$0xff]
    %v7019 = vld [vmem:[#allocation25 + $0x658] sm:$0xff]
    %v7020 = vld [vmem:[#allocation25 + $0x660] sm:$0xff]
    %v7021 = vld [vmem:[#allocation25 + $0x668] sm:$0xff]
    %v7022 = vld [vmem:[#allocation25 + $0x670] sm:$0xff]
    %v7023 = vld [vmem:[#allocation25 + $0x678] sm:$0xff]
    %v7024 = vld [vmem:[#allocation25 + $0x680] sm:$0xff]
    %v7025 = vld [vmem:[#allocation25 + $0x688] sm:$0xff]
    %v7026 = vld [vmem:[#allocation25 + $0x690] sm:$0xff]
    %v7027 = vld [vmem:[#allocation25 + $0x698] sm:$0xff]
    %v7028 = vld [vmem:[#allocation25 + $0x6a0] sm:$0xff]
    %v7029 = vld [vmem:[#allocation25 + $0x6a8] sm:$0xff]
    %v7030 = vld [vmem:[#allocation25 + $0x6b0] sm:$0xff]
    %v7031 = vld [vmem:[#allocation25 + $0x6b8] sm:$0xff]
    %v7032 = vld [vmem:[#allocation25 + $0x6c0] sm:$0xff]
    %v7033 = vld [vmem:[#allocation25 + $0x6c8] sm:$0xff]
    %v7034 = vld [vmem:[#allocation25 + $0x6d0] sm:$0xff]
    %v7035 = vld [vmem:[#allocation25 + $0x6d8] sm:$0xff]
    %v7036 = vld [vmem:[#allocation25 + $0x6e0] sm:$0xff]
    %v7037 = vld [vmem:[#allocation25 + $0x6e8] sm:$0xff]
    %v7038 = vld [vmem:[#allocation25 + $0x6f0] sm:$0xff]
    %v7039 = vld [vmem:[#allocation25 + $0x6f8] sm:$0xff]
    %v7040 = vld [vmem:[#allocation25 + $0x700] sm:$0xff]
    %v7041 = vld [vmem:[#allocation25 + $0x708] sm:$0xff]
    %v7042 = vld [vmem:[#allocation25 + $0x710] sm:$0xff]
    %v7043 = vld [vmem:[#allocation25 + $0x718] sm:$0xff]
    %v7044 = vld [vmem:[#allocation25 + $0x720] sm:$0xff]
    %v7045 = vld [vmem:[#allocation25 + $0x728] sm:$0xff]
    %v7046 = vld [vmem:[#allocation25 + $0x730] sm:$0xff]
    %v7047 = vld [vmem:[#allocation25 + $0x738] sm:$0xff]
    %v7048 = vld [vmem:[#allocation25 + $0x740] sm:$0xff]
    %v7049 = vld [vmem:[#allocation25 + $0x748] sm:$0xff]
    %v7050 = vld [vmem:[#allocation25 + $0x750] sm:$0xff]
    %v7051 = vld [vmem:[#allocation25 + $0x758] sm:$0xff]
    %v7052 = vld [vmem:[#allocation25 + $0x760] sm:$0xff]
    %v7053 = vld [vmem:[#allocation25 + $0x768] sm:$0xff]
    %v7054 = vld [vmem:[#allocation25 + $0x770] sm:$0xff]
    %v7055 = vld [vmem:[#allocation25 + $0x778] sm:$0xff]
    %v7056 = vld [vmem:[#allocation25 + $0x780] sm:$0xff]
    %v7057 = vld [vmem:[#allocation25 + $0x788] sm:$0xff]
    %v7058 = vld [vmem:[#allocation25 + $0x790] sm:$0xff]
    %v7059 = vld [vmem:[#allocation25 + $0x798] sm:$0xff]
    %v7060 = vld [vmem:[#allocation25 + $0x7a0] sm:$0xff]
    %v7061 = vld [vmem:[#allocation25 + $0x7a8] sm:$0xff]
    %v7062 = vld [vmem:[#allocation25 + $0x7b0] sm:$0xff]
    %v7063 = vld [vmem:[#allocation25 + $0x7b8] sm:$0xff]
    %v7064 = vld [vmem:[#allocation25 + $0x7c0] sm:$0xff]
    %v7065 = vld [vmem:[#allocation25 + $0x7c8] sm:$0xff]
    %v7066 = vld [vmem:[#allocation25 + $0x7d0] sm:$0xff]
    %v7067 = vld [vmem:[#allocation25 + $0x7d8] sm:$0xff]
    %v7068 = vld [vmem:[#allocation25 + $0x7e0] sm:$0xff]
    %v7069 = vld [vmem:[#allocation25 + $0x7e8] sm:$0xff]
    %v7070 = vld [vmem:[#allocation25 + $0x7f0] sm:$0xff]
    %v7071 = vld [vmem:[#allocation25 + $0x7f8] sm:$0xff]
    %v7072 = vld [vmem:[%s49] sm:$0xf]
    %v7074 = vlaneseq
    %v7075 = vshrl.u32 %v7074, 7
    %v7076 = vsub.s32 0, %v7075
    %v7077 = vrot.slane %v7072, %v7076
    %v7078 = vlaneseq
    %v7079 = vshrl.u32 %v7078, 7
    %v7080 = vsub.s32 1, %v7079
    %v7081 = vrot.slane %v7072, %v7080
    %v7082 = vlaneseq
    %v7083 = vshrl.u32 %v7082, 7
    %v7084 = vsub.s32 2, %v7083
    %v7085 = vrot.slane %v7072, %v7084
    %v7086 = vlaneseq
    %v7087 = vshrl.u32 %v7086, 7
    %v7088 = vsub.s32 3, %v7087
    %v7089 = vrot.slane %v7072, %v7088
    %v7350 = vunpack.c.l.b16 %v6816
    %v7351 = vunpack.c.h.b16 %v6816
    %v7352 = vunpack.c.l.b16 %v6817
    %v7353 = vunpack.c.h.b16 %v6817
    %v7354 = vunpack.c.l.b16 %v6818
    %v7355 = vunpack.c.h.b16 %v6818
    %v7356 = vunpack.c.l.b16 %v6819
    %v7357 = vunpack.c.h.b16 %v6819
    %v7358 = vunpack.c.l.b16 %v6820
    %v7359 = vunpack.c.h.b16 %v6820
    %v7360 = vunpack.c.l.b16 %v6821
    %v7361 = vunpack.c.h.b16 %v6821
    %v7362 = vunpack.c.l.b16 %v6822
    %v7363 = vunpack.c.h.b16 %v6822
    %v7364 = vunpack.c.l.b16 %v6823
    %v7365 = vunpack.c.h.b16 %v6823
    %v7366 = vunpack.c.l.b16 %v6824
    %v7367 = vunpack.c.h.b16 %v6824
    %v7368 = vunpack.c.l.b16 %v6825
    %v7369 = vunpack.c.h.b16 %v6825
    %v7370 = vunpack.c.l.b16 %v6826
    %v7371 = vunpack.c.h.b16 %v6826
    %v7372 = vunpack.c.l.b16 %v6827
    %v7373 = vunpack.c.h.b16 %v6827
    %v7374 = vunpack.c.l.b16 %v6828
    %v7375 = vunpack.c.h.b16 %v6828
    %v7376 = vunpack.c.l.b16 %v6829
    %v7377 = vunpack.c.h.b16 %v6829
    %v7378 = vunpack.c.l.b16 %v6830
    %v7379 = vunpack.c.h.b16 %v6830
    %v7380 = vunpack.c.l.b16 %v6831
    %v7381 = vunpack.c.h.b16 %v6831
    %v7382 = vunpack.c.l.b16 %v6832
    %v7383 = vunpack.c.h.b16 %v6832
    %v7384 = vunpack.c.l.b16 %v6833
    %v7385 = vunpack.c.h.b16 %v6833
    %v7386 = vunpack.c.l.b16 %v6834
    %v7387 = vunpack.c.h.b16 %v6834
    %v7388 = vunpack.c.l.b16 %v6835
    %v7389 = vunpack.c.h.b16 %v6835
    %v7390 = vunpack.c.l.b16 %v6836
    %v7391 = vunpack.c.h.b16 %v6836
    %v7392 = vunpack.c.l.b16 %v6837
    %v7393 = vunpack.c.h.b16 %v6837
    %v7394 = vunpack.c.l.b16 %v6838
    %v7395 = vunpack.c.h.b16 %v6838
    %v7396 = vunpack.c.l.b16 %v6839
    %v7397 = vunpack.c.h.b16 %v6839
    %v7398 = vunpack.c.l.b16 %v6840
    %v7399 = vunpack.c.h.b16 %v6840
    %v7400 = vunpack.c.l.b16 %v6841
    %v7401 = vunpack.c.h.b16 %v6841
    %v7402 = vunpack.c.l.b16 %v6842
    %v7403 = vunpack.c.h.b16 %v6842
    %v7404 = vunpack.c.l.b16 %v6843
    %v7405 = vunpack.c.h.b16 %v6843
    %v7406 = vunpack.c.l.b16 %v6844
    %v7407 = vunpack.c.h.b16 %v6844
    %v7408 = vunpack.c.l.b16 %v6845
    %v7409 = vunpack.c.h.b16 %v6845
    %v7410 = vunpack.c.l.b16 %v6846
    %v7411 = vunpack.c.h.b16 %v6846
    %v7412 = vunpack.c.l.b16 %v6847
    %v7413 = vunpack.c.h.b16 %v6847
    %v7414 = vunpack.c.l.b16 %v6848
    %v7415 = vunpack.c.h.b16 %v6848
    %v7416 = vunpack.c.l.b16 %v6849
    %v7417 = vunpack.c.h.b16 %v6849
    %v7418 = vunpack.c.l.b16 %v6850
    %v7419 = vunpack.c.h.b16 %v6850
    %v7420 = vunpack.c.l.b16 %v6851
    %v7421 = vunpack.c.h.b16 %v6851
    %v7422 = vunpack.c.l.b16 %v6852
    %v7423 = vunpack.c.h.b16 %v6852
    %v7424 = vunpack.c.l.b16 %v6853
    %v7425 = vunpack.c.h.b16 %v6853
    %v7426 = vunpack.c.l.b16 %v6854
    %v7427 = vunpack.c.h.b16 %v6854
    %v7428 = vunpack.c.l.b16 %v6855
    %v7429 = vunpack.c.h.b16 %v6855
    %v7430 = vunpack.c.l.b16 %v6856
    %v7431 = vunpack.c.h.b16 %v6856
    %v7432 = vunpack.c.l.b16 %v6857
    %v7433 = vunpack.c.h.b16 %v6857
    %v7434 = vunpack.c.l.b16 %v6858
    %v7435 = vunpack.c.h.b16 %v6858
    %v7436 = vunpack.c.l.b16 %v6859
    %v7437 = vunpack.c.h.b16 %v6859
    %v7438 = vunpack.c.l.b16 %v6860
    %v7439 = vunpack.c.h.b16 %v6860
    %v7440 = vunpack.c.l.b16 %v6861
    %v7441 = vunpack.c.h.b16 %v6861
    %v7442 = vunpack.c.l.b16 %v6862
    %v7443 = vunpack.c.h.b16 %v6862
    %v7444 = vunpack.c.l.b16 %v6863
    %v7445 = vunpack.c.h.b16 %v6863
    %v7446 = vunpack.c.l.b16 %v6864
    %v7447 = vunpack.c.h.b16 %v6864
    %v7448 = vunpack.c.l.b16 %v6865
    %v7449 = vunpack.c.h.b16 %v6865
    %v7450 = vunpack.c.l.b16 %v6866
    %v7451 = vunpack.c.h.b16 %v6866
    %v7452 = vunpack.c.l.b16 %v6867
    %v7453 = vunpack.c.h.b16 %v6867
    %v7454 = vunpack.c.l.b16 %v6868
    %v7455 = vunpack.c.h.b16 %v6868
    %v7456 = vunpack.c.l.b16 %v6869
    %v7457 = vunpack.c.h.b16 %v6869
    %v7458 = vunpack.c.l.b16 %v6870
    %v7459 = vunpack.c.h.b16 %v6870
    %v7460 = vunpack.c.l.b16 %v6871
    %v7461 = vunpack.c.h.b16 %v6871
    %v7462 = vunpack.c.l.b16 %v6872
    %v7463 = vunpack.c.h.b16 %v6872
    %v7464 = vunpack.c.l.b16 %v6873
    %v7465 = vunpack.c.h.b16 %v6873
    %v7466 = vunpack.c.l.b16 %v6874
    %v7467 = vunpack.c.h.b16 %v6874
    %v7468 = vunpack.c.l.b16 %v6875
    %v7469 = vunpack.c.h.b16 %v6875
    %v7470 = vunpack.c.l.b16 %v6876
    %v7471 = vunpack.c.h.b16 %v6876
    %v7472 = vunpack.c.l.b16 %v6877
    %v7473 = vunpack.c.h.b16 %v6877
    %v7474 = vunpack.c.l.b16 %v6878
    %v7475 = vunpack.c.h.b16 %v6878
    %v7476 = vunpack.c.l.b16 %v6879
    %v7477 = vunpack.c.h.b16 %v6879
    %v7478 = vunpack.c.l.b16 %v6880
    %v7479 = vunpack.c.h.b16 %v6880
    %v7480 = vunpack.c.l.b16 %v6881
    %v7481 = vunpack.c.h.b16 %v6881
    %v7482 = vunpack.c.l.b16 %v6882
    %v7483 = vunpack.c.h.b16 %v6882
    %v7484 = vunpack.c.l.b16 %v6883
    %v7485 = vunpack.c.h.b16 %v6883
    %v7486 = vunpack.c.l.b16 %v6884
    %v7487 = vunpack.c.h.b16 %v6884
    %v7488 = vunpack.c.l.b16 %v6885
    %v7489 = vunpack.c.h.b16 %v6885
    %v7490 = vunpack.c.l.b16 %v6886
    %v7491 = vunpack.c.h.b16 %v6886
    %v7492 = vunpack.c.l.b16 %v6887
    %v7493 = vunpack.c.h.b16 %v6887
    %v7494 = vunpack.c.l.b16 %v6888
    %v7495 = vunpack.c.h.b16 %v6888
    %v7496 = vunpack.c.l.b16 %v6889
    %v7497 = vunpack.c.h.b16 %v6889
    %v7498 = vunpack.c.l.b16 %v6890
    %v7499 = vunpack.c.h.b16 %v6890
    %v7500 = vunpack.c.l.b16 %v6891
    %v7501 = vunpack.c.h.b16 %v6891
    %v7502 = vunpack.c.l.b16 %v6892
    %v7503 = vunpack.c.h.b16 %v6892
    %v7504 = vunpack.c.l.b16 %v6893
    %v7505 = vunpack.c.h.b16 %v6893
    %v7506 = vunpack.c.l.b16 %v6894
    %v7507 = vunpack.c.h.b16 %v6894
    %v7508 = vunpack.c.l.b16 %v6895
    %v7509 = vunpack.c.h.b16 %v6895
    %v7510 = vunpack.c.l.b16 %v6896
    %v7511 = vunpack.c.h.b16 %v6896
    %v7512 = vunpack.c.l.b16 %v6897
    %v7513 = vunpack.c.h.b16 %v6897
    %v7514 = vunpack.c.l.b16 %v6898
    %v7515 = vunpack.c.h.b16 %v6898
    %v7516 = vunpack.c.l.b16 %v6899
    %v7517 = vunpack.c.h.b16 %v6899
    %v7518 = vunpack.c.l.b16 %v6900
    %v7519 = vunpack.c.h.b16 %v6900
    %v7520 = vunpack.c.l.b16 %v6901
    %v7521 = vunpack.c.h.b16 %v6901
    %v7522 = vunpack.c.l.b16 %v6902
    %v7523 = vunpack.c.h.b16 %v6902
    %v7524 = vunpack.c.l.b16 %v6903
    %v7525 = vunpack.c.h.b16 %v6903
    %v7526 = vunpack.c.l.b16 %v6904
    %v7527 = vunpack.c.h.b16 %v6904
    %v7528 = vunpack.c.l.b16 %v6905
    %v7529 = vunpack.c.h.b16 %v6905
    %v7530 = vunpack.c.l.b16 %v6906
    %v7531 = vunpack.c.h.b16 %v6906
    %v7532 = vunpack.c.l.b16 %v6907
    %v7533 = vunpack.c.h.b16 %v6907
    %v7534 = vunpack.c.l.b16 %v6908
    %v7535 = vunpack.c.h.b16 %v6908
    %v7536 = vunpack.c.l.b16 %v6909
    %v7537 = vunpack.c.h.b16 %v6909
    %v7538 = vunpack.c.l.b16 %v6910
    %v7539 = vunpack.c.h.b16 %v6910
    %v7540 = vunpack.c.l.b16 %v6911
    %v7541 = vunpack.c.h.b16 %v6911
    %v7542 = vunpack.c.l.b16 %v6912
    %v7543 = vunpack.c.h.b16 %v6912
    %v7544 = vunpack.c.l.b16 %v6913
    %v7545 = vunpack.c.h.b16 %v6913
    %v7546 = vunpack.c.l.b16 %v6914
    %v7547 = vunpack.c.h.b16 %v6914
    %v7548 = vunpack.c.l.b16 %v6915
    %v7549 = vunpack.c.h.b16 %v6915
    %v7550 = vunpack.c.l.b16 %v6916
    %v7551 = vunpack.c.h.b16 %v6916
    %v7552 = vunpack.c.l.b16 %v6917
    %v7553 = vunpack.c.h.b16 %v6917
    %v7554 = vunpack.c.l.b16 %v6918
    %v7555 = vunpack.c.h.b16 %v6918
    %v7556 = vunpack.c.l.b16 %v6919
    %v7557 = vunpack.c.h.b16 %v6919
    %v7558 = vunpack.c.l.b16 %v6920
    %v7559 = vunpack.c.h.b16 %v6920
    %v7560 = vunpack.c.l.b16 %v6921
    %v7561 = vunpack.c.h.b16 %v6921
    %v7562 = vunpack.c.l.b16 %v6922
    %v7563 = vunpack.c.h.b16 %v6922
    %v7564 = vunpack.c.l.b16 %v6923
    %v7565 = vunpack.c.h.b16 %v6923
    %v7566 = vunpack.c.l.b16 %v6924
    %v7567 = vunpack.c.h.b16 %v6924
    %v7568 = vunpack.c.l.b16 %v6925
    %v7569 = vunpack.c.h.b16 %v6925
    %v7570 = vunpack.c.l.b16 %v6926
    %v7571 = vunpack.c.h.b16 %v6926
    %v7572 = vunpack.c.l.b16 %v6927
    %v7573 = vunpack.c.h.b16 %v6927
    %v7574 = vunpack.c.l.b16 %v6928
    %v7575 = vunpack.c.h.b16 %v6928
    %v7576 = vunpack.c.l.b16 %v6929
    %v7577 = vunpack.c.h.b16 %v6929
    %v7578 = vunpack.c.l.b16 %v6930
    %v7579 = vunpack.c.h.b16 %v6930
    %v7580 = vunpack.c.l.b16 %v6931
    %v7581 = vunpack.c.h.b16 %v6931
    %v7582 = vunpack.c.l.b16 %v6932
    %v7583 = vunpack.c.h.b16 %v6932
    %v7584 = vunpack.c.l.b16 %v6933
    %v7585 = vunpack.c.h.b16 %v6933
    %v7586 = vunpack.c.l.b16 %v6934
    %v7587 = vunpack.c.h.b16 %v6934
    %v7588 = vunpack.c.l.b16 %v6935
    %v7589 = vunpack.c.h.b16 %v6935
    %v7590 = vunpack.c.l.b16 %v6936
    %v7591 = vunpack.c.h.b16 %v6936
    %v7592 = vunpack.c.l.b16 %v6937
    %v7593 = vunpack.c.h.b16 %v6937
    %v7594 = vunpack.c.l.b16 %v6938
    %v7595 = vunpack.c.h.b16 %v6938
    %v7596 = vunpack.c.l.b16 %v6939
    %v7597 = vunpack.c.h.b16 %v6939
    %v7598 = vunpack.c.l.b16 %v6940
    %v7599 = vunpack.c.h.b16 %v6940
    %v7600 = vunpack.c.l.b16 %v6941
    %v7601 = vunpack.c.h.b16 %v6941
    %v7602 = vunpack.c.l.b16 %v6942
    %v7603 = vunpack.c.h.b16 %v6942
    %v7604 = vunpack.c.l.b16 %v6943
    %v7605 = vunpack.c.h.b16 %v6943
    %v7606 = vunpack.c.l.b16 %v6944
    %v7607 = vunpack.c.h.b16 %v6944
    %v7608 = vunpack.c.l.b16 %v6945
    %v7609 = vunpack.c.h.b16 %v6945
    %v7610 = vunpack.c.l.b16 %v6946
    %v7611 = vunpack.c.h.b16 %v6946
    %v7612 = vunpack.c.l.b16 %v6947
    %v7613 = vunpack.c.h.b16 %v6947
    %v7614 = vunpack.c.l.b16 %v6948
    %v7615 = vunpack.c.h.b16 %v6948
    %v7616 = vunpack.c.l.b16 %v6949
    %v7617 = vunpack.c.h.b16 %v6949
    %v7618 = vunpack.c.l.b16 %v6950
    %v7619 = vunpack.c.h.b16 %v6950
    %v7620 = vunpack.c.l.b16 %v6951
    %v7621 = vunpack.c.h.b16 %v6951
    %v7622 = vunpack.c.l.b16 %v6952
    %v7623 = vunpack.c.h.b16 %v6952
    %v7624 = vunpack.c.l.b16 %v6953
    %v7625 = vunpack.c.h.b16 %v6953
    %v7626 = vunpack.c.l.b16 %v6954
    %v7627 = vunpack.c.h.b16 %v6954
    %v7628 = vunpack.c.l.b16 %v6955
    %v7629 = vunpack.c.h.b16 %v6955
    %v7630 = vunpack.c.l.b16 %v6956
    %v7631 = vunpack.c.h.b16 %v6956
    %v7632 = vunpack.c.l.b16 %v6957
    %v7633 = vunpack.c.h.b16 %v6957
    %v7634 = vunpack.c.l.b16 %v6958
    %v7635 = vunpack.c.h.b16 %v6958
    %v7636 = vunpack.c.l.b16 %v6959
    %v7637 = vunpack.c.h.b16 %v6959
    %v7638 = vunpack.c.l.b16 %v6960
    %v7639 = vunpack.c.h.b16 %v6960
    %v7640 = vunpack.c.l.b16 %v6961
    %v7641 = vunpack.c.h.b16 %v6961
    %v7642 = vunpack.c.l.b16 %v6962
    %v7643 = vunpack.c.h.b16 %v6962
    %v7644 = vunpack.c.l.b16 %v6963
    %v7645 = vunpack.c.h.b16 %v6963
    %v7646 = vunpack.c.l.b16 %v6964
    %v7647 = vunpack.c.h.b16 %v6964
    %v7648 = vunpack.c.l.b16 %v6965
    %v7649 = vunpack.c.h.b16 %v6965
    %v7650 = vunpack.c.l.b16 %v6966
    %v7651 = vunpack.c.h.b16 %v6966
    %v7652 = vunpack.c.l.b16 %v6967
    %v7653 = vunpack.c.h.b16 %v6967
    %v7654 = vunpack.c.l.b16 %v6968
    %v7655 = vunpack.c.h.b16 %v6968
    %v7656 = vunpack.c.l.b16 %v6969
    %v7657 = vunpack.c.h.b16 %v6969
    %v7658 = vunpack.c.l.b16 %v6970
    %v7659 = vunpack.c.h.b16 %v6970
    %v7660 = vunpack.c.l.b16 %v6971
    %v7661 = vunpack.c.h.b16 %v6971
    %v7662 = vunpack.c.l.b16 %v6972
    %v7663 = vunpack.c.h.b16 %v6972
    %v7664 = vunpack.c.l.b16 %v6973
    %v7665 = vunpack.c.h.b16 %v6973
    %v7666 = vunpack.c.l.b16 %v6974
    %v7667 = vunpack.c.h.b16 %v6974
    %v7668 = vunpack.c.l.b16 %v6975
    %v7669 = vunpack.c.h.b16 %v6975
    %v7670 = vunpack.c.l.b16 %v6976
    %v7671 = vunpack.c.h.b16 %v6976
    %v7672 = vunpack.c.l.b16 %v6977
    %v7673 = vunpack.c.h.b16 %v6977
    %v7674 = vunpack.c.l.b16 %v6978
    %v7675 = vunpack.c.h.b16 %v6978
    %v7676 = vunpack.c.l.b16 %v6979
    %v7677 = vunpack.c.h.b16 %v6979
    %v7678 = vunpack.c.l.b16 %v6980
    %v7679 = vunpack.c.h.b16 %v6980
    %v7680 = vunpack.c.l.b16 %v6981
    %v7681 = vunpack.c.h.b16 %v6981
    %v7682 = vunpack.c.l.b16 %v6982
    %v7683 = vunpack.c.h.b16 %v6982
    %v7684 = vunpack.c.l.b16 %v6983
    %v7685 = vunpack.c.h.b16 %v6983
    %v7686 = vunpack.c.l.b16 %v6984
    %v7687 = vunpack.c.h.b16 %v6984
    %v7688 = vunpack.c.l.b16 %v6985
    %v7689 = vunpack.c.h.b16 %v6985
    %v7690 = vunpack.c.l.b16 %v6986
    %v7691 = vunpack.c.h.b16 %v6986
    %v7692 = vunpack.c.l.b16 %v6987
    %v7693 = vunpack.c.h.b16 %v6987
    %v7694 = vunpack.c.l.b16 %v6988
    %v7695 = vunpack.c.h.b16 %v6988
    %v7696 = vunpack.c.l.b16 %v6989
    %v7697 = vunpack.c.h.b16 %v6989
    %v7698 = vunpack.c.l.b16 %v6990
    %v7699 = vunpack.c.h.b16 %v6990
    %v7700 = vunpack.c.l.b16 %v6991
    %v7701 = vunpack.c.h.b16 %v6991
    %v7702 = vunpack.c.l.b16 %v6992
    %v7703 = vunpack.c.h.b16 %v6992
    %v7704 = vunpack.c.l.b16 %v6993
    %v7705 = vunpack.c.h.b16 %v6993
    %v7706 = vunpack.c.l.b16 %v6994
    %v7707 = vunpack.c.h.b16 %v6994
    %v7708 = vunpack.c.l.b16 %v6995
    %v7709 = vunpack.c.h.b16 %v6995
    %v7710 = vunpack.c.l.b16 %v6996
    %v7711 = vunpack.c.h.b16 %v6996
    %v7712 = vunpack.c.l.b16 %v6997
    %v7713 = vunpack.c.h.b16 %v6997
    %v7714 = vunpack.c.l.b16 %v6998
    %v7715 = vunpack.c.h.b16 %v6998
    %v7716 = vunpack.c.l.b16 %v6999
    %v7717 = vunpack.c.h.b16 %v6999
    %v7718 = vunpack.c.l.b16 %v7000
    %v7719 = vunpack.c.h.b16 %v7000
    %v7720 = vunpack.c.l.b16 %v7001
    %v7721 = vunpack.c.h.b16 %v7001
    %v7722 = vunpack.c.l.b16 %v7002
    %v7723 = vunpack.c.h.b16 %v7002
    %v7724 = vunpack.c.l.b16 %v7003
    %v7725 = vunpack.c.h.b16 %v7003
    %v7726 = vunpack.c.l.b16 %v7004
    %v7727 = vunpack.c.h.b16 %v7004
    %v7728 = vunpack.c.l.b16 %v7005
    %v7729 = vunpack.c.h.b16 %v7005
    %v7730 = vunpack.c.l.b16 %v7006
    %v7731 = vunpack.c.h.b16 %v7006
    %v7732 = vunpack.c.l.b16 %v7007
    %v7733 = vunpack.c.h.b16 %v7007
    %v7734 = vunpack.c.l.b16 %v7008
    %v7735 = vunpack.c.h.b16 %v7008
    %v7736 = vunpack.c.l.b16 %v7009
    %v7737 = vunpack.c.h.b16 %v7009
    %v7738 = vunpack.c.l.b16 %v7010
    %v7739 = vunpack.c.h.b16 %v7010
    %v7740 = vunpack.c.l.b16 %v7011
    %v7741 = vunpack.c.h.b16 %v7011
    %v7742 = vunpack.c.l.b16 %v7012
    %v7743 = vunpack.c.h.b16 %v7012
    %v7744 = vunpack.c.l.b16 %v7013
    %v7745 = vunpack.c.h.b16 %v7013
    %v7746 = vunpack.c.l.b16 %v7014
    %v7747 = vunpack.c.h.b16 %v7014
    %v7748 = vunpack.c.l.b16 %v7015
    %v7749 = vunpack.c.h.b16 %v7015
    %v7750 = vunpack.c.l.b16 %v7016
    %v7751 = vunpack.c.h.b16 %v7016
    %v7752 = vunpack.c.l.b16 %v7017
    %v7753 = vunpack.c.h.b16 %v7017
    %v7754 = vunpack.c.l.b16 %v7018
    %v7755 = vunpack.c.h.b16 %v7018
    %v7756 = vunpack.c.l.b16 %v7019
    %v7757 = vunpack.c.h.b16 %v7019
    %v7758 = vunpack.c.l.b16 %v7020
    %v7759 = vunpack.c.h.b16 %v7020
    %v7760 = vunpack.c.l.b16 %v7021
    %v7761 = vunpack.c.h.b16 %v7021
    %v7762 = vunpack.c.l.b16 %v7022
    %v7763 = vunpack.c.h.b16 %v7022
    %v7764 = vunpack.c.l.b16 %v7023
    %v7765 = vunpack.c.h.b16 %v7023
    %v7766 = vunpack.c.l.b16 %v7024
    %v7767 = vunpack.c.h.b16 %v7024
    %v7768 = vunpack.c.l.b16 %v7025
    %v7769 = vunpack.c.h.b16 %v7025
    %v7770 = vunpack.c.l.b16 %v7026
    %v7771 = vunpack.c.h.b16 %v7026
    %v7772 = vunpack.c.l.b16 %v7027
    %v7773 = vunpack.c.h.b16 %v7027
    %v7774 = vunpack.c.l.b16 %v7028
    %v7775 = vunpack.c.h.b16 %v7028
    %v7776 = vunpack.c.l.b16 %v7029
    %v7777 = vunpack.c.h.b16 %v7029
    %v7778 = vunpack.c.l.b16 %v7030
    %v7779 = vunpack.c.h.b16 %v7030
    %v7780 = vunpack.c.l.b16 %v7031
    %v7781 = vunpack.c.h.b16 %v7031
    %v7782 = vunpack.c.l.b16 %v7032
    %v7783 = vunpack.c.h.b16 %v7032
    %v7784 = vunpack.c.l.b16 %v7033
    %v7785 = vunpack.c.h.b16 %v7033
    %v7786 = vunpack.c.l.b16 %v7034
    %v7787 = vunpack.c.h.b16 %v7034
    %v7788 = vunpack.c.l.b16 %v7035
    %v7789 = vunpack.c.h.b16 %v7035
    %v7790 = vunpack.c.l.b16 %v7036
    %v7791 = vunpack.c.h.b16 %v7036
    %v7792 = vunpack.c.l.b16 %v7037
    %v7793 = vunpack.c.h.b16 %v7037
    %v7794 = vunpack.c.l.b16 %v7038
    %v7795 = vunpack.c.h.b16 %v7038
    %v7796 = vunpack.c.l.b16 %v7039
    %v7797 = vunpack.c.h.b16 %v7039
    %v7798 = vunpack.c.l.b16 %v7040
    %v7799 = vunpack.c.h.b16 %v7040
    %v7800 = vunpack.c.l.b16 %v7041
    %v7801 = vunpack.c.h.b16 %v7041
    %v7802 = vunpack.c.l.b16 %v7042
    %v7803 = vunpack.c.h.b16 %v7042
    %v7804 = vunpack.c.l.b16 %v7043
    %v7805 = vunpack.c.h.b16 %v7043
    %v7806 = vunpack.c.l.b16 %v7044
    %v7807 = vunpack.c.h.b16 %v7044
    %v7808 = vunpack.c.l.b16 %v7045
    %v7809 = vunpack.c.h.b16 %v7045
    %v7810 = vunpack.c.l.b16 %v7046
    %v7811 = vunpack.c.h.b16 %v7046
    %v7812 = vunpack.c.l.b16 %v7047
    %v7813 = vunpack.c.h.b16 %v7047
    %v7814 = vunpack.c.l.b16 %v7048
    %v7815 = vunpack.c.h.b16 %v7048
    %v7816 = vunpack.c.l.b16 %v7049
    %v7817 = vunpack.c.h.b16 %v7049
    %v7818 = vunpack.c.l.b16 %v7050
    %v7819 = vunpack.c.h.b16 %v7050
    %v7820 = vunpack.c.l.b16 %v7051
    %v7821 = vunpack.c.h.b16 %v7051
    %v7822 = vunpack.c.l.b16 %v7052
    %v7823 = vunpack.c.h.b16 %v7052
    %v7824 = vunpack.c.l.b16 %v7053
    %v7825 = vunpack.c.h.b16 %v7053
    %v7826 = vunpack.c.l.b16 %v7054
    %v7827 = vunpack.c.h.b16 %v7054
    %v7828 = vunpack.c.l.b16 %v7055
    %v7829 = vunpack.c.h.b16 %v7055
    %v7830 = vunpack.c.l.b16 %v7056
    %v7831 = vunpack.c.h.b16 %v7056
    %v7832 = vunpack.c.l.b16 %v7057
    %v7833 = vunpack.c.h.b16 %v7057
    %v7834 = vunpack.c.l.b16 %v7058
    %v7835 = vunpack.c.h.b16 %v7058
    %v7836 = vunpack.c.l.b16 %v7059
    %v7837 = vunpack.c.h.b16 %v7059
    %v7838 = vunpack.c.l.b16 %v7060
    %v7839 = vunpack.c.h.b16 %v7060
    %v7840 = vunpack.c.l.b16 %v7061
    %v7841 = vunpack.c.h.b16 %v7061
    %v7842 = vunpack.c.l.b16 %v7062
    %v7843 = vunpack.c.h.b16 %v7062
    %v7844 = vunpack.c.l.b16 %v7063
    %v7845 = vunpack.c.h.b16 %v7063
    %v7846 = vunpack.c.l.b16 %v7064
    %v7847 = vunpack.c.h.b16 %v7064
    %v7848 = vunpack.c.l.b16 %v7065
    %v7849 = vunpack.c.h.b16 %v7065
    %v7850 = vunpack.c.l.b16 %v7066
    %v7851 = vunpack.c.h.b16 %v7066
    %v7852 = vunpack.c.l.b16 %v7067
    %v7853 = vunpack.c.h.b16 %v7067
    %v7854 = vunpack.c.l.b16 %v7068
    %v7855 = vunpack.c.h.b16 %v7068
    %v7856 = vunpack.c.l.b16 %v7069
    %v7857 = vunpack.c.h.b16 %v7069
    %v7858 = vunpack.c.l.b16 %v7070
    %v7859 = vunpack.c.h.b16 %v7070
    %v7860 = vunpack.c.l.b16 %v7071
    %v7861 = vunpack.c.h.b16 %v7071
    %v7862 = vpack.c.b16 %v7354, %v7350
    %v7863 = vpack.c.b16 %v7355, %v7351
    %v7864 = vpack.c.b16 %v7356, %v7352
    %v7865 = vpack.c.b16 %v7357, %v7353
    %v7866 = vpack.c.b16 %v7362, %v7358
    %v7867 = vpack.c.b16 %v7363, %v7359
    %v7868 = vpack.c.b16 %v7364, %v7360
    %v7869 = vpack.c.b16 %v7365, %v7361
    %v7870 = vpack.c.b16 %v7370, %v7366
    %v7871 = vpack.c.b16 %v7371, %v7367
    %v7872 = vpack.c.b16 %v7372, %v7368
    %v7873 = vpack.c.b16 %v7373, %v7369
    %v7874 = vpack.c.b16 %v7378, %v7374
    %v7875 = vpack.c.b16 %v7379, %v7375
    %v7876 = vpack.c.b16 %v7380, %v7376
    %v7877 = vpack.c.b16 %v7381, %v7377
    %v7878 = vpack.c.b16 %v7386, %v7382
    %v7879 = vpack.c.b16 %v7387, %v7383
    %v7880 = vpack.c.b16 %v7388, %v7384
    %v7881 = vpack.c.b16 %v7389, %v7385
    %v7882 = vpack.c.b16 %v7394, %v7390
    %v7883 = vpack.c.b16 %v7395, %v7391
    %v7884 = vpack.c.b16 %v7396, %v7392
    %v7885 = vpack.c.b16 %v7397, %v7393
    %v7886 = vpack.c.b16 %v7402, %v7398
    %v7887 = vpack.c.b16 %v7403, %v7399
    %v7888 = vpack.c.b16 %v7404, %v7400
    %v7889 = vpack.c.b16 %v7405, %v7401
    %v7890 = vpack.c.b16 %v7410, %v7406
    %v7891 = vpack.c.b16 %v7411, %v7407
    %v7892 = vpack.c.b16 %v7412, %v7408
    %v7893 = vpack.c.b16 %v7413, %v7409
    %v7894 = vpack.c.b16 %v7418, %v7414
    %v7895 = vpack.c.b16 %v7419, %v7415
    %v7896 = vpack.c.b16 %v7420, %v7416
    %v7897 = vpack.c.b16 %v7421, %v7417
    %v7898 = vpack.c.b16 %v7426, %v7422
    %v7899 = vpack.c.b16 %v7427, %v7423
    %v7900 = vpack.c.b16 %v7428, %v7424
    %v7901 = vpack.c.b16 %v7429, %v7425
    %v7902 = vpack.c.b16 %v7434, %v7430
    %v7903 = vpack.c.b16 %v7435, %v7431
    %v7904 = vpack.c.b16 %v7436, %v7432
    %v7905 = vpack.c.b16 %v7437, %v7433
    %v7906 = vpack.c.b16 %v7442, %v7438
    %v7907 = vpack.c.b16 %v7443, %v7439
    %v7908 = vpack.c.b16 %v7444, %v7440
    %v7909 = vpack.c.b16 %v7445, %v7441
    %v7910 = vpack.c.b16 %v7450, %v7446
    %v7911 = vpack.c.b16 %v7451, %v7447
    %v7912 = vpack.c.b16 %v7452, %v7448
    %v7913 = vpack.c.b16 %v7453, %v7449
    %v7914 = vpack.c.b16 %v7458, %v7454
    %v7915 = vpack.c.b16 %v7459, %v7455
    %v7916 = vpack.c.b16 %v7460, %v7456
    %v7917 = vpack.c.b16 %v7461, %v7457
    %v7918 = vpack.c.b16 %v7466, %v7462
    %v7919 = vpack.c.b16 %v7467, %v7463
    %v7920 = vpack.c.b16 %v7468, %v7464
    %v7921 = vpack.c.b16 %v7469, %v7465
    %v7922 = vpack.c.b16 %v7474, %v7470
    %v7923 = vpack.c.b16 %v7475, %v7471
    %v7924 = vpack.c.b16 %v7476, %v7472
    %v7925 = vpack.c.b16 %v7477, %v7473
    %v7926 = vpack.c.b16 %v7482, %v7478
    %v7927 = vpack.c.b16 %v7483, %v7479
    %v7928 = vpack.c.b16 %v7484, %v7480
    %v7929 = vpack.c.b16 %v7485, %v7481
    %v7930 = vpack.c.b16 %v7490, %v7486
    %v7931 = vpack.c.b16 %v7491, %v7487
    %v7932 = vpack.c.b16 %v7492, %v7488
    %v7933 = vpack.c.b16 %v7493, %v7489
    %v7934 = vpack.c.b16 %v7498, %v7494
    %v7935 = vpack.c.b16 %v7499, %v7495
    %v7936 = vpack.c.b16 %v7500, %v7496
    %v7937 = vpack.c.b16 %v7501, %v7497
    %v7938 = vpack.c.b16 %v7506, %v7502
    %v7939 = vpack.c.b16 %v7507, %v7503
    %v7940 = vpack.c.b16 %v7508, %v7504
    %v7941 = vpack.c.b16 %v7509, %v7505
    %v7942 = vpack.c.b16 %v7514, %v7510
    %v7943 = vpack.c.b16 %v7515, %v7511
    %v7944 = vpack.c.b16 %v7516, %v7512
    %v7945 = vpack.c.b16 %v7517, %v7513
    %v7946 = vpack.c.b16 %v7522, %v7518
    %v7947 = vpack.c.b16 %v7523, %v7519
    %v7948 = vpack.c.b16 %v7524, %v7520
    %v7949 = vpack.c.b16 %v7525, %v7521
    %v7950 = vpack.c.b16 %v7530, %v7526
    %v7951 = vpack.c.b16 %v7531, %v7527
    %v7952 = vpack.c.b16 %v7532, %v7528
    %v7953 = vpack.c.b16 %v7533, %v7529
    %v7954 = vpack.c.b16 %v7538, %v7534
    %v7955 = vpack.c.b16 %v7539, %v7535
    %v7956 = vpack.c.b16 %v7540, %v7536
    %v7957 = vpack.c.b16 %v7541, %v7537
    %v7958 = vpack.c.b16 %v7546, %v7542
    %v7959 = vpack.c.b16 %v7547, %v7543
    %v7960 = vpack.c.b16 %v7548, %v7544
    %v7961 = vpack.c.b16 %v7549, %v7545
    %v7962 = vpack.c.b16 %v7554, %v7550
    %v7963 = vpack.c.b16 %v7555, %v7551
    %v7964 = vpack.c.b16 %v7556, %v7552
    %v7965 = vpack.c.b16 %v7557, %v7553
    %v7966 = vpack.c.b16 %v7562, %v7558
    %v7967 = vpack.c.b16 %v7563, %v7559
    %v7968 = vpack.c.b16 %v7564, %v7560
    %v7969 = vpack.c.b16 %v7565, %v7561
    %v7970 = vpack.c.b16 %v7570, %v7566
    %v7971 = vpack.c.b16 %v7571, %v7567
    %v7972 = vpack.c.b16 %v7572, %v7568
    %v7973 = vpack.c.b16 %v7573, %v7569
    %v7974 = vpack.c.b16 %v7578, %v7574
    %v7975 = vpack.c.b16 %v7579, %v7575
    %v7976 = vpack.c.b16 %v7580, %v7576
    %v7977 = vpack.c.b16 %v7581, %v7577
    %v7978 = vpack.c.b16 %v7586, %v7582
    %v7979 = vpack.c.b16 %v7587, %v7583
    %v7980 = vpack.c.b16 %v7588, %v7584
    %v7981 = vpack.c.b16 %v7589, %v7585
    %v7982 = vpack.c.b16 %v7594, %v7590
    %v7983 = vpack.c.b16 %v7595, %v7591
    %v7984 = vpack.c.b16 %v7596, %v7592
    %v7985 = vpack.c.b16 %v7597, %v7593
    %v7986 = vpack.c.b16 %v7602, %v7598
    %v7987 = vpack.c.b16 %v7603, %v7599
    %v7988 = vpack.c.b16 %v7604, %v7600
    %v7989 = vpack.c.b16 %v7605, %v7601
    %v7990 = vpack.c.b16 %v7610, %v7606
    %v7991 = vpack.c.b16 %v7611, %v7607
    %v7992 = vpack.c.b16 %v7612, %v7608
    %v7993 = vpack.c.b16 %v7613, %v7609
    %v7994 = vpack.c.b16 %v7618, %v7614
    %v7995 = vpack.c.b16 %v7619, %v7615
    %v7996 = vpack.c.b16 %v7620, %v7616
    %v7997 = vpack.c.b16 %v7621, %v7617
    %v7998 = vpack.c.b16 %v7626, %v7622
    %v7999 = vpack.c.b16 %v7627, %v7623
    %v8000 = vpack.c.b16 %v7628, %v7624
    %v8001 = vpack.c.b16 %v7629, %v7625
    %v8002 = vpack.c.b16 %v7634, %v7630
    %v8003 = vpack.c.b16 %v7635, %v7631
    %v8004 = vpack.c.b16 %v7636, %v7632
    %v8005 = vpack.c.b16 %v7637, %v7633
    %v8006 = vpack.c.b16 %v7642, %v7638
    %v8007 = vpack.c.b16 %v7643, %v7639
    %v8008 = vpack.c.b16 %v7644, %v7640
    %v8009 = vpack.c.b16 %v7645, %v7641
    %v8010 = vpack.c.b16 %v7650, %v7646
    %v8011 = vpack.c.b16 %v7651, %v7647
    %v8012 = vpack.c.b16 %v7652, %v7648
    %v8013 = vpack.c.b16 %v7653, %v7649
    %v8014 = vpack.c.b16 %v7658, %v7654
    %v8015 = vpack.c.b16 %v7659, %v7655
    %v8016 = vpack.c.b16 %v7660, %v7656
    %v8017 = vpack.c.b16 %v7661, %v7657
    %v8018 = vpack.c.b16 %v7666, %v7662
    %v8019 = vpack.c.b16 %v7667, %v7663
    %v8020 = vpack.c.b16 %v7668, %v7664
    %v8021 = vpack.c.b16 %v7669, %v7665
    %v8022 = vpack.c.b16 %v7674, %v7670
    %v8023 = vpack.c.b16 %v7675, %v7671
    %v8024 = vpack.c.b16 %v7676, %v7672
    %v8025 = vpack.c.b16 %v7677, %v7673
    %v8026 = vpack.c.b16 %v7682, %v7678
    %v8027 = vpack.c.b16 %v7683, %v7679
    %v8028 = vpack.c.b16 %v7684, %v7680
    %v8029 = vpack.c.b16 %v7685, %v7681
    %v8030 = vpack.c.b16 %v7690, %v7686
    %v8031 = vpack.c.b16 %v7691, %v7687
    %v8032 = vpack.c.b16 %v7692, %v7688
    %v8033 = vpack.c.b16 %v7693, %v7689
    %v8034 = vpack.c.b16 %v7698, %v7694
    %v8035 = vpack.c.b16 %v7699, %v7695
    %v8036 = vpack.c.b16 %v7700, %v7696
    %v8037 = vpack.c.b16 %v7701, %v7697
    %v8038 = vpack.c.b16 %v7706, %v7702
    %v8039 = vpack.c.b16 %v7707, %v7703
    %v8040 = vpack.c.b16 %v7708, %v7704
    %v8041 = vpack.c.b16 %v7709, %v7705
    %v8042 = vpack.c.b16 %v7714, %v7710
    %v8043 = vpack.c.b16 %v7715, %v7711
    %v8044 = vpack.c.b16 %v7716, %v7712
    %v8045 = vpack.c.b16 %v7717, %v7713
    %v8046 = vpack.c.b16 %v7722, %v7718
    %v8047 = vpack.c.b16 %v7723, %v7719
    %v8048 = vpack.c.b16 %v7724, %v7720
    %v8049 = vpack.c.b16 %v7725, %v7721
    %v8050 = vpack.c.b16 %v7730, %v7726
    %v8051 = vpack.c.b16 %v7731, %v7727
    %v8052 = vpack.c.b16 %v7732, %v7728
    %v8053 = vpack.c.b16 %v7733, %v7729
    %v8054 = vpack.c.b16 %v7738, %v7734
    %v8055 = vpack.c.b16 %v7739, %v7735
    %v8056 = vpack.c.b16 %v7740, %v7736
    %v8057 = vpack.c.b16 %v7741, %v7737
    %v8058 = vpack.c.b16 %v7746, %v7742
    %v8059 = vpack.c.b16 %v7747, %v7743
    %v8060 = vpack.c.b16 %v7748, %v7744
    %v8061 = vpack.c.b16 %v7749, %v7745
    %v8062 = vpack.c.b16 %v7754, %v7750
    %v8063 = vpack.c.b16 %v7755, %v7751
    %v8064 = vpack.c.b16 %v7756, %v7752
    %v8065 = vpack.c.b16 %v7757, %v7753
    %v8066 = vpack.c.b16 %v7762, %v7758
    %v8067 = vpack.c.b16 %v7763, %v7759
    %v8068 = vpack.c.b16 %v7764, %v7760
    %v8069 = vpack.c.b16 %v7765, %v7761
    %v8070 = vpack.c.b16 %v7770, %v7766
    %v8071 = vpack.c.b16 %v7771, %v7767
    %v8072 = vpack.c.b16 %v7772, %v7768
    %v8073 = vpack.c.b16 %v7773, %v7769
    %v8074 = vpack.c.b16 %v7778, %v7774
    %v8075 = vpack.c.b16 %v7779, %v7775
    %v8076 = vpack.c.b16 %v7780, %v7776
    %v8077 = vpack.c.b16 %v7781, %v7777
    %v8078 = vpack.c.b16 %v7786, %v7782
    %v8079 = vpack.c.b16 %v7787, %v7783
    %v8080 = vpack.c.b16 %v7788, %v7784
    %v8081 = vpack.c.b16 %v7789, %v7785
    %v8082 = vpack.c.b16 %v7794, %v7790
    %v8083 = vpack.c.b16 %v7795, %v7791
    %v8084 = vpack.c.b16 %v7796, %v7792
    %v8085 = vpack.c.b16 %v7797, %v7793
    %v8086 = vpack.c.b16 %v7802, %v7798
    %v8087 = vpack.c.b16 %v7803, %v7799
    %v8088 = vpack.c.b16 %v7804, %v7800
    %v8089 = vpack.c.b16 %v7805, %v7801
    %v8090 = vpack.c.b16 %v7810, %v7806
    %v8091 = vpack.c.b16 %v7811, %v7807
    %v8092 = vpack.c.b16 %v7812, %v7808
    %v8093 = vpack.c.b16 %v7813, %v7809
    %v8094 = vpack.c.b16 %v7818, %v7814
    %v8095 = vpack.c.b16 %v7819, %v7815
    %v8096 = vpack.c.b16 %v7820, %v7816
    %v8097 = vpack.c.b16 %v7821, %v7817
    %v8098 = vpack.c.b16 %v7826, %v7822
    %v8099 = vpack.c.b16 %v7827, %v7823
    %v8100 = vpack.c.b16 %v7828, %v7824
    %v8101 = vpack.c.b16 %v7829, %v7825
    %v8102 = vpack.c.b16 %v7834, %v7830
    %v8103 = vpack.c.b16 %v7835, %v7831
    %v8104 = vpack.c.b16 %v7836, %v7832
    %v8105 = vpack.c.b16 %v7837, %v7833
    %v8106 = vpack.c.b16 %v7842, %v7838
    %v8107 = vpack.c.b16 %v7843, %v7839
    %v8108 = vpack.c.b16 %v7844, %v7840
    %v8109 = vpack.c.b16 %v7845, %v7841
    %v8110 = vpack.c.b16 %v7850, %v7846
    %v8111 = vpack.c.b16 %v7851, %v7847
    %v8112 = vpack.c.b16 %v7852, %v7848
    %v8113 = vpack.c.b16 %v7853, %v7849
    %v8114 = vpack.c.b16 %v7858, %v7854
    %v8115 = vpack.c.b16 %v7859, %v7855
    %v8116 = vpack.c.b16 %v7860, %v7856
    %v8117 = vpack.c.b16 %v7861, %v7857
    %8374 = vmatprep.subr.bf16.mxu0 %v7863
    %8375 = vmatpush1.bf16.msra.mxu0 %v7862
    %8376 = vmatprep.subr.bf16.mxu0 %v7867
    %8377 = vmatpush1.bf16.msra.mxu0 %v7866
    %8378 = vmatprep.subr.bf16.mxu0 %v7871
    %8379 = vmatpush1.bf16.msra.mxu0 %v7870
    %8380 = vmatprep.subr.bf16.mxu0 %v7875
    %8381 = vmatpush1.bf16.msra.mxu0 %v7874
    %8382 = vmatprep.subr.bf16.mxu0 %v7879
    %8383 = vmatpush1.bf16.msra.mxu0 %v7878
    %8384 = vmatprep.subr.bf16.mxu0 %v7883
    %8385 = vmatpush1.bf16.msra.mxu0 %v7882
    %8386 = vmatprep.subr.bf16.mxu0 %v7887
    %8387 = vmatpush1.bf16.msra.mxu0 %v7886
    %8388 = vmatprep.subr.bf16.mxu0 %v7891
    %8389 = vmatpush1.bf16.msra.mxu0 %v7890
    %8390 = vmatprep.subr.bf16.mxu0 %v7895
    %8391 = vmatpush1.bf16.msra.mxu0 %v7894
    %8392 = vmatprep.subr.bf16.mxu0 %v7899
    %8393 = vmatpush1.bf16.msra.mxu0 %v7898
    %8394 = vmatprep.subr.bf16.mxu0 %v7903
    %8395 = vmatpush1.bf16.msra.mxu0 %v7902
    %8396 = vmatprep.subr.bf16.mxu0 %v7907
    %8397 = vmatpush1.bf16.msra.mxu0 %v7906
    %8398 = vmatprep.subr.bf16.mxu0 %v7911
    %8399 = vmatpush1.bf16.msra.mxu0 %v7910
    %8400 = vmatprep.subr.bf16.mxu0 %v7915
    %8401 = vmatpush1.bf16.msra.mxu0 %v7914
    %8402 = vmatprep.subr.bf16.mxu0 %v7919
    %8403 = vmatpush1.bf16.msra.mxu0 %v7918
    %8404 = vmatprep.subr.bf16.mxu0 %v7923
    %8405 = vmatpush1.bf16.msra.mxu0 %v7922
    %8406 = vmatprep.mubr.bf16.mxu0 %v683
    %8407 = vmatmul.mubr.bf16.gmra.mrb[0].mxu0 %v682
    %v8408 = vpop.f32.mrb[0].mxu0
    %v8409 = vadd.f32 %v7077, %v8408
    %v8410 = vpop.f32.mrb[0].mxu0
    %v8411 = vadd.f32 %v7081, %v8410
    %v8412 = vpop.f32.mrb[0].mxu0
    %v8413 = vadd.f32 %v7077, %v8412
    %v8414 = vpop.f32.mrb[0].mxu0
    %v8415 = vadd.f32 %v7081, %v8414
    %8416 = vdwg.mxu0
    %8417 = vmatprep.subr.bf16.mxu0 %v7927
    %8418 = vmatpush1.bf16.msra.mxu0 %v7926
    %8419 = vmatprep.subr.bf16.mxu0 %v7931
    %8420 = vmatpush1.bf16.msra.mxu0 %v7930
    %8421 = vmatprep.subr.bf16.mxu0 %v7935
    %8422 = vmatpush1.bf16.msra.mxu0 %v7934
    %8423 = vmatprep.subr.bf16.mxu0 %v7939
    %8424 = vmatpush1.bf16.msra.mxu0 %v7938
    %8425 = vmatprep.subr.bf16.mxu0 %v7943
    %8426 = vmatpush1.bf16.msra.mxu0 %v7942
    %8427 = vmatprep.subr.bf16.mxu0 %v7947
    %8428 = vmatpush1.bf16.msra.mxu0 %v7946
    %8429 = vmatprep.subr.bf16.mxu0 %v7951
    %8430 = vmatpush1.bf16.msra.mxu0 %v7950
    %8431 = vmatprep.subr.bf16.mxu0 %v7955
    %8432 = vmatpush1.bf16.msra.mxu0 %v7954
    %8433 = vmatprep.subr.bf16.mxu0 %v7959
    %8434 = vmatpush1.bf16.msra.mxu0 %v7958
    %8435 = vmatprep.subr.bf16.mxu0 %v7963
    %8436 = vmatpush1.bf16.msra.mxu0 %v7962
    %8437 = vmatprep.subr.bf16.mxu0 %v7967
    %8438 = vmatpush1.bf16.msra.mxu0 %v7966
    %8439 = vmatprep.subr.bf16.mxu0 %v7971
    %8440 = vmatpush1.bf16.msra.mxu0 %v7970
    %8441 = vmatprep.subr.bf16.mxu0 %v7975
    %8442 = vmatpush1.bf16.msra.mxu0 %v7974
    %8443 = vmatprep.subr.bf16.mxu0 %v7979
    %8444 = vmatpush1.bf16.msra.mxu0 %v7978
    %8445 = vmatprep.subr.bf16.mxu0 %v7983
    %8446 = vmatpush1.bf16.msra.mxu0 %v7982
    %8447 = vmatprep.subr.bf16.mxu0 %v7987
    %8448 = vmatpush1.bf16.msra.mxu0 %v7986
    %8449 = vmatprep.mubr.bf16.mxu0 %v685
    %8450 = vmatmul.mubr.bf16.gmra.mrb[0].mxu0 %v684
    %v8451 = vpop.f32.mrb[0].mxu0
    %v8452 = vadd.f32 %v8409, %v8451
    %v8453 = vpop.f32.mrb[0].mxu0
    %v8454 = vadd.f32 %v8411, %v8453
    %v8455 = vpop.f32.mrb[0].mxu0
    %v8456 = vadd.f32 %v8413, %v8455
    %v8457 = vpop.f32.mrb[0].mxu0
    %v8458 = vadd.f32 %v8415, %v8457
    %8459 = vdwg.mxu0
    %8460 = vmatprep.subr.bf16.mxu0 %v7991
    %8461 = vmatpush1.bf16.msra.mxu0 %v7990
    %8462 = vmatprep.subr.bf16.mxu0 %v7995
    %8463 = vmatpush1.bf16.msra.mxu0 %v7994
    %8464 = vmatprep.subr.bf16.mxu0 %v7999
    %8465 = vmatpush1.bf16.msra.mxu0 %v7998
    %8466 = vmatprep.subr.bf16.mxu0 %v8003
    %8467 = vmatpush1.bf16.msra.mxu0 %v8002
    %8468 = vmatprep.subr.bf16.mxu0 %v8007
    %8469 = vmatpush1.bf16.msra.mxu0 %v8006
    %8470 = vmatprep.subr.bf16.mxu0 %v8011
    %8471 = vmatpush1.bf16.msra.mxu0 %v8010
    %8472 = vmatprep.subr.bf16.mxu0 %v8015
    %8473 = vmatpush1.bf16.msra.mxu0 %v8014
    %8474 = vmatprep.subr.bf16.mxu0 %v8019
    %8475 = vmatpush1.bf16.msra.mxu0 %v8018
    %8476 = vmatprep.subr.bf16.mxu0 %v8023
    %8477 = vmatpush1.bf16.msra.mxu0 %v8022
    %8478 = vmatprep.subr.bf16.mxu0 %v8027
    %8479 = vmatpush1.bf16.msra.mxu0 %v8026
    %8480 = vmatprep.subr.bf16.mxu0 %v8031
    %8481 = vmatpush1.bf16.msra.mxu0 %v8030
    %8482 = vmatprep.subr.bf16.mxu0 %v8035
    %8483 = vmatpush1.bf16.msra.mxu0 %v8034
    %8484 = vmatprep.subr.bf16.mxu0 %v8039
    %8485 = vmatpush1.bf16.msra.mxu0 %v8038
    %8486 = vmatprep.subr.bf16.mxu0 %v8043
    %8487 = vmatpush1.bf16.msra.mxu0 %v8042
    %8488 = vmatprep.subr.bf16.mxu0 %v8047
    %8489 = vmatpush1.bf16.msra.mxu0 %v8046
    %8490 = vmatprep.subr.bf16.mxu0 %v8051
    %8491 = vmatpush1.bf16.msra.mxu0 %v8050
    %8492 = vmatprep.mubr.bf16.mxu0 %v687
    %8493 = vmatmul.mubr.bf16.gmra.mrb[0].mxu0 %v686
    %v8494 = vpop.f32.mrb[0].mxu0
    %v8495 = vadd.f32 %v8452, %v8494
    %v8496 = vpop.f32.mrb[0].mxu0
    %v8497 = vadd.f32 %v8454, %v8496
    %v8498 = vpop.f32.mrb[0].mxu0
    %v8499 = vadd.f32 %v8456, %v8498
    %v8500 = vpop.f32.mrb[0].mxu0
    %v8501 = vadd.f32 %v8458, %v8500
    %8502 = vdwg.mxu0
    %8503 = vmatprep.subr.bf16.mxu0 %v8055
    %8504 = vmatpush1.bf16.msra.mxu0 %v8054
    %8505 = vmatprep.subr.bf16.mxu0 %v8059
    %8506 = vmatpush1.bf16.msra.mxu0 %v8058
    %8507 = vmatprep.subr.bf16.mxu0 %v8063
    %8508 = vmatpush1.bf16.msra.mxu0 %v8062
    %8509 = vmatprep.subr.bf16.mxu0 %v8067
    %8510 = vmatpush1.bf16.msra.mxu0 %v8066
    %8511 = vmatprep.subr.bf16.mxu0 %v8071
    %8512 = vmatpush1.bf16.msra.mxu0 %v8070
    %8513 = vmatprep.subr.bf16.mxu0 %v8075
    %8514 = vmatpush1.bf16.msra.mxu0 %v8074
    %8515 = vmatprep.subr.bf16.mxu0 %v8079
    %8516 = vmatpush1.bf16.msra.mxu0 %v8078
    %8517 = vmatprep.subr.bf16.mxu0 %v8083
    %8518 = vmatpush1.bf16.msra.mxu0 %v8082
    %8519 = vmatprep.subr.bf16.mxu0 %v8087
    %8520 = vmatpush1.bf16.msra.mxu0 %v8086
    %8521 = vmatprep.subr.bf16.mxu0 %v8091
    %8522 = vmatpush1.bf16.msra.mxu0 %v8090
    %8523 = vmatprep.subr.bf16.mxu0 %v8095
    %8524 = vmatpush1.bf16.msra.mxu0 %v8094
    %8525 = vmatprep.subr.bf16.mxu0 %v8099
    %8526 = vmatpush1.bf16.msra.mxu0 %v8098
    %8527 = vmatprep.subr.bf16.mxu0 %v8103
    %8528 = vmatpush1.bf16.msra.mxu0 %v8102
    %8529 = vmatprep.subr.bf16.mxu0 %v8107
    %8530 = vmatpush1.bf16.msra.mxu0 %v8106
    %8531 = vmatprep.subr.bf16.mxu0 %v8111
    %8532 = vmatpush1.bf16.msra.mxu0 %v8110
    %8533 = vmatprep.subr.bf16.mxu0 %v8115
    %8534 = vmatpush1.bf16.msra.mxu0 %v8114
    %8535 = vmatprep.mubr.bf16.mxu0 %v689
    %8536 = vmatmul.mubr.bf16.gmra.mrb[0].mxu0 %v688
    %v8537 = vpop.f32.mrb[0].mxu0
    %v8538 = vadd.f32 %v8495, %v8537
    %v8539 = vpop.f32.mrb[0].mxu0
    %v8540 = vadd.f32 %v8497, %v8539
    %v8541 = vpop.f32.mrb[0].mxu0
    %v8542 = vadd.f32 %v8499, %v8541
    %v8543 = vpop.f32.mrb[0].mxu0
    %v8544 = vadd.f32 %v8501, %v8543
    %8545 = vdwg.mxu0
    %8546 = vmatprep.subr.bf16.mxu0 %v7865
    %8547 = vmatpush1.bf16.msra.mxu0 %v7864
    %8548 = vmatprep.subr.bf16.mxu0 %v7869
    %8549 = vmatpush1.bf16.msra.mxu0 %v7868
    %8550 = vmatprep.subr.bf16.mxu0 %v7873
    %8551 = vmatpush1.bf16.msra.mxu0 %v7872
    %8552 = vmatprep.subr.bf16.mxu0 %v7877
    %8553 = vmatpush1.bf16.msra.mxu0 %v7876
    %8554 = vmatprep.subr.bf16.mxu0 %v7881
    %8555 = vmatpush1.bf16.msra.mxu0 %v7880
    %8556 = vmatprep.subr.bf16.mxu0 %v7885
    %8557 = vmatpush1.bf16.msra.mxu0 %v7884
    %8558 = vmatprep.subr.bf16.mxu0 %v7889
    %8559 = vmatpush1.bf16.msra.mxu0 %v7888
    %8560 = vmatprep.subr.bf16.mxu0 %v7893
    %8561 = vmatpush1.bf16.msra.mxu0 %v7892
    %8562 = vmatprep.subr.bf16.mxu0 %v7897
    %8563 = vmatpush1.bf16.msra.mxu0 %v7896
    %8564 = vmatprep.subr.bf16.mxu0 %v7901
    %8565 = vmatpush1.bf16.msra.mxu0 %v7900
    %8566 = vmatprep.subr.bf16.mxu0 %v7905
    %8567 = vmatpush1.bf16.msra.mxu0 %v7904
    %8568 = vmatprep.subr.bf16.mxu0 %v7909
    %8569 = vmatpush1.bf16.msra.mxu0 %v7908
    %8570 = vmatprep.subr.bf16.mxu0 %v7913
    %8571 = vmatpush1.bf16.msra.mxu0 %v7912
    %8572 = vmatprep.subr.bf16.mxu0 %v7917
    %8573 = vmatpush1.bf16.msra.mxu0 %v7916
    %8574 = vmatprep.subr.bf16.mxu0 %v7921
    %8575 = vmatpush1.bf16.msra.mxu0 %v7920
    %8576 = vmatprep.subr.bf16.mxu0 %v7925
    %8577 = vmatpush1.bf16.msra.mxu0 %v7924
    %8578 = vmatprep.mubr.bf16.mxu0 %v683
    %8579 = vmatmul.mubr.bf16.gmra.mrb[0].mxu0 %v682
    %v8580 = vpop.f32.mrb[0].mxu0
    %v8581 = vadd.f32 %v7085, %v8580
    %v8582 = vpop.f32.mrb[0].mxu0
    %v8583 = vadd.f32 %v7089, %v8582
    %v8584 = vpop.f32.mrb[0].mxu0
    %v8585 = vadd.f32 %v7085, %v8584
    %v8586 = vpop.f32.mrb[0].mxu0
    %v8587 = vadd.f32 %v7089, %v8586
    %8588 = vdwg.mxu0
    %8589 = vmatprep.subr.bf16.mxu0 %v7929
    %8590 = vmatpush1.bf16.msra.mxu0 %v7928
    %8591 = vmatprep.subr.bf16.mxu0 %v7933
    %8592 = vmatpush1.bf16.msra.mxu0 %v7932
    %8593 = vmatprep.subr.bf16.mxu0 %v7937
    %8594 = vmatpush1.bf16.msra.mxu0 %v7936
    %8595 = vmatprep.subr.bf16.mxu0 %v7941
    %8596 = vmatpush1.bf16.msra.mxu0 %v7940
    %8597 = vmatprep.subr.bf16.mxu0 %v7945
    %8598 = vmatpush1.bf16.msra.mxu0 %v7944
    %8599 = vmatprep.subr.bf16.mxu0 %v7949
    %8600 = vmatpush1.bf16.msra.mxu0 %v7948
    %8601 = vmatprep.subr.bf16.mxu0 %v7953
    %8602 = vmatpush1.bf16.msra.mxu0 %v7952
    %8603 = vmatprep.subr.bf16.mxu0 %v7957
    %8604 = vmatpush1.bf16.msra.mxu0 %v7956
    %8605 = vmatprep.subr.bf16.mxu0 %v7961
    %8606 = vmatpush1.bf16.msra.mxu0 %v7960
    %8607 = vmatprep.subr.bf16.mxu0 %v7965
    %8608 = vmatpush1.bf16.msra.mxu0 %v7964
    %8609 = vmatprep.subr.bf16.mxu0 %v7969
    %8610 = vmatpush1.bf16.msra.mxu0 %v7968
    %8611 = vmatprep.subr.bf16.mxu0 %v7973
    %8612 = vmatpush1.bf16.msra.mxu0 %v7972
    %8613 = vmatprep.subr.bf16.mxu0 %v7977
    %8614 = vmatpush1.bf16.msra.mxu0 %v7976
    %8615 = vmatprep.subr.bf16.mxu0 %v7981
    %8616 = vmatpush1.bf16.msra.mxu0 %v7980
    %8617 = vmatprep.subr.bf16.mxu0 %v7985
    %8618 = vmatpush1.bf16.msra.mxu0 %v7984
    %8619 = vmatprep.subr.bf16.mxu0 %v7989
    %8620 = vmatpush1.bf16.msra.mxu0 %v7988
    %8621 = vmatprep.mubr.bf16.mxu0 %v685
    %8622 = vmatmul.mubr.bf16.gmra.mrb[0].mxu0 %v684
    %v8623 = vpop.f32.mrb[0].mxu0
    %v8624 = vadd.f32 %v8581, %v8623
    %v8625 = vpop.f32.mrb[0].mxu0
    %v8626 = vadd.f32 %v8583, %v8625
    %v8627 = vpop.f32.mrb[0].mxu0
    %v8628 = vadd.f32 %v8585, %v8627
    %v8629 = vpop.f32.mrb[0].mxu0
    %v8630 = vadd.f32 %v8587, %v8629
    %8631 = vdwg.mxu0
    %8632 = vmatprep.subr.bf16.mxu0 %v7993
    %8633 = vmatpush1.bf16.msra.mxu0 %v7992
    %8634 = vmatprep.subr.bf16.mxu0 %v7997
    %8635 = vmatpush1.bf16.msra.mxu0 %v7996
    %8636 = vmatprep.subr.bf16.mxu0 %v8001
    %8637 = vmatpush1.bf16.msra.mxu0 %v8000
    %8638 = vmatprep.subr.bf16.mxu0 %v8005
    %8639 = vmatpush1.bf16.msra.mxu0 %v8004
    %8640 = vmatprep.subr.bf16.mxu0 %v8009
    %8641 = vmatpush1.bf16.msra.mxu0 %v8008
    %8642 = vmatprep.subr.bf16.mxu0 %v8013
    %8643 = vmatpush1.bf16.msra.mxu0 %v8012
    %8644 = vmatprep.subr.bf16.mxu0 %v8017
    %8645 = vmatpush1.bf16.msra.mxu0 %v8016
    %8646 = vmatprep.subr.bf16.mxu0 %v8021
    %8647 = vmatpush1.bf16.msra.mxu0 %v8020
    %8648 = vmatprep.subr.bf16.mxu0 %v8025
    %8649 = vmatpush1.bf16.msra.mxu0 %v8024
    %8650 = vmatprep.subr.bf16.mxu0 %v8029
    %8651 = vmatpush1.bf16.msra.mxu0 %v8028
    %8652 = vmatprep.subr.bf16.mxu0 %v8033
    %8653 = vmatpush1.bf16.msra.mxu0 %v8032
    %8654 = vmatprep.subr.bf16.mxu0 %v8037
    %8655 = vmatpush1.bf16.msra.mxu0 %v8036
    %8656 = vmatprep.subr.bf16.mxu0 %v8041
    %8657 = vmatpush1.bf16.msra.mxu0 %v8040
    %8658 = vmatprep.subr.bf16.mxu0 %v8045
    %8659 = vmatpush1.bf16.msra.mxu0 %v8044
    %8660 = vmatprep.subr.bf16.mxu0 %v8049
    %8661 = vmatpush1.bf16.msra.mxu0 %v8048
    %8662 = vmatprep.subr.bf16.mxu0 %v8053
    %8663 = vmatpush1.bf16.msra.mxu0 %v8052
    %8664 = vmatprep.mubr.bf16.mxu0 %v687
    %8665 = vmatmul.mubr.bf16.gmra.mrb[0].mxu0 %v686
    %v8666 = vpop.f32.mrb[0].mxu0
    %v8667 = vadd.f32 %v8624, %v8666
    %v8668 = vpop.f32.mrb[0].mxu0
    %v8669 = vadd.f32 %v8626, %v8668
    %v8670 = vpop.f32.mrb[0].mxu0
    %v8671 = vadd.f32 %v8628, %v8670
    %v8672 = vpop.f32.mrb[0].mxu0
    %v8673 = vadd.f32 %v8630, %v8672
    %8674 = vdwg.mxu0
    %8675 = vmatprep.subr.bf16.mxu0 %v8057
    %8676 = vmatpush1.bf16.msra.mxu0 %v8056
    %8677 = vmatprep.subr.bf16.mxu0 %v8061
    %8678 = vmatpush1.bf16.msra.mxu0 %v8060
    %8679 = vmatprep.subr.bf16.mxu0 %v8065
    %8680 = vmatpush1.bf16.msra.mxu0 %v8064
    %8681 = vmatprep.subr.bf16.mxu0 %v8069
    %8682 = vmatpush1.bf16.msra.mxu0 %v8068
    %8683 = vmatprep.subr.bf16.mxu0 %v8073
    %8684 = vmatpush1.bf16.msra.mxu0 %v8072
    %8685 = vmatprep.subr.bf16.mxu0 %v8077
    %8686 = vmatpush1.bf16.msra.mxu0 %v8076
    %8687 = vmatprep.subr.bf16.mxu0 %v8081
    %8688 = vmatpush1.bf16.msra.mxu0 %v8080
    %8689 = vmatprep.subr.bf16.mxu0 %v8085
    %8690 = vmatpush1.bf16.msra.mxu0 %v8084
    %8691 = vmatprep.subr.bf16.mxu0 %v8089
    %8692 = vmatpush1.bf16.msra.mxu0 %v8088
    %8693 = vmatprep.subr.bf16.mxu0 %v8093
    %8694 = vmatpush1.bf16.msra.mxu0 %v8092
    %8695 = vmatprep.subr.bf16.mxu0 %v8097
    %8696 = vmatpush1.bf16.msra.mxu0 %v8096
    %8697 = vmatprep.subr.bf16.mxu0 %v8101
    %8698 = vmatpush1.bf16.msra.mxu0 %v8100
    %8699 = vmatprep.subr.bf16.mxu0 %v8105
    %8700 = vmatpush1.bf16.msra.mxu0 %v8104
    %8701 = vmatprep.subr.bf16.mxu0 %v8109
    %8702 = vmatpush1.bf16.msra.mxu0 %v8108
    %8703 = vmatprep.subr.bf16.mxu0 %v8113
    %8704 = vmatpush1.bf16.msra.mxu0 %v8112
    %8705 = vmatprep.subr.bf16.mxu0 %v8117
    %8706 = vmatpush1.bf16.msra.mxu0 %v8116
    %8707 = vmatprep.mubr.bf16.mxu0 %v689
    %8708 = vmatmul.mubr.bf16.gmra.mrb[0].mxu0 %v688
    %v8709 = vpop.f32.mrb[0].mxu0
    %v8710 = vadd.f32 %v8667, %v8709
    %v8711 = vpop.f32.mrb[0].mxu0
    %v8712 = vadd.f32 %v8669, %v8711
    %v8713 = vpop.f32.mrb[0].mxu0
    %v8714 = vadd.f32 %v8671, %v8713
    %v8715 = vpop.f32.mrb[0].mxu0
    %v8716 = vadd.f32 %v8673, %v8715
    %8717 = vdwg.mxu0
    %v8718 = vadd.f32 %v6811, %v377
    %v8719 = vadd.f32 %v6812, %v378
    %v8720 = vadd.f32 %v6813, %v377
    %v8721 = vadd.f32 %v6814, %v378
    %v8722 = vld [vmem:[#allocation26] sm:$0xff]
    %v8723 = vld [vmem:[#allocation26 + $0x8] sm:$0xff]
    %v8724 = vld [vmem:[#allocation26 + $0x10] sm:$0xff]
    %v8725 = vld [vmem:[#allocation26 + $0x18] sm:$0xff]
    %v8726 = vld [vmem:[#allocation26 + $0x20] sm:$0xff]
    %v8727 = vld [vmem:[#allocation26 + $0x28] sm:$0xff]
    %v8728 = vld [vmem:[#allocation26 + $0x30] sm:$0xff]
    %v8729 = vld [vmem:[#allocation26 + $0x38] sm:$0xff]
    %v8730 = vld [vmem:[#allocation26 + $0x40] sm:$0xff]
    %v8731 = vld [vmem:[#allocation26 + $0x48] sm:$0xff]
    %v8732 = vld [vmem:[#allocation26 + $0x50] sm:$0xff]
    %v8733 = vld [vmem:[#allocation26 + $0x58] sm:$0xff]
    %v8734 = vld [vmem:[#allocation26 + $0x60] sm:$0xff]
    %v8735 = vld [vmem:[#allocation26 + $0x68] sm:$0xff]
    %v8736 = vld [vmem:[#allocation26 + $0x70] sm:$0xff]
    %v8737 = vld [vmem:[#allocation26 + $0x78] sm:$0xff]
    %v8738 = vld [vmem:[#allocation26 + $0x80] sm:$0xff]
    %v8739 = vld [vmem:[#allocation26 + $0x88] sm:$0xff]
    %v8740 = vld [vmem:[#allocation26 + $0x90] sm:$0xff]
    %v8741 = vld [vmem:[#allocation26 + $0x98] sm:$0xff]
    %v8742 = vld [vmem:[#allocation26 + $0xa0] sm:$0xff]
    %v8743 = vld [vmem:[#allocation26 + $0xa8] sm:$0xff]
    %v8744 = vld [vmem:[#allocation26 + $0xb0] sm:$0xff]
    %v8745 = vld [vmem:[#allocation26 + $0xb8] sm:$0xff]
    %v8746 = vld [vmem:[#allocation26 + $0xc0] sm:$0xff]
    %v8747 = vld [vmem:[#allocation26 + $0xc8] sm:$0xff]
    %v8748 = vld [vmem:[#allocation26 + $0xd0] sm:$0xff]
    %v8749 = vld [vmem:[#allocation26 + $0xd8] sm:$0xff]
    %v8750 = vld [vmem:[#allocation26 + $0xe0] sm:$0xff]
    %v8751 = vld [vmem:[#allocation26 + $0xe8] sm:$0xff]
    %v8752 = vld [vmem:[#allocation26 + $0xf0] sm:$0xff]
    %v8753 = vld [vmem:[#allocation26 + $0xf8] sm:$0xff]
    %v8754 = vpack.c.bf16 %v8720, %v8718
    %v8755 = vpack.c.bf16 %v8721, %v8719
    %v8756 = vld [vmem:[%s53] sm:$0x3]
    %v8758 = vlaneseq
    %v8759 = vshrl.u32 %v8758, 7
    %v8760 = vsub.s32 0, %v8759
    %v8761 = vrot.slane %v8756, %v8760
    %v8762 = vlaneseq
    %v8763 = vshrl.u32 %v8762, 7
    %v8764 = vsub.s32 1, %v8763
    %v8765 = vrot.slane %v8756, %v8764
    %v8800 = vunpack.c.l.b16 %v8722
    %v8801 = vunpack.c.h.b16 %v8722
    %v8802 = vunpack.c.l.b16 %v8723
    %v8803 = vunpack.c.h.b16 %v8723
    %v8804 = vunpack.c.l.b16 %v8724
    %v8805 = vunpack.c.h.b16 %v8724
    %v8806 = vunpack.c.l.b16 %v8725
    %v8807 = vunpack.c.h.b16 %v8725
    %v8808 = vunpack.c.l.b16 %v8726
    %v8809 = vunpack.c.h.b16 %v8726
    %v8810 = vunpack.c.l.b16 %v8727
    %v8811 = vunpack.c.h.b16 %v8727
    %v8812 = vunpack.c.l.b16 %v8728
    %v8813 = vunpack.c.h.b16 %v8728
    %v8814 = vunpack.c.l.b16 %v8729
    %v8815 = vunpack.c.h.b16 %v8729
    %v8816 = vunpack.c.l.b16 %v8730
    %v8817 = vunpack.c.h.b16 %v8730
    %v8818 = vunpack.c.l.b16 %v8731
    %v8819 = vunpack.c.h.b16 %v8731
    %v8820 = vunpack.c.l.b16 %v8732
    %v8821 = vunpack.c.h.b16 %v8732
    %v8822 = vunpack.c.l.b16 %v8733
    %v8823 = vunpack.c.h.b16 %v8733
    %v8824 = vunpack.c.l.b16 %v8734
    %v8825 = vunpack.c.h.b16 %v8734
    %v8826 = vunpack.c.l.b16 %v8735
    %v8827 = vunpack.c.h.b16 %v8735
    %v8828 = vunpack.c.l.b16 %v8736
    %v8829 = vunpack.c.h.b16 %v8736
    %v8830 = vunpack.c.l.b16 %v8737
    %v8831 = vunpack.c.h.b16 %v8737
    %v8832 = vunpack.c.l.b16 %v8738
    %v8833 = vunpack.c.h.b16 %v8738
    %v8834 = vunpack.c.l.b16 %v8739
    %v8835 = vunpack.c.h.b16 %v8739
    %v8836 = vunpack.c.l.b16 %v8740
    %v8837 = vunpack.c.h.b16 %v8740
    %v8838 = vunpack.c.l.b16 %v8741
    %v8839 = vunpack.c.h.b16 %v8741
    %v8840 = vunpack.c.l.b16 %v8742
    %v8841 = vunpack.c.h.b16 %v8742
    %v8842 = vunpack.c.l.b16 %v8743
    %v8843 = vunpack.c.h.b16 %v8743
    %v8844 = vunpack.c.l.b16 %v8744
    %v8845 = vunpack.c.h.b16 %v8744
    %v8846 = vunpack.c.l.b16 %v8745
    %v8847 = vunpack.c.h.b16 %v8745
    %v8848 = vunpack.c.l.b16 %v8746
    %v8849 = vunpack.c.h.b16 %v8746
    %v8850 = vunpack.c.l.b16 %v8747
    %v8851 = vunpack.c.h.b16 %v8747
    %v8852 = vunpack.c.l.b16 %v8748
    %v8853 = vunpack.c.h.b16 %v8748
    %v8854 = vunpack.c.l.b16 %v8749
    %v8855 = vunpack.c.h.b16 %v8749
    %v8856 = vunpack.c.l.b16 %v8750
    %v8857 = vunpack.c.h.b16 %v8750
    %v8858 = vunpack.c.l.b16 %v8751
    %v8859 = vunpack.c.h.b16 %v8751
    %v8860 = vunpack.c.l.b16 %v8752
    %v8861 = vunpack.c.h.b16 %v8752
    %v8862 = vunpack.c.l.b16 %v8753
    %v8863 = vunpack.c.h.b16 %v8753
    %v8864 = vpack.c.b16 %v8802, %v8800
    %v8865 = vpack.c.b16 %v8803, %v8801
    %v8866 = vpack.c.b16 %v8806, %v8804
    %v8867 = vpack.c.b16 %v8807, %v8805
    %v8868 = vpack.c.b16 %v8810, %v8808
    %v8869 = vpack.c.b16 %v8811, %v8809
    %v8870 = vpack.c.b16 %v8814, %v8812
    %v8871 = vpack.c.b16 %v8815, %v8813
    %v8872 = vpack.c.b16 %v8818, %v8816
    %v8873 = vpack.c.b16 %v8819, %v8817
    %v8874 = vpack.c.b16 %v8822, %v8820
    %v8875 = vpack.c.b16 %v8823, %v8821
    %v8876 = vpack.c.b16 %v8826, %v8824
    %v8877 = vpack.c.b16 %v8827, %v8825
    %v8878 = vpack.c.b16 %v8830, %v8828
    %v8879 = vpack.c.b16 %v8831, %v8829
    %v8880 = vpack.c.b16 %v8834, %v8832
    %v8881 = vpack.c.b16 %v8835, %v8833
    %v8882 = vpack.c.b16 %v8838, %v8836
    %v8883 = vpack.c.b16 %v8839, %v8837
    %v8884 = vpack.c.b16 %v8842, %v8840
    %v8885 = vpack.c.b16 %v8843, %v8841
    %v8886 = vpack.c.b16 %v8846, %v8844
    %v8887 = vpack.c.b16 %v8847, %v8845
    %v8888 = vpack.c.b16 %v8850, %v8848
    %v8889 = vpack.c.b16 %v8851, %v8849
    %v8890 = vpack.c.b16 %v8854, %v8852
    %v8891 = vpack.c.b16 %v8855, %v8853
    %v8892 = vpack.c.b16 %v8858, %v8856
    %v8893 = vpack.c.b16 %v8859, %v8857
    %v8894 = vpack.c.b16 %v8862, %v8860
    %v8895 = vpack.c.b16 %v8863, %v8861
    %8928 = vmatprep.subr.bf16.mxu0 %v8865
    %8929 = vmatpush1.bf16.msra.mxu0 %v8864
    %8930 = vmatprep.subr.bf16.mxu0 %v8867
    %8931 = vmatpush1.bf16.msra.mxu0 %v8866
    %8932 = vmatprep.subr.bf16.mxu0 %v8869
    %8933 = vmatpush1.bf16.msra.mxu0 %v8868
    %8934 = vmatprep.subr.bf16.mxu0 %v8871
    %8935 = vmatpush1.bf16.msra.mxu0 %v8870
    %8936 = vmatprep.subr.bf16.mxu0 %v8873
    %8937 = vmatpush1.bf16.msra.mxu0 %v8872
    %8938 = vmatprep.subr.bf16.mxu0 %v8875
    %8939 = vmatpush1.bf16.msra.mxu0 %v8874
    %8940 = vmatprep.subr.bf16.mxu0 %v8877
    %8941 = vmatpush1.bf16.msra.mxu0 %v8876
    %8942 = vmatprep.subr.bf16.mxu0 %v8879
    %8943 = vmatpush1.bf16.msra.mxu0 %v8878
    %8944 = vmatprep.subr.bf16.mxu0 %v8881
    %8945 = vmatpush1.bf16.msra.mxu0 %v8880
    %8946 = vmatprep.subr.bf16.mxu0 %v8883
    %8947 = vmatpush1.bf16.msra.mxu0 %v8882
    %8948 = vmatprep.subr.bf16.mxu0 %v8885
    %8949 = vmatpush1.bf16.msra.mxu0 %v8884
    %8950 = vmatprep.subr.bf16.mxu0 %v8887
    %8951 = vmatpush1.bf16.msra.mxu0 %v8886
    %8952 = vmatprep.subr.bf16.mxu0 %v8889
    %8953 = vmatpush1.bf16.msra.mxu0 %v8888
    %8954 = vmatprep.subr.bf16.mxu0 %v8891
    %8955 = vmatpush1.bf16.msra.mxu0 %v8890
    %8956 = vmatprep.subr.bf16.mxu0 %v8893
    %8957 = vmatpush1.bf16.msra.mxu0 %v8892
    %8958 = vmatprep.subr.bf16.mxu0 %v8895
    %8959 = vmatpush1.bf16.msra.mxu0 %v8894
    %8960 = vmatprep.mubr.bf16.mxu0 %v8755
    %8961 = vmatmul.mubr.bf16.gmra.mrb[0].mxu0 %v8754
    %v8962 = vpop.f32.mrb[0].mxu0
    %v8963 = vadd.f32 %v8761, %v8962
    %v8964 = vpop.f32.mrb[0].mxu0
    %v8965 = vadd.f32 %v8765, %v8964
    %v8966 = vpop.f32.mrb[0].mxu0
    %v8967 = vadd.f32 %v8761, %v8966
    %v8968 = vpop.f32.mrb[0].mxu0
    %v8969 = vadd.f32 %v8765, %v8968
    %8970 = vdwg.mxu0
    %v8971 = vpack.c.bf16 %v8963, %v8963
    %v8972 = vpack.c.bf16 %v8965, %v8965
    %v8973 = vpack.c.bf16 %v8967, %v8967
    %v8974 = vpack.c.bf16 %v8969, %v8969
    %v8975 = vpack.c.bf16 %v8538, %v8538
    %v8976 = vpack.c.bf16 %v8540, %v8540
    %v8977 = vpack.c.bf16 %v8542, %v8542
    %v8978 = vpack.c.bf16 %v8544, %v8544
    %8979 = vmatprep.subr.bf16.mxu0 %v8976
    %8980 = vmatpush1.bf16.xpose.msra.mxu0 %v8975
    %8981 = vmatprep.subr.bf16.mxu0 0
    %8982 = vmatpush1.bf16.xpose.msra.mxu0 0
    %8983 = vmatprep.subr.bf16.mxu0 0
    %8984 = vmatpush1.bf16.xpose.msra.mxu0 0
    %8985 = vmatprep.subr.bf16.mxu0 0
    %8986 = vmatpush1.bf16.xpose.msra.mxu0 0
    %8987 = vmatprep.subr.bf16.mxu0 0
    %8988 = vmatpush1.bf16.xpose.msra.mxu0 0
    %8989 = vmatprep.subr.bf16.mxu0 0
    %8990 = vmatpush1.bf16.xpose.msra.mxu0 0
    %8991 = vmatprep.subr.bf16.mxu0 0
    %8992 = vmatpush1.bf16.xpose.msra.mxu0 0
    %8993 = vmatprep.subr.bf16.mxu0 0
    %8994 = vmatpush1.bf16.xpose.msra.mxu0 0
    %8995 = vmatprep.subr.bf16.mxu0 0
    %8996 = vmatpush1.bf16.xpose.msra.mxu0 0
    %8997 = vmatprep.subr.bf16.mxu0 0
    %8998 = vmatpush1.bf16.xpose.msra.mxu0 0
    %8999 = vmatprep.subr.bf16.mxu0 0
    %9000 = vmatpush1.bf16.xpose.msra.mxu0 0
    %9001 = vmatprep.subr.bf16.mxu0 0
    %9002 = vmatpush1.bf16.xpose.msra.mxu0 0
    %9003 = vmatprep.subr.bf16.mxu0 0
    %9004 = vmatpush1.bf16.xpose.msra.mxu0 0
    %9005 = vmatprep.subr.bf16.mxu0 0
    %9006 = vmatpush1.bf16.xpose.msra.mxu0 0
    %9007 = vmatprep.subr.bf16.mxu0 0
    %9008 = vmatpush1.bf16.xpose.msra.mxu0 0
    %9009 = vmatprep.subr.bf16.mxu0 0
    %9010 = vmatpush1.bf16.xpose.msra.mxu0 0
    %9011 = vmatprep.mubr.bf16.mxu0 %v8972
    %9012 = vmatmul.mubr.bf16.gmra.mrb[0].mxu0 %v8971
    %v9013 = vpop.f32.mrb[0].mxu0
    %v9014 = vadd.f32 0.0, %v9013
    %v9015 = vpop.f32.mrb[0].mxu0
    %v9016 = vpop.f32.mrb[0].mxu0
    %v9017 = vpop.f32.mrb[0].mxu0
    %9018 = vdwg.mxu0
    %9019 = vmatprep.subr.bf16.mxu0 %v8978
    %9020 = vmatpush1.bf16.xpose.msra.mxu0 %v8977
    %9021 = vmatprep.subr.bf16.mxu0 0
    %9022 = vmatpush1.bf16.xpose.msra.mxu0 0
    %9023 = vmatprep.subr.bf16.mxu0 0
    %9024 = vmatpush1.bf16.xpose.msra.mxu0 0
    %9025 = vmatprep.subr.bf16.mxu0 0
    %9026 = vmatpush1.bf16.xpose.msra.mxu0 0
    %9027 = vmatprep.subr.bf16.mxu0 0
    %9028 = vmatpush1.bf16.xpose.msra.mxu0 0
    %9029 = vmatprep.subr.bf16.mxu0 0
    %9030 = vmatpush1.bf16.xpose.msra.mxu0 0
    %9031 = vmatprep.subr.bf16.mxu0 0
    %9032 = vmatpush1.bf16.xpose.msra.mxu0 0
    %9033 = vmatprep.subr.bf16.mxu0 0
    %9034 = vmatpush1.bf16.xpose.msra.mxu0 0
    %9035 = vmatprep.subr.bf16.mxu0 0
    %9036 = vmatpush1.bf16.xpose.msra.mxu0 0
    %9037 = vmatprep.subr.bf16.mxu0 0
    %9038 = vmatpush1.bf16.xpose.msra.mxu0 0
    %9039 = vmatprep.subr.bf16.mxu0 0
    %9040 = vmatpush1.bf16.xpose.msra.mxu0 0
    %9041 = vmatprep.subr.bf16.mxu0 0
    %9042 = vmatpush1.bf16.xpose.msra.mxu0 0
    %9043 = vmatprep.subr.bf16.mxu0 0
    %9044 = vmatpush1.bf16.xpose.msra.mxu0 0
    %9045 = vmatprep.subr.bf16.mxu0 0
    %9046 = vmatpush1.bf16.xpose.msra.mxu0 0
    %9047 = vmatprep.subr.bf16.mxu0 0
    %9048 = vmatpush1.bf16.xpose.msra.mxu0 0
    %9049 = vmatprep.subr.bf16.mxu0 0
    %9050 = vmatpush1.bf16.xpose.msra.mxu0 0
    %9051 = vmatprep.mubr.bf16.mxu0 %v8974
    %9052 = vmatmul.mubr.bf16.gmra.mrb[0].mxu0 %v8973
    %v9053 = vpop.f32.mrb[0].mxu0
    %v9054 = vadd.f32 0.0, %v9053
    %v9055 = vpop.f32.mrb[0].mxu0
    %v9056 = vpop.f32.mrb[0].mxu0
    %v9057 = vpop.f32.mrb[0].mxu0
    %9058 = vdwg.mxu0
    %v9059 = vstv %s6815
    %v9060 = vmul.f32 %v9014, %v9059
    %v9061 = vmul.f32 %v9054, %v9059
    %v9062 = vsel %vm2664, %v9060, -inf
    %9063 = vmax.xlane.f32.xlu0 %v9062
    %v9064 = vpop.xlane.xlu0 %9063
    %v9065 = vsel %vm2664, %v9061, -inf
    %9066 = vmax.xlane.f32.xlu0 %v9065
    %v9067 = vpop.xlane.xlu0 %9066
    %v9068 = vsub.f32 %v9060, %v9064
    %v9069 = vsub.f32 %v9061, %v9067
    %v9070 = vmul.f32 %v9068, 1.442695
    %v9071 = vpow.pop %v9070
    %v9072 = vmul.f32 %v9069, 1.442695
    %v9073 = vpow.pop %v9072
    %v9074 = vsel %vm2664, %v9071, 0.0
    %9075 = vadd.xlane.f32.xlu0 %v9074
    %v9076 = vpop.xlane.xlu0 %9075
    %v9077 = vsel %vm2664, %v9073, 0.0
    %9078 = vadd.xlane.f32.xlu0 %v9077
    %v9079 = vpop.xlane.xlu0 %9078
    %v9080 = vrcp.pop %v9076
    %v9081 = vrcp.pop %v9079
    %v9082 = vmul.f32 %v9071, %v9080
    %v9083 = vmul.f32 %v9073, %v9081
    %v9084 = vpack.c.bf16 %v9082, %v9082
    %v9085 = vpack.c.bf16 %v9083, %v9083
    %v9086 = vpack.c.bf16 %v8710, %v8710
    %v9087 = vpack.c.bf16 %v8712, %v8712
    %v9088 = vpack.c.bf16 %v8714, %v8714
    %v9089 = vpack.c.bf16 %v8716, %v8716
    %v9091 = vsel %vm2664, %v9084, 0
    %v9094 = vsel %vm2696, %v9086, 0
    %v9097 = vsel %vm2696, %v9087, 0
    %9099 = vmatprep.subr.bf16.mxu0 %v9097
    %9100 = vmatpush1.bf16.msra.mxu0 %v9094
    %9101 = vmatprep.subr.bf16.mxu0 0
    %9102 = vmatpush1.bf16.msra.mxu0 0
    %9103 = vmatprep.subr.bf16.mxu0 0
    %9104 = vmatpush1.bf16.msra.mxu0 0
    %9105 = vmatprep.subr.bf16.mxu0 0
    %9106 = vmatpush1.bf16.msra.mxu0 0
    %9107 = vmatprep.subr.bf16.mxu0 0
    %9108 = vmatpush1.bf16.msra.mxu0 0
    %9109 = vmatprep.subr.bf16.mxu0 0
    %9110 = vmatpush1.bf16.msra.mxu0 0
    %9111 = vmatprep.subr.bf16.mxu0 0
    %9112 = vmatpush1.bf16.msra.mxu0 0
    %9113 = vmatprep.subr.bf16.mxu0 0
    %9114 = vmatpush1.bf16.msra.mxu0 0
    %9115 = vmatprep.subr.bf16.mxu0 0
    %9116 = vmatpush1.bf16.msra.mxu0 0
    %9117 = vmatprep.subr.bf16.mxu0 0
    %9118 = vmatpush1.bf16.msra.mxu0 0
    %9119 = vmatprep.subr.bf16.mxu0 0
    %9120 = vmatpush1.bf16.msra.mxu0 0
    %9121 = vmatprep.subr.bf16.mxu0 0
    %9122 = vmatpush1.bf16.msra.mxu0 0
    %9123 = vmatprep.subr.bf16.mxu0 0
    %9124 = vmatpush1.bf16.msra.mxu0 0
    %9125 = vmatprep.subr.bf16.mxu0 0
    %9126 = vmatpush1.bf16.msra.mxu0 0
    %9127 = vmatprep.subr.bf16.mxu0 0
    %9128 = vmatpush1.bf16.msra.mxu0 0
    %9129 = vmatprep.subr.bf16.mxu0 0
    %9130 = vmatpush1.bf16.msra.mxu0 0
    %9131 = vmatprep.mubr.bf16.mxu0 0
    %9132 = vmatmul.mubr.bf16.gmra.mrb[0].mxu0 %v9091
    %v9133 = vpop.f32.mrb[0].mxu0
    %v9134 = vadd.f32 0.0, %v9133
    %v9135 = vpop.f32.mrb[0].mxu0
    %v9136 = vadd.f32 0.0, %v9135
    %v9137 = vpop.f32.mrb[0].mxu0
    %v9138 = vpop.f32.mrb[0].mxu0
    %9139 = vdwg.mxu0
    %v9141 = vsel %vm2664, %v9085, 0
    %v9144 = vsel %vm2696, %v9088, 0
    %v9147 = vsel %vm2696, %v9089, 0
    %9149 = vmatprep.subr.bf16.mxu0 %v9147
    %9150 = vmatpush1.bf16.msra.mxu0 %v9144
    %9151 = vmatprep.subr.bf16.mxu0 0
    %9152 = vmatpush1.bf16.msra.mxu0 0
    %9153 = vmatprep.subr.bf16.mxu0 0
    %9154 = vmatpush1.bf16.msra.mxu0 0
    %9155 = vmatprep.subr.bf16.mxu0 0
    %9156 = vmatpush1.bf16.msra.mxu0 0
    %9157 = vmatprep.subr.bf16.mxu0 0
    %9158 = vmatpush1.bf16.msra.mxu0 0
    %9159 = vmatprep.subr.bf16.mxu0 0
    %9160 = vmatpush1.bf16.msra.mxu0 0
    %9161 = vmatprep.subr.bf16.mxu0 0
    %9162 = vmatpush1.bf16.msra.mxu0 0
    %9163 = vmatprep.subr.bf16.mxu0 0
    %9164 = vmatpush1.bf16.msra.mxu0 0
    %9165 = vmatprep.subr.bf16.mxu0 0
    %9166 = vmatpush1.bf16.msra.mxu0 0
    %9167 = vmatprep.subr.bf16.mxu0 0
    %9168 = vmatpush1.bf16.msra.mxu0 0
    %9169 = vmatprep.subr.bf16.mxu0 0
    %9170 = vmatpush1.bf16.msra.mxu0 0
    %9171 = vmatprep.subr.bf16.mxu0 0
    %9172 = vmatpush1.bf16.msra.mxu0 0
    %9173 = vmatprep.subr.bf16.mxu0 0
    %9174 = vmatpush1.bf16.msra.mxu0 0
    %9175 = vmatprep.subr.bf16.mxu0 0
    %9176 = vmatpush1.bf16.msra.mxu0 0
    %9177 = vmatprep.subr.bf16.mxu0 0
    %9178 = vmatpush1.bf16.msra.mxu0 0
    %9179 = vmatprep.subr.bf16.mxu0 0
    %9180 = vmatpush1.bf16.msra.mxu0 0
    %9181 = vmatprep.mubr.bf16.mxu0 0
    %9182 = vmatmul.mubr.bf16.gmra.mrb[0].mxu0 %v9141
    %v9183 = vpop.f32.mrb[0].mxu0
    %v9184 = vadd.f32 0.0, %v9183
    %v9185 = vpop.f32.mrb[0].mxu0
    %v9186 = vadd.f32 0.0, %v9185
    %v9187 = vpop.f32.mrb[0].mxu0
    %v9188 = vpop.f32.mrb[0].mxu0
    %9189 = vdwg.mxu0
    %v9190 = vadd.f32 %v6811, %v9134
    %v9191 = vadd.f32 %v6812, %v9136
    %v9192 = vadd.f32 %v6813, %v9184
    %v9193 = vadd.f32 %v6814, %v9186
    %v9194 = vld [vmem:[%s55] sm:$0x3]
    %v9195 = vld [vmem:[%s57] sm:$0x3]
    %v9196 = vadd.f32 %v9190, %v9191
    %9197 = vadd.xlane.f32.xlu0 %v9196
    %v9198 = vpop.xlane.xlu0 %9197
    %v9199 = vadd.f32 %v9192, %v9193
    %9200 = vadd.xlane.f32.xlu0 %v9199
    %v9201 = vpop.xlane.xlu0 %9200
    %v9202 = vmul.f32 %v9198, %v2802
    %v9203 = vmul.f32 %v9201, %v2802
    %v9204 = vsub.f32 %v9190, %v9202
    %v9205 = vsub.f32 %v9191, %v9202
    %v9206 = vsub.f32 %v9192, %v9203
    %v9207 = vsub.f32 %v9193, %v9203
    %v9208 = vmul.f32 %v9204, %v9204
    %v9209 = vmul.f32 %v9205, %v9205
    %v9210 = vmul.f32 %v9206, %v9206
    %v9211 = vmul.f32 %v9207, %v9207
    %v9212 = vadd.f32 %v9208, %v9209
    %9213 = vadd.xlane.f32.xlu0 %v9212
    %v9214 = vpop.xlane.xlu0 %9213
    %v9215 = vadd.f32 %v9210, %v9211
    %9216 = vadd.xlane.f32.xlu0 %v9215
    %v9217 = vpop.xlane.xlu0 %9216
    %v9218 = vmul.f32 %v9214, %v2802
    %v9219 = vmul.f32 %v9217, %v2802
    %v9220 = vadd.f32 %v9218, 1e-05
    %v9221 = vadd.f32 %v9219, 1e-05
    %v9222 = vrsqrt.pop %v9220
    %v9223 = vrsqrt.pop %v9221
    %v9224 = vmul.f32 %v9204, %v9222
    %v9225 = vmul.f32 %v9205, %v9222
    %v9226 = vmul.f32 %v9206, %v9223
    %v9227 = vmul.f32 %v9207, %v9223
    %v9229 = vlaneseq
    %v9230 = vshrl.u32 %v9229, 7
    %v9231 = vsub.s32 0, %v9230
    %v9232 = vrot.slane %v9194, %v9231
    %v9233 = vlaneseq
    %v9234 = vshrl.u32 %v9233, 7
    %v9235 = vsub.s32 1, %v9234
    %v9236 = vrot.slane %v9194, %v9235
    %v9239 = vmul.f32 %v9224, %v9232
    %v9240 = vmul.f32 %v9225, %v9236
    %v9241 = vmul.f32 %v9226, %v9232
    %v9242 = vmul.f32 %v9227, %v9236
    %v9244 = vlaneseq
    %v9245 = vshrl.u32 %v9244, 7
    %v9246 = vsub.s32 0, %v9245
    %v9247 = vrot.slane %v9195, %v9246
    %v9248 = vlaneseq
    %v9249 = vshrl.u32 %v9248, 7
    %v9250 = vsub.s32 1, %v9249
    %v9251 = vrot.slane %v9195, %v9250
    %v9254 = vadd.f32 %v9239, %v9247
    %v9255 = vadd.f32 %v9240, %v9251
    %v9256 = vadd.f32 %v9241, %v9247
    %v9257 = vadd.f32 %v9242, %v9251
    %v9258 = vld [vmem:[#allocation28] sm:$0xff]
    %v9259 = vld [vmem:[#allocation28 + $0x8] sm:$0xff]
    %v9260 = vld [vmem:[#allocation28 + $0x10] sm:$0xff]
    %v9261 = vld [vmem:[#allocation28 + $0x18] sm:$0xff]
    %v9262 = vld [vmem:[#allocation28 + $0x20] sm:$0xff]
    %v9263 = vld [vmem:[#allocation28 + $0x28] sm:$0xff]
    %v9264 = vld [vmem:[#allocation28 + $0x30] sm:$0xff]
    %v9265 = vld [vmem:[#allocation28 + $0x38] sm:$0xff]
    %v9266 = vld [vmem:[#allocation28 + $0x40] sm:$0xff]
    %v9267 = vld [vmem:[#allocation28 + $0x48] sm:$0xff]
    %v9268 = vld [vmem:[#allocation28 + $0x50] sm:$0xff]
    %v9269 = vld [vmem:[#allocation28 + $0x58] sm:$0xff]
    %v9270 = vld [vmem:[#allocation28 + $0x60] sm:$0xff]
    %v9271 = vld [vmem:[#allocation28 + $0x68] sm:$0xff]
    %v9272 = vld [vmem:[#allocation28 + $0x70] sm:$0xff]
    %v9273 = vld [vmem:[#allocation28 + $0x78] sm:$0xff]
    %v9274 = vld [vmem:[#allocation28 + $0x80] sm:$0xff]
    %v9275 = vld [vmem:[#allocation28 + $0x88] sm:$0xff]
    %v9276 = vld [vmem:[#allocation28 + $0x90] sm:$0xff]
    %v9277 = vld [vmem:[#allocation28 + $0x98] sm:$0xff]
    %v9278 = vld [vmem:[#allocation28 + $0xa0] sm:$0xff]
    %v9279 = vld [vmem:[#allocation28 + $0xa8] sm:$0xff]
    %v9280 = vld [vmem:[#allocation28 + $0xb0] sm:$0xff]
    %v9281 = vld [vmem:[#allocation28 + $0xb8] sm:$0xff]
    %v9282 = vld [vmem:[#allocation28 + $0xc0] sm:$0xff]
    %v9283 = vld [vmem:[#allocation28 + $0xc8] sm:$0xff]
    %v9284 = vld [vmem:[#allocation28 + $0xd0] sm:$0xff]
    %v9285 = vld [vmem:[#allocation28 + $0xd8] sm:$0xff]
    %v9286 = vld [vmem:[#allocation28 + $0xe0] sm:$0xff]
    %v9287 = vld [vmem:[#allocation28 + $0xe8] sm:$0xff]
    %v9288 = vld [vmem:[#allocation28 + $0xf0] sm:$0xff]
    %v9289 = vld [vmem:[#allocation28 + $0xf8] sm:$0xff]
    %v9290 = vld [vmem:[#allocation28 + $0x100] sm:$0xff]
    %v9291 = vld [vmem:[#allocation28 + $0x108] sm:$0xff]
    %v9292 = vld [vmem:[#allocation28 + $0x110] sm:$0xff]
    %v9293 = vld [vmem:[#allocation28 + $0x118] sm:$0xff]
    %v9294 = vld [vmem:[#allocation28 + $0x120] sm:$0xff]
    %v9295 = vld [vmem:[#allocation28 + $0x128] sm:$0xff]
    %v9296 = vld [vmem:[#allocation28 + $0x130] sm:$0xff]
    %v9297 = vld [vmem:[#allocation28 + $0x138] sm:$0xff]
    %v9298 = vld [vmem:[#allocation28 + $0x140] sm:$0xff]
    %v9299 = vld [vmem:[#allocation28 + $0x148] sm:$0xff]
    %v9300 = vld [vmem:[#allocation28 + $0x150] sm:$0xff]
    %v9301 = vld [vmem:[#allocation28 + $0x158] sm:$0xff]
    %v9302 = vld [vmem:[#allocation28 + $0x160] sm:$0xff]
    %v9303 = vld [vmem:[#allocation28 + $0x168] sm:$0xff]
    %v9304 = vld [vmem:[#allocation28 + $0x170] sm:$0xff]
    %v9305 = vld [vmem:[#allocation28 + $0x178] sm:$0xff]
    %v9306 = vld [vmem:[#allocation28 + $0x180] sm:$0xff]
    %v9307 = vld [vmem:[#allocation28 + $0x188] sm:$0xff]
    %v9308 = vld [vmem:[#allocation28 + $0x190] sm:$0xff]
    %v9309 = vld [vmem:[#allocation28 + $0x198] sm:$0xff]
    %v9310 = vld [vmem:[#allocation28 + $0x1a0] sm:$0xff]
    %v9311 = vld [vmem:[#allocation28 + $0x1a8] sm:$0xff]
    %v9312 = vld [vmem:[#allocation28 + $0x1b0] sm:$0xff]
    %v9313 = vld [vmem:[#allocation28 + $0x1b8] sm:$0xff]
    %v9314 = vld [vmem:[#allocation28 + $0x1c0] sm:$0xff]
    %v9315 = vld [vmem:[#allocation28 + $0x1c8] sm:$0xff]
    %v9316 = vld [vmem:[#allocation28 + $0x1d0] sm:$0xff]
    %v9317 = vld [vmem:[#allocation28 + $0x1d8] sm:$0xff]
    %v9318 = vld [vmem:[#allocation28 + $0x1e0] sm:$0xff]
    %v9319 = vld [vmem:[#allocation28 + $0x1e8] sm:$0xff]
    %v9320 = vld [vmem:[#allocation28 + $0x1f0] sm:$0xff]
    %v9321 = vld [vmem:[#allocation28 + $0x1f8] sm:$0xff]
    %v9322 = vpack.c.bf16 %v9256, %v9254
    %v9323 = vpack.c.bf16 %v9257, %v9255
    %v9324 = vld [vmem:[%s61] sm:$0xf]
    %v9326 = vlaneseq
    %v9327 = vshrl.u32 %v9326, 7
    %v9328 = vsub.s32 0, %v9327
    %v9329 = vrot.slane %v9324, %v9328
    %v9330 = vlaneseq
    %v9331 = vshrl.u32 %v9330, 7
    %v9332 = vsub.s32 1, %v9331
    %v9333 = vrot.slane %v9324, %v9332
    %v9334 = vlaneseq
    %v9335 = vshrl.u32 %v9334, 7
    %v9336 = vsub.s32 2, %v9335
    %v9337 = vrot.slane %v9324, %v9336
    %v9338 = vlaneseq
    %v9339 = vshrl.u32 %v9338, 7
    %v9340 = vsub.s32 3, %v9339
    %v9341 = vrot.slane %v9324, %v9340
    %v9410 = vunpack.c.l.b16 %v9258
    %v9411 = vunpack.c.h.b16 %v9258
    %v9412 = vunpack.c.l.b16 %v9259
    %v9413 = vunpack.c.h.b16 %v9259
    %v9414 = vunpack.c.l.b16 %v9260
    %v9415 = vunpack.c.h.b16 %v9260
    %v9416 = vunpack.c.l.b16 %v9261
    %v9417 = vunpack.c.h.b16 %v9261
    %v9418 = vunpack.c.l.b16 %v9262
    %v9419 = vunpack.c.h.b16 %v9262
    %v9420 = vunpack.c.l.b16 %v9263
    %v9421 = vunpack.c.h.b16 %v9263
    %v9422 = vunpack.c.l.b16 %v9264
    %v9423 = vunpack.c.h.b16 %v9264
    %v9424 = vunpack.c.l.b16 %v9265
    %v9425 = vunpack.c.h.b16 %v9265
    %v9426 = vunpack.c.l.b16 %v9266
    %v9427 = vunpack.c.h.b16 %v9266
    %v9428 = vunpack.c.l.b16 %v9267
    %v9429 = vunpack.c.h.b16 %v9267
    %v9430 = vunpack.c.l.b16 %v9268
    %v9431 = vunpack.c.h.b16 %v9268
    %v9432 = vunpack.c.l.b16 %v9269
    %v9433 = vunpack.c.h.b16 %v9269
    %v9434 = vunpack.c.l.b16 %v9270
    %v9435 = vunpack.c.h.b16 %v9270
    %v9436 = vunpack.c.l.b16 %v9271
    %v9437 = vunpack.c.h.b16 %v9271
    %v9438 = vunpack.c.l.b16 %v9272
    %v9439 = vunpack.c.h.b16 %v9272
    %v9440 = vunpack.c.l.b16 %v9273
    %v9441 = vunpack.c.h.b16 %v9273
    %v9442 = vunpack.c.l.b16 %v9274
    %v9443 = vunpack.c.h.b16 %v9274
    %v9444 = vunpack.c.l.b16 %v9275
    %v9445 = vunpack.c.h.b16 %v9275
    %v9446 = vunpack.c.l.b16 %v9276
    %v9447 = vunpack.c.h.b16 %v9276
    %v9448 = vunpack.c.l.b16 %v9277
    %v9449 = vunpack.c.h.b16 %v9277
    %v9450 = vunpack.c.l.b16 %v9278
    %v9451 = vunpack.c.h.b16 %v9278
    %v9452 = vunpack.c.l.b16 %v9279
    %v9453 = vunpack.c.h.b16 %v9279
    %v9454 = vunpack.c.l.b16 %v9280
    %v9455 = vunpack.c.h.b16 %v9280
    %v9456 = vunpack.c.l.b16 %v9281
    %v9457 = vunpack.c.h.b16 %v9281
    %v9458 = vunpack.c.l.b16 %v9282
    %v9459 = vunpack.c.h.b16 %v9282
    %v9460 = vunpack.c.l.b16 %v9283
    %v9461 = vunpack.c.h.b16 %v9283
    %v9462 = vunpack.c.l.b16 %v9284
    %v9463 = vunpack.c.h.b16 %v9284
    %v9464 = vunpack.c.l.b16 %v9285
    %v9465 = vunpack.c.h.b16 %v9285
    %v9466 = vunpack.c.l.b16 %v9286
    %v9467 = vunpack.c.h.b16 %v9286
    %v9468 = vunpack.c.l.b16 %v9287
    %v9469 = vunpack.c.h.b16 %v9287
    %v9470 = vunpack.c.l.b16 %v9288
    %v9471 = vunpack.c.h.b16 %v9288
    %v9472 = vunpack.c.l.b16 %v9289
    %v9473 = vunpack.c.h.b16 %v9289
    %v9474 = vunpack.c.l.b16 %v9290
    %v9475 = vunpack.c.h.b16 %v9290
    %v9476 = vunpack.c.l.b16 %v9291
    %v9477 = vunpack.c.h.b16 %v9291
    %v9478 = vunpack.c.l.b16 %v9292
    %v9479 = vunpack.c.h.b16 %v9292
    %v9480 = vunpack.c.l.b16 %v9293
    %v9481 = vunpack.c.h.b16 %v9293
    %v9482 = vunpack.c.l.b16 %v9294
    %v9483 = vunpack.c.h.b16 %v9294
    %v9484 = vunpack.c.l.b16 %v9295
    %v9485 = vunpack.c.h.b16 %v9295
    %v9486 = vunpack.c.l.b16 %v9296
    %v9487 = vunpack.c.h.b16 %v9296
    %v9488 = vunpack.c.l.b16 %v9297
    %v9489 = vunpack.c.h.b16 %v9297
    %v9490 = vunpack.c.l.b16 %v9298
    %v9491 = vunpack.c.h.b16 %v9298
    %v9492 = vunpack.c.l.b16 %v9299
    %v9493 = vunpack.c.h.b16 %v9299
    %v9494 = vunpack.c.l.b16 %v9300
    %v9495 = vunpack.c.h.b16 %v9300
    %v9496 = vunpack.c.l.b16 %v9301
    %v9497 = vunpack.c.h.b16 %v9301
    %v9498 = vunpack.c.l.b16 %v9302
    %v9499 = vunpack.c.h.b16 %v9302
    %v9500 = vunpack.c.l.b16 %v9303
    %v9501 = vunpack.c.h.b16 %v9303
    %v9502 = vunpack.c.l.b16 %v9304
    %v9503 = vunpack.c.h.b16 %v9304
    %v9504 = vunpack.c.l.b16 %v9305
    %v9505 = vunpack.c.h.b16 %v9305
    %v9506 = vunpack.c.l.b16 %v9306
    %v9507 = vunpack.c.h.b16 %v9306
    %v9508 = vunpack.c.l.b16 %v9307
    %v9509 = vunpack.c.h.b16 %v9307
    %v9510 = vunpack.c.l.b16 %v9308
    %v9511 = vunpack.c.h.b16 %v9308
    %v9512 = vunpack.c.l.b16 %v9309
    %v9513 = vunpack.c.h.b16 %v9309
    %v9514 = vunpack.c.l.b16 %v9310
    %v9515 = vunpack.c.h.b16 %v9310
    %v9516 = vunpack.c.l.b16 %v9311
    %v9517 = vunpack.c.h.b16 %v9311
    %v9518 = vunpack.c.l.b16 %v9312
    %v9519 = vunpack.c.h.b16 %v9312
    %v9520 = vunpack.c.l.b16 %v9313
    %v9521 = vunpack.c.h.b16 %v9313
    %v9522 = vunpack.c.l.b16 %v9314
    %v9523 = vunpack.c.h.b16 %v9314
    %v9524 = vunpack.c.l.b16 %v9315
    %v9525 = vunpack.c.h.b16 %v9315
    %v9526 = vunpack.c.l.b16 %v9316
    %v9527 = vunpack.c.h.b16 %v9316
    %v9528 = vunpack.c.l.b16 %v9317
    %v9529 = vunpack.c.h.b16 %v9317
    %v9530 = vunpack.c.l.b16 %v9318
    %v9531 = vunpack.c.h.b16 %v9318
    %v9532 = vunpack.c.l.b16 %v9319
    %v9533 = vunpack.c.h.b16 %v9319
    %v9534 = vunpack.c.l.b16 %v9320
    %v9535 = vunpack.c.h.b16 %v9320
    %v9536 = vunpack.c.l.b16 %v9321
    %v9537 = vunpack.c.h.b16 %v9321
    %v9538 = vpack.c.b16 %v9414, %v9410
    %v9539 = vpack.c.b16 %v9415, %v9411
    %v9540 = vpack.c.b16 %v9416, %v9412
    %v9541 = vpack.c.b16 %v9417, %v9413
    %v9542 = vpack.c.b16 %v9422, %v9418
    %v9543 = vpack.c.b16 %v9423, %v9419
    %v9544 = vpack.c.b16 %v9424, %v9420
    %v9545 = vpack.c.b16 %v9425, %v9421
    %v9546 = vpack.c.b16 %v9430, %v9426
    %v9547 = vpack.c.b16 %v9431, %v9427
    %v9548 = vpack.c.b16 %v9432, %v9428
    %v9549 = vpack.c.b16 %v9433, %v9429
    %v9550 = vpack.c.b16 %v9438, %v9434
    %v9551 = vpack.c.b16 %v9439, %v9435
    %v9552 = vpack.c.b16 %v9440, %v9436
    %v9553 = vpack.c.b16 %v9441, %v9437
    %v9554 = vpack.c.b16 %v9446, %v9442
    %v9555 = vpack.c.b16 %v9447, %v9443
    %v9556 = vpack.c.b16 %v9448, %v9444
    %v9557 = vpack.c.b16 %v9449, %v9445
    %v9558 = vpack.c.b16 %v9454, %v9450
    %v9559 = vpack.c.b16 %v9455, %v9451
    %v9560 = vpack.c.b16 %v9456, %v9452
    %v9561 = vpack.c.b16 %v9457, %v9453
    %v9562 = vpack.c.b16 %v9462, %v9458
    %v9563 = vpack.c.b16 %v9463, %v9459
    %v9564 = vpack.c.b16 %v9464, %v9460
    %v9565 = vpack.c.b16 %v9465, %v9461
    %v9566 = vpack.c.b16 %v9470, %v9466
    %v9567 = vpack.c.b16 %v9471, %v9467
    %v9568 = vpack.c.b16 %v9472, %v9468
    %v9569 = vpack.c.b16 %v9473, %v9469
    %v9570 = vpack.c.b16 %v9478, %v9474
    %v9571 = vpack.c.b16 %v9479, %v9475
    %v9572 = vpack.c.b16 %v9480, %v9476
    %v9573 = vpack.c.b16 %v9481, %v9477
    %v9574 = vpack.c.b16 %v9486, %v9482
    %v9575 = vpack.c.b16 %v9487, %v9483
    %v9576 = vpack.c.b16 %v9488, %v9484
    %v9577 = vpack.c.b16 %v9489, %v9485
    %v9578 = vpack.c.b16 %v9494, %v9490
    %v9579 = vpack.c.b16 %v9495, %v9491
    %v9580 = vpack.c.b16 %v9496, %v9492
    %v9581 = vpack.c.b16 %v9497, %v9493
    %v9582 = vpack.c.b16 %v9502, %v9498
    %v9583 = vpack.c.b16 %v9503, %v9499
    %v9584 = vpack.c.b16 %v9504, %v9500
    %v9585 = vpack.c.b16 %v9505, %v9501
    %v9586 = vpack.c.b16 %v9510, %v9506
    %v9587 = vpack.c.b16 %v9511, %v9507
    %v9588 = vpack.c.b16 %v9512, %v9508
    %v9589 = vpack.c.b16 %v9513, %v9509
    %v9590 = vpack.c.b16 %v9518, %v9514
    %v9591 = vpack.c.b16 %v9519, %v9515
    %v9592 = vpack.c.b16 %v9520, %v9516
    %v9593 = vpack.c.b16 %v9521, %v9517
    %v9594 = vpack.c.b16 %v9526, %v9522
    %v9595 = vpack.c.b16 %v9527, %v9523
    %v9596 = vpack.c.b16 %v9528, %v9524
    %v9597 = vpack.c.b16 %v9529, %v9525
    %v9598 = vpack.c.b16 %v9534, %v9530
    %v9599 = vpack.c.b16 %v9535, %v9531
    %v9600 = vpack.c.b16 %v9536, %v9532
    %v9601 = vpack.c.b16 %v9537, %v9533
    %9666 = vmatprep.subr.bf16.mxu0 %v9539
    %9667 = vmatpush1.bf16.msra.mxu0 %v9538
    %9668 = vmatprep.subr.bf16.mxu0 %v9543
    %9669 = vmatpush1.bf16.msra.mxu0 %v9542
    %9670 = vmatprep.subr.bf16.mxu0 %v9547
    %9671 = vmatpush1.bf16.msra.mxu0 %v9546
    %9672 = vmatprep.subr.bf16.mxu0 %v9551
    %9673 = vmatpush1.bf16.msra.mxu0 %v9550
    %9674 = vmatprep.subr.bf16.mxu0 %v9555
    %9675 = vmatpush1.bf16.msra.mxu0 %v9554
    %9676 = vmatprep.subr.bf16.mxu0 %v9559
    %9677 = vmatpush1.bf16.msra.mxu0 %v9558
    %9678 = vmatprep.subr.bf16.mxu0 %v9563
    %9679 = vmatpush1.bf16.msra.mxu0 %v9562
    %9680 = vmatprep.subr.bf16.mxu0 %v9567
    %9681 = vmatpush1.bf16.msra.mxu0 %v9566
    %9682 = vmatprep.subr.bf16.mxu0 %v9571
    %9683 = vmatpush1.bf16.msra.mxu0 %v9570
    %9684 = vmatprep.subr.bf16.mxu0 %v9575
    %9685 = vmatpush1.bf16.msra.mxu0 %v9574
    %9686 = vmatprep.subr.bf16.mxu0 %v9579
    %9687 = vmatpush1.bf16.msra.mxu0 %v9578
    %9688 = vmatprep.subr.bf16.mxu0 %v9583
    %9689 = vmatpush1.bf16.msra.mxu0 %v9582
    %9690 = vmatprep.subr.bf16.mxu0 %v9587
    %9691 = vmatpush1.bf16.msra.mxu0 %v9586
    %9692 = vmatprep.subr.bf16.mxu0 %v9591
    %9693 = vmatpush1.bf16.msra.mxu0 %v9590
    %9694 = vmatprep.subr.bf16.mxu0 %v9595
    %9695 = vmatpush1.bf16.msra.mxu0 %v9594
    %9696 = vmatprep.subr.bf16.mxu0 %v9599
    %9697 = vmatpush1.bf16.msra.mxu0 %v9598
    %9698 = vmatprep.mubr.bf16.mxu0 %v9323
    %9699 = vmatmul.mubr.bf16.gmra.mrb[0].mxu0 %v9322
    %v9700 = vpop.f32.mrb[0].mxu0
    %v9701 = vadd.f32 %v9329, %v9700
    %v9702 = vpop.f32.mrb[0].mxu0
    %v9703 = vadd.f32 %v9333, %v9702
    %v9704 = vpop.f32.mrb[0].mxu0
    %v9705 = vadd.f32 %v9329, %v9704
    %v9706 = vpop.f32.mrb[0].mxu0
    %v9707 = vadd.f32 %v9333, %v9706
    %9708 = vdwg.mxu0
    %9709 = vmatprep.subr.bf16.mxu0 %v9541
    %9710 = vmatpush1.bf16.msra.mxu0 %v9540
    %9711 = vmatprep.subr.bf16.mxu0 %v9545
    %9712 = vmatpush1.bf16.msra.mxu0 %v9544
    %9713 = vmatprep.subr.bf16.mxu0 %v9549
    %9714 = vmatpush1.bf16.msra.mxu0 %v9548
    %9715 = vmatprep.subr.bf16.mxu0 %v9553
    %9716 = vmatpush1.bf16.msra.mxu0 %v9552
    %9717 = vmatprep.subr.bf16.mxu0 %v9557
    %9718 = vmatpush1.bf16.msra.mxu0 %v9556
    %9719 = vmatprep.subr.bf16.mxu0 %v9561
    %9720 = vmatpush1.bf16.msra.mxu0 %v9560
    %9721 = vmatprep.subr.bf16.mxu0 %v9565
    %9722 = vmatpush1.bf16.msra.mxu0 %v9564
    %9723 = vmatprep.subr.bf16.mxu0 %v9569
    %9724 = vmatpush1.bf16.msra.mxu0 %v9568
    %9725 = vmatprep.subr.bf16.mxu0 %v9573
    %9726 = vmatpush1.bf16.msra.mxu0 %v9572
    %9727 = vmatprep.subr.bf16.mxu0 %v9577
    %9728 = vmatpush1.bf16.msra.mxu0 %v9576
    %9729 = vmatprep.subr.bf16.mxu0 %v9581
    %9730 = vmatpush1.bf16.msra.mxu0 %v9580
    %9731 = vmatprep.subr.bf16.mxu0 %v9585
    %9732 = vmatpush1.bf16.msra.mxu0 %v9584
    %9733 = vmatprep.subr.bf16.mxu0 %v9589
    %9734 = vmatpush1.bf16.msra.mxu0 %v9588
    %9735 = vmatprep.subr.bf16.mxu0 %v9593
    %9736 = vmatpush1.bf16.msra.mxu0 %v9592
    %9737 = vmatprep.subr.bf16.mxu0 %v9597
    %9738 = vmatpush1.bf16.msra.mxu0 %v9596
    %9739 = vmatprep.subr.bf16.mxu0 %v9601
    %9740 = vmatpush1.bf16.msra.mxu0 %v9600
    %9741 = vmatprep.mubr.bf16.mxu0 %v9323
    %9742 = vmatmul.mubr.bf16.gmra.mrb[0].mxu0 %v9322
    %v9743 = vpop.f32.mrb[0].mxu0
    %v9744 = vadd.f32 %v9337, %v9743
    %v9745 = vpop.f32.mrb[0].mxu0
    %v9746 = vadd.f32 %v9341, %v9745
    %v9747 = vpop.f32.mrb[0].mxu0
    %v9748 = vadd.f32 %v9337, %v9747
    %v9749 = vpop.f32.mrb[0].mxu0
    %v9750 = vadd.f32 %v9341, %v9749
    %9751 = vdwg.mxu0
    %v9752 = vmax.f32 %v9701, 0.0
    %v9753 = vmax.f32 %v9703, 0.0
    %v9754 = vmax.f32 %v9744, 0.0
    %v9755 = vmax.f32 %v9746, 0.0
    %v9756 = vmax.f32 %v9705, 0.0
    %v9757 = vmax.f32 %v9707, 0.0
    %v9758 = vmax.f32 %v9748, 0.0
    %v9759 = vmax.f32 %v9750, 0.0
    %v9760 = vld [vmem:[#allocation29] sm:$0xff]
    %v9761 = vld [vmem:[#allocation29 + $0x8] sm:$0xff]
    %v9762 = vld [vmem:[#allocation29 + $0x10] sm:$0xff]
    %v9763 = vld [vmem:[#allocation29 + $0x18] sm:$0xff]
    %v9764 = vld [vmem:[#allocation29 + $0x20] sm:$0xff]
    %v9765 = vld [vmem:[#allocation29 + $0x28] sm:$0xff]
    %v9766 = vld [vmem:[#allocation29 + $0x30] sm:$0xff]
    %v9767 = vld [vmem:[#allocation29 + $0x38] sm:$0xff]
    %v9768 = vld [vmem:[#allocation29 + $0x40] sm:$0xff]
    %v9769 = vld [vmem:[#allocation29 + $0x48] sm:$0xff]
    %v9770 = vld [vmem:[#allocation29 + $0x50] sm:$0xff]
    %v9771 = vld [vmem:[#allocation29 + $0x58] sm:$0xff]
    %v9772 = vld [vmem:[#allocation29 + $0x60] sm:$0xff]
    %v9773 = vld [vmem:[#allocation29 + $0x68] sm:$0xff]
    %v9774 = vld [vmem:[#allocation29 + $0x70] sm:$0xff]
    %v9775 = vld [vmem:[#allocation29 + $0x78] sm:$0xff]
    %v9776 = vld [vmem:[#allocation29 + $0x80] sm:$0xff]
    %v9777 = vld [vmem:[#allocation29 + $0x88] sm:$0xff]
    %v9778 = vld [vmem:[#allocation29 + $0x90] sm:$0xff]
    %v9779 = vld [vmem:[#allocation29 + $0x98] sm:$0xff]
    %v9780 = vld [vmem:[#allocation29 + $0xa0] sm:$0xff]
    %v9781 = vld [vmem:[#allocation29 + $0xa8] sm:$0xff]
    %v9782 = vld [vmem:[#allocation29 + $0xb0] sm:$0xff]
    %v9783 = vld [vmem:[#allocation29 + $0xb8] sm:$0xff]
    %v9784 = vld [vmem:[#allocation29 + $0xc0] sm:$0xff]
    %v9785 = vld [vmem:[#allocation29 + $0xc8] sm:$0xff]
    %v9786 = vld [vmem:[#allocation29 + $0xd0] sm:$0xff]
    %v9787 = vld [vmem:[#allocation29 + $0xd8] sm:$0xff]
    %v9788 = vld [vmem:[#allocation29 + $0xe0] sm:$0xff]
    %v9789 = vld [vmem:[#allocation29 + $0xe8] sm:$0xff]
    %v9790 = vld [vmem:[#allocation29 + $0xf0] sm:$0xff]
    %v9791 = vld [vmem:[#allocation29 + $0xf8] sm:$0xff]
    %v9792 = vld [vmem:[#allocation29 + $0x100] sm:$0xff]
    %v9793 = vld [vmem:[#allocation29 + $0x108] sm:$0xff]
    %v9794 = vld [vmem:[#allocation29 + $0x110] sm:$0xff]
    %v9795 = vld [vmem:[#allocation29 + $0x118] sm:$0xff]
    %v9796 = vld [vmem:[#allocation29 + $0x120] sm:$0xff]
    %v9797 = vld [vmem:[#allocation29 + $0x128] sm:$0xff]
    %v9798 = vld [vmem:[#allocation29 + $0x130] sm:$0xff]
    %v9799 = vld [vmem:[#allocation29 + $0x138] sm:$0xff]
    %v9800 = vld [vmem:[#allocation29 + $0x140] sm:$0xff]
    %v9801 = vld [vmem:[#allocation29 + $0x148] sm:$0xff]
    %v9802 = vld [vmem:[#allocation29 + $0x150] sm:$0xff]
    %v9803 = vld [vmem:[#allocation29 + $0x158] sm:$0xff]
    %v9804 = vld [vmem:[#allocation29 + $0x160] sm:$0xff]
    %v9805 = vld [vmem:[#allocation29 + $0x168] sm:$0xff]
    %v9806 = vld [vmem:[#allocation29 + $0x170] sm:$0xff]
    %v9807 = vld [vmem:[#allocation29 + $0x178] sm:$0xff]
    %v9808 = vld [vmem:[#allocation29 + $0x180] sm:$0xff]
    %v9809 = vld [vmem:[#allocation29 + $0x188] sm:$0xff]
    %v9810 = vld [vmem:[#allocation29 + $0x190] sm:$0xff]
    %v9811 = vld [vmem:[#allocation29 + $0x198] sm:$0xff]
    %v9812 = vld [vmem:[#allocation29 + $0x1a0] sm:$0xff]
    %v9813 = vld [vmem:[#allocation29 + $0x1a8] sm:$0xff]
    %v9814 = vld [vmem:[#allocation29 + $0x1b0] sm:$0xff]
    %v9815 = vld [vmem:[#allocation29 + $0x1b8] sm:$0xff]
    %v9816 = vld [vmem:[#allocation29 + $0x1c0] sm:$0xff]
    %v9817 = vld [vmem:[#allocation29 + $0x1c8] sm:$0xff]
    %v9818 = vld [vmem:[#allocation29 + $0x1d0] sm:$0xff]
    %v9819 = vld [vmem:[#allocation29 + $0x1d8] sm:$0xff]
    %v9820 = vld [vmem:[#allocation29 + $0x1e0] sm:$0xff]
    %v9821 = vld [vmem:[#allocation29 + $0x1e8] sm:$0xff]
    %v9822 = vld [vmem:[#allocation29 + $0x1f0] sm:$0xff]
    %v9823 = vld [vmem:[#allocation29 + $0x1f8] sm:$0xff]
    %v9824 = vpack.c.bf16 %v9756, %v9752
    %v9825 = vpack.c.bf16 %v9757, %v9753
    %v9826 = vpack.c.bf16 %v9758, %v9754
    %v9827 = vpack.c.bf16 %v9759, %v9755
    %v9828 = vld [vmem:[%s65] sm:$0x3]
    %v9830 = vlaneseq
    %v9831 = vshrl.u32 %v9830, 7
    %v9832 = vsub.s32 0, %v9831
    %v9833 = vrot.slane %v9828, %v9832
    %v9834 = vlaneseq
    %v9835 = vshrl.u32 %v9834, 7
    %v9836 = vsub.s32 1, %v9835
    %v9837 = vrot.slane %v9828, %v9836
    %v9904 = vunpack.c.l.b16 %v9760
    %v9905 = vunpack.c.h.b16 %v9760
    %v9906 = vunpack.c.l.b16 %v9761
    %v9907 = vunpack.c.h.b16 %v9761
    %v9908 = vunpack.c.l.b16 %v9762
    %v9909 = vunpack.c.h.b16 %v9762
    %v9910 = vunpack.c.l.b16 %v9763
    %v9911 = vunpack.c.h.b16 %v9763
    %v9912 = vunpack.c.l.b16 %v9764
    %v9913 = vunpack.c.h.b16 %v9764
    %v9914 = vunpack.c.l.b16 %v9765
    %v9915 = vunpack.c.h.b16 %v9765
    %v9916 = vunpack.c.l.b16 %v9766
    %v9917 = vunpack.c.h.b16 %v9766
    %v9918 = vunpack.c.l.b16 %v9767
    %v9919 = vunpack.c.h.b16 %v9767
    %v9920 = vunpack.c.l.b16 %v9768
    %v9921 = vunpack.c.h.b16 %v9768
    %v9922 = vunpack.c.l.b16 %v9769
    %v9923 = vunpack.c.h.b16 %v9769
    %v9924 = vunpack.c.l.b16 %v9770
    %v9925 = vunpack.c.h.b16 %v9770
    %v9926 = vunpack.c.l.b16 %v9771
    %v9927 = vunpack.c.h.b16 %v9771
    %v9928 = vunpack.c.l.b16 %v9772
    %v9929 = vunpack.c.h.b16 %v9772
    %v9930 = vunpack.c.l.b16 %v9773
    %v9931 = vunpack.c.h.b16 %v9773
    %v9932 = vunpack.c.l.b16 %v9774
    %v9933 = vunpack.c.h.b16 %v9774
    %v9934 = vunpack.c.l.b16 %v9775
    %v9935 = vunpack.c.h.b16 %v9775
    %v9936 = vunpack.c.l.b16 %v9776
    %v9937 = vunpack.c.h.b16 %v9776
    %v9938 = vunpack.c.l.b16 %v9777
    %v9939 = vunpack.c.h.b16 %v9777
    %v9940 = vunpack.c.l.b16 %v9778
    %v9941 = vunpack.c.h.b16 %v9778
    %v9942 = vunpack.c.l.b16 %v9779
    %v9943 = vunpack.c.h.b16 %v9779
    %v9944 = vunpack.c.l.b16 %v9780
    %v9945 = vunpack.c.h.b16 %v9780
    %v9946 = vunpack.c.l.b16 %v9781
    %v9947 = vunpack.c.h.b16 %v9781
    %v9948 = vunpack.c.l.b16 %v9782
    %v9949 = vunpack.c.h.b16 %v9782
    %v9950 = vunpack.c.l.b16 %v9783
    %v9951 = vunpack.c.h.b16 %v9783
    %v9952 = vunpack.c.l.b16 %v9784
    %v9953 = vunpack.c.h.b16 %v9784
    %v9954 = vunpack.c.l.b16 %v9785
    %v9955 = vunpack.c.h.b16 %v9785
    %v9956 = vunpack.c.l.b16 %v9786
    %v9957 = vunpack.c.h.b16 %v9786
    %v9958 = vunpack.c.l.b16 %v9787
    %v9959 = vunpack.c.h.b16 %v9787
    %v9960 = vunpack.c.l.b16 %v9788
    %v9961 = vunpack.c.h.b16 %v9788
    %v9962 = vunpack.c.l.b16 %v9789
    %v9963 = vunpack.c.h.b16 %v9789
    %v9964 = vunpack.c.l.b16 %v9790
    %v9965 = vunpack.c.h.b16 %v9790
    %v9966 = vunpack.c.l.b16 %v9791
    %v9967 = vunpack.c.h.b16 %v9791
    %v9968 = vunpack.c.l.b16 %v9792
    %v9969 = vunpack.c.h.b16 %v9792
    %v9970 = vunpack.c.l.b16 %v9793
    %v9971 = vunpack.c.h.b16 %v9793
    %v9972 = vunpack.c.l.b16 %v9794
    %v9973 = vunpack.c.h.b16 %v9794
    %v9974 = vunpack.c.l.b16 %v9795
    %v9975 = vunpack.c.h.b16 %v9795
    %v9976 = vunpack.c.l.b16 %v9796
    %v9977 = vunpack.c.h.b16 %v9796
    %v9978 = vunpack.c.l.b16 %v9797
    %v9979 = vunpack.c.h.b16 %v9797
    %v9980 = vunpack.c.l.b16 %v9798
    %v9981 = vunpack.c.h.b16 %v9798
    %v9982 = vunpack.c.l.b16 %v9799
    %v9983 = vunpack.c.h.b16 %v9799
    %v9984 = vunpack.c.l.b16 %v9800
    %v9985 = vunpack.c.h.b16 %v9800
    %v9986 = vunpack.c.l.b16 %v9801
    %v9987 = vunpack.c.h.b16 %v9801
    %v9988 = vunpack.c.l.b16 %v9802
    %v9989 = vunpack.c.h.b16 %v9802
    %v9990 = vunpack.c.l.b16 %v9803
    %v9991 = vunpack.c.h.b16 %v9803
    %v9992 = vunpack.c.l.b16 %v9804
    %v9993 = vunpack.c.h.b16 %v9804
    %v9994 = vunpack.c.l.b16 %v9805
    %v9995 = vunpack.c.h.b16 %v9805
    %v9996 = vunpack.c.l.b16 %v9806
    %v9997 = vunpack.c.h.b16 %v9806
    %v9998 = vunpack.c.l.b16 %v9807
    %v9999 = vunpack.c.h.b16 %v9807
    %v10000 = vunpack.c.l.b16 %v9808
    %v10001 = vunpack.c.h.b16 %v9808
    %v10002 = vunpack.c.l.b16 %v9809
    %v10003 = vunpack.c.h.b16 %v9809
    %v10004 = vunpack.c.l.b16 %v9810
    %v10005 = vunpack.c.h.b16 %v9810
    %v10006 = vunpack.c.l.b16 %v9811
    %v10007 = vunpack.c.h.b16 %v9811
    %v10008 = vunpack.c.l.b16 %v9812
    %v10009 = vunpack.c.h.b16 %v9812
    %v10010 = vunpack.c.l.b16 %v9813
    %v10011 = vunpack.c.h.b16 %v9813
    %v10012 = vunpack.c.l.b16 %v9814
    %v10013 = vunpack.c.h.b16 %v9814
    %v10014 = vunpack.c.l.b16 %v9815
    %v10015 = vunpack.c.h.b16 %v9815
    %v10016 = vunpack.c.l.b16 %v9816
    %v10017 = vunpack.c.h.b16 %v9816
    %v10018 = vunpack.c.l.b16 %v9817
    %v10019 = vunpack.c.h.b16 %v9817
    %v10020 = vunpack.c.l.b16 %v9818
    %v10021 = vunpack.c.h.b16 %v9818
    %v10022 = vunpack.c.l.b16 %v9819
    %v10023 = vunpack.c.h.b16 %v9819
    %v10024 = vunpack.c.l.b16 %v9820
    %v10025 = vunpack.c.h.b16 %v9820
    %v10026 = vunpack.c.l.b16 %v9821
    %v10027 = vunpack.c.h.b16 %v9821
    %v10028 = vunpack.c.l.b16 %v9822
    %v10029 = vunpack.c.h.b16 %v9822
    %v10030 = vunpack.c.l.b16 %v9823
    %v10031 = vunpack.c.h.b16 %v9823
    %v10032 = vpack.c.b16 %v9906, %v9904
    %v10033 = vpack.c.b16 %v9907, %v9905
    %v10034 = vpack.c.b16 %v9910, %v9908
    %v10035 = vpack.c.b16 %v9911, %v9909
    %v10036 = vpack.c.b16 %v9914, %v9912
    %v10037 = vpack.c.b16 %v9915, %v9913
    %v10038 = vpack.c.b16 %v9918, %v9916
    %v10039 = vpack.c.b16 %v9919, %v9917
    %v10040 = vpack.c.b16 %v9922, %v9920
    %v10041 = vpack.c.b16 %v9923, %v9921
    %v10042 = vpack.c.b16 %v9926, %v9924
    %v10043 = vpack.c.b16 %v9927, %v9925
    %v10044 = vpack.c.b16 %v9930, %v9928
    %v10045 = vpack.c.b16 %v9931, %v9929
    %v10046 = vpack.c.b16 %v9934, %v9932
    %v10047 = vpack.c.b16 %v9935, %v9933
    %v10048 = vpack.c.b16 %v9938, %v9936
    %v10049 = vpack.c.b16 %v9939, %v9937
    %v10050 = vpack.c.b16 %v9942, %v9940
    %v10051 = vpack.c.b16 %v9943, %v9941
    %v10052 = vpack.c.b16 %v9946, %v9944
    %v10053 = vpack.c.b16 %v9947, %v9945
    %v10054 = vpack.c.b16 %v9950, %v9948
    %v10055 = vpack.c.b16 %v9951, %v9949
    %v10056 = vpack.c.b16 %v9954, %v9952
    %v10057 = vpack.c.b16 %v9955, %v9953
    %v10058 = vpack.c.b16 %v9958, %v9956
    %v10059 = vpack.c.b16 %v9959, %v9957
    %v10060 = vpack.c.b16 %v9962, %v9960
    %v10061 = vpack.c.b16 %v9963, %v9961
    %v10062 = vpack.c.b16 %v9966, %v9964
    %v10063 = vpack.c.b16 %v9967, %v9965
    %v10064 = vpack.c.b16 %v9970, %v9968
    %v10065 = vpack.c.b16 %v9971, %v9969
    %v10066 = vpack.c.b16 %v9974, %v9972
    %v10067 = vpack.c.b16 %v9975, %v9973
    %v10068 = vpack.c.b16 %v9978, %v9976
    %v10069 = vpack.c.b16 %v9979, %v9977
    %v10070 = vpack.c.b16 %v9982, %v9980
    %v10071 = vpack.c.b16 %v9983, %v9981
    %v10072 = vpack.c.b16 %v9986, %v9984
    %v10073 = vpack.c.b16 %v9987, %v9985
    %v10074 = vpack.c.b16 %v9990, %v9988
    %v10075 = vpack.c.b16 %v9991, %v9989
    %v10076 = vpack.c.b16 %v9994, %v9992
    %v10077 = vpack.c.b16 %v9995, %v9993
    %v10078 = vpack.c.b16 %v9998, %v9996
    %v10079 = vpack.c.b16 %v9999, %v9997
    %v10080 = vpack.c.b16 %v10002, %v10000
    %v10081 = vpack.c.b16 %v10003, %v10001
    %v10082 = vpack.c.b16 %v10006, %v10004
    %v10083 = vpack.c.b16 %v10007, %v10005
    %v10084 = vpack.c.b16 %v10010, %v10008
    %v10085 = vpack.c.b16 %v10011, %v10009
    %v10086 = vpack.c.b16 %v10014, %v10012
    %v10087 = vpack.c.b16 %v10015, %v10013
    %v10088 = vpack.c.b16 %v10018, %v10016
    %v10089 = vpack.c.b16 %v10019, %v10017
    %v10090 = vpack.c.b16 %v10022, %v10020
    %v10091 = vpack.c.b16 %v10023, %v10021
    %v10092 = vpack.c.b16 %v10026, %v10024
    %v10093 = vpack.c.b16 %v10027, %v10025
    %v10094 = vpack.c.b16 %v10030, %v10028
    %v10095 = vpack.c.b16 %v10031, %v10029
    %10160 = vmatprep.subr.bf16.mxu0 %v10033
    %10161 = vmatpush1.bf16.msra.mxu0 %v10032
    %10162 = vmatprep.subr.bf16.mxu0 %v10035
    %10163 = vmatpush1.bf16.msra.mxu0 %v10034
    %10164 = vmatprep.subr.bf16.mxu0 %v10037
    %10165 = vmatpush1.bf16.msra.mxu0 %v10036
    %10166 = vmatprep.subr.bf16.mxu0 %v10039
    %10167 = vmatpush1.bf16.msra.mxu0 %v10038
    %10168 = vmatprep.subr.bf16.mxu0 %v10041
    %10169 = vmatpush1.bf16.msra.mxu0 %v10040
    %10170 = vmatprep.subr.bf16.mxu0 %v10043
    %10171 = vmatpush1.bf16.msra.mxu0 %v10042
    %10172 = vmatprep.subr.bf16.mxu0 %v10045
    %10173 = vmatpush1.bf16.msra.mxu0 %v10044
    %10174 = vmatprep.subr.bf16.mxu0 %v10047
    %10175 = vmatpush1.bf16.msra.mxu0 %v10046
    %10176 = vmatprep.subr.bf16.mxu0 %v10049
    %10177 = vmatpush1.bf16.msra.mxu0 %v10048
    %10178 = vmatprep.subr.bf16.mxu0 %v10051
    %10179 = vmatpush1.bf16.msra.mxu0 %v10050
    %10180 = vmatprep.subr.bf16.mxu0 %v10053
    %10181 = vmatpush1.bf16.msra.mxu0 %v10052
    %10182 = vmatprep.subr.bf16.mxu0 %v10055
    %10183 = vmatpush1.bf16.msra.mxu0 %v10054
    %10184 = vmatprep.subr.bf16.mxu0 %v10057
    %10185 = vmatpush1.bf16.msra.mxu0 %v10056
    %10186 = vmatprep.subr.bf16.mxu0 %v10059
    %10187 = vmatpush1.bf16.msra.mxu0 %v10058
    %10188 = vmatprep.subr.bf16.mxu0 %v10061
    %10189 = vmatpush1.bf16.msra.mxu0 %v10060
    %10190 = vmatprep.subr.bf16.mxu0 %v10063
    %10191 = vmatpush1.bf16.msra.mxu0 %v10062
    %10192 = vmatprep.mubr.bf16.mxu0 %v9825
    %10193 = vmatmul.mubr.bf16.gmra.mrb[0].mxu0 %v9824
    %v10194 = vpop.f32.mrb[0].mxu0
    %v10195 = vadd.f32 %v9833, %v10194
    %v10196 = vpop.f32.mrb[0].mxu0
    %v10197 = vadd.f32 %v9837, %v10196
    %v10198 = vpop.f32.mrb[0].mxu0
    %v10199 = vadd.f32 %v9833, %v10198
    %v10200 = vpop.f32.mrb[0].mxu0
    %v10201 = vadd.f32 %v9837, %v10200
    %10202 = vdwg.mxu0
    %10203 = vmatprep.subr.bf16.mxu0 %v10065
    %10204 = vmatpush1.bf16.msra.mxu0 %v10064
    %10205 = vmatprep.subr.bf16.mxu0 %v10067
    %10206 = vmatpush1.bf16.msra.mxu0 %v10066
    %10207 = vmatprep.subr.bf16.mxu0 %v10069
    %10208 = vmatpush1.bf16.msra.mxu0 %v10068
    %10209 = vmatprep.subr.bf16.mxu0 %v10071
    %10210 = vmatpush1.bf16.msra.mxu0 %v10070
    %10211 = vmatprep.subr.bf16.mxu0 %v10073
    %10212 = vmatpush1.bf16.msra.mxu0 %v10072
    %10213 = vmatprep.subr.bf16.mxu0 %v10075
    %10214 = vmatpush1.bf16.msra.mxu0 %v10074
    %10215 = vmatprep.subr.bf16.mxu0 %v10077
    %10216 = vmatpush1.bf16.msra.mxu0 %v10076
    %10217 = vmatprep.subr.bf16.mxu0 %v10079
    %10218 = vmatpush1.bf16.msra.mxu0 %v10078
    %10219 = vmatprep.subr.bf16.mxu0 %v10081
    %10220 = vmatpush1.bf16.msra.mxu0 %v10080
    %10221 = vmatprep.subr.bf16.mxu0 %v10083
    %10222 = vmatpush1.bf16.msra.mxu0 %v10082
    %10223 = vmatprep.subr.bf16.mxu0 %v10085
    %10224 = vmatpush1.bf16.msra.mxu0 %v10084
    %10225 = vmatprep.subr.bf16.mxu0 %v10087
    %10226 = vmatpush1.bf16.msra.mxu0 %v10086
    %10227 = vmatprep.subr.bf16.mxu0 %v10089
    %10228 = vmatpush1.bf16.msra.mxu0 %v10088
    %10229 = vmatprep.subr.bf16.mxu0 %v10091
    %10230 = vmatpush1.bf16.msra.mxu0 %v10090
    %10231 = vmatprep.subr.bf16.mxu0 %v10093
    %10232 = vmatpush1.bf16.msra.mxu0 %v10092
    %10233 = vmatprep.subr.bf16.mxu0 %v10095
    %10234 = vmatpush1.bf16.msra.mxu0 %v10094
    %10235 = vmatprep.mubr.bf16.mxu0 %v9827
    %10236 = vmatmul.mubr.bf16.gmra.mrb[0].mxu0 %v9826
    %v10237 = vpop.f32.mrb[0].mxu0
    %v10238 = vadd.f32 %v10195, %v10237
    %v10239 = vpop.f32.mrb[0].mxu0
    %v10240 = vadd.f32 %v10197, %v10239
    %v10241 = vpop.f32.mrb[0].mxu0
    %v10242 = vadd.f32 %v10199, %v10241
    %v10243 = vpop.f32.mrb[0].mxu0
    %v10244 = vadd.f32 %v10201, %v10243
    %10245 = vdwg.mxu0
    %v10246 = vadd.f32 %v9254, %v10238
    %v10247 = vadd.f32 %v9255, %v10240
    %v10248 = vadd.f32 %v9256, %v10242
    %v10249 = vadd.f32 %v9257, %v10244
    %v10250 = vld [vmem:[%s67] sm:$0x3]
    %v10251 = vld [vmem:[%s69] sm:$0x3]
    %v10252 = vadd.f32 %v10246, %v10247
    %10253 = vadd.xlane.f32.xlu0 %v10252
    %v10254 = vpop.xlane.xlu0 %10253
    %v10255 = vadd.f32 %v10248, %v10249
    %10256 = vadd.xlane.f32.xlu0 %v10255
    %v10257 = vpop.xlane.xlu0 %10256
    %v10258 = vmul.f32 %v10254, %v2802
    %v10259 = vmul.f32 %v10257, %v2802
    %v10260 = vsub.f32 %v10246, %v10258
    %v10261 = vsub.f32 %v10247, %v10258
    %v10262 = vsub.f32 %v10248, %v10259
    %v10263 = vsub.f32 %v10249, %v10259
    %v10264 = vmul.f32 %v10260, %v10260
    %v10265 = vmul.f32 %v10261, %v10261
    %v10266 = vmul.f32 %v10262, %v10262
    %v10267 = vmul.f32 %v10263, %v10263
    %v10268 = vadd.f32 %v10264, %v10265
    %10269 = vadd.xlane.f32.xlu0 %v10268
    %v10270 = vpop.xlane.xlu0 %10269
    %v10271 = vadd.f32 %v10266, %v10267
    %10272 = vadd.xlane.f32.xlu0 %v10271
    %v10273 = vpop.xlane.xlu0 %10272
    %v10274 = vmul.f32 %v10270, %v2802
    %v10275 = vmul.f32 %v10273, %v2802
    %v10276 = vadd.f32 %v10274, 1e-05
    %v10277 = vadd.f32 %v10275, 1e-05
    %v10278 = vrsqrt.pop %v10276
    %v10279 = vrsqrt.pop %v10277
    %v10280 = vmul.f32 %v10260, %v10278
    %v10281 = vmul.f32 %v10261, %v10278
    %v10282 = vmul.f32 %v10262, %v10279
    %v10283 = vmul.f32 %v10263, %v10279
    %v10285 = vlaneseq
    %v10286 = vshrl.u32 %v10285, 7
    %v10287 = vsub.s32 0, %v10286
    %v10288 = vrot.slane %v10250, %v10287
    %v10289 = vlaneseq
    %v10290 = vshrl.u32 %v10289, 7
    %v10291 = vsub.s32 1, %v10290
    %v10292 = vrot.slane %v10250, %v10291
    %v10295 = vmul.f32 %v10280, %v10288
    %v10296 = vmul.f32 %v10281, %v10292
    %v10297 = vmul.f32 %v10282, %v10288
    %v10298 = vmul.f32 %v10283, %v10292
    %v10300 = vlaneseq
    %v10301 = vshrl.u32 %v10300, 7
    %v10302 = vsub.s32 0, %v10301
    %v10303 = vrot.slane %v10251, %v10302
    %v10304 = vlaneseq
    %v10305 = vshrl.u32 %v10304, 7
    %v10306 = vsub.s32 1, %v10305
    %v10307 = vrot.slane %v10251, %v10306
    %v10310 = vadd.f32 %v10295, %v10303
    %v10311 = vadd.f32 %v10296, %v10307
    %v10312 = vadd.f32 %v10297, %v10303
    %v10313 = vadd.f32 %v10298, %v10307
    %10314 = vst [vmem:[#allocation31] sm:$0xff] %v10310
    %10315 = vst [vmem:[#allocation31 + $0x8] sm:$0xff] %v10311
    %10316 = vst [vmem:[#allocation31 + $0x10] sm:$0xff] %v10312
    %10317 = vst [vmem:[#allocation31 + $0x18] sm:$0xff] %v10313
    %10318 = vst.msk [vmem:[%s73] sm:$0xff] %vm2664, %v2685
    %10319 = vst.msk [vmem:[%s73 + $0x10] sm:$0xff] %vm2664, %v2686
    %s10320 = scalar_lea.vmem %s73, 8
    %10321 = vst.msk [vmem:[%s10320] sm:$0xff] %vm2664, %v9082
    %10322 = vst.msk [vmem:[%s10320 + $0x10] sm:$0xff] %vm2664, %v9083
    // Predicated region
    $region210: #{action_decoder_forward.1} parent=1 // pred_check
      _
    $region211: #{action_decoder_forward.1} parent=1 // pred_check_branch
      %10324 = sbr.rel (0) target = $region213
    $region212: #{action_decoder_forward.1} parent=1 // pred_region
      %s10326 = ssub.s32 512, 512
      %10327 = vsyncadd [#allocation5], %s10326
      %s10328 = sshll.u32 [#allocation31], 4
      %s10329 = int_to_ptr.vmem [resolvable:$true] %s10328
      %10334 = dma.vmem_to_hbm [thread:$0]  %s10329, 512, %s71, [#allocation5], 256, 256, 16
    $region213: #{action_decoder_forward.1} parent=1 // pred_fallthru
      _
    // Predicated region
    $region214: #{action_decoder_forward.1} parent=1 // pred_check
      _
    $region215: #{action_decoder_forward.1} parent=1 // pred_check_branch
      %10336 = sbr.rel (0) target = $region217
    $region216: #{action_decoder_forward.1} parent=1 // pred_region
      _
    $region217: #{action_decoder_forward.1} parent=1 // pred_fallthru
      _
    // Predicated region
    $region218: #{action_decoder_forward.1} parent=1 // pred_check
      _
    $region219: #{action_decoder_forward.1} parent=1 // pred_check_branch
      %10338 = sbr.rel (0) target = $region221
    $region220: #{action_decoder_forward.1} parent=1 // pred_region
      %10339 = dma.done [#allocation5], 512
    $region221: #{action_decoder_forward.1} parent=1 // pred_fallthru
      _
    // Predicated region
    $region222: #{action_decoder_forward.1} parent=1 // pred_check
      _
    $region223: #{action_decoder_forward.1} parent=1 // pred_check_branch
      %10341 = sbr.rel (0) target = $region225
    $region224: #{action_decoder_forward.1} parent=1 // pred_region
      _
    $region225: #{action_decoder_forward.1} parent=1 // pred_fallthru
      _
    %10342 = vsyncpa [#allocation4], 1
    %10343 = vsyncpa [#allocation9], 1
    %10344 = vsyncpa [#allocation12], 1
    %10345 = vsyncpa [#allocation15], 1
    %10346 = vsyncpa [#allocation18], 1
    %10347 = vsyncpa [#allocation21], 1
    %10348 = vsyncpa [#allocation24], 1
    %10349 = vsyncpa [#allocation27], 1
    %10350 = vsyncpa [#allocation30], 1
    %10351 = vsyncpa [#allocation5], 1
    %10352 = vsyncpa [#allocation6], 1

</llo_original>
